<compile_context>
chip_gen: v6e
topology: v6e:2x2x1
jax: 0.10.0
libtpu: 0.0.40
codegen_flags: <defaults>
</compile_context>

<pallas_src>
import functools

import jax
import jax.numpy as jnp
from jax.experimental import pallas as pl
from jax.experimental.pallas import tpu as pltpu


CP = 128   # input channels padded to this many lanes
KP = 128   # output channels padded to this many lanes


# ----------------------------------------------------------------------------
# Pallas kernel: 3x3 same-padded conv (+ optional fused freq residual add)
# ----------------------------------------------------------------------------
def _conv3x3_kernel(*refs, tile_h, width, apply_relu, add_freq):
    """One (batch image, output-row block).

    out = [relu]( sum_{dy,dx} shift(x)[dy,dx] @ w_tap[dy,dx] + b )
    If add_freq, the slab is x + |F| * inv_fmax (fused residual add).

    refs (add_freq=True):  xp, fabs, inv_fmax, w_taps, bias, out
    refs (add_freq=False): xp, w_taps, bias, out
    """
    if add_freq:
        xp_ref, fabs_ref, inv_ref, w_ref, b_ref, o_ref = refs
    else:
        xp_ref, w_ref, b_ref, o_ref = refs
        fabs_ref = inv_ref = None

    cp = xp_ref.shape[-1]          # padded input channels (lanes)
    kp = o_ref.shape[-1]           # padded output channels (lanes)
    row0 = pl.program_id(1) * tile_h   # first output row of this block

    acc = None
    for dy in range(3):
        for dx in range(3):
            # (tile_h, width, cp) window of the padded image for this tap.
            slab = xp_ref[0, pl.ds(row0 + dy, tile_h), pl.ds(dx, width), :]
            if add_freq:
                fslab = fabs_ref[0, pl.ds(row0 + dy, tile_h), pl.ds(dx, width), :]
                slab = slab + fslab * inv_ref[...]   # f32 residual add, fused
            a = slab.astype(jnp.bfloat16).reshape(tile_h * width, cp)
            contrib = jnp.dot(a, w_ref[dy * 3 + dx],
                              preferred_element_type=jnp.float32)
            acc = contrib if acc is None else acc + contrib

    acc = acc + b_ref[...]
    if apply_relu:
        acc = jnp.maximum(acc, 0.0)
    o_ref[...] = acc.reshape(1, tile_h, width, kp).astype(o_ref.dtype)


# ----------------------------------------------------------------------------
# pallas_call wrapper
# ----------------------------------------------------------------------------
def _conv3x3(xp, w_taps, b_row, *, tile_h, apply_relu, out_dtype,
             fabs=None, inv_fmax=None):
    """xp: [N, H+2, W+2, CP] (spatially padded, channel padded, NHWC)."""
    n, hp, wp, cp = xp.shape
    h, width = hp - 2, wp - 2
    kp = w_taps.shape[-1]
    assert h % tile_h == 0
    grid = (n, h // tile_h)

    # Full padded image resident per batch index (re-DMA only when n changes);
    # rows for the current block (+ halo) are sliced inside the kernel.
    img_spec = pl.BlockSpec((1, hp, wp, cp), lambda i, r: (i, 0, 0, 0))
    in_specs = [img_spec]
    operands = [xp]
    if fabs is not None:
        in_specs += [img_spec,
                     pl.BlockSpec((1, 1, cp), lambda i, r: (i, 0, 0))]
        operands += [fabs, inv_fmax]
    in_specs += [pl.BlockSpec((9, cp, kp), lambda i, r: (0, 0, 0)),
                 pl.BlockSpec((1, kp), lambda i, r: (0, 0))]
    operands += [w_taps, b_row]

    out_spec = pl.BlockSpec((1, tile_h, width, kp), lambda i, r: (i, r, 0, 0))

    bytes_in = sum(int(a.size) * a.dtype.itemsize for a in operands)
    bytes_out = n * h * width * kp * jnp.dtype(out_dtype).itemsize
    cost = pl.CostEstimate(flops=2 * 9 * n * h * width * cp * kp,
                           transcendentals=0,
                           bytes_accessed=int(bytes_in + bytes_out))

    kernel = functools.partial(_conv3x3_kernel, tile_h=tile_h, width=width,
                               apply_relu=apply_relu, add_freq=fabs is not None)
    return pl.pallas_call(
        kernel,
        out_shape=jax.ShapeDtypeStruct((n, h, width, kp), out_dtype),
        grid=grid,
        in_specs=in_specs,
        out_specs=out_spec,
        compiler_params=pltpu.CompilerParams(
            dimension_semantics=("parallel", "parallel"),
            vmem_limit_bytes=32 * 1024 * 1024),   # explicit; fits all of v5e/v6e/v7x
        cost_estimate=cost,
    )(*operands)


# ----------------------------------------------------------------------------
# Layout / weight prep (XLA glue)
# ----------------------------------------------------------------------------
def _prep_weights(weight, bias, cp=CP, kp=KP):
    """[Cout,Cin,3,3] -> tap-major [9, CP, KP] bf16 (tap = dy*3+dx), bias [1,KP] f32."""
    cout, cin = weight.shape[0], weight.shape[1]
    wt = jnp.transpose(weight, (2, 3, 1, 0)).reshape(9, cin, cout)
    w_taps = (jnp.zeros((9, cp, kp), jnp.bfloat16)
              .at[:, :cin, :cout].set(wt.astype(jnp.bfloat16)))
    b_row = (jnp.zeros((1, kp), jnp.float32)
             .at[0, :cout].set(bias.astype(jnp.float32)))
    return w_taps, b_row


def _nhwc_pad(x_nchw, cp, dtype):
    """NCHW -> NHWC, zero-pad channels to cp lanes, 1-pixel spatial zero pad."""
    x = jnp.transpose(x_nchw, (0, 2, 3, 1)).astype(dtype)
    return jnp.pad(x, ((0, 0), (1, 1), (1, 1), (0, cp - x.shape[-1])))


def _pad_hw(x_nhwc):
    return jnp.pad(x_nhwc, ((0, 0), (1, 1), (1, 1), (0, 0)))


# ----------------------------------------------------------------------------
# FourierCNN forward
# ----------------------------------------------------------------------------
def init_params(key):
    k1, k2, k3 = jax.random.split(key, 3)
    scale = 0.05
    return {
        "w1": scale * jax.random.normal(k1, (64, 3, 3, 3), jnp.float32),
        "b1": jnp.linspace(-0.1, 0.1, 64, dtype=jnp.float32),
        "w2": scale * jax.random.normal(k2, (64, 64, 3, 3), jnp.float32),
        "b2": jnp.linspace(0.1, -0.1, 64, dtype=jnp.float32),
        "w3": scale * jax.random.normal(k3, (3, 64, 3, 3), jnp.float32),
        "b3": jnp.array([0.01, -0.02, 0.03], dtype=jnp.float32),
    }


def fourier_cnn_forward(params, x):
    n, c, h, w = x.shape
    cout_final = params["w3"].shape[0]
    # Row-block size: multiple of 8; raise for larger images (M per grid step
    # is tile_h * W), keeping double-buffered blocks within VMEM on v7x.
    tile_h = 8 if h % 8 == 0 else h

    # ---- XLA glue: FFT magnitude + tiny per-(n,c) amax (no Pallas FFT) ----
    freq_abs = jnp.abs(jnp.fft.fft2(x)).astype(jnp.float32)          # [N,C,H,W]
    fmax = jnp.max(freq_abs, axis=(-2, -1), keepdims=True)           # [N,C,1,1]
    inv = (1.0 / (fmax + 1e-8)).reshape(n, 1, c)
    inv_fmax = jnp.zeros((n, 1, CP), jnp.float32).at[:, :, :c].set(inv)

    # NHWC, 128-lane channel pad, 1-pixel spatial pad (padded lanes are zero,
    # so they contribute nothing to the matmuls or the residual add).
    xp = _nhwc_pad(x.astype(jnp.float32), CP, jnp.float32)
    fp = _nhwc_pad(freq_abs, CP, jnp.float32)

    w1, b1 = _prep_weights(params["w1"], params["b1"])
    w2, b2 = _prep_weights(params["w2"], params["b2"])
    w3, b3 = _prep_weights(params["w3"], params["b3"])

    # conv1 with the frequency-amplitude residual add fused into the slab load.
    y = _conv3x3(xp, w1, b1, tile_h=tile_h, apply_relu=True,
                 out_dtype=jnp.bfloat16, fabs=fp, inv_fmax=inv_fmax)
    y = _conv3x3(_pad_hw(y), w2, b2, tile_h=tile_h, apply_relu=True,
                 out_dtype=jnp.bfloat16)
    y = _conv3x3(_pad_hw(y), w3, b3, tile_h=tile_h, apply_relu=False,
                 out_dtype=jnp.float32)

    # Back to NCHW, drop lane padding.
    return jnp.transpose(y[..., :cout_final], (0, 3, 1, 2))


# ----------------------------------------------------------------------------
# Pure-JAX references for verification
# ----------------------------------------------------------------------------
def _conv_ref(x, w, b, relu, in_dtype):
    y = jax.lax.conv_general_dilated(
        x.astype(in_dtype), w.astype(in_dtype), (1, 1), "SAME",
        dimension_numbers=("NCHW", "OIHW", "NCHW"),
        preferred_element_type=jnp.float32)
    y = y + b.reshape(1, -1, 1, 1)
    return jnp.maximum(y, 0.0) if relu else y


def _ref_forward_f32(params, x):
    """Exact PyTorch-equivalent math in f32."""
    freq_abs = jnp.abs(jnp.fft.fft2(x)).astype(jnp.float32)
    fmax = jnp.max(freq_abs, axis=(-2, -1), keepdims=True)
    h = x + freq_abs / (fmax + 1e-8)
    h = _conv_ref(h, params["w1"], params["b1"], True, jnp.float32)
    h = _conv_ref(h, params["w2"], params["b2"], True, jnp.float32)
    return _conv_ref(h, params["w3"], params["b3"], False, jnp.float32)


def _ref_forward_bf16(params, x):
    """Mirrors the kernel's bf16 MXU-input casts (f32 accumulation) for a tight check."""
    freq_abs = jnp.abs(jnp.fft.fft2(x)).astype(jnp.float32)
    fmax = jnp.max(freq_abs, axis=(-2, -1), keepdims=True)
    inv = 1.0 / (fmax + 1e-8)
    h = (x.astype(jnp.float32) + freq_abs * inv).astype(jnp.bfloat16)
    h = _conv_ref(h, params["w1"], params["b1"], True, jnp.bfloat16).astype(jnp.bfloat16)
    h = _conv_ref(h, params["w2"], params["b2"], True, jnp.bfloat16).astype(jnp.bfloat16)
    return _conv_ref(h, params["w3"], params["b3"], False, jnp.bfloat16)


if __name__ == "__main__":
    key = jax.random.PRNGKey(0)
    kx, kparam = jax.random.split(key)
    # N=2, C=3 (conv1 requires 3 input channels), H=W=16
    x = jax.random.normal(kx, (2, 3, 16, 16), jnp.float32)
    params = init_params(kparam)

    fwd = jax.jit(fourier_cnn_forward)
    out = jax.block_until_ready(fwd(params, x))
    assert out.shape == (2, 3, 16, 16)
    assert out.dtype == jnp.float32

    ref_mirror = jax.block_until_ready(_ref_forward_bf16(params, x))
    ref_f32 = jax.block_until_ready(_ref_forward_f32(params, x))
    # Tight structural check vs. the bf16-mirrored reference; loose check vs.
    # the pure-f32 PyTorch-equivalent math (bf16 MXU inputs, f32 accumulation).
    assert jnp.allclose(out, ref_mirror, atol=5e-3, rtol=5e-3), \
        float(jnp.max(jnp.abs(out - ref_mirror)))
    assert jnp.allclose(out, ref_f32, atol=5e-2, rtol=5e-2), \
        float(jnp.max(jnp.abs(out - ref_f32)))
    print("KERNEL_OK")
</pallas_src>

<mosaic_0001>
module attributes {stable_mosaic.version = 11 : i64} {
  func.func @_conv3x3_kernel(%arg0: i32, %arg1: i32, %arg2: memref<1x18x18x128xf32, #tpu.memory_space<vmem>>, %arg3: memref<1x18x18x128xf32, #tpu.memory_space<vmem>>, %arg4: memref<1x1x128xf32, #tpu.memory_space<vmem>>, %arg5: memref<9x128x128xbf16, #tpu.memory_space<vmem>>, %arg6: memref<1x128xf32, #tpu.memory_space<vmem>>, %arg7: memref<1x8x16x128xbf16, #tpu.memory_space<vmem>>) attributes {dimension_semantics = [#tpu.dimension_semantics<parallel>, #tpu.dimension_semantics<parallel>], iteration_bounds = array<i64: 2, 2>, scalar_prefetch = 0 : i64, scratch_operands = 0 : i64, tpu.core_type = #tpu.core_type<tc>, window_params = [{transform_indices = @transform_0, window_bounds = array<i64: 1, 18, 18, 128>}, {transform_indices = @transform_1, window_bounds = array<i64: 1, 18, 18, 128>}, {transform_indices = @transform_2, window_bounds = array<i64: 1, 1, 128>}, {pipeline_mode = #tpu.pipeline_mode<synchronous>, transform_indices = @transform_3, window_bounds = array<i64: 9, 128, 128>}, {pipeline_mode = #tpu.pipeline_mode<synchronous>, transform_indices = @transform_4, window_bounds = array<i64: 1, 128>}, {transform_indices = @transform_5, window_bounds = array<i64: 1, 8, 16, 128>}]} {
    %c8_i32 = arith.constant 8 : i32
    %0 = arith.muli %arg1, %c8_i32 : i32
    %c0_i32 = arith.constant 0 : i32
    %1 = arith.addi %0, %c0_i32 : i32
    %c0 = arith.constant 0 : index
    %2 = arith.index_cast %1 : i32 to index
    %c0_0 = arith.constant 0 : index
    %c0_1 = arith.constant 0 : index
    %3 = vector.load %arg2[%c0, %2, %c0_0, %c0_1] : memref<1x18x18x128xf32, #tpu.memory_space<vmem>>, vector<1x8x16x128xf32>
    %4 = vector.shape_cast %3 : vector<1x8x16x128xf32> to vector<8x16x128xf32>
    %c0_i32_2 = arith.constant 0 : i32
    %5 = arith.addi %0, %c0_i32_2 : i32
    %c0_3 = arith.constant 0 : index
    %6 = arith.index_cast %5 : i32 to index
    %c0_4 = arith.constant 0 : index
    %c0_5 = arith.constant 0 : index
    %7 = vector.load %arg3[%c0_3, %6, %c0_4, %c0_5] : memref<1x18x18x128xf32, #tpu.memory_space<vmem>>, vector<1x8x16x128xf32>
    %8 = vector.shape_cast %7 : vector<1x8x16x128xf32> to vector<8x16x128xf32>
    %c0_6 = arith.constant 0 : index
    %c0_7 = arith.constant 0 : index
    %c0_8 = arith.constant 0 : index
    %9 = vector.load %arg4[%c0_6, %c0_7, %c0_8] : memref<1x1x128xf32, #tpu.memory_space<vmem>>, vector<1x1x128xf32>
    %10 = vector.broadcast %9 : vector<1x1x128xf32> to vector<8x16x128xf32>
    %11 = arith.mulf %8, %10 : vector<8x16x128xf32>
    %12 = arith.addf %4, %11 : vector<8x16x128xf32>
    %13 = arith.truncf %12 : vector<8x16x128xf32> to vector<8x16x128xbf16>
    %14 = vector.shape_cast %13 : vector<8x16x128xbf16> to vector<128x128xbf16>
    %c0_9 = arith.constant 0 : index
    %c0_10 = arith.constant 0 : index
    %c0_11 = arith.constant 0 : index
    %15 = vector.load %arg5[%c0_9, %c0_10, %c0_11] : memref<9x128x128xbf16, #tpu.memory_space<vmem>>, vector<1x128x128xbf16>
    %16 = vector.shape_cast %15 : vector<1x128x128xbf16> to vector<128x128xbf16>
    %cst = arith.constant dense<0.000000e+00> : vector<128x128xf32>
    %17 = tpu.matmul %14, %16, %cst {dimension_numbers = #tpu.dot_dimension_numbers<[1], [0], [0], [1], [0, 0, 1, 1], [], []>} : vector<128x128xbf16>, vector<128x128xbf16>, vector<128x128xf32> -> vector<128x128xf32>
    %c0_i32_12 = arith.constant 0 : i32
    %18 = arith.addi %0, %c0_i32_12 : i32
    %c0_13 = arith.constant 0 : index
    %19 = arith.index_cast %18 : i32 to index
    %c1 = arith.constant 1 : index
    %c0_14 = arith.constant 0 : index
    %20 = vector.load %arg2[%c0_13, %19, %c1, %c0_14] : memref<1x18x18x128xf32, #tpu.memory_space<vmem>>, vector<1x8x16x128xf32>
    %21 = vector.shape_cast %20 : vector<1x8x16x128xf32> to vector<8x16x128xf32>
    %c0_i32_15 = arith.constant 0 : i32
    %22 = arith.addi %0, %c0_i32_15 : i32
    %c0_16 = arith.constant 0 : index
    %23 = arith.index_cast %22 : i32 to index
    %c1_17 = arith.constant 1 : index
    %c0_18 = arith.constant 0 : index
    %24 = vector.load %arg3[%c0_16, %23, %c1_17, %c0_18] : memref<1x18x18x128xf32, #tpu.memory_space<vmem>>, vector<1x8x16x128xf32>
    %25 = vector.shape_cast %24 : vector<1x8x16x128xf32> to vector<8x16x128xf32>
    %c0_19 = arith.constant 0 : index
    %c0_20 = arith.constant 0 : index
    %c0_21 = arith.constant 0 : index
    %26 = vector.load %arg4[%c0_19, %c0_20, %c0_21] : memref<1x1x128xf32, #tpu.memory_space<vmem>>, vector<1x1x128xf32>
    %27 = vector.broadcast %26 : vector<1x1x128xf32> to vector<8x16x128xf32>
    %28 = arith.mulf %25, %27 : vector<8x16x128xf32>
    %29 = arith.addf %21, %28 : vector<8x16x128xf32>
    %30 = arith.truncf %29 : vector<8x16x128xf32> to vector<8x16x128xbf16>
    %31 = vector.shape_cast %30 : vector<8x16x128xbf16> to vector<128x128xbf16>
    %c1_22 = arith.constant 1 : index
    %c0_23 = arith.constant 0 : index
    %c0_24 = arith.constant 0 : index
    %32 = vector.load %arg5[%c1_22, %c0_23, %c0_24] : memref<9x128x128xbf16, #tpu.memory_space<vmem>>, vector<1x128x128xbf16>
    %33 = vector.shape_cast %32 : vector<1x128x128xbf16> to vector<128x128xbf16>
    %cst_25 = arith.constant dense<0.000000e+00> : vector<128x128xf32>
    %34 = tpu.matmul %31, %33, %cst_25 {dimension_numbers = #tpu.dot_dimension_numbers<[1], [0], [0], [1], [0, 0, 1, 1], [], []>} : vector<128x128xbf16>, vector<128x128xbf16>, vector<128x128xf32> -> vector<128x128xf32>
    %35 = arith.addf %17, %34 : vector<128x128xf32>
    %c0_i32_26 = arith.constant 0 : i32
    %36 = arith.addi %0, %c0_i32_26 : i32
    %c0_27 = arith.constant 0 : index
    %37 = arith.index_cast %36 : i32 to index
    %c2 = arith.constant 2 : index
    %c0_28 = arith.constant 0 : index
    %38 = vector.load %arg2[%c0_27, %37, %c2, %c0_28] : memref<1x18x18x128xf32, #tpu.memory_space<vmem>>, vector<1x8x16x128xf32>
    %39 = vector.shape_cast %38 : vector<1x8x16x128xf32> to vector<8x16x128xf32>
    %c0_i32_29 = arith.constant 0 : i32
    %40 = arith.addi %0, %c0_i32_29 : i32
    %c0_30 = arith.constant 0 : index
    %41 = arith.index_cast %40 : i32 to index
    %c2_31 = arith.constant 2 : index
    %c0_32 = arith.constant 0 : index
    %42 = vector.load %arg3[%c0_30, %41, %c2_31, %c0_32] : memref<1x18x18x128xf32, #tpu.memory_space<vmem>>, vector<1x8x16x128xf32>
    %43 = vector.shape_cast %42 : vector<1x8x16x128xf32> to vector<8x16x128xf32>
    %c0_33 = arith.constant 0 : index
    %c0_34 = arith.constant 0 : index
    %c0_35 = arith.constant 0 : index
    %44 = vector.load %arg4[%c0_33, %c0_34, %c0_35] : memref<1x1x128xf32, #tpu.memory_space<vmem>>, vector<1x1x128xf32>
    %45 = vector.broadcast %44 : vector<1x1x128xf32> to vector<8x16x128xf32>
    %46 = arith.mulf %43, %45 : vector<8x16x128xf32>
    %47 = arith.addf %39, %46 : vector<8x16x128xf32>
    %48 = arith.truncf %47 : vector<8x16x128xf32> to vector<8x16x128xbf16>
    %49 = vector.shape_cast %48 : vector<8x16x128xbf16> to vector<128x128xbf16>
    %c2_36 = arith.constant 2 : index
    %c0_37 = arith.constant 0 : index
    %c0_38 = arith.constant 0 : index
    %50 = vector.load %arg5[%c2_36, %c0_37, %c0_38] : memref<9x128x128xbf16, #tpu.memory_space<vmem>>, vector<1x128x128xbf16>
    %51 = vector.shape_cast %50 : vector<1x128x128xbf16> to vector<128x128xbf16>
    %cst_39 = arith.constant dense<0.000000e+00> : vector<128x128xf32>
    %52 = tpu.matmul %49, %51, %cst_39 {dimension_numbers = #tpu.dot_dimension_numbers<[1], [0], [0], [1], [0, 0, 1, 1], [], []>} : vector<128x128xbf16>, vector<128x128xbf16>, vector<128x128xf32> -> vector<128x128xf32>
    %53 = arith.addf %35, %52 : vector<128x128xf32>
    %c1_i32 = arith.constant 1 : i32
    %54 = arith.addi %0, %c1_i32 : i32
    %c0_40 = arith.constant 0 : index
    %55 = arith.index_cast %54 : i32 to index
    %c0_41 = arith.constant 0 : index
    %c0_42 = arith.constant 0 : index
    %56 = vector.load %arg2[%c0_40, %55, %c0_41, %c0_42] : memref<1x18x18x128xf32, #tpu.memory_space<vmem>>, vector<1x8x16x128xf32>
    %57 = vector.shape_cast %56 : vector<1x8x16x128xf32> to vector<8x16x128xf32>
    %c1_i32_43 = arith.constant 1 : i32
    %58 = arith.addi %0, %c1_i32_43 : i32
    %c0_44 = arith.constant 0 : index
    %59 = arith.index_cast %58 : i32 to index
    %c0_45 = arith.constant 0 : index
    %c0_46 = arith.constant 0 : index
    %60 = vector.load %arg3[%c0_44, %59, %c0_45, %c0_46] : memref<1x18x18x128xf32, #tpu.memory_space<vmem>>, vector<1x8x16x128xf32>
    %61 = vector.shape_cast %60 : vector<1x8x16x128xf32> to vector<8x16x128xf32>
    %c0_47 = arith.constant 0 : index
    %c0_48 = arith.constant 0 : index
    %c0_49 = arith.constant 0 : index
    %62 = vector.load %arg4[%c0_47, %c0_48, %c0_49] : memref<1x1x128xf32, #tpu.memory_space<vmem>>, vector<1x1x128xf32>
    %63 = vector.broadcast %62 : vector<1x1x128xf32> to vector<8x16x128xf32>
    %64 = arith.mulf %61, %63 : vector<8x16x128xf32>
    %65 = arith.addf %57, %64 : vector<8x16x128xf32>
    %66 = arith.truncf %65 : vector<8x16x128xf32> to vector<8x16x128xbf16>
    %67 = vector.shape_cast %66 : vector<8x16x128xbf16> to vector<128x128xbf16>
    %c3 = arith.constant 3 : index
    %c0_50 = arith.constant 0 : index
    %c0_51 = arith.constant 0 : index
    %68 = vector.load %arg5[%c3, %c0_50, %c0_51] : memref<9x128x128xbf16, #tpu.memory_space<vmem>>, vector<1x128x128xbf16>
    %69 = vector.shape_cast %68 : vector<1x128x128xbf16> to vector<128x128xbf16>
    %cst_52 = arith.constant dense<0.000000e+00> : vector<128x128xf32>
    %70 = tpu.matmul %67, %69, %cst_52 {dimension_numbers = #tpu.dot_dimension_numbers<[1], [0], [0], [1], [0, 0, 1, 1], [], []>} : vector<128x128xbf16>, vector<128x128xbf16>, vector<128x128xf32> -> vector<128x128xf32>
    %71 = arith.addf %53, %70 : vector<128x128xf32>
    %c1_i32_53 = arith.constant 1 : i32
    %72 = arith.addi %0, %c1_i32_53 : i32
    %c0_54 = arith.constant 0 : index
    %73 = arith.index_cast %72 : i32 to index
    %c1_55 = arith.constant 1 : index
    %c0_56 = arith.constant 0 : index
    %74 = vector.load %arg2[%c0_54, %73, %c1_55, %c0_56] : memref<1x18x18x128xf32, #tpu.memory_space<vmem>>, vector<1x8x16x128xf32>
    %75 = vector.shape_cast %74 : vector<1x8x16x128xf32> to vector<8x16x128xf32>
    %c1_i32_57 = arith.constant 1 : i32
    %76 = arith.addi %0, %c1_i32_57 : i32
    %c0_58 = arith.constant 0 : index
    %77 = arith.index_cast %76 : i32 to index
    %c1_59 = arith.constant 1 : index
    %c0_60 = arith.constant 0 : index
    %78 = vector.load %arg3[%c0_58, %77, %c1_59, %c0_60] : memref<1x18x18x128xf32, #tpu.memory_space<vmem>>, vector<1x8x16x128xf32>
    %79 = vector.shape_cast %78 : vector<1x8x16x128xf32> to vector<8x16x128xf32>
    %c0_61 = arith.constant 0 : index
    %c0_62 = arith.constant 0 : index
    %c0_63 = arith.constant 0 : index
    %80 = vector.load %arg4[%c0_61, %c0_62, %c0_63] : memref<1x1x128xf32, #tpu.memory_space<vmem>>, vector<1x1x128xf32>
    %81 = vector.broadcast %80 : vector<1x1x128xf32> to vector<8x16x128xf32>
    %82 = arith.mulf %79, %81 : vector<8x16x128xf32>
    %83 = arith.addf %75, %82 : vector<8x16x128xf32>
    %84 = arith.truncf %83 : vector<8x16x128xf32> to vector<8x16x128xbf16>
    %85 = vector.shape_cast %84 : vector<8x16x128xbf16> to vector<128x128xbf16>
    %c4 = arith.constant 4 : index
    %c0_64 = arith.constant 0 : index
    %c0_65 = arith.constant 0 : index
    %86 = vector.load %arg5[%c4, %c0_64, %c0_65] : memref<9x128x128xbf16, #tpu.memory_space<vmem>>, vector<1x128x128xbf16>
    %87 = vector.shape_cast %86 : vector<1x128x128xbf16> to vector<128x128xbf16>
    %cst_66 = arith.constant dense<0.000000e+00> : vector<128x128xf32>
    %88 = tpu.matmul %85, %87, %cst_66 {dimension_numbers = #tpu.dot_dimension_numbers<[1], [0], [0], [1], [0, 0, 1, 1], [], []>} : vector<128x128xbf16>, vector<128x128xbf16>, vector<128x128xf32> -> vector<128x128xf32>
    %89 = arith.addf %71, %88 : vector<128x128xf32>
    %c1_i32_67 = arith.constant 1 : i32
    %90 = arith.addi %0, %c1_i32_67 : i32
    %c0_68 = arith.constant 0 : index
    %91 = arith.index_cast %90 : i32 to index
    %c2_69 = arith.constant 2 : index
    %c0_70 = arith.constant 0 : index
    %92 = vector.load %arg2[%c0_68, %91, %c2_69, %c0_70] : memref<1x18x18x128xf32, #tpu.memory_space<vmem>>, vector<1x8x16x128xf32>
    %93 = vector.shape_cast %92 : vector<1x8x16x128xf32> to vector<8x16x128xf32>
    %c1_i32_71 = arith.constant 1 : i32
    %94 = arith.addi %0, %c1_i32_71 : i32
    %c0_72 = arith.constant 0 : index
    %95 = arith.index_cast %94 : i32 to index
    %c2_73 = arith.constant 2 : index
    %c0_74 = arith.constant 0 : index
    %96 = vector.load %arg3[%c0_72, %95, %c2_73, %c0_74] : memref<1x18x18x128xf32, #tpu.memory_space<vmem>>, vector<1x8x16x128xf32>
    %97 = vector.shape_cast %96 : vector<1x8x16x128xf32> to vector<8x16x128xf32>
    %c0_75 = arith.constant 0 : index
    %c0_76 = arith.constant 0 : index
    %c0_77 = arith.constant 0 : index
    %98 = vector.load %arg4[%c0_75, %c0_76, %c0_77] : memref<1x1x128xf32, #tpu.memory_space<vmem>>, vector<1x1x128xf32>
    %99 = vector.broadcast %98 : vector<1x1x128xf32> to vector<8x16x128xf32>
    %100 = arith.mulf %97, %99 : vector<8x16x128xf32>
    %101 = arith.addf %93, %100 : vector<8x16x128xf32>
    %102 = arith.truncf %101 : vector<8x16x128xf32> to vector<8x16x128xbf16>
    %103 = vector.shape_cast %102 : vector<8x16x128xbf16> to vector<128x128xbf16>
    %c5 = arith.constant 5 : index
    %c0_78 = arith.constant 0 : index
    %c0_79 = arith.constant 0 : index
    %104 = vector.load %arg5[%c5, %c0_78, %c0_79] : memref<9x128x128xbf16, #tpu.memory_space<vmem>>, vector<1x128x128xbf16>
    %105 = vector.shape_cast %104 : vector<1x128x128xbf16> to vector<128x128xbf16>
    %cst_80 = arith.constant dense<0.000000e+00> : vector<128x128xf32>
    %106 = tpu.matmul %103, %105, %cst_80 {dimension_numbers = #tpu.dot_dimension_numbers<[1], [0], [0], [1], [0, 0, 1, 1], [], []>} : vector<128x128xbf16>, vector<128x128xbf16>, vector<128x128xf32> -> vector<128x128xf32>
    %107 = arith.addf %89, %106 : vector<128x128xf32>
    %c2_i32 = arith.constant 2 : i32
    %108 = arith.addi %0, %c2_i32 : i32
    %c0_81 = arith.constant 0 : index
    %109 = arith.index_cast %108 : i32 to index
    %c0_82 = arith.constant 0 : index
    %c0_83 = arith.constant 0 : index
    %110 = vector.load %arg2[%c0_81, %109, %c0_82, %c0_83] : memref<1x18x18x128xf32, #tpu.memory_space<vmem>>, vector<1x8x16x128xf32>
    %111 = vector.shape_cast %110 : vector<1x8x16x128xf32> to vector<8x16x128xf32>
    %c2_i32_84 = arith.constant 2 : i32
    %112 = arith.addi %0, %c2_i32_84 : i32
    %c0_85 = arith.constant 0 : index
    %113 = arith.index_cast %112 : i32 to index
    %c0_86 = arith.constant 0 : index
    %c0_87 = arith.constant 0 : index
    %114 = vector.load %arg3[%c0_85, %113, %c0_86, %c0_87] : memref<1x18x18x128xf32, #tpu.memory_space<vmem>>, vector<1x8x16x128xf32>
    %115 = vector.shape_cast %114 : vector<1x8x16x128xf32> to vector<8x16x128xf32>
    %c0_88 = arith.constant 0 : index
    %c0_89 = arith.constant 0 : index
    %c0_90 = arith.constant 0 : index
    %116 = vector.load %arg4[%c0_88, %c0_89, %c0_90] : memref<1x1x128xf32, #tpu.memory_space<vmem>>, vector<1x1x128xf32>
    %117 = vector.broadcast %116 : vector<1x1x128xf32> to vector<8x16x128xf32>
    %118 = arith.mulf %115, %117 : vector<8x16x128xf32>
    %119 = arith.addf %111, %118 : vector<8x16x128xf32>
    %120 = arith.truncf %119 : vector<8x16x128xf32> to vector<8x16x128xbf16>
    %121 = vector.shape_cast %120 : vector<8x16x128xbf16> to vector<128x128xbf16>
    %c6 = arith.constant 6 : index
    %c0_91 = arith.constant 0 : index
    %c0_92 = arith.constant 0 : index
    %122 = vector.load %arg5[%c6, %c0_91, %c0_92] : memref<9x128x128xbf16, #tpu.memory_space<vmem>>, vector<1x128x128xbf16>
    %123 = vector.shape_cast %122 : vector<1x128x128xbf16> to vector<128x128xbf16>
    %cst_93 = arith.constant dense<0.000000e+00> : vector<128x128xf32>
    %124 = tpu.matmul %121, %123, %cst_93 {dimension_numbers = #tpu.dot_dimension_numbers<[1], [0], [0], [1], [0, 0, 1, 1], [], []>} : vector<128x128xbf16>, vector<128x128xbf16>, vector<128x128xf32> -> vector<128x128xf32>
    %125 = arith.addf %107, %124 : vector<128x128xf32>
    %c2_i32_94 = arith.constant 2 : i32
    %126 = arith.addi %0, %c2_i32_94 : i32
    %c0_95 = arith.constant 0 : index
    %127 = arith.index_cast %126 : i32 to index
    %c1_96 = arith.constant 1 : index
    %c0_97 = arith.constant 0 : index
    %128 = vector.load %arg2[%c0_95, %127, %c1_96, %c0_97] : memref<1x18x18x128xf32, #tpu.memory_space<vmem>>, vector<1x8x16x128xf32>
    %129 = vector.shape_cast %128 : vector<1x8x16x128xf32> to vector<8x16x128xf32>
    %c2_i32_98 = arith.constant 2 : i32
    %130 = arith.addi %0, %c2_i32_98 : i32
    %c0_99 = arith.constant 0 : index
    %131 = arith.index_cast %130 : i32 to index
    %c1_100 = arith.constant 1 : index
    %c0_101 = arith.constant 0 : index
    %132 = vector.load %arg3[%c0_99, %131, %c1_100, %c0_101] : memref<1x18x18x128xf32, #tpu.memory_space<vmem>>, vector<1x8x16x128xf32>
    %133 = vector.shape_cast %132 : vector<1x8x16x128xf32> to vector<8x16x128xf32>
    %c0_102 = arith.constant 0 : index
    %c0_103 = arith.constant 0 : index
    %c0_104 = arith.constant 0 : index
    %134 = vector.load %arg4[%c0_102, %c0_103, %c0_104] : memref<1x1x128xf32, #tpu.memory_space<vmem>>, vector<1x1x128xf32>
    %135 = vector.broadcast %134 : vector<1x1x128xf32> to vector<8x16x128xf32>
    %136 = arith.mulf %133, %135 : vector<8x16x128xf32>
    %137 = arith.addf %129, %136 : vector<8x16x128xf32>
    %138 = arith.truncf %137 : vector<8x16x128xf32> to vector<8x16x128xbf16>
    %139 = vector.shape_cast %138 : vector<8x16x128xbf16> to vector<128x128xbf16>
    %c7 = arith.constant 7 : index
    %c0_105 = arith.constant 0 : index
    %c0_106 = arith.constant 0 : index
    %140 = vector.load %arg5[%c7, %c0_105, %c0_106] : memref<9x128x128xbf16, #tpu.memory_space<vmem>>, vector<1x128x128xbf16>
    %141 = vector.shape_cast %140 : vector<1x128x128xbf16> to vector<128x128xbf16>
    %cst_107 = arith.constant dense<0.000000e+00> : vector<128x128xf32>
    %142 = tpu.matmul %139, %141, %cst_107 {dimension_numbers = #tpu.dot_dimension_numbers<[1], [0], [0], [1], [0, 0, 1, 1], [], []>} : vector<128x128xbf16>, vector<128x128xbf16>, vector<128x128xf32> -> vector<128x128xf32>
    %143 = arith.addf %125, %142 : vector<128x128xf32>
    %c2_i32_108 = arith.constant 2 : i32
    %144 = arith.addi %0, %c2_i32_108 : i32
    %c0_109 = arith.constant 0 : index
    %145 = arith.index_cast %144 : i32 to index
    %c2_110 = arith.constant 2 : index
    %c0_111 = arith.constant 0 : index
    %146 = vector.load %arg2[%c0_109, %145, %c2_110, %c0_111] : memref<1x18x18x128xf32, #tpu.memory_space<vmem>>, vector<1x8x16x128xf32>
    %147 = vector.shape_cast %146 : vector<1x8x16x128xf32> to vector<8x16x128xf32>
    %c2_i32_112 = arith.constant 2 : i32
    %148 = arith.addi %0, %c2_i32_112 : i32
    %c0_113 = arith.constant 0 : index
    %149 = arith.index_cast %148 : i32 to index
    %c2_114 = arith.constant 2 : index
    %c0_115 = arith.constant 0 : index
    %150 = vector.load %arg3[%c0_113, %149, %c2_114, %c0_115] : memref<1x18x18x128xf32, #tpu.memory_space<vmem>>, vector<1x8x16x128xf32>
    %151 = vector.shape_cast %150 : vector<1x8x16x128xf32> to vector<8x16x128xf32>
    %c0_116 = arith.constant 0 : index
    %c0_117 = arith.constant 0 : index
    %c0_118 = arith.constant 0 : index
    %152 = vector.load %arg4[%c0_116, %c0_117, %c0_118] : memref<1x1x128xf32, #tpu.memory_space<vmem>>, vector<1x1x128xf32>
    %153 = vector.broadcast %152 : vector<1x1x128xf32> to vector<8x16x128xf32>
    %154 = arith.mulf %151, %153 : vector<8x16x128xf32>
    %155 = arith.addf %147, %154 : vector<8x16x128xf32>
    %156 = arith.truncf %155 : vector<8x16x128xf32> to vector<8x16x128xbf16>
    %157 = vector.shape_cast %156 : vector<8x16x128xbf16> to vector<128x128xbf16>
    %c8 = arith.constant 8 : index
    %c0_119 = arith.constant 0 : index
    %c0_120 = arith.constant 0 : index
    %158 = vector.load %arg5[%c8, %c0_119, %c0_120] : memref<9x128x128xbf16, #tpu.memory_space<vmem>>, vector<1x128x128xbf16>
    %159 = vector.shape_cast %158 : vector<1x128x128xbf16> to vector<128x128xbf16>
    %cst_121 = arith.constant dense<0.000000e+00> : vector<128x128xf32>
    %160 = tpu.matmul %157, %159, %cst_121 {dimension_numbers = #tpu.dot_dimension_numbers<[1], [0], [0], [1], [0, 0, 1, 1], [], []>} : vector<128x128xbf16>, vector<128x128xbf16>, vector<128x128xf32> -> vector<128x128xf32>
    %161 = arith.addf %143, %160 : vector<128x128xf32>
    %c0_122 = arith.constant 0 : index
    %c0_123 = arith.constant 0 : index
    %162 = vector.load %arg6[%c0_122, %c0_123] : memref<1x128xf32, #tpu.memory_space<vmem>>, vector<1x128xf32>
    %163 = vector.broadcast %162 : vector<1x128xf32> to vector<128x128xf32>
    %164 = arith.addf %161, %163 : vector<128x128xf32>
    %cst_124 = arith.constant 0.000000e+00 : f32
    %165 = vector.broadcast %cst_124 : f32 to vector<128x128xf32>
    %166 = arith.maximumf %164, %165 : vector<128x128xf32>
    %167 = vector.shape_cast %166 : vector<128x128xf32> to vector<1x8x16x128xf32>
    %168 = arith.truncf %167 : vector<1x8x16x128xf32> to vector<1x8x16x128xbf16>
    %c0_125 = arith.constant 0 : index
    %c0_126 = arith.constant 0 : index
    %c0_127 = arith.constant 0 : index
    %c0_128 = arith.constant 0 : index
    %169 = vector.load %arg7[%c0_125, %c0_126, %c0_127, %c0_128] : memref<1x8x16x128xbf16, #tpu.memory_space<vmem>>, vector<1x8x16x128xbf16>
    tpu.vector_store %arg7[%c0_125, %c0_126, %c0_127, %c0_128], %168 {strides = array<i32>} : memref<1x8x16x128xbf16, #tpu.memory_space<vmem>>, vector<1x8x16x128xbf16>,
    return
  }
  func.func @transform_0(%arg0: i32, %arg1: i32) -> (i32, i32, i32, i32) {
    %c0_i32 = arith.constant 0 : i32
    %c0_i32_0 = arith.constant 0 : i32
    %c0_i32_1 = arith.constant 0 : i32
    %c0_i32_2 = arith.constant 0 : i32
    return %arg0, %c0_i32, %c0_i32_0, %c0_i32_1 : i32, i32, i32, i32
  }
  func.func @transform_1(%arg0: i32, %arg1: i32) -> (i32, i32, i32, i32) {
    %c0_i32 = arith.constant 0 : i32
    %c0_i32_0 = arith.constant 0 : i32
    %c0_i32_1 = arith.constant 0 : i32
    %c0_i32_2 = arith.constant 0 : i32
    return %arg0, %c0_i32, %c0_i32_0, %c0_i32_1 : i32, i32, i32, i32
  }
  func.func @transform_2(%arg0: i32, %arg1: i32) -> (i32, i32, i32) {
    %c0_i32 = arith.constant 0 : i32
    %c0_i32_0 = arith.constant 0 : i32
    %c0_i32_1 = arith.constant 0 : i32
    return %arg0, %c0_i32, %c0_i32_0 : i32, i32, i32
  }
  func.func @transform_3(%arg0: i32, %arg1: i32) -> (i32, i32, i32) {
    %c0_i32 = arith.constant 0 : i32
    %c0_i32_0 = arith.constant 0 : i32
    %c0_i32_1 = arith.constant 0 : i32
    %c0_i32_2 = arith.constant 0 : i32
    return %c0_i32, %c0_i32_0, %c0_i32_1 : i32, i32, i32
  }
  func.func @transform_4(%arg0: i32, %arg1: i32) -> (i32, i32) {
    %c0_i32 = arith.constant 0 : i32
    %c0_i32_0 = arith.constant 0 : i32
    %c0_i32_1 = arith.constant 0 : i32
    return %c0_i32, %c0_i32_0 : i32, i32
  }
  func.func @transform_5(%arg0: i32, %arg1: i32) -> (i32, i32, i32, i32) {
    %c0_i32 = arith.constant 0 : i32
    %c0_i32_0 = arith.constant 0 : i32
    %c0_i32_1 = arith.constant 0 : i32
    return %arg0, %arg1, %c0_i32, %c0_i32_0 : i32, i32, i32, i32
  }
}

module attributes {stable_mosaic.version = 11 : i64} {
  func.func @_conv3x3_kernel(%arg0: i32, %arg1: i32, %arg2: memref<1x18x18x128xbf16, #tpu.memory_space<vmem>>, %arg3: memref<9x128x128xbf16, #tpu.memory_space<vmem>>, %arg4: memref<1x128xf32, #tpu.memory_space<vmem>>, %arg5: memref<1x8x16x128xbf16, #tpu.memory_space<vmem>>) attributes {dimension_semantics = [#tpu.dimension_semantics<parallel>, #tpu.dimension_semantics<parallel>], iteration_bounds = array<i64: 2, 2>, scalar_prefetch = 0 : i64, scratch_operands = 0 : i64, tpu.core_type = #tpu.core_type<tc>, window_params = [{transform_indices = @transform_0, window_bounds = array<i64: 1, 18, 18, 128>}, {pipeline_mode = #tpu.pipeline_mode<synchronous>, transform_indices = @transform_1, window_bounds = array<i64: 9, 128, 128>}, {pipeline_mode = #tpu.pipeline_mode<synchronous>, transform_indices = @transform_2, window_bounds = array<i64: 1, 128>}, {transform_indices = @transform_3, window_bounds = array<i64: 1, 8, 16, 128>}]} {
    %c8_i32 = arith.constant 8 : i32
    %0 = arith.muli %arg1, %c8_i32 : i32
    %c0_i32 = arith.constant 0 : i32
    %1 = arith.addi %0, %c0_i32 : i32
    %c0 = arith.constant 0 : index
    %2 = arith.index_cast %1 : i32 to index
    %c0_0 = arith.constant 0 : index
    %c0_1 = arith.constant 0 : index
    %3 = vector.load %arg2[%c0, %2, %c0_0, %c0_1] : memref<1x18x18x128xbf16, #tpu.memory_space<vmem>>, vector<1x8x16x128xbf16>
    %4 = vector.shape_cast %3 : vector<1x8x16x128xbf16> to vector<8x16x128xbf16>
    %5 = vector.shape_cast %4 : vector<8x16x128xbf16> to vector<128x128xbf16>
    %c0_2 = arith.constant 0 : index
    %c0_3 = arith.constant 0 : index
    %c0_4 = arith.constant 0 : index
    %6 = vector.load %arg3[%c0_2, %c0_3, %c0_4] : memref<9x128x128xbf16, #tpu.memory_space<vmem>>, vector<1x128x128xbf16>
    %7 = vector.shape_cast %6 : vector<1x128x128xbf16> to vector<128x128xbf16>
    %cst = arith.constant dense<0.000000e+00> : vector<128x128xf32>
    %8 = tpu.matmul %5, %7, %cst {dimension_numbers = #tpu.dot_dimension_numbers<[1], [0], [0], [1], [0, 0, 1, 1], [], []>} : vector<128x128xbf16>, vector<128x128xbf16>, vector<128x128xf32> -> vector<128x128xf32>
    %c0_i32_5 = arith.constant 0 : i32
    %9 = arith.addi %0, %c0_i32_5 : i32
    %c0_6 = arith.constant 0 : index
    %10 = arith.index_cast %9 : i32 to index
    %c1 = arith.constant 1 : index
    %c0_7 = arith.constant 0 : index
    %11 = vector.load %arg2[%c0_6, %10, %c1, %c0_7] : memref<1x18x18x128xbf16, #tpu.memory_space<vmem>>, vector<1x8x16x128xbf16>
    %12 = vector.shape_cast %11 : vector<1x8x16x128xbf16> to vector<8x16x128xbf16>
    %13 = vector.shape_cast %12 : vector<8x16x128xbf16> to vector<128x128xbf16>
    %c1_8 = arith.constant 1 : index
    %c0_9 = arith.constant 0 : index
    %c0_10 = arith.constant 0 : index
    %14 = vector.load %arg3[%c1_8, %c0_9, %c0_10] : memref<9x128x128xbf16, #tpu.memory_space<vmem>>, vector<1x128x128xbf16>
    %15 = vector.shape_cast %14 : vector<1x128x128xbf16> to vector<128x128xbf16>
    %cst_11 = arith.constant dense<0.000000e+00> : vector<128x128xf32>
    %16 = tpu.matmul %13, %15, %cst_11 {dimension_numbers = #tpu.dot_dimension_numbers<[1], [0], [0], [1], [0, 0, 1, 1], [], []>} : vector<128x128xbf16>, vector<128x128xbf16>, vector<128x128xf32> -> vector<128x128xf32>
    %17 = arith.addf %8, %16 : vector<128x128xf32>
    %c0_i32_12 = arith.constant 0 : i32
    %18 = arith.addi %0, %c0_i32_12 : i32
    %c0_13 = arith.constant 0 : index
    %19 = arith.index_cast %18 : i32 to index
    %c2 = arith.constant 2 : index
    %c0_14 = arith.constant 0 : index
    %20 = vector.load %arg2[%c0_13, %19, %c2, %c0_14] : memref<1x18x18x128xbf16, #tpu.memory_space<vmem>>, vector<1x8x16x128xbf16>
    %21 = vector.shape_cast %20 : vector<1x8x16x128xbf16> to vector<8x16x128xbf16>
    %22 = vector.shape_cast %21 : vector<8x16x128xbf16> to vector<128x128xbf16>
    %c2_15 = arith.constant 2 : index
    %c0_16 = arith.constant 0 : index
    %c0_17 = arith.constant 0 : index
    %23 = vector.load %arg3[%c2_15, %c0_16, %c0_17] : memref<9x128x128xbf16, #tpu.memory_space<vmem>>, vector<1x128x128xbf16>
    %24 = vector.shape_cast %23 : vector<1x128x128xbf16> to vector<128x128xbf16>
    %cst_18 = arith.constant dense<0.000000e+00> : vector<128x128xf32>
    %25 = tpu.matmul %22, %24, %cst_18 {dimension_numbers = #tpu.dot_dimension_numbers<[1], [0], [0], [1], [0, 0, 1, 1], [], []>} : vector<128x128xbf16>, vector<128x128xbf16>, vector<128x128xf32> -> vector<128x128xf32>
    %26 = arith.addf %17, %25 : vector<128x128xf32>
    %c1_i32 = arith.constant 1 : i32
    %27 = arith.addi %0, %c1_i32 : i32
    %c0_19 = arith.constant 0 : index
    %28 = arith.index_cast %27 : i32 to index
    %c0_20 = arith.constant 0 : index
    %c0_21 = arith.constant 0 : index
    %29 = vector.load %arg2[%c0_19, %28, %c0_20, %c0_21] : memref<1x18x18x128xbf16, #tpu.memory_space<vmem>>, vector<1x8x16x128xbf16>
    %30 = vector.shape_cast %29 : vector<1x8x16x128xbf16> to vector<8x16x128xbf16>
    %31 = vector.shape_cast %30 : vector<8x16x128xbf16> to vector<128x128xbf16>
    %c3 = arith.constant 3 : index
    %c0_22 = arith.constant 0 : index
    %c0_23 = arith.constant 0 : index
    %32 = vector.load %arg3[%c3, %c0_22, %c0_23] : memref<9x128x128xbf16, #tpu.memory_space<vmem>>, vector<1x128x128xbf16>
    %33 = vector.shape_cast %32 : vector<1x128x128xbf16> to vector<128x128xbf16>
    %cst_24 = arith.constant dense<0.000000e+00> : vector<128x128xf32>
    %34 = tpu.matmul %31, %33, %cst_24 {dimension_numbers = #tpu.dot_dimension_numbers<[1], [0], [0], [1], [0, 0, 1, 1], [], []>} : vector<128x128xbf16>, vector<128x128xbf16>, vector<128x128xf32> -> vector<128x128xf32>
    %35 = arith.addf %26, %34 : vector<128x128xf32>
    %c1_i32_25 = arith.constant 1 : i32
    %36 = arith.addi %0, %c1_i32_25 : i32
    %c0_26 = arith.constant 0 : index
    %37 = arith.index_cast %36 : i32 to index
    %c1_27 = arith.constant 1 : index
    %c0_28 = arith.constant 0 : index
    %38 = vector.load %arg2[%c0_26, %37, %c1_27, %c0_28] : memref<1x18x18x128xbf16, #tpu.memory_space<vmem>>, vector<1x8x16x128xbf16>
    %39 = vector.shape_cast %38 : vector<1x8x16x128xbf16> to vector<8x16x128xbf16>
    %40 = vector.shape_cast %39 : vector<8x16x128xbf16> to vector<128x128xbf16>
    %c4 = arith.constant 4 : index
    %c0_29 = arith.constant 0 : index
    %c0_30 = arith.constant 0 : index
    %41 = vector.load %arg3[%c4, %c0_29, %c0_30] : memref<9x128x128xbf16, #tpu.memory_space<vmem>>, vector<1x128x128xbf16>
    %42 = vector.shape_cast %41 : vector<1x128x128xbf16> to vector<128x128xbf16>
    %cst_31 = arith.constant dense<0.000000e+00> : vector<128x128xf32>
    %43 = tpu.matmul %40, %42, %cst_31 {dimension_numbers = #tpu.dot_dimension_numbers<[1], [0], [0], [1], [0, 0, 1, 1], [], []>} : vector<128x128xbf16>, vector<128x128xbf16>, vector<128x128xf32> -> vector<128x128xf32>
    %44 = arith.addf %35, %43 : vector<128x128xf32>
    %c1_i32_32 = arith.constant 1 : i32
    %45 = arith.addi %0, %c1_i32_32 : i32
    %c0_33 = arith.constant 0 : index
    %46 = arith.index_cast %45 : i32 to index
    %c2_34 = arith.constant 2 : index
    %c0_35 = arith.constant 0 : index
    %47 = vector.load %arg2[%c0_33, %46, %c2_34, %c0_35] : memref<1x18x18x128xbf16, #tpu.memory_space<vmem>>, vector<1x8x16x128xbf16>
    %48 = vector.shape_cast %47 : vector<1x8x16x128xbf16> to vector<8x16x128xbf16>
    %49 = vector.shape_cast %48 : vector<8x16x128xbf16> to vector<128x128xbf16>
    %c5 = arith.constant 5 : index
    %c0_36 = arith.constant 0 : index
    %c0_37 = arith.constant 0 : index
    %50 = vector.load %arg3[%c5, %c0_36, %c0_37] : memref<9x128x128xbf16, #tpu.memory_space<vmem>>, vector<1x128x128xbf16>
    %51 = vector.shape_cast %50 : vector<1x128x128xbf16> to vector<128x128xbf16>
    %cst_38 = arith.constant dense<0.000000e+00> : vector<128x128xf32>
    %52 = tpu.matmul %49, %51, %cst_38 {dimension_numbers = #tpu.dot_dimension_numbers<[1], [0], [0], [1], [0, 0, 1, 1], [], []>} : vector<128x128xbf16>, vector<128x128xbf16>, vector<128x128xf32> -> vector<128x128xf32>
    %53 = arith.addf %44, %52 : vector<128x128xf32>
    %c2_i32 = arith.constant 2 : i32
    %54 = arith.addi %0, %c2_i32 : i32
    %c0_39 = arith.constant 0 : index
    %55 = arith.index_cast %54 : i32 to index
    %c0_40 = arith.constant 0 : index
    %c0_41 = arith.constant 0 : index
    %56 = vector.load %arg2[%c0_39, %55, %c0_40, %c0_41] : memref<1x18x18x128xbf16, #tpu.memory_space<vmem>>, vector<1x8x16x128xbf16>
    %57 = vector.shape_cast %56 : vector<1x8x16x128xbf16> to vector<8x16x128xbf16>
    %58 = vector.shape_cast %57 : vector<8x16x128xbf16> to vector<128x128xbf16>
    %c6 = arith.constant 6 : index
    %c0_42 = arith.constant 0 : index
    %c0_43 = arith.constant 0 : index
    %59 = vector.load %arg3[%c6, %c0_42, %c0_43] : memref<9x128x128xbf16, #tpu.memory_space<vmem>>, vector<1x128x128xbf16>
    %60 = vector.shape_cast %59 : vector<1x128x128xbf16> to vector<128x128xbf16>
    %cst_44 = arith.constant dense<0.000000e+00> : vector<128x128xf32>
    %61 = tpu.matmul %58, %60, %cst_44 {dimension_numbers = #tpu.dot_dimension_numbers<[1], [0], [0], [1], [0, 0, 1, 1], [], []>} : vector<128x128xbf16>, vector<128x128xbf16>, vector<128x128xf32> -> vector<128x128xf32>
    %62 = arith.addf %53, %61 : vector<128x128xf32>
    %c2_i32_45 = arith.constant 2 : i32
    %63 = arith.addi %0, %c2_i32_45 : i32
    %c0_46 = arith.constant 0 : index
    %64 = arith.index_cast %63 : i32 to index
    %c1_47 = arith.constant 1 : index
    %c0_48 = arith.constant 0 : index
    %65 = vector.load %arg2[%c0_46, %64, %c1_47, %c0_48] : memref<1x18x18x128xbf16, #tpu.memory_space<vmem>>, vector<1x8x16x128xbf16>
    %66 = vector.shape_cast %65 : vector<1x8x16x128xbf16> to vector<8x16x128xbf16>
    %67 = vector.shape_cast %66 : vector<8x16x128xbf16> to vector<128x128xbf16>
    %c7 = arith.constant 7 : index
    %c0_49 = arith.constant 0 : index
    %c0_50 = arith.constant 0 : index
    %68 = vector.load %arg3[%c7, %c0_49, %c0_50] : memref<9x128x128xbf16, #tpu.memory_space<vmem>>, vector<1x128x128xbf16>
    %69 = vector.shape_cast %68 : vector<1x128x128xbf16> to vector<128x128xbf16>
    %cst_51 = arith.constant dense<0.000000e+00> : vector<128x128xf32>
    %70 = tpu.matmul %67, %69, %cst_51 {dimension_numbers = #tpu.dot_dimension_numbers<[1], [0], [0], [1], [0, 0, 1, 1], [], []>} : vector<128x128xbf16>, vector<128x128xbf16>, vector<128x128xf32> -> vector<128x128xf32>
    %71 = arith.addf %62, %70 : vector<128x128xf32>
    %c2_i32_52 = arith.constant 2 : i32
    %72 = arith.addi %0, %c2_i32_52 : i32
    %c0_53 = arith.constant 0 : index
    %73 = arith.index_cast %72 : i32 to index
    %c2_54 = arith.constant 2 : index
    %c0_55 = arith.constant 0 : index
    %74 = vector.load %arg2[%c0_53, %73, %c2_54, %c0_55] : memref<1x18x18x128xbf16, #tpu.memory_space<vmem>>, vector<1x8x16x128xbf16>
    %75 = vector.shape_cast %74 : vector<1x8x16x128xbf16> to vector<8x16x128xbf16>
    %76 = vector.shape_cast %75 : vector<8x16x128xbf16> to vector<128x128xbf16>
    %c8 = arith.constant 8 : index
    %c0_56 = arith.constant 0 : index
    %c0_57 = arith.constant 0 : index
    %77 = vector.load %arg3[%c8, %c0_56, %c0_57] : memref<9x128x128xbf16, #tpu.memory_space<vmem>>, vector<1x128x128xbf16>
    %78 = vector.shape_cast %77 : vector<1x128x128xbf16> to vector<128x128xbf16>
    %cst_58 = arith.constant dense<0.000000e+00> : vector<128x128xf32>
    %79 = tpu.matmul %76, %78, %cst_58 {dimension_numbers = #tpu.dot_dimension_numbers<[1], [0], [0], [1], [0, 0, 1, 1], [], []>} : vector<128x128xbf16>, vector<128x128xbf16>, vector<128x128xf32> -> vector<128x128xf32>
    %80 = arith.addf %71, %79 : vector<128x128xf32>
    %c0_59 = arith.constant 0 : index
    %c0_60 = arith.constant 0 : index
    %81 = vector.load %arg4[%c0_59, %c0_60] : memref<1x128xf32, #tpu.memory_space<vmem>>, vector<1x128xf32>
    %82 = vector.broadcast %81 : vector<1x128xf32> to vector<128x128xf32>
    %83 = arith.addf %80, %82 : vector<128x128xf32>
    %cst_61 = arith.constant 0.000000e+00 : f32
    %84 = vector.broadcast %cst_61 : f32 to vector<128x128xf32>
    %85 = arith.maximumf %83, %84 : vector<128x128xf32>
    %86 = vector.shape_cast %85 : vector<128x128xf32> to vector<1x8x16x128xf32>
    %87 = arith.truncf %86 : vector<1x8x16x128xf32> to vector<1x8x16x128xbf16>
    %c0_62 = arith.constant 0 : index
    %c0_63 = arith.constant 0 : index
    %c0_64 = arith.constant 0 : index
    %c0_65 = arith.constant 0 : index
    %88 = vector.load %arg5[%c0_62, %c0_63, %c0_64, %c0_65] : memref<1x8x16x128xbf16, #tpu.memory_space<vmem>>, vector<1x8x16x128xbf16>
    tpu.vector_store %arg5[%c0_62, %c0_63, %c0_64, %c0_65], %87 {strides = array<i32>} : memref<1x8x16x128xbf16, #tpu.memory_space<vmem>>, vector<1x8x16x128xbf16>,
    return
  }
  func.func @transform_0(%arg0: i32, %arg1: i32) -> (i32, i32, i32, i32) {
    %c0_i32 = arith.constant 0 : i32
    %c0_i32_0 = arith.constant 0 : i32
    %c0_i32_1 = arith.constant 0 : i32
    %c0_i32_2 = arith.constant 0 : i32
    return %arg0, %c0_i32, %c0_i32_0, %c0_i32_1 : i32, i32, i32, i32
  }
  func.func @transform_1(%arg0: i32, %arg1: i32) -> (i32, i32, i32) {
    %c0_i32 = arith.constant 0 : i32
    %c0_i32_0 = arith.constant 0 : i32
    %c0_i32_1 = arith.constant 0 : i32
    %c0_i32_2 = arith.constant 0 : i32
    return %c0_i32, %c0_i32_0, %c0_i32_1 : i32, i32, i32
  }
  func.func @transform_2(%arg0: i32, %arg1: i32) -> (i32, i32) {
    %c0_i32 = arith.constant 0 : i32
    %c0_i32_0 = arith.constant 0 : i32
    %c0_i32_1 = arith.constant 0 : i32
    return %c0_i32, %c0_i32_0 : i32, i32
  }
  func.func @transform_3(%arg0: i32, %arg1: i32) -> (i32, i32, i32, i32) {
    %c0_i32 = arith.constant 0 : i32
    %c0_i32_0 = arith.constant 0 : i32
    %c0_i32_1 = arith.constant 0 : i32
    return %arg0, %arg1, %c0_i32, %c0_i32_0 : i32, i32, i32, i32
  }
}

module attributes {stable_mosaic.version = 11 : i64} {
  func.func @_conv3x3_kernel(%arg0: i32, %arg1: i32, %arg2: memref<1x18x18x128xbf16, #tpu.memory_space<vmem>>, %arg3: memref<9x128x128xbf16, #tpu.memory_space<vmem>>, %arg4: memref<1x128xf32, #tpu.memory_space<vmem>>, %arg5: memref<1x8x16x128xf32, #tpu.memory_space<vmem>>) attributes {dimension_semantics = [#tpu.dimension_semantics<parallel>, #tpu.dimension_semantics<parallel>], iteration_bounds = array<i64: 2, 2>, scalar_prefetch = 0 : i64, scratch_operands = 0 : i64, tpu.core_type = #tpu.core_type<tc>, window_params = [{transform_indices = @transform_0, window_bounds = array<i64: 1, 18, 18, 128>}, {pipeline_mode = #tpu.pipeline_mode<synchronous>, transform_indices = @transform_1, window_bounds = array<i64: 9, 128, 128>}, {pipeline_mode = #tpu.pipeline_mode<synchronous>, transform_indices = @transform_2, window_bounds = array<i64: 1, 128>}, {transform_indices = @transform_3, window_bounds = array<i64: 1, 8, 16, 128>}]} {
    %c8_i32 = arith.constant 8 : i32
    %0 = arith.muli %arg1, %c8_i32 : i32
    %c0_i32 = arith.constant 0 : i32
    %1 = arith.addi %0, %c0_i32 : i32
    %c0 = arith.constant 0 : index
    %2 = arith.index_cast %1 : i32 to index
    %c0_0 = arith.constant 0 : index
    %c0_1 = arith.constant 0 : index
    %3 = vector.load %arg2[%c0, %2, %c0_0, %c0_1] : memref<1x18x18x128xbf16, #tpu.memory_space<vmem>>, vector<1x8x16x128xbf16>
    %4 = vector.shape_cast %3 : vector<1x8x16x128xbf16> to vector<8x16x128xbf16>
    %5 = vector.shape_cast %4 : vector<8x16x128xbf16> to vector<128x128xbf16>
    %c0_2 = arith.constant 0 : index
    %c0_3 = arith.constant 0 : index
    %c0_4 = arith.constant 0 : index
    %6 = vector.load %arg3[%c0_2, %c0_3, %c0_4] : memref<9x128x128xbf16, #tpu.memory_space<vmem>>, vector<1x128x128xbf16>
    %7 = vector.shape_cast %6 : vector<1x128x128xbf16> to vector<128x128xbf16>
    %cst = arith.constant dense<0.000000e+00> : vector<128x128xf32>
    %8 = tpu.matmul %5, %7, %cst {dimension_numbers = #tpu.dot_dimension_numbers<[1], [0], [0], [1], [0, 0, 1, 1], [], []>} : vector<128x128xbf16>, vector<128x128xbf16>, vector<128x128xf32> -> vector<128x128xf32>
    %c0_i32_5 = arith.constant 0 : i32
    %9 = arith.addi %0, %c0_i32_5 : i32
    %c0_6 = arith.constant 0 : index
    %10 = arith.index_cast %9 : i32 to index
    %c1 = arith.constant 1 : index
    %c0_7 = arith.constant 0 : index
    %11 = vector.load %arg2[%c0_6, %10, %c1, %c0_7] : memref<1x18x18x128xbf16, #tpu.memory_space<vmem>>, vector<1x8x16x128xbf16>
    %12 = vector.shape_cast %11 : vector<1x8x16x128xbf16> to vector<8x16x128xbf16>
    %13 = vector.shape_cast %12 : vector<8x16x128xbf16> to vector<128x128xbf16>
    %c1_8 = arith.constant 1 : index
    %c0_9 = arith.constant 0 : index
    %c0_10 = arith.constant 0 : index
    %14 = vector.load %arg3[%c1_8, %c0_9, %c0_10] : memref<9x128x128xbf16, #tpu.memory_space<vmem>>, vector<1x128x128xbf16>
    %15 = vector.shape_cast %14 : vector<1x128x128xbf16> to vector<128x128xbf16>
    %cst_11 = arith.constant dense<0.000000e+00> : vector<128x128xf32>
    %16 = tpu.matmul %13, %15, %cst_11 {dimension_numbers = #tpu.dot_dimension_numbers<[1], [0], [0], [1], [0, 0, 1, 1], [], []>} : vector<128x128xbf16>, vector<128x128xbf16>, vector<128x128xf32> -> vector<128x128xf32>
    %17 = arith.addf %8, %16 : vector<128x128xf32>
    %c0_i32_12 = arith.constant 0 : i32
    %18 = arith.addi %0, %c0_i32_12 : i32
    %c0_13 = arith.constant 0 : index
    %19 = arith.index_cast %18 : i32 to index
    %c2 = arith.constant 2 : index
    %c0_14 = arith.constant 0 : index
    %20 = vector.load %arg2[%c0_13, %19, %c2, %c0_14] : memref<1x18x18x128xbf16, #tpu.memory_space<vmem>>, vector<1x8x16x128xbf16>
    %21 = vector.shape_cast %20 : vector<1x8x16x128xbf16> to vector<8x16x128xbf16>
    %22 = vector.shape_cast %21 : vector<8x16x128xbf16> to vector<128x128xbf16>
    %c2_15 = arith.constant 2 : index
    %c0_16 = arith.constant 0 : index
    %c0_17 = arith.constant 0 : index
    %23 = vector.load %arg3[%c2_15, %c0_16, %c0_17] : memref<9x128x128xbf16, #tpu.memory_space<vmem>>, vector<1x128x128xbf16>
    %24 = vector.shape_cast %23 : vector<1x128x128xbf16> to vector<128x128xbf16>
    %cst_18 = arith.constant dense<0.000000e+00> : vector<128x128xf32>
    %25 = tpu.matmul %22, %24, %cst_18 {dimension_numbers = #tpu.dot_dimension_numbers<[1], [0], [0], [1], [0, 0, 1, 1], [], []>} : vector<128x128xbf16>, vector<128x128xbf16>, vector<128x128xf32> -> vector<128x128xf32>
    %26 = arith.addf %17, %25 : vector<128x128xf32>
    %c1_i32 = arith.constant 1 : i32
    %27 = arith.addi %0, %c1_i32 : i32
    %c0_19 = arith.constant 0 : index
    %28 = arith.index_cast %27 : i32 to index
    %c0_20 = arith.constant 0 : index
    %c0_21 = arith.constant 0 : index
    %29 = vector.load %arg2[%c0_19, %28, %c0_20, %c0_21] : memref<1x18x18x128xbf16, #tpu.memory_space<vmem>>, vector<1x8x16x128xbf16>
    %30 = vector.shape_cast %29 : vector<1x8x16x128xbf16> to vector<8x16x128xbf16>
    %31 = vector.shape_cast %30 : vector<8x16x128xbf16> to vector<128x128xbf16>
    %c3 = arith.constant 3 : index
    %c0_22 = arith.constant 0 : index
    %c0_23 = arith.constant 0 : index
    %32 = vector.load %arg3[%c3, %c0_22, %c0_23] : memref<9x128x128xbf16, #tpu.memory_space<vmem>>, vector<1x128x128xbf16>
    %33 = vector.shape_cast %32 : vector<1x128x128xbf16> to vector<128x128xbf16>
    %cst_24 = arith.constant dense<0.000000e+00> : vector<128x128xf32>
    %34 = tpu.matmul %31, %33, %cst_24 {dimension_numbers = #tpu.dot_dimension_numbers<[1], [0], [0], [1], [0, 0, 1, 1], [], []>} : vector<128x128xbf16>, vector<128x128xbf16>, vector<128x128xf32> -> vector<128x128xf32>
    %35 = arith.addf %26, %34 : vector<128x128xf32>
    %c1_i32_25 = arith.constant 1 : i32
    %36 = arith.addi %0, %c1_i32_25 : i32
    %c0_26 = arith.constant 0 : index
    %37 = arith.index_cast %36 : i32 to index
    %c1_27 = arith.constant 1 : index
    %c0_28 = arith.constant 0 : index
    %38 = vector.load %arg2[%c0_26, %37, %c1_27, %c0_28] : memref<1x18x18x128xbf16, #tpu.memory_space<vmem>>, vector<1x8x16x128xbf16>
    %39 = vector.shape_cast %38 : vector<1x8x16x128xbf16> to vector<8x16x128xbf16>
    %40 = vector.shape_cast %39 : vector<8x16x128xbf16> to vector<128x128xbf16>
    %c4 = arith.constant 4 : index
    %c0_29 = arith.constant 0 : index
    %c0_30 = arith.constant 0 : index
    %41 = vector.load %arg3[%c4, %c0_29, %c0_30] : memref<9x128x128xbf16, #tpu.memory_space<vmem>>, vector<1x128x128xbf16>
    %42 = vector.shape_cast %41 : vector<1x128x128xbf16> to vector<128x128xbf16>
    %cst_31 = arith.constant dense<0.000000e+00> : vector<128x128xf32>
    %43 = tpu.matmul %40, %42, %cst_31 {dimension_numbers = #tpu.dot_dimension_numbers<[1], [0], [0], [1], [0, 0, 1, 1], [], []>} : vector<128x128xbf16>, vector<128x128xbf16>, vector<128x128xf32> -> vector<128x128xf32>
    %44 = arith.addf %35, %43 : vector<128x128xf32>
    %c1_i32_32 = arith.constant 1 : i32
    %45 = arith.addi %0, %c1_i32_32 : i32
    %c0_33 = arith.constant 0 : index
    %46 = arith.index_cast %45 : i32 to index
    %c2_34 = arith.constant 2 : index
    %c0_35 = arith.constant 0 : index
    %47 = vector.load %arg2[%c0_33, %46, %c2_34, %c0_35] : memref<1x18x18x128xbf16, #tpu.memory_space<vmem>>, vector<1x8x16x128xbf16>
    %48 = vector.shape_cast %47 : vector<1x8x16x128xbf16> to vector<8x16x128xbf16>
    %49 = vector.shape_cast %48 : vector<8x16x128xbf16> to vector<128x128xbf16>
    %c5 = arith.constant 5 : index
    %c0_36 = arith.constant 0 : index
    %c0_37 = arith.constant 0 : index
    %50 = vector.load %arg3[%c5, %c0_36, %c0_37] : memref<9x128x128xbf16, #tpu.memory_space<vmem>>, vector<1x128x128xbf16>
    %51 = vector.shape_cast %50 : vector<1x128x128xbf16> to vector<128x128xbf16>
    %cst_38 = arith.constant dense<0.000000e+00> : vector<128x128xf32>
    %52 = tpu.matmul %49, %51, %cst_38 {dimension_numbers = #tpu.dot_dimension_numbers<[1], [0], [0], [1], [0, 0, 1, 1], [], []>} : vector<128x128xbf16>, vector<128x128xbf16>, vector<128x128xf32> -> vector<128x128xf32>
    %53 = arith.addf %44, %52 : vector<128x128xf32>
    %c2_i32 = arith.constant 2 : i32
    %54 = arith.addi %0, %c2_i32 : i32
    %c0_39 = arith.constant 0 : index
    %55 = arith.index_cast %54 : i32 to index
    %c0_40 = arith.constant 0 : index
    %c0_41 = arith.constant 0 : index
    %56 = vector.load %arg2[%c0_39, %55, %c0_40, %c0_41] : memref<1x18x18x128xbf16, #tpu.memory_space<vmem>>, vector<1x8x16x128xbf16>
    %57 = vector.shape_cast %56 : vector<1x8x16x128xbf16> to vector<8x16x128xbf16>
    %58 = vector.shape_cast %57 : vector<8x16x128xbf16> to vector<128x128xbf16>
    %c6 = arith.constant 6 : index
    %c0_42 = arith.constant 0 : index
    %c0_43 = arith.constant 0 : index
    %59 = vector.load %arg3[%c6, %c0_42, %c0_43] : memref<9x128x128xbf16, #tpu.memory_space<vmem>>, vector<1x128x128xbf16>
    %60 = vector.shape_cast %59 : vector<1x128x128xbf16> to vector<128x128xbf16>
    %cst_44 = arith.constant dense<0.000000e+00> : vector<128x128xf32>
    %61 = tpu.matmul %58, %60, %cst_44 {dimension_numbers = #tpu.dot_dimension_numbers<[1], [0], [0], [1], [0, 0, 1, 1], [], []>} : vector<128x128xbf16>, vector<128x128xbf16>, vector<128x128xf32> -> vector<128x128xf32>
    %62 = arith.addf %53, %61 : vector<128x128xf32>
    %c2_i32_45 = arith.constant 2 : i32
    %63 = arith.addi %0, %c2_i32_45 : i32
    %c0_46 = arith.constant 0 : index
    %64 = arith.index_cast %63 : i32 to index
    %c1_47 = arith.constant 1 : index
    %c0_48 = arith.constant 0 : index
    %65 = vector.load %arg2[%c0_46, %64, %c1_47, %c0_48] : memref<1x18x18x128xbf16, #tpu.memory_space<vmem>>, vector<1x8x16x128xbf16>
    %66 = vector.shape_cast %65 : vector<1x8x16x128xbf16> to vector<8x16x128xbf16>
    %67 = vector.shape_cast %66 : vector<8x16x128xbf16> to vector<128x128xbf16>
    %c7 = arith.constant 7 : index
    %c0_49 = arith.constant 0 : index
    %c0_50 = arith.constant 0 : index
    %68 = vector.load %arg3[%c7, %c0_49, %c0_50] : memref<9x128x128xbf16, #tpu.memory_space<vmem>>, vector<1x128x128xbf16>
    %69 = vector.shape_cast %68 : vector<1x128x128xbf16> to vector<128x128xbf16>
    %cst_51 = arith.constant dense<0.000000e+00> : vector<128x128xf32>
    %70 = tpu.matmul %67, %69, %cst_51 {dimension_numbers = #tpu.dot_dimension_numbers<[1], [0], [0], [1], [0, 0, 1, 1], [], []>} : vector<128x128xbf16>, vector<128x128xbf16>, vector<128x128xf32> -> vector<128x128xf32>
    %71 = arith.addf %62, %70 : vector<128x128xf32>
    %c2_i32_52 = arith.constant 2 : i32
    %72 = arith.addi %0, %c2_i32_52 : i32
    %c0_53 = arith.constant 0 : index
    %73 = arith.index_cast %72 : i32 to index
    %c2_54 = arith.constant 2 : index
    %c0_55 = arith.constant 0 : index
    %74 = vector.load %arg2[%c0_53, %73, %c2_54, %c0_55] : memref<1x18x18x128xbf16, #tpu.memory_space<vmem>>, vector<1x8x16x128xbf16>
    %75 = vector.shape_cast %74 : vector<1x8x16x128xbf16> to vector<8x16x128xbf16>
    %76 = vector.shape_cast %75 : vector<8x16x128xbf16> to vector<128x128xbf16>
    %c8 = arith.constant 8 : index
    %c0_56 = arith.constant 0 : index
    %c0_57 = arith.constant 0 : index
    %77 = vector.load %arg3[%c8, %c0_56, %c0_57] : memref<9x128x128xbf16, #tpu.memory_space<vmem>>, vector<1x128x128xbf16>
    %78 = vector.shape_cast %77 : vector<1x128x128xbf16> to vector<128x128xbf16>
    %cst_58 = arith.constant dense<0.000000e+00> : vector<128x128xf32>
    %79 = tpu.matmul %76, %78, %cst_58 {dimension_numbers = #tpu.dot_dimension_numbers<[1], [0], [0], [1], [0, 0, 1, 1], [], []>} : vector<128x128xbf16>, vector<128x128xbf16>, vector<128x128xf32> -> vector<128x128xf32>
    %80 = arith.addf %71, %79 : vector<128x128xf32>
    %c0_59 = arith.constant 0 : index
    %c0_60 = arith.constant 0 : index
    %81 = vector.load %arg4[%c0_59, %c0_60] : memref<1x128xf32, #tpu.memory_space<vmem>>, vector<1x128xf32>
    %82 = vector.broadcast %81 : vector<1x128xf32> to vector<128x128xf32>
    %83 = arith.addf %80, %82 : vector<128x128xf32>
    %84 = vector.shape_cast %83 : vector<128x128xf32> to vector<1x8x16x128xf32>
    %c0_61 = arith.constant 0 : index
    %c0_62 = arith.constant 0 : index
    %c0_63 = arith.constant 0 : index
    %c0_64 = arith.constant 0 : index
    %85 = vector.load %arg5[%c0_61, %c0_62, %c0_63, %c0_64] : memref<1x8x16x128xf32, #tpu.memory_space<vmem>>, vector<1x8x16x128xf32>
    tpu.vector_store %arg5[%c0_61, %c0_62, %c0_63, %c0_64], %84 {strides = array<i32>} : memref<1x8x16x128xf32, #tpu.memory_space<vmem>>, vector<1x8x16x128xf32>,
    return
  }
  func.func @transform_0(%arg0: i32, %arg1: i32) -> (i32, i32, i32, i32) {
    %c0_i32 = arith.constant 0 : i32
    %c0_i32_0 = arith.constant 0 : i32
    %c0_i32_1 = arith.constant 0 : i32
    %c0_i32_2 = arith.constant 0 : i32
    return %arg0, %c0_i32, %c0_i32_0, %c0_i32_1 : i32, i32, i32, i32
  }
  func.func @transform_1(%arg0: i32, %arg1: i32) -> (i32, i32, i32) {
    %c0_i32 = arith.constant 0 : i32
    %c0_i32_0 = arith.constant 0 : i32
    %c0_i32_1 = arith.constant 0 : i32
    %c0_i32_2 = arith.constant 0 : i32
    return %c0_i32, %c0_i32_0, %c0_i32_1 : i32, i32, i32
  }
  func.func @transform_2(%arg0: i32, %arg1: i32) -> (i32, i32) {
    %c0_i32 = arith.constant 0 : i32
    %c0_i32_0 = arith.constant 0 : i32
    %c0_i32_1 = arith.constant 0 : i32
    return %c0_i32, %c0_i32_0 : i32, i32
  }
  func.func @transform_3(%arg0: i32, %arg1: i32) -> (i32, i32, i32, i32) {
    %c0_i32 = arith.constant 0 : i32
    %c0_i32_0 = arith.constant 0 : i32
    %c0_i32_1 = arith.constant 0 : i32
    return %arg0, %arg1, %c0_i32, %c0_i32_0 : i32, i32, i32, i32
  }
}

</mosaic_0001>

<llo_original>
// kernel: fourier_cnn_forward.3
$region0: #{fourier_cnn_forward.3}
  #allocation0 [shape = 'u32[]', space=smem, size = 0x4, offset = 0x4, fixed_abs, tag = 'smem constant byte address 0x4 - core index']
  #allocation1 [shape = 'u32[144,128]{1,0:T(1,128)}', space=vmem, size = 0x12000, scoped, tag = 'internal scratch']
  %s0 = inlined_call_operand.vmem [shape: f32[2,18,18,128], index: 0, kind: input, shape index: {}]
  %s1 = inlined_call_operand.vmem [shape: f32[2,18,18,128], index: 1, kind: input, shape index: {}]
  %s2 = inlined_call_operand.vmem [shape: f32[2,1,128], index: 2, kind: input, shape index: {}]
  %s3 = inlined_call_operand.vmem [shape: bf16[9,128,128], index: 3, kind: input, shape index: {}]
  %s4 = inlined_call_operand.vmem [shape: f32[1,128], index: 4, kind: input, shape index: {}]
  %s5 = inlined_call_operand.vmem [shape: bf16[2,16,16,128], index: 5, kind: output, shape index: {}]
  %s6 = sld [smem:[#allocation0]]
  $region53: #{fourier_cnn_forward.3} parent=0
    _
  %s8 = ssub.s32 1, %s6
  %s9 = scalar_select 0, %s8, %s6
  loop: start=0, step=1, limit=6
  $region2: #{fourier_cnn_forward.3} parent=0 // loop_pre_header
    _
  $region3: #{fourier_cnn_forward.3} parent=0 // loop_header
    %s11 = sphi 0, %s15
    %p12 = scmp.ge.s32.totalorder %s11, 6
    %s18 = sphi 0, %s30
    %s19 = sphi 0, %s26
    %s20 = sphi 0, %s18
    %s21 = sphi 0, %s19
    %s22 = sphi 0, %s20
    %s23 = sphi 0, %s21
    %s33 = sphi 0, %s35
    %s36 = sphi 0, %s33
    %s37 = sphi 0, %s36
    %s53 = sphi 0, %s37
    %s59 = sphi 0, %s61
    %s62 = sphi 0, %s59
    %s63 = sphi 0, %s62
    %s79 = sphi 0, %s63
    %s85 = sphi 0, %s87
    %s88 = sphi 0, %s85
    %s89 = sphi 0, %s88
    %s105 = sphi 0, %s89
    %s109 = sphi 0, %s109
    %s111 = sphi 0, %s109
    %s112 = sphi 0, %s111
    %s126 = sphi 0, %s112
    %s130 = sphi 0, %s130
    %s132 = sphi 0, %s130
    %s133 = sphi 0, %s132
    %s147 = sphi 0, %s133
    %s155 = sphi 0, %s157
    %s158 = sphi 0, %s155
    %s159 = sphi 0, %s158
    %s175 = sphi 0, %s159
  $region4: #{fourier_cnn_forward.3} parent=0 // loop_header_branch
    %14 = sbr.rel (%p12) target = $region8
  $region5: #{fourier_cnn_forward.3} parent=0 // loop_body
    %s16 = ssub.s32 %s11, 1
    %s17 = ssub.s32 %s11, 2
    %s24 = sadd.s32 1, %s19
    %p25 = scmp.ge.s32.totalorder %s24, 2
    %s26 = scalar_select %p25, 0, %s24
    %s27 = sadd.s32 1, %s18
    %s28 = scalar_select %p25, %s27, %s18
    %p29 = scmp.ge.s32.totalorder %s28, 2
    %s30 = scalar_select %p29, 0, %s28
    %s31 = ssub.s32 %s18, %s30
    %p32 = scmp.eq.s32.totalorder %s31, 0
    %s34 = sadd.s32 %s33, 1
    %s35 = scalar_select %p32, %s33, %s34
    %p38 = pneg %p32
    %p39 = scmp.eq.s32.totalorder %s11, 3
    %p40 = por %p38, %p39
    %p41 = scmp.ne.s32.totalorder %s33, %s36
    %p42 = scmp.eq.s32.totalorder %s11, 0
    %p43 = por %p41, %p42
    %p44 = scmp.ne.s32.totalorder %s33, %s36
    %p45 = scmp.eq.s32.totalorder %s16, 3
    %p46 = por %p44, %p45
    %p47 = scmp.ne.s32.totalorder %s36, %s37
    %p48 = scmp.eq.s32.totalorder %s16, 0
    %p49 = por %p47, %p48
    %p50 = scmp.ne.s32.totalorder %s36, %s37
    %p51 = scmp.eq.s32.totalorder %s17, 3
    %p52 = por %p50, %p51
    %p54 = scmp.ne.s32.totalorder %s37, %s53
    %p55 = scmp.eq.s32.totalorder %s17, 0
    %p56 = por %p54, %p55
    %s57 = ssub.s32 %s18, %s30
    %p58 = scmp.eq.s32.totalorder %s57, 0
    %s60 = sadd.s32 %s59, 1
    %s61 = scalar_select %p58, %s59, %s60
    %p64 = pneg %p58
    %p65 = scmp.eq.s32.totalorder %s11, 3
    %p66 = por %p64, %p65
    %p67 = scmp.ne.s32.totalorder %s59, %s62
    %p68 = scmp.eq.s32.totalorder %s11, 0
    %p69 = por %p67, %p68
    %p70 = scmp.ne.s32.totalorder %s59, %s62
    %p71 = scmp.eq.s32.totalorder %s16, 3
    %p72 = por %p70, %p71
    %p73 = scmp.ne.s32.totalorder %s62, %s63
    %p74 = scmp.eq.s32.totalorder %s16, 0
    %p75 = por %p73, %p74
    %p76 = scmp.ne.s32.totalorder %s62, %s63
    %p77 = scmp.eq.s32.totalorder %s17, 3
    %p78 = por %p76, %p77
    %p80 = scmp.ne.s32.totalorder %s63, %s79
    %p81 = scmp.eq.s32.totalorder %s17, 0
    %p82 = por %p80, %p81
    %s83 = ssub.s32 %s18, %s30
    %p84 = scmp.eq.s32.totalorder %s83, 0
    %s86 = sadd.s32 %s85, 1
    %s87 = scalar_select %p84, %s85, %s86
    %p90 = pneg %p84
    %p91 = scmp.eq.s32.totalorder %s11, 3
    %p92 = por %p90, %p91
    %p93 = scmp.ne.s32.totalorder %s85, %s88
    %p94 = scmp.eq.s32.totalorder %s11, 0
    %p95 = por %p93, %p94
    %p96 = scmp.ne.s32.totalorder %s85, %s88
    %p97 = scmp.eq.s32.totalorder %s16, 3
    %p98 = por %p96, %p97
    %p99 = scmp.ne.s32.totalorder %s88, %s89
    %p100 = scmp.eq.s32.totalorder %s16, 0
    %p101 = por %p99, %p100
    %p102 = scmp.ne.s32.totalorder %s88, %s89
    %p103 = scmp.eq.s32.totalorder %s17, 3
    %p104 = por %p102, %p103
    %p106 = scmp.ne.s32.totalorder %s89, %s105
    %p107 = scmp.eq.s32.totalorder %s17, 0
    %p108 = por %p106, %p107
    %s110 = sadd.s32 %s109, 1
    %p113 = scmp.eq.s32.totalorder %s11, 3
    %p114 = scmp.ne.s32.totalorder %s109, %s111
    %p115 = scmp.eq.s32.totalorder %s11, 0
    %p116 = por %p114, %p115
    %p117 = scmp.ne.s32.totalorder %s109, %s111
    %p118 = scmp.eq.s32.totalorder %s16, 3
    %p119 = por %p117, %p118
    %p120 = scmp.ne.s32.totalorder %s111, %s112
    %p121 = scmp.eq.s32.totalorder %s16, 0
    %p122 = por %p120, %p121
    %p123 = scmp.ne.s32.totalorder %s111, %s112
    %p124 = scmp.eq.s32.totalorder %s17, 3
    %p125 = por %p123, %p124
    %p127 = scmp.ne.s32.totalorder %s112, %s126
    %p128 = scmp.eq.s32.totalorder %s17, 0
    %p129 = por %p127, %p128
    %s131 = sadd.s32 %s130, 1
    %p134 = scmp.eq.s32.totalorder %s11, 3
    %p135 = scmp.ne.s32.totalorder %s130, %s132
    %p136 = scmp.eq.s32.totalorder %s11, 0
    %p137 = por %p135, %p136
    %p138 = scmp.ne.s32.totalorder %s130, %s132
    %p139 = scmp.eq.s32.totalorder %s16, 3
    %p140 = por %p138, %p139
    %p141 = scmp.ne.s32.totalorder %s132, %s133
    %p142 = scmp.eq.s32.totalorder %s16, 0
    %p143 = por %p141, %p142
    %p144 = scmp.ne.s32.totalorder %s132, %s133
    %p145 = scmp.eq.s32.totalorder %s17, 3
    %p146 = por %p144, %p145
    %p148 = scmp.ne.s32.totalorder %s133, %s147
    %p149 = scmp.eq.s32.totalorder %s17, 0
    %p150 = por %p148, %p149
    %s151 = ssub.s32 %s18, %s30
    %s152 = ssub.s32 %s19, %s26
    %s153 = sor.u32 %s151, %s152
    %p154 = scmp.eq.s32.totalorder %s153, 0
    %s156 = sadd.s32 %s155, 1
    %s157 = scalar_select %p154, %s155, %s156
    %p160 = pneg %p154
    %p161 = scmp.eq.s32.totalorder %s11, 3
    %p162 = por %p160, %p161
    %p163 = scmp.ne.s32.totalorder %s155, %s158
    %p164 = scmp.eq.s32.totalorder %s11, 0
    %p165 = por %p163, %p164
    %p166 = scmp.ne.s32.totalorder %s155, %s158
    %p167 = scmp.eq.s32.totalorder %s16, 3
    %p168 = por %p166, %p167
    %p169 = scmp.ne.s32.totalorder %s158, %s159
    %p170 = scmp.eq.s32.totalorder %s16, 0
    %p171 = por %p169, %p170
    %p172 = scmp.ne.s32.totalorder %s158, %s159
    %p173 = scmp.eq.s32.totalorder %s17, 3
    %p174 = por %p172, %p173
    %p176 = scmp.ne.s32.totalorder %s159, %s175
    %p177 = scmp.eq.s32.totalorder %s17, 0
    %p178 = por %p176, %p177
    %p179 = scmp.le.s32.totalorder 1, %s11
    %p180 = scmp.lt.s32.totalorder %s11, 5
    %p181 = pnand %p179, %p180
    %p182 = pneg %p181
    // Predicated region
    $region9: #{fourier_cnn_forward.3} parent=5 // pred_check
      _
    $region10: #{fourier_cnn_forward.3} parent=5 // pred_check_branch
      %184 = sbr.rel (%p181) target = $region12
    $region11: #{fourier_cnn_forward.3} parent=5 // pred_region
      %s185 = ssub.s32 %s11, 1
      // Predicated region
      $region13: #{fourier_cnn_forward.3} parent=11 // pred_check
        %p186 = pneg %p122
      $region14: #{fourier_cnn_forward.3} parent=11 // pred_check_branch
        %188 = sbr.rel (%p186) target = $region16
      $region15: #{fourier_cnn_forward.3} parent=11 // pred_region
        _
      $region16: #{fourier_cnn_forward.3} parent=11 // pred_fallthru
        _
      // Predicated region
      $region17: #{fourier_cnn_forward.3} parent=11 // pred_check
        %p189 = pneg %p143
      $region18: #{fourier_cnn_forward.3} parent=11 // pred_check_branch
        %191 = sbr.rel (%p189) target = $region20
      $region19: #{fourier_cnn_forward.3} parent=11 // pred_region
        _
      $region20: #{fourier_cnn_forward.3} parent=11 // pred_fallthru
        _
    $region12: #{fourier_cnn_forward.3} parent=5 // pred_fallthru
      _
    %p192 = scmp.lt.s32.totalorder %s11, 4
    // Predicated region
    $region21: #{fourier_cnn_forward.3} parent=5 // pred_check
      %p193 = pneg %p192
    $region22: #{fourier_cnn_forward.3} parent=5 // pred_check_branch
      %195 = sbr.rel (%p193) target = $region24
    $region23: #{fourier_cnn_forward.3} parent=5 // pred_region
      // Predicated region
      $region25: #{fourier_cnn_forward.3} parent=23 // pred_check
        %p196 = pneg %p43
      $region26: #{fourier_cnn_forward.3} parent=23 // pred_check_branch
        %198 = sbr.rel (%p196) target = $region28
      $region27: #{fourier_cnn_forward.3} parent=23 // pred_region
        %p199 = scmp.lt.s32.totalorder %s18, 1
        %s200 = scalar_select %p199, %s18, 1
        %s201 = smul.addr %s200, 54
        %s202 = smul.addr %s201, 8
        %s203 = scalar_lea.vmem %s0, %s202
      $region28: #{fourier_cnn_forward.3} parent=23 // pred_fallthru
        _
      // Predicated region
      $region29: #{fourier_cnn_forward.3} parent=23 // pred_check
        %p204 = pneg %p69
      $region30: #{fourier_cnn_forward.3} parent=23 // pred_check_branch
        %206 = sbr.rel (%p204) target = $region32
      $region31: #{fourier_cnn_forward.3} parent=23 // pred_region
        %p207 = scmp.lt.s32.totalorder %s18, 1
        %s208 = scalar_select %p207, %s18, 1
        %s209 = smul.addr %s208, 54
        %s210 = smul.addr %s209, 8
        %s211 = scalar_lea.vmem %s1, %s210
      $region32: #{fourier_cnn_forward.3} parent=23 // pred_fallthru
        _
      // Predicated region
      $region33: #{fourier_cnn_forward.3} parent=23 // pred_check
        %p212 = pneg %p95
      $region34: #{fourier_cnn_forward.3} parent=23 // pred_check_branch
        %214 = sbr.rel (%p212) target = $region36
      $region35: #{fourier_cnn_forward.3} parent=23 // pred_region
        %p215 = scmp.lt.s32.totalorder %s18, 1
        %s216 = scalar_select %p215, %s18, 1
        %s217 = scalar_lea.vmem %s2, %s216
      $region36: #{fourier_cnn_forward.3} parent=23 // pred_fallthru
        _
    $region24: #{fourier_cnn_forward.3} parent=5 // pred_fallthru
      _
    %p218 = scmp.le.s32.totalorder 1, %s11
    %p219 = scmp.lt.s32.totalorder %s11, 5
    %p220 = pnand %p218, %p219
    %p221 = pneg %p220
    // Predicated region
    $region37: #{fourier_cnn_forward.3} parent=5 // pred_check
      _
    $region38: #{fourier_cnn_forward.3} parent=5 // pred_check_branch
      %223 = sbr.rel (%p220) target = $region40
    $region39: #{fourier_cnn_forward.3} parent=5 // pred_region
      %s224 = ssub.s32 %s11, 1
      %p225 = scmp.lt.s32.totalorder %s20, 1
      %s226 = scalar_select %p225, %s20, 1
      %s227 = smul.addr %s226, 54
      %s228 = smul.addr %s227, 8
      %s229 = scalar_lea.vmem %s0, %s228
      %p230 = pneg %p49
      %p231 = pneg %p46
      %p232 = scmp.lt.s32.totalorder %s20, 1
      %s233 = scalar_select %p232, %s20, 1
      %s234 = smul.addr %s233, 54
      %s235 = smul.addr %s234, 8
      %s236 = scalar_lea.vmem %s1, %s235
      %p237 = pneg %p75
      %p238 = pneg %p72
      %p239 = scmp.lt.s32.totalorder %s20, 1
      %s240 = scalar_select %p239, %s20, 1
      %s241 = scalar_lea.vmem %s2, %s240
      %p242 = pneg %p101
      %p243 = pneg %p98
      %p244 = pneg %p122
      %p245 = pneg %p119
      %p246 = pneg %p143
      %p247 = pneg %p140
      %p248 = pneg %p171
      %p249 = pneg %p168
      %s250 = smul.u32 8, %s21
      %p251 = scmp.lt.s32.totalorder %s20, 1
      %s252 = scalar_select %p251, %s20, 1
      %p253 = scmp.lt.s32.totalorder %s250, 15
      %s254 = scalar_select %p253, %s250, 15
      %s255 = smul.addr %s254, 2
      %s256 = smul.addr %s252, 32
      %s257 = sadd.s32 %s255, %s256
      %s258 = smul.addr %s257, 4
      %s259 = scalar_lea.vmem %s5, %s258
      %p260 = scmp.lt.s32.totalorder %s20, 1
      %s261 = scalar_select %p260, %s20, 1
      %s262 = smul.addr %s261, 54
      %s263 = smul.addr %s262, 8
      %s264 = scalar_lea.vmem %s0, %s263
      %p265 = scmp.lt.s32.totalorder %s20, 1
      %s266 = scalar_select %p265, %s20, 1
      %s267 = smul.addr %s266, 54
      %s268 = smul.addr %s267, 8
      %s269 = scalar_lea.vmem %s1, %s268
      %p270 = scmp.lt.s32.totalorder %s20, 1
      %s271 = scalar_select %p270, %s20, 1
      %s272 = scalar_lea.vmem %s2, %s271
      %s273 = smul.u32 8, %s21
      %p274 = scmp.lt.s32.totalorder %s20, 1
      %s275 = scalar_select %p274, %s20, 1
      %p276 = scmp.lt.s32.totalorder %s273, 15
      %s277 = scalar_select %p276, %s273, 15
      %s278 = smul.addr %s277, 2
      %s279 = smul.addr %s275, 32
      %s280 = sadd.s32 %s278, %s279
      %s281 = smul.addr %s280, 4
      %s282 = scalar_lea.vmem %s5, %s281
      %s283 = smul.u32 8, %s21
      %s285 = smul.u32 %s21, 8
      %s286 = smul.u32 %s285, 24
      %s287 = scalar_lea.vmem %s264, %s286
      %v288 = vld [vmem:[%s287] sm:$0xff]
      %v289 = vld [vmem:[%s287 + $0x8] sm:$0xff]
      %v290 = vld [vmem:[%s287 + $0x18] sm:$0xff]
      %v291 = vld [vmem:[%s287 + $0x20] sm:$0xff]
      %v292 = vld [vmem:[%s287 + $0x30] sm:$0xff]
      %v293 = vld [vmem:[%s287 + $0x38] sm:$0xff]
      %v294 = vld [vmem:[%s287 + $0x48] sm:$0xff]
      %v295 = vld [vmem:[%s287 + $0x50] sm:$0xff]
      %v296 = vld [vmem:[%s287 + $0x60] sm:$0xff]
      %v297 = vld [vmem:[%s287 + $0x68] sm:$0xff]
      %v298 = vld [vmem:[%s287 + $0x78] sm:$0xff]
      %v299 = vld [vmem:[%s287 + $0x80] sm:$0xff]
      %v300 = vld [vmem:[%s287 + $0x90] sm:$0xff]
      %v301 = vld [vmem:[%s287 + $0x98] sm:$0xff]
      %v302 = vld [vmem:[%s287 + $0xa8] sm:$0xff]
      %v303 = vld [vmem:[%s287 + $0xb0] sm:$0xff]
      %s304 = scalar_lea.vmem %s269, %s286
      %v305 = vld [vmem:[%s304] sm:$0xff]
      %v306 = vld [vmem:[%s304 + $0x8] sm:$0xff]
      %v307 = vld [vmem:[%s304 + $0x18] sm:$0xff]
      %v308 = vld [vmem:[%s304 + $0x20] sm:$0xff]
      %v309 = vld [vmem:[%s304 + $0x30] sm:$0xff]
      %v310 = vld [vmem:[%s304 + $0x38] sm:$0xff]
      %v311 = vld [vmem:[%s304 + $0x48] sm:$0xff]
      %v312 = vld [vmem:[%s304 + $0x50] sm:$0xff]
      %v313 = vld [vmem:[%s304 + $0x60] sm:$0xff]
      %v314 = vld [vmem:[%s304 + $0x68] sm:$0xff]
      %v315 = vld [vmem:[%s304 + $0x78] sm:$0xff]
      %v316 = vld [vmem:[%s304 + $0x80] sm:$0xff]
      %v317 = vld [vmem:[%s304 + $0x90] sm:$0xff]
      %v318 = vld [vmem:[%s304 + $0x98] sm:$0xff]
      %v319 = vld [vmem:[%s304 + $0xa8] sm:$0xff]
      %v320 = vld [vmem:[%s304 + $0xb0] sm:$0xff]
      %v321 = vld [vmem:[%s272] sm:$0x1]
      %v323 = vlaneseq
      %v324 = vshrl.u32 %v323, 7
      %v325 = vsub.s32 0, %v324
      %v326 = vrot.slane %v321, %v325
      %v328 = vmul.f32 %v305, %v326
      %v329 = vmul.f32 %v306, %v326
      %v330 = vmul.f32 %v307, %v326
      %v331 = vmul.f32 %v308, %v326
      %v332 = vmul.f32 %v309, %v326
      %v333 = vmul.f32 %v310, %v326
      %v334 = vmul.f32 %v311, %v326
      %v335 = vmul.f32 %v312, %v326
      %v336 = vmul.f32 %v313, %v326
      %v337 = vmul.f32 %v314, %v326
      %v338 = vmul.f32 %v315, %v326
      %v339 = vmul.f32 %v316, %v326
      %v340 = vmul.f32 %v317, %v326
      %v341 = vmul.f32 %v318, %v326
      %v342 = vmul.f32 %v319, %v326
      %v343 = vmul.f32 %v320, %v326
      %v344 = vadd.f32 %v288, %v328
      %v345 = vadd.f32 %v289, %v329
      %v346 = vadd.f32 %v290, %v330
      %v347 = vadd.f32 %v291, %v331
      %v348 = vadd.f32 %v292, %v332
      %v349 = vadd.f32 %v293, %v333
      %v350 = vadd.f32 %v294, %v334
      %v351 = vadd.f32 %v295, %v335
      %v352 = vadd.f32 %v296, %v336
      %v353 = vadd.f32 %v297, %v337
      %v354 = vadd.f32 %v298, %v338
      %v355 = vadd.f32 %v299, %v339
      %v356 = vadd.f32 %v300, %v340
      %v357 = vadd.f32 %v301, %v341
      %v358 = vadd.f32 %v302, %v342
      %v359 = vadd.f32 %v303, %v343
      %v360 = vpack.c.bf16 %v345, %v344
      %v361 = vpack.c.bf16 %v347, %v346
      %v362 = vpack.c.bf16 %v349, %v348
      %v363 = vpack.c.bf16 %v351, %v350
      %v364 = vpack.c.bf16 %v353, %v352
      %v365 = vpack.c.bf16 %v355, %v354
      %v366 = vpack.c.bf16 %v357, %v356
      %v367 = vpack.c.bf16 %v359, %v358
      %v368 = vld [vmem:[%s3] sm:$0xf]
      %v369 = vld [vmem:[%s3 + $0x4] sm:$0xf]
      %v370 = vld [vmem:[%s3 + $0x8] sm:$0xf]
      %v371 = vld [vmem:[%s3 + $0xc] sm:$0xf]
      %v372 = vld [vmem:[%s3 + $0x10] sm:$0xf]
      %v373 = vld [vmem:[%s3 + $0x14] sm:$0xf]
      %v374 = vld [vmem:[%s3 + $0x18] sm:$0xf]
      %v375 = vld [vmem:[%s3 + $0x1c] sm:$0xf]
      %v376 = vld [vmem:[%s3 + $0x20] sm:$0xf]
      %v377 = vld [vmem:[%s3 + $0x24] sm:$0xf]
      %v378 = vld [vmem:[%s3 + $0x28] sm:$0xf]
      %v379 = vld [vmem:[%s3 + $0x2c] sm:$0xf]
      %v380 = vld [vmem:[%s3 + $0x30] sm:$0xf]
      %v381 = vld [vmem:[%s3 + $0x34] sm:$0xf]
      %v382 = vld [vmem:[%s3 + $0x38] sm:$0xf]
      %v383 = vld [vmem:[%s3 + $0x3c] sm:$0xf]
      %v384 = vld [vmem:[%s287 + $0x1] sm:$0xff]
      %v385 = vld [vmem:[%s287 + $0x9] sm:$0xff]
      %v386 = vld [vmem:[%s287 + $0x19] sm:$0xff]
      %v387 = vld [vmem:[%s287 + $0x21] sm:$0xff]
      %v388 = vld [vmem:[%s287 + $0x31] sm:$0xff]
      %v389 = vld [vmem:[%s287 + $0x39] sm:$0xff]
      %v390 = vld [vmem:[%s287 + $0x49] sm:$0xff]
      %v391 = vld [vmem:[%s287 + $0x51] sm:$0xff]
      %v392 = vld [vmem:[%s287 + $0x61] sm:$0xff]
      %v393 = vld [vmem:[%s287 + $0x69] sm:$0xff]
      %v394 = vld [vmem:[%s287 + $0x79] sm:$0xff]
      %v395 = vld [vmem:[%s287 + $0x81] sm:$0xff]
      %v396 = vld [vmem:[%s287 + $0x91] sm:$0xff]
      %v397 = vld [vmem:[%s287 + $0x99] sm:$0xff]
      %v398 = vld [vmem:[%s287 + $0xa9] sm:$0xff]
      %v399 = vld [vmem:[%s287 + $0xb1] sm:$0xff]
      %v400 = vld [vmem:[%s304 + $0x1] sm:$0xff]
      %v401 = vld [vmem:[%s304 + $0x9] sm:$0xff]
      %v402 = vld [vmem:[%s304 + $0x19] sm:$0xff]
      %v403 = vld [vmem:[%s304 + $0x21] sm:$0xff]
      %v404 = vld [vmem:[%s304 + $0x31] sm:$0xff]
      %v405 = vld [vmem:[%s304 + $0x39] sm:$0xff]
      %v406 = vld [vmem:[%s304 + $0x49] sm:$0xff]
      %v407 = vld [vmem:[%s304 + $0x51] sm:$0xff]
      %v408 = vld [vmem:[%s304 + $0x61] sm:$0xff]
      %v409 = vld [vmem:[%s304 + $0x69] sm:$0xff]
      %v410 = vld [vmem:[%s304 + $0x79] sm:$0xff]
      %v411 = vld [vmem:[%s304 + $0x81] sm:$0xff]
      %v412 = vld [vmem:[%s304 + $0x91] sm:$0xff]
      %v413 = vld [vmem:[%s304 + $0x99] sm:$0xff]
      %v414 = vld [vmem:[%s304 + $0xa9] sm:$0xff]
      %v415 = vld [vmem:[%s304 + $0xb1] sm:$0xff]
      %v416 = vmul.f32 %v400, %v326
      %v417 = vmul.f32 %v401, %v326
      %v418 = vmul.f32 %v402, %v326
      %v419 = vmul.f32 %v403, %v326
      %v420 = vmul.f32 %v404, %v326
      %v421 = vmul.f32 %v405, %v326
      %v422 = vmul.f32 %v406, %v326
      %v423 = vmul.f32 %v407, %v326
      %v424 = vmul.f32 %v408, %v326
      %v425 = vmul.f32 %v409, %v326
      %v426 = vmul.f32 %v410, %v326
      %v427 = vmul.f32 %v411, %v326
      %v428 = vmul.f32 %v412, %v326
      %v429 = vmul.f32 %v413, %v326
      %v430 = vmul.f32 %v414, %v326
      %v431 = vmul.f32 %v415, %v326
      %v432 = vadd.f32 %v384, %v416
      %v433 = vadd.f32 %v385, %v417
      %v434 = vadd.f32 %v386, %v418
      %v435 = vadd.f32 %v387, %v419
      %v436 = vadd.f32 %v388, %v420
      %v437 = vadd.f32 %v389, %v421
      %v438 = vadd.f32 %v390, %v422
      %v439 = vadd.f32 %v391, %v423
      %v440 = vadd.f32 %v392, %v424
      %v441 = vadd.f32 %v393, %v425
      %v442 = vadd.f32 %v394, %v426
      %v443 = vadd.f32 %v395, %v427
      %v444 = vadd.f32 %v396, %v428
      %v445 = vadd.f32 %v397, %v429
      %v446 = vadd.f32 %v398, %v430
      %v447 = vadd.f32 %v399, %v431
      %v448 = vpack.c.bf16 %v433, %v432
      %v449 = vpack.c.bf16 %v435, %v434
      %v450 = vpack.c.bf16 %v437, %v436
      %v451 = vpack.c.bf16 %v439, %v438
      %v452 = vpack.c.bf16 %v441, %v440
      %v453 = vpack.c.bf16 %v443, %v442
      %v454 = vpack.c.bf16 %v445, %v444
      %v455 = vpack.c.bf16 %v447, %v446
      %s456 = scalar_lea.vmem %s3, 64
      %v457 = vld [vmem:[%s456] sm:$0xf]
      %v458 = vld [vmem:[%s456 + $0x4] sm:$0xf]
      %v459 = vld [vmem:[%s456 + $0x8] sm:$0xf]
      %v460 = vld [vmem:[%s456 + $0xc] sm:$0xf]
      %v461 = vld [vmem:[%s456 + $0x10] sm:$0xf]
      %v462 = vld [vmem:[%s456 + $0x14] sm:$0xf]
      %v463 = vld [vmem:[%s456 + $0x18] sm:$0xf]
      %v464 = vld [vmem:[%s456 + $0x1c] sm:$0xf]
      %v465 = vld [vmem:[%s456 + $0x20] sm:$0xf]
      %v466 = vld [vmem:[%s456 + $0x24] sm:$0xf]
      %v467 = vld [vmem:[%s456 + $0x28] sm:$0xf]
      %v468 = vld [vmem:[%s456 + $0x2c] sm:$0xf]
      %v469 = vld [vmem:[%s456 + $0x30] sm:$0xf]
      %v470 = vld [vmem:[%s456 + $0x34] sm:$0xf]
      %v471 = vld [vmem:[%s456 + $0x38] sm:$0xf]
      %v472 = vld [vmem:[%s456 + $0x3c] sm:$0xf]
      %v489 = vunpack.c.l.b16 %v457
      %v490 = vunpack.c.l.b16 %v458
      %v491 = vunpack.c.l.b16 %v459
      %v492 = vunpack.c.l.b16 %v460
      %v493 = vunpack.c.l.b16 %v461
      %v494 = vunpack.c.l.b16 %v462
      %v495 = vunpack.c.l.b16 %v463
      %v496 = vunpack.c.l.b16 %v464
      %v497 = vunpack.c.l.b16 %v465
      %v498 = vunpack.c.l.b16 %v466
      %v499 = vunpack.c.l.b16 %v467
      %v500 = vunpack.c.l.b16 %v468
      %v501 = vunpack.c.l.b16 %v469
      %v502 = vunpack.c.l.b16 %v470
      %v503 = vunpack.c.l.b16 %v471
      %v504 = vunpack.c.l.b16 %v472
      %v505 = vpack.c.b16 %v490, %v489
      %v506 = vpack.c.b16 %v492, %v491
      %v507 = vpack.c.b16 %v494, %v493
      %v508 = vpack.c.b16 %v496, %v495
      %v509 = vpack.c.b16 %v498, %v497
      %v510 = vpack.c.b16 %v500, %v499
      %v511 = vpack.c.b16 %v502, %v501
      %v512 = vpack.c.b16 %v504, %v503
      %521 = vmatprep.subr.bf16.mxu0 0
      %522 = vmatpush1.bf16.msra.mxu0 %v512
      %523 = vmatprep.subr.bf16.mxu0 0
      %524 = vmatpush1.bf16.msra.mxu0 %v511
      %525 = vmatprep.subr.bf16.mxu0 0
      %526 = vmatpush1.bf16.msra.mxu0 %v510
      %527 = vmatprep.subr.bf16.mxu0 0
      %528 = vmatpush1.bf16.msra.mxu0 %v509
      %529 = vmatprep.subr.bf16.mxu0 0
      %530 = vmatpush1.bf16.msra.mxu0 %v508
      %531 = vmatprep.subr.bf16.mxu0 0
      %532 = vmatpush1.bf16.msra.mxu0 %v507
      %533 = vmatprep.subr.bf16.mxu0 0
      %534 = vmatpush1.bf16.msra.mxu0 %v506
      %535 = vmatprep.subr.bf16.mxu0 0
      %536 = vmatpush1.bf16.msra.mxu0 %v505
      %537 = vmatprep.subr.bf16.mxu0 0
      %538 = vmatpush2.bf16.msra.mxu0 0
      %539 = vmatprep.subr.bf16.mxu0 0
      %540 = vmatpush2.bf16.msra.mxu0 0
      %541 = vmatprep.subr.bf16.mxu0 0
      %542 = vmatpush2.bf16.msra.mxu0 0
      %543 = vmatprep.subr.bf16.mxu0 0
      %544 = vmatpush2.bf16.msra.mxu0 0
      %545 = vmatprep.subr.bf16.mxu0 0
      %546 = vmatpush2.bf16.msra.mxu0 0
      %547 = vmatprep.subr.bf16.mxu0 0
      %548 = vmatpush2.bf16.msra.mxu0 0
      %549 = vmatprep.subr.bf16.mxu0 0
      %550 = vmatpush2.bf16.msra.mxu0 0
      %551 = vmatprep.subr.bf16.mxu0 0
      %552 = vmatpush2.bf16.msra.mxu0 0
      %553 = vmatprep.mubr.bf16.mxu0 0
      %554 = vmatmul.mubr.bf16.gmra.mxu0 %v448
      %v555 = vpop.f32.mrf.mxu0
      %v556 = vadd.f32 0.0, %v555
      %v557 = vpop.f32.mrf.mxu0
      %v558 = vpop.f32.mrf.mxu0
      %v559 = vadd.f32 0.0, %v558
      %v560 = vpop.f32.mrf.mxu0
      %561 = vmatprep.mubr.bf16.mxu0 0
      %562 = vmatmul.mubr.bf16.gmra.mxu0 %v449
      %v563 = vpop.f32.mrf.mxu0
      %v564 = vadd.f32 0.0, %v563
      %v565 = vpop.f32.mrf.mxu0
      %v566 = vpop.f32.mrf.mxu0
      %v567 = vadd.f32 0.0, %v566
      %v568 = vpop.f32.mrf.mxu0
      %569 = vmatprep.mubr.bf16.mxu0 0
      %570 = vmatmul.mubr.bf16.gmra.mxu0 %v450
      %v571 = vpop.f32.mrf.mxu0
      %v572 = vadd.f32 0.0, %v571
      %v573 = vpop.f32.mrf.mxu0
      %v574 = vpop.f32.mrf.mxu0
      %v575 = vadd.f32 0.0, %v574
      %v576 = vpop.f32.mrf.mxu0
      %577 = vmatprep.mubr.bf16.mxu0 0
      %578 = vmatmul.mubr.bf16.gmra.mxu0 %v451
      %v579 = vpop.f32.mrf.mxu0
      %v580 = vadd.f32 0.0, %v579
      %v581 = vpop.f32.mrf.mxu0
      %v582 = vpop.f32.mrf.mxu0
      %v583 = vadd.f32 0.0, %v582
      %v584 = vpop.f32.mrf.mxu0
      %585 = vmatprep.mubr.bf16.mxu0 0
      %586 = vmatmul.mubr.bf16.gmra.mxu0 %v452
      %v587 = vpop.f32.mrf.mxu0
      %v588 = vadd.f32 0.0, %v587
      %v589 = vpop.f32.mrf.mxu0
      %v590 = vpop.f32.mrf.mxu0
      %v591 = vadd.f32 0.0, %v590
      %v592 = vpop.f32.mrf.mxu0
      %593 = vmatprep.mubr.bf16.mxu0 0
      %594 = vmatmul.mubr.bf16.gmra.mxu0 %v453
      %v595 = vpop.f32.mrf.mxu0
      %v596 = vadd.f32 0.0, %v595
      %v597 = vpop.f32.mrf.mxu0
      %v598 = vpop.f32.mrf.mxu0
      %v599 = vadd.f32 0.0, %v598
      %v600 = vpop.f32.mrf.mxu0
      %601 = vmatprep.mubr.bf16.mxu0 0
      %602 = vmatmul.mubr.bf16.gmra.mxu0 %v454
      %v603 = vpop.f32.mrf.mxu0
      %v604 = vadd.f32 0.0, %v603
      %v605 = vpop.f32.mrf.mxu0
      %v606 = vpop.f32.mrf.mxu0
      %v607 = vadd.f32 0.0, %v606
      %v608 = vpop.f32.mrf.mxu0
      %609 = vmatprep.mubr.bf16.mxu0 0
      %610 = vmatmul.mubr.bf16.gmra.mxu0 %v455
      %v611 = vpop.f32.mrf.mxu0
      %v612 = vadd.f32 0.0, %v611
      %v613 = vpop.f32.mrf.mxu0
      %v614 = vpop.f32.mrf.mxu0
      %v615 = vadd.f32 0.0, %v614
      %v616 = vpop.f32.mrf.mxu0
      %617 = vdwg.mxu0
      %v634 = vunpack.c.l.b16 %v368
      %v635 = vunpack.c.l.b16 %v369
      %v636 = vunpack.c.l.b16 %v370
      %v637 = vunpack.c.l.b16 %v371
      %v638 = vunpack.c.l.b16 %v372
      %v639 = vunpack.c.l.b16 %v373
      %v640 = vunpack.c.l.b16 %v374
      %v641 = vunpack.c.l.b16 %v375
      %v642 = vunpack.c.l.b16 %v376
      %v643 = vunpack.c.l.b16 %v377
      %v644 = vunpack.c.l.b16 %v378
      %v645 = vunpack.c.l.b16 %v379
      %v646 = vunpack.c.l.b16 %v380
      %v647 = vunpack.c.l.b16 %v381
      %v648 = vunpack.c.l.b16 %v382
      %v649 = vunpack.c.l.b16 %v383
      %v650 = vpack.c.b16 %v635, %v634
      %v651 = vpack.c.b16 %v637, %v636
      %v652 = vpack.c.b16 %v639, %v638
      %v653 = vpack.c.b16 %v641, %v640
      %v654 = vpack.c.b16 %v643, %v642
      %v655 = vpack.c.b16 %v645, %v644
      %v656 = vpack.c.b16 %v647, %v646
      %v657 = vpack.c.b16 %v649, %v648
      %666 = vmatprep.subr.bf16.mxu0 0
      %667 = vmatpush1.bf16.msra.mxu0 %v657
      %668 = vmatprep.subr.bf16.mxu0 0
      %669 = vmatpush1.bf16.msra.mxu0 %v656
      %670 = vmatprep.subr.bf16.mxu0 0
      %671 = vmatpush1.bf16.msra.mxu0 %v655
      %672 = vmatprep.subr.bf16.mxu0 0
      %673 = vmatpush1.bf16.msra.mxu0 %v654
      %674 = vmatprep.subr.bf16.mxu0 0
      %675 = vmatpush1.bf16.msra.mxu0 %v653
      %676 = vmatprep.subr.bf16.mxu0 0
      %677 = vmatpush1.bf16.msra.mxu0 %v652
      %678 = vmatprep.subr.bf16.mxu0 0
      %679 = vmatpush1.bf16.msra.mxu0 %v651
      %680 = vmatprep.subr.bf16.mxu0 0
      %681 = vmatpush1.bf16.msra.mxu0 %v650
      %682 = vmatprep.subr.bf16.mxu0 0
      %683 = vmatpush2.bf16.msra.mxu0 0
      %684 = vmatprep.subr.bf16.mxu0 0
      %685 = vmatpush2.bf16.msra.mxu0 0
      %686 = vmatprep.subr.bf16.mxu0 0
      %687 = vmatpush2.bf16.msra.mxu0 0
      %688 = vmatprep.subr.bf16.mxu0 0
      %689 = vmatpush2.bf16.msra.mxu0 0
      %690 = vmatprep.subr.bf16.mxu0 0
      %691 = vmatpush2.bf16.msra.mxu0 0
      %692 = vmatprep.subr.bf16.mxu0 0
      %693 = vmatpush2.bf16.msra.mxu0 0
      %694 = vmatprep.subr.bf16.mxu0 0
      %695 = vmatpush2.bf16.msra.mxu0 0
      %696 = vmatprep.subr.bf16.mxu0 0
      %697 = vmatpush2.bf16.msra.mxu0 0
      %698 = vmatprep.mubr.bf16.mxu0 0
      %699 = vmatmul.mubr.bf16.gmra.mxu0 %v360
      %v700 = vpop.f32.mrf.mxu0
      %v701 = vadd.f32 %v556, %v700
      %v702 = vpop.f32.mrf.mxu0
      %v703 = vpop.f32.mrf.mxu0
      %v704 = vadd.f32 %v559, %v703
      %v705 = vpop.f32.mrf.mxu0
      %706 = vmatprep.mubr.bf16.mxu0 0
      %707 = vmatmul.mubr.bf16.gmra.mxu0 %v361
      %v708 = vpop.f32.mrf.mxu0
      %v709 = vadd.f32 %v564, %v708
      %v710 = vpop.f32.mrf.mxu0
      %v711 = vpop.f32.mrf.mxu0
      %v712 = vadd.f32 %v567, %v711
      %v713 = vpop.f32.mrf.mxu0
      %714 = vmatprep.mubr.bf16.mxu0 0
      %715 = vmatmul.mubr.bf16.gmra.mxu0 %v362
      %v716 = vpop.f32.mrf.mxu0
      %v717 = vadd.f32 %v572, %v716
      %v718 = vpop.f32.mrf.mxu0
      %v719 = vpop.f32.mrf.mxu0
      %v720 = vadd.f32 %v575, %v719
      %v721 = vpop.f32.mrf.mxu0
      %722 = vmatprep.mubr.bf16.mxu0 0
      %723 = vmatmul.mubr.bf16.gmra.mxu0 %v363
      %v724 = vpop.f32.mrf.mxu0
      %v725 = vadd.f32 %v580, %v724
      %v726 = vpop.f32.mrf.mxu0
      %v727 = vpop.f32.mrf.mxu0
      %v728 = vadd.f32 %v583, %v727
      %v729 = vpop.f32.mrf.mxu0
      %730 = vmatprep.mubr.bf16.mxu0 0
      %731 = vmatmul.mubr.bf16.gmra.mxu0 %v364
      %v732 = vpop.f32.mrf.mxu0
      %v733 = vadd.f32 %v588, %v732
      %v734 = vpop.f32.mrf.mxu0
      %v735 = vpop.f32.mrf.mxu0
      %v736 = vadd.f32 %v591, %v735
      %v737 = vpop.f32.mrf.mxu0
      %738 = vmatprep.mubr.bf16.mxu0 0
      %739 = vmatmul.mubr.bf16.gmra.mxu0 %v365
      %v740 = vpop.f32.mrf.mxu0
      %v741 = vadd.f32 %v596, %v740
      %v742 = vpop.f32.mrf.mxu0
      %v743 = vpop.f32.mrf.mxu0
      %v744 = vadd.f32 %v599, %v743
      %v745 = vpop.f32.mrf.mxu0
      %746 = vmatprep.mubr.bf16.mxu0 0
      %747 = vmatmul.mubr.bf16.gmra.mxu0 %v366
      %v748 = vpop.f32.mrf.mxu0
      %v749 = vadd.f32 %v604, %v748
      %v750 = vpop.f32.mrf.mxu0
      %v751 = vpop.f32.mrf.mxu0
      %v752 = vadd.f32 %v607, %v751
      %v753 = vpop.f32.mrf.mxu0
      %754 = vmatprep.mubr.bf16.mxu0 0
      %755 = vmatmul.mubr.bf16.gmra.mxu0 %v367
      %v756 = vpop.f32.mrf.mxu0
      %v757 = vadd.f32 %v612, %v756
      %v758 = vpop.f32.mrf.mxu0
      %v759 = vpop.f32.mrf.mxu0
      %v760 = vadd.f32 %v615, %v759
      %v761 = vpop.f32.mrf.mxu0
      %762 = vdwg.mxu0
      %v763 = vld [vmem:[%s287 + $0x2] sm:$0xff]
      %v764 = vld [vmem:[%s287 + $0xa] sm:$0xff]
      %v765 = vld [vmem:[%s287 + $0x1a] sm:$0xff]
      %v766 = vld [vmem:[%s287 + $0x22] sm:$0xff]
      %v767 = vld [vmem:[%s287 + $0x32] sm:$0xff]
      %v768 = vld [vmem:[%s287 + $0x3a] sm:$0xff]
      %v769 = vld [vmem:[%s287 + $0x4a] sm:$0xff]
      %v770 = vld [vmem:[%s287 + $0x52] sm:$0xff]
      %v771 = vld [vmem:[%s287 + $0x62] sm:$0xff]
      %v772 = vld [vmem:[%s287 + $0x6a] sm:$0xff]
      %v773 = vld [vmem:[%s287 + $0x7a] sm:$0xff]
      %v774 = vld [vmem:[%s287 + $0x82] sm:$0xff]
      %v775 = vld [vmem:[%s287 + $0x92] sm:$0xff]
      %v776 = vld [vmem:[%s287 + $0x9a] sm:$0xff]
      %v777 = vld [vmem:[%s287 + $0xaa] sm:$0xff]
      %v778 = vld [vmem:[%s287 + $0xb2] sm:$0xff]
      %v779 = vld [vmem:[%s304 + $0x2] sm:$0xff]
      %v780 = vld [vmem:[%s304 + $0xa] sm:$0xff]
      %v781 = vld [vmem:[%s304 + $0x1a] sm:$0xff]
      %v782 = vld [vmem:[%s304 + $0x22] sm:$0xff]
      %v783 = vld [vmem:[%s304 + $0x32] sm:$0xff]
      %v784 = vld [vmem:[%s304 + $0x3a] sm:$0xff]
      %v785 = vld [vmem:[%s304 + $0x4a] sm:$0xff]
      %v786 = vld [vmem:[%s304 + $0x52] sm:$0xff]
      %v787 = vld [vmem:[%s304 + $0x62] sm:$0xff]
      %v788 = vld [vmem:[%s304 + $0x6a] sm:$0xff]
      %v789 = vld [vmem:[%s304 + $0x7a] sm:$0xff]
      %v790 = vld [vmem:[%s304 + $0x82] sm:$0xff]
      %v791 = vld [vmem:[%s304 + $0x92] sm:$0xff]
      %v792 = vld [vmem:[%s304 + $0x9a] sm:$0xff]
      %v793 = vld [vmem:[%s304 + $0xaa] sm:$0xff]
      %v794 = vld [vmem:[%s304 + $0xb2] sm:$0xff]
      %v795 = vmul.f32 %v779, %v326
      %v796 = vmul.f32 %v780, %v326
      %v797 = vmul.f32 %v781, %v326
      %v798 = vmul.f32 %v782, %v326
      %v799 = vmul.f32 %v783, %v326
      %v800 = vmul.f32 %v784, %v326
      %v801 = vmul.f32 %v785, %v326
      %v802 = vmul.f32 %v786, %v326
      %v803 = vmul.f32 %v787, %v326
      %v804 = vmul.f32 %v788, %v326
      %v805 = vmul.f32 %v789, %v326
      %v806 = vmul.f32 %v790, %v326
      %v807 = vmul.f32 %v791, %v326
      %v808 = vmul.f32 %v792, %v326
      %v809 = vmul.f32 %v793, %v326
      %v810 = vmul.f32 %v794, %v326
      %v811 = vadd.f32 %v763, %v795
      %v812 = vadd.f32 %v764, %v796
      %v813 = vadd.f32 %v765, %v797
      %v814 = vadd.f32 %v766, %v798
      %v815 = vadd.f32 %v767, %v799
      %v816 = vadd.f32 %v768, %v800
      %v817 = vadd.f32 %v769, %v801
      %v818 = vadd.f32 %v770, %v802
      %v819 = vadd.f32 %v771, %v803
      %v820 = vadd.f32 %v772, %v804
      %v821 = vadd.f32 %v773, %v805
      %v822 = vadd.f32 %v774, %v806
      %v823 = vadd.f32 %v775, %v807
      %v824 = vadd.f32 %v776, %v808
      %v825 = vadd.f32 %v777, %v809
      %v826 = vadd.f32 %v778, %v810
      %v827 = vpack.c.bf16 %v812, %v811
      %v828 = vpack.c.bf16 %v814, %v813
      %v829 = vpack.c.bf16 %v816, %v815
      %v830 = vpack.c.bf16 %v818, %v817
      %v831 = vpack.c.bf16 %v820, %v819
      %v832 = vpack.c.bf16 %v822, %v821
      %v833 = vpack.c.bf16 %v824, %v823
      %v834 = vpack.c.bf16 %v826, %v825
      %s835 = scalar_lea.vmem %s3, 128
      %v836 = vld [vmem:[%s835] sm:$0xf]
      %v837 = vld [vmem:[%s835 + $0x4] sm:$0xf]
      %v838 = vld [vmem:[%s835 + $0x8] sm:$0xf]
      %v839 = vld [vmem:[%s835 + $0xc] sm:$0xf]
      %v840 = vld [vmem:[%s835 + $0x10] sm:$0xf]
      %v841 = vld [vmem:[%s835 + $0x14] sm:$0xf]
      %v842 = vld [vmem:[%s835 + $0x18] sm:$0xf]
      %v843 = vld [vmem:[%s835 + $0x1c] sm:$0xf]
      %v844 = vld [vmem:[%s835 + $0x20] sm:$0xf]
      %v845 = vld [vmem:[%s835 + $0x24] sm:$0xf]
      %v846 = vld [vmem:[%s835 + $0x28] sm:$0xf]
      %v847 = vld [vmem:[%s835 + $0x2c] sm:$0xf]
      %v848 = vld [vmem:[%s835 + $0x30] sm:$0xf]
      %v849 = vld [vmem:[%s835 + $0x34] sm:$0xf]
      %v850 = vld [vmem:[%s835 + $0x38] sm:$0xf]
      %v851 = vld [vmem:[%s835 + $0x3c] sm:$0xf]
      %v868 = vunpack.c.l.b16 %v836
      %v869 = vunpack.c.l.b16 %v837
      %v870 = vunpack.c.l.b16 %v838
      %v871 = vunpack.c.l.b16 %v839
      %v872 = vunpack.c.l.b16 %v840
      %v873 = vunpack.c.l.b16 %v841
      %v874 = vunpack.c.l.b16 %v842
      %v875 = vunpack.c.l.b16 %v843
      %v876 = vunpack.c.l.b16 %v844
      %v877 = vunpack.c.l.b16 %v845
      %v878 = vunpack.c.l.b16 %v846
      %v879 = vunpack.c.l.b16 %v847
      %v880 = vunpack.c.l.b16 %v848
      %v881 = vunpack.c.l.b16 %v849
      %v882 = vunpack.c.l.b16 %v850
      %v883 = vunpack.c.l.b16 %v851
      %v884 = vpack.c.b16 %v869, %v868
      %v885 = vpack.c.b16 %v871, %v870
      %v886 = vpack.c.b16 %v873, %v872
      %v887 = vpack.c.b16 %v875, %v874
      %v888 = vpack.c.b16 %v877, %v876
      %v889 = vpack.c.b16 %v879, %v878
      %v890 = vpack.c.b16 %v881, %v880
      %v891 = vpack.c.b16 %v883, %v882
      %900 = vmatprep.subr.bf16.mxu0 0
      %901 = vmatpush1.bf16.msra.mxu0 %v891
      %902 = vmatprep.subr.bf16.mxu0 0
      %903 = vmatpush1.bf16.msra.mxu0 %v890
      %904 = vmatprep.subr.bf16.mxu0 0
      %905 = vmatpush1.bf16.msra.mxu0 %v889
      %906 = vmatprep.subr.bf16.mxu0 0
      %907 = vmatpush1.bf16.msra.mxu0 %v888
      %908 = vmatprep.subr.bf16.mxu0 0
      %909 = vmatpush1.bf16.msra.mxu0 %v887
      %910 = vmatprep.subr.bf16.mxu0 0
      %911 = vmatpush1.bf16.msra.mxu0 %v886
      %912 = vmatprep.subr.bf16.mxu0 0
      %913 = vmatpush1.bf16.msra.mxu0 %v885
      %914 = vmatprep.subr.bf16.mxu0 0
      %915 = vmatpush1.bf16.msra.mxu0 %v884
      %916 = vmatprep.subr.bf16.mxu0 0
      %917 = vmatpush2.bf16.msra.mxu0 0
      %918 = vmatprep.subr.bf16.mxu0 0
      %919 = vmatpush2.bf16.msra.mxu0 0
      %920 = vmatprep.subr.bf16.mxu0 0
      %921 = vmatpush2.bf16.msra.mxu0 0
      %922 = vmatprep.subr.bf16.mxu0 0
      %923 = vmatpush2.bf16.msra.mxu0 0
      %924 = vmatprep.subr.bf16.mxu0 0
      %925 = vmatpush2.bf16.msra.mxu0 0
      %926 = vmatprep.subr.bf16.mxu0 0
      %927 = vmatpush2.bf16.msra.mxu0 0
      %928 = vmatprep.subr.bf16.mxu0 0
      %929 = vmatpush2.bf16.msra.mxu0 0
      %930 = vmatprep.subr.bf16.mxu0 0
      %931 = vmatpush2.bf16.msra.mxu0 0
      %932 = vmatprep.mubr.bf16.mxu0 0
      %933 = vmatmul.mubr.bf16.gmra.mxu0 %v827
      %v934 = vpop.f32.mrf.mxu0
      %v935 = vadd.f32 0.0, %v934
      %v936 = vpop.f32.mrf.mxu0
      %v937 = vpop.f32.mrf.mxu0
      %v938 = vadd.f32 0.0, %v937
      %v939 = vpop.f32.mrf.mxu0
      %940 = vmatprep.mubr.bf16.mxu0 0
      %941 = vmatmul.mubr.bf16.gmra.mxu0 %v828
      %v942 = vpop.f32.mrf.mxu0
      %v943 = vadd.f32 0.0, %v942
      %v944 = vpop.f32.mrf.mxu0
      %v945 = vpop.f32.mrf.mxu0
      %v946 = vadd.f32 0.0, %v945
      %v947 = vpop.f32.mrf.mxu0
      %948 = vmatprep.mubr.bf16.mxu0 0
      %949 = vmatmul.mubr.bf16.gmra.mxu0 %v829
      %v950 = vpop.f32.mrf.mxu0
      %v951 = vadd.f32 0.0, %v950
      %v952 = vpop.f32.mrf.mxu0
      %v953 = vpop.f32.mrf.mxu0
      %v954 = vadd.f32 0.0, %v953
      %v955 = vpop.f32.mrf.mxu0
      %956 = vmatprep.mubr.bf16.mxu0 0
      %957 = vmatmul.mubr.bf16.gmra.mxu0 %v830
      %v958 = vpop.f32.mrf.mxu0
      %v959 = vadd.f32 0.0, %v958
      %v960 = vpop.f32.mrf.mxu0
      %v961 = vpop.f32.mrf.mxu0
      %v962 = vadd.f32 0.0, %v961
      %v963 = vpop.f32.mrf.mxu0
      %964 = vmatprep.mubr.bf16.mxu0 0
      %965 = vmatmul.mubr.bf16.gmra.mxu0 %v831
      %v966 = vpop.f32.mrf.mxu0
      %v967 = vadd.f32 0.0, %v966
      %v968 = vpop.f32.mrf.mxu0
      %v969 = vpop.f32.mrf.mxu0
      %v970 = vadd.f32 0.0, %v969
      %v971 = vpop.f32.mrf.mxu0
      %972 = vmatprep.mubr.bf16.mxu0 0
      %973 = vmatmul.mubr.bf16.gmra.mxu0 %v832
      %v974 = vpop.f32.mrf.mxu0
      %v975 = vadd.f32 0.0, %v974
      %v976 = vpop.f32.mrf.mxu0
      %v977 = vpop.f32.mrf.mxu0
      %v978 = vadd.f32 0.0, %v977
      %v979 = vpop.f32.mrf.mxu0
      %980 = vmatprep.mubr.bf16.mxu0 0
      %981 = vmatmul.mubr.bf16.gmra.mxu0 %v833
      %v982 = vpop.f32.mrf.mxu0
      %v983 = vadd.f32 0.0, %v982
      %v984 = vpop.f32.mrf.mxu0
      %v985 = vpop.f32.mrf.mxu0
      %v986 = vadd.f32 0.0, %v985
      %v987 = vpop.f32.mrf.mxu0
      %988 = vmatprep.mubr.bf16.mxu0 0
      %989 = vmatmul.mubr.bf16.gmra.mxu0 %v834
      %v990 = vpop.f32.mrf.mxu0
      %v991 = vadd.f32 0.0, %v990
      %v992 = vpop.f32.mrf.mxu0
      %v993 = vpop.f32.mrf.mxu0
      %v994 = vadd.f32 0.0, %v993
      %v995 = vpop.f32.mrf.mxu0
      %996 = vdwg.mxu0
      %v997 = vadd.f32 %v701, %v935
      %v998 = vadd.f32 %v704, %v938
      %v999 = vadd.f32 %v709, %v943
      %v1000 = vadd.f32 %v712, %v946
      %v1001 = vadd.f32 %v717, %v951
      %v1002 = vadd.f32 %v720, %v954
      %v1003 = vadd.f32 %v725, %v959
      %v1004 = vadd.f32 %v728, %v962
      %v1005 = vadd.f32 %v733, %v967
      %v1006 = vadd.f32 %v736, %v970
      %v1007 = vadd.f32 %v741, %v975
      %v1008 = vadd.f32 %v744, %v978
      %v1009 = vadd.f32 %v749, %v983
      %v1010 = vadd.f32 %v752, %v986
      %v1011 = vadd.f32 %v757, %v991
      %v1012 = vadd.f32 %v760, %v994
      %s1013 = sadd.s32 %s285, 1
      %s1014 = smul.u32 %s1013, 24
      %s1015 = scalar_lea.vmem %s264, %s1014
      %v1016 = vld [vmem:[%s1015] sm:$0xff]
      %v1017 = vld [vmem:[%s1015 + $0x8] sm:$0xff]
      %v1018 = vld [vmem:[%s1015 + $0x18] sm:$0xff]
      %v1019 = vld [vmem:[%s1015 + $0x20] sm:$0xff]
      %v1020 = vld [vmem:[%s1015 + $0x30] sm:$0xff]
      %v1021 = vld [vmem:[%s1015 + $0x38] sm:$0xff]
      %v1022 = vld [vmem:[%s1015 + $0x48] sm:$0xff]
      %v1023 = vld [vmem:[%s1015 + $0x50] sm:$0xff]
      %v1024 = vld [vmem:[%s1015 + $0x60] sm:$0xff]
      %v1025 = vld [vmem:[%s1015 + $0x68] sm:$0xff]
      %v1026 = vld [vmem:[%s1015 + $0x78] sm:$0xff]
      %v1027 = vld [vmem:[%s1015 + $0x80] sm:$0xff]
      %v1028 = vld [vmem:[%s1015 + $0x90] sm:$0xff]
      %v1029 = vld [vmem:[%s1015 + $0x98] sm:$0xff]
      %v1030 = vld [vmem:[%s1015 + $0xa8] sm:$0xff]
      %v1031 = vld [vmem:[%s1015 + $0xb0] sm:$0xff]
      %s1032 = scalar_lea.vmem %s269, %s1014
      %v1033 = vld [vmem:[%s1032] sm:$0xff]
      %v1034 = vld [vmem:[%s1032 + $0x8] sm:$0xff]
      %v1035 = vld [vmem:[%s1032 + $0x18] sm:$0xff]
      %v1036 = vld [vmem:[%s1032 + $0x20] sm:$0xff]
      %v1037 = vld [vmem:[%s1032 + $0x30] sm:$0xff]
      %v1038 = vld [vmem:[%s1032 + $0x38] sm:$0xff]
      %v1039 = vld [vmem:[%s1032 + $0x48] sm:$0xff]
      %v1040 = vld [vmem:[%s1032 + $0x50] sm:$0xff]
      %v1041 = vld [vmem:[%s1032 + $0x60] sm:$0xff]
      %v1042 = vld [vmem:[%s1032 + $0x68] sm:$0xff]
      %v1043 = vld [vmem:[%s1032 + $0x78] sm:$0xff]
      %v1044 = vld [vmem:[%s1032 + $0x80] sm:$0xff]
      %v1045 = vld [vmem:[%s1032 + $0x90] sm:$0xff]
      %v1046 = vld [vmem:[%s1032 + $0x98] sm:$0xff]
      %v1047 = vld [vmem:[%s1032 + $0xa8] sm:$0xff]
      %v1048 = vld [vmem:[%s1032 + $0xb0] sm:$0xff]
      %v1049 = vmul.f32 %v1033, %v326
      %v1050 = vmul.f32 %v1034, %v326
      %v1051 = vmul.f32 %v1035, %v326
      %v1052 = vmul.f32 %v1036, %v326
      %v1053 = vmul.f32 %v1037, %v326
      %v1054 = vmul.f32 %v1038, %v326
      %v1055 = vmul.f32 %v1039, %v326
      %v1056 = vmul.f32 %v1040, %v326
      %v1057 = vmul.f32 %v1041, %v326
      %v1058 = vmul.f32 %v1042, %v326
      %v1059 = vmul.f32 %v1043, %v326
      %v1060 = vmul.f32 %v1044, %v326
      %v1061 = vmul.f32 %v1045, %v326
      %v1062 = vmul.f32 %v1046, %v326
      %v1063 = vmul.f32 %v1047, %v326
      %v1064 = vmul.f32 %v1048, %v326
      %v1065 = vadd.f32 %v1016, %v1049
      %v1066 = vadd.f32 %v1017, %v1050
      %v1067 = vadd.f32 %v1018, %v1051
      %v1068 = vadd.f32 %v1019, %v1052
      %v1069 = vadd.f32 %v1020, %v1053
      %v1070 = vadd.f32 %v1021, %v1054
      %v1071 = vadd.f32 %v1022, %v1055
      %v1072 = vadd.f32 %v1023, %v1056
      %v1073 = vadd.f32 %v1024, %v1057
      %v1074 = vadd.f32 %v1025, %v1058
      %v1075 = vadd.f32 %v1026, %v1059
      %v1076 = vadd.f32 %v1027, %v1060
      %v1077 = vadd.f32 %v1028, %v1061
      %v1078 = vadd.f32 %v1029, %v1062
      %v1079 = vadd.f32 %v1030, %v1063
      %v1080 = vadd.f32 %v1031, %v1064
      %v1081 = vpack.c.bf16 %v1066, %v1065
      %v1082 = vpack.c.bf16 %v1068, %v1067
      %v1083 = vpack.c.bf16 %v1070, %v1069
      %v1084 = vpack.c.bf16 %v1072, %v1071
      %v1085 = vpack.c.bf16 %v1074, %v1073
      %v1086 = vpack.c.bf16 %v1076, %v1075
      %v1087 = vpack.c.bf16 %v1078, %v1077
      %v1088 = vpack.c.bf16 %v1080, %v1079
      %s1089 = scalar_lea.vmem %s3, 192
      %v1090 = vld [vmem:[%s1089] sm:$0xf]
      %v1091 = vld [vmem:[%s1089 + $0x4] sm:$0xf]
      %v1092 = vld [vmem:[%s1089 + $0x8] sm:$0xf]
      %v1093 = vld [vmem:[%s1089 + $0xc] sm:$0xf]
      %v1094 = vld [vmem:[%s1089 + $0x10] sm:$0xf]
      %v1095 = vld [vmem:[%s1089 + $0x14] sm:$0xf]
      %v1096 = vld [vmem:[%s1089 + $0x18] sm:$0xf]
      %v1097 = vld [vmem:[%s1089 + $0x1c] sm:$0xf]
      %v1098 = vld [vmem:[%s1089 + $0x20] sm:$0xf]
      %v1099 = vld [vmem:[%s1089 + $0x24] sm:$0xf]
      %v1100 = vld [vmem:[%s1089 + $0x28] sm:$0xf]
      %v1101 = vld [vmem:[%s1089 + $0x2c] sm:$0xf]
      %v1102 = vld [vmem:[%s1089 + $0x30] sm:$0xf]
      %v1103 = vld [vmem:[%s1089 + $0x34] sm:$0xf]
      %v1104 = vld [vmem:[%s1089 + $0x38] sm:$0xf]
      %v1105 = vld [vmem:[%s1089 + $0x3c] sm:$0xf]
      %v1122 = vunpack.c.l.b16 %v1090
      %v1123 = vunpack.c.l.b16 %v1091
      %v1124 = vunpack.c.l.b16 %v1092
      %v1125 = vunpack.c.l.b16 %v1093
      %v1126 = vunpack.c.l.b16 %v1094
      %v1127 = vunpack.c.l.b16 %v1095
      %v1128 = vunpack.c.l.b16 %v1096
      %v1129 = vunpack.c.l.b16 %v1097
      %v1130 = vunpack.c.l.b16 %v1098
      %v1131 = vunpack.c.l.b16 %v1099
      %v1132 = vunpack.c.l.b16 %v1100
      %v1133 = vunpack.c.l.b16 %v1101
      %v1134 = vunpack.c.l.b16 %v1102
      %v1135 = vunpack.c.l.b16 %v1103
      %v1136 = vunpack.c.l.b16 %v1104
      %v1137 = vunpack.c.l.b16 %v1105
      %v1138 = vpack.c.b16 %v1123, %v1122
      %v1139 = vpack.c.b16 %v1125, %v1124
      %v1140 = vpack.c.b16 %v1127, %v1126
      %v1141 = vpack.c.b16 %v1129, %v1128
      %v1142 = vpack.c.b16 %v1131, %v1130
      %v1143 = vpack.c.b16 %v1133, %v1132
      %v1144 = vpack.c.b16 %v1135, %v1134
      %v1145 = vpack.c.b16 %v1137, %v1136
      %1154 = vmatprep.subr.bf16.mxu0 0
      %1155 = vmatpush1.bf16.msra.mxu0 %v1145
      %1156 = vmatprep.subr.bf16.mxu0 0
      %1157 = vmatpush1.bf16.msra.mxu0 %v1144
      %1158 = vmatprep.subr.bf16.mxu0 0
      %1159 = vmatpush1.bf16.msra.mxu0 %v1143
      %1160 = vmatprep.subr.bf16.mxu0 0
      %1161 = vmatpush1.bf16.msra.mxu0 %v1142
      %1162 = vmatprep.subr.bf16.mxu0 0
      %1163 = vmatpush1.bf16.msra.mxu0 %v1141
      %1164 = vmatprep.subr.bf16.mxu0 0
      %1165 = vmatpush1.bf16.msra.mxu0 %v1140
      %1166 = vmatprep.subr.bf16.mxu0 0
      %1167 = vmatpush1.bf16.msra.mxu0 %v1139
      %1168 = vmatprep.subr.bf16.mxu0 0
      %1169 = vmatpush1.bf16.msra.mxu0 %v1138
      %1170 = vmatprep.subr.bf16.mxu0 0
      %1171 = vmatpush2.bf16.msra.mxu0 0
      %1172 = vmatprep.subr.bf16.mxu0 0
      %1173 = vmatpush2.bf16.msra.mxu0 0
      %1174 = vmatprep.subr.bf16.mxu0 0
      %1175 = vmatpush2.bf16.msra.mxu0 0
      %1176 = vmatprep.subr.bf16.mxu0 0
      %1177 = vmatpush2.bf16.msra.mxu0 0
      %1178 = vmatprep.subr.bf16.mxu0 0
      %1179 = vmatpush2.bf16.msra.mxu0 0
      %1180 = vmatprep.subr.bf16.mxu0 0
      %1181 = vmatpush2.bf16.msra.mxu0 0
      %1182 = vmatprep.subr.bf16.mxu0 0
      %1183 = vmatpush2.bf16.msra.mxu0 0
      %1184 = vmatprep.subr.bf16.mxu0 0
      %1185 = vmatpush2.bf16.msra.mxu0 0
      %1186 = vmatprep.mubr.bf16.mxu0 0
      %1187 = vmatmul.mubr.bf16.gmra.mxu0 %v1081
      %v1188 = vpop.f32.mrf.mxu0
      %v1189 = vadd.f32 0.0, %v1188
      %v1190 = vpop.f32.mrf.mxu0
      %v1191 = vpop.f32.mrf.mxu0
      %v1192 = vadd.f32 0.0, %v1191
      %v1193 = vpop.f32.mrf.mxu0
      %1194 = vmatprep.mubr.bf16.mxu0 0
      %1195 = vmatmul.mubr.bf16.gmra.mxu0 %v1082
      %v1196 = vpop.f32.mrf.mxu0
      %v1197 = vadd.f32 0.0, %v1196
      %v1198 = vpop.f32.mrf.mxu0
      %v1199 = vpop.f32.mrf.mxu0
      %v1200 = vadd.f32 0.0, %v1199
      %v1201 = vpop.f32.mrf.mxu0
      %1202 = vmatprep.mubr.bf16.mxu0 0
      %1203 = vmatmul.mubr.bf16.gmra.mxu0 %v1083
      %v1204 = vpop.f32.mrf.mxu0
      %v1205 = vadd.f32 0.0, %v1204
      %v1206 = vpop.f32.mrf.mxu0
      %v1207 = vpop.f32.mrf.mxu0
      %v1208 = vadd.f32 0.0, %v1207
      %v1209 = vpop.f32.mrf.mxu0
      %1210 = vmatprep.mubr.bf16.mxu0 0
      %1211 = vmatmul.mubr.bf16.gmra.mxu0 %v1084
      %v1212 = vpop.f32.mrf.mxu0
      %v1213 = vadd.f32 0.0, %v1212
      %v1214 = vpop.f32.mrf.mxu0
      %v1215 = vpop.f32.mrf.mxu0
      %v1216 = vadd.f32 0.0, %v1215
      %v1217 = vpop.f32.mrf.mxu0
      %1218 = vmatprep.mubr.bf16.mxu0 0
      %1219 = vmatmul.mubr.bf16.gmra.mxu0 %v1085
      %v1220 = vpop.f32.mrf.mxu0
      %v1221 = vadd.f32 0.0, %v1220
      %v1222 = vpop.f32.mrf.mxu0
      %v1223 = vpop.f32.mrf.mxu0
      %v1224 = vadd.f32 0.0, %v1223
      %v1225 = vpop.f32.mrf.mxu0
      %1226 = vmatprep.mubr.bf16.mxu0 0
      %1227 = vmatmul.mubr.bf16.gmra.mxu0 %v1086
      %v1228 = vpop.f32.mrf.mxu0
      %v1229 = vadd.f32 0.0, %v1228
      %v1230 = vpop.f32.mrf.mxu0
      %v1231 = vpop.f32.mrf.mxu0
      %v1232 = vadd.f32 0.0, %v1231
      %v1233 = vpop.f32.mrf.mxu0
      %1234 = vmatprep.mubr.bf16.mxu0 0
      %1235 = vmatmul.mubr.bf16.gmra.mxu0 %v1087
      %v1236 = vpop.f32.mrf.mxu0
      %v1237 = vadd.f32 0.0, %v1236
      %v1238 = vpop.f32.mrf.mxu0
      %v1239 = vpop.f32.mrf.mxu0
      %v1240 = vadd.f32 0.0, %v1239
      %v1241 = vpop.f32.mrf.mxu0
      %1242 = vmatprep.mubr.bf16.mxu0 0
      %1243 = vmatmul.mubr.bf16.gmra.mxu0 %v1088
      %v1244 = vpop.f32.mrf.mxu0
      %v1245 = vadd.f32 0.0, %v1244
      %v1246 = vpop.f32.mrf.mxu0
      %v1247 = vpop.f32.mrf.mxu0
      %v1248 = vadd.f32 0.0, %v1247
      %v1249 = vpop.f32.mrf.mxu0
      %1250 = vdwg.mxu0
      %v1251 = vadd.f32 %v997, %v1189
      %v1252 = vadd.f32 %v998, %v1192
      %v1253 = vadd.f32 %v999, %v1197
      %v1254 = vadd.f32 %v1000, %v1200
      %v1255 = vadd.f32 %v1001, %v1205
      %v1256 = vadd.f32 %v1002, %v1208
      %v1257 = vadd.f32 %v1003, %v1213
      %v1258 = vadd.f32 %v1004, %v1216
      %v1259 = vadd.f32 %v1005, %v1221
      %v1260 = vadd.f32 %v1006, %v1224
      %v1261 = vadd.f32 %v1007, %v1229
      %v1262 = vadd.f32 %v1008, %v1232
      %v1263 = vadd.f32 %v1009, %v1237
      %v1264 = vadd.f32 %v1010, %v1240
      %v1265 = vadd.f32 %v1011, %v1245
      %v1266 = vadd.f32 %v1012, %v1248
      %v1267 = vld [vmem:[%s1015 + $0x1] sm:$0xff]
      %v1268 = vld [vmem:[%s1015 + $0x9] sm:$0xff]
      %v1269 = vld [vmem:[%s1015 + $0x19] sm:$0xff]
      %v1270 = vld [vmem:[%s1015 + $0x21] sm:$0xff]
      %v1271 = vld [vmem:[%s1015 + $0x31] sm:$0xff]
      %v1272 = vld [vmem:[%s1015 + $0x39] sm:$0xff]
      %v1273 = vld [vmem:[%s1015 + $0x49] sm:$0xff]
      %v1274 = vld [vmem:[%s1015 + $0x51] sm:$0xff]
      %v1275 = vld [vmem:[%s1015 + $0x61] sm:$0xff]
      %v1276 = vld [vmem:[%s1015 + $0x69] sm:$0xff]
      %v1277 = vld [vmem:[%s1015 + $0x79] sm:$0xff]
      %v1278 = vld [vmem:[%s1015 + $0x81] sm:$0xff]
      %v1279 = vld [vmem:[%s1015 + $0x91] sm:$0xff]
      %v1280 = vld [vmem:[%s1015 + $0x99] sm:$0xff]
      %v1281 = vld [vmem:[%s1015 + $0xa9] sm:$0xff]
      %v1282 = vld [vmem:[%s1015 + $0xb1] sm:$0xff]
      %v1283 = vld [vmem:[%s1032 + $0x1] sm:$0xff]
      %v1284 = vld [vmem:[%s1032 + $0x9] sm:$0xff]
      %v1285 = vld [vmem:[%s1032 + $0x19] sm:$0xff]
      %v1286 = vld [vmem:[%s1032 + $0x21] sm:$0xff]
      %v1287 = vld [vmem:[%s1032 + $0x31] sm:$0xff]
      %v1288 = vld [vmem:[%s1032 + $0x39] sm:$0xff]
      %v1289 = vld [vmem:[%s1032 + $0x49] sm:$0xff]
      %v1290 = vld [vmem:[%s1032 + $0x51] sm:$0xff]
      %v1291 = vld [vmem:[%s1032 + $0x61] sm:$0xff]
      %v1292 = vld [vmem:[%s1032 + $0x69] sm:$0xff]
      %v1293 = vld [vmem:[%s1032 + $0x79] sm:$0xff]
      %v1294 = vld [vmem:[%s1032 + $0x81] sm:$0xff]
      %v1295 = vld [vmem:[%s1032 + $0x91] sm:$0xff]
      %v1296 = vld [vmem:[%s1032 + $0x99] sm:$0xff]
      %v1297 = vld [vmem:[%s1032 + $0xa9] sm:$0xff]
      %v1298 = vld [vmem:[%s1032 + $0xb1] sm:$0xff]
      %v1299 = vmul.f32 %v1283, %v326
      %v1300 = vmul.f32 %v1284, %v326
      %v1301 = vmul.f32 %v1285, %v326
      %v1302 = vmul.f32 %v1286, %v326
      %v1303 = vmul.f32 %v1287, %v326
      %v1304 = vmul.f32 %v1288, %v326
      %v1305 = vmul.f32 %v1289, %v326
      %v1306 = vmul.f32 %v1290, %v326
      %v1307 = vmul.f32 %v1291, %v326
      %v1308 = vmul.f32 %v1292, %v326
      %v1309 = vmul.f32 %v1293, %v326
      %v1310 = vmul.f32 %v1294, %v326
      %v1311 = vmul.f32 %v1295, %v326
      %v1312 = vmul.f32 %v1296, %v326
      %v1313 = vmul.f32 %v1297, %v326
      %v1314 = vmul.f32 %v1298, %v326
      %v1315 = vadd.f32 %v1267, %v1299
      %v1316 = vadd.f32 %v1268, %v1300
      %v1317 = vadd.f32 %v1269, %v1301
      %v1318 = vadd.f32 %v1270, %v1302
      %v1319 = vadd.f32 %v1271, %v1303
      %v1320 = vadd.f32 %v1272, %v1304
      %v1321 = vadd.f32 %v1273, %v1305
      %v1322 = vadd.f32 %v1274, %v1306
      %v1323 = vadd.f32 %v1275, %v1307
      %v1324 = vadd.f32 %v1276, %v1308
      %v1325 = vadd.f32 %v1277, %v1309
      %v1326 = vadd.f32 %v1278, %v1310
      %v1327 = vadd.f32 %v1279, %v1311
      %v1328 = vadd.f32 %v1280, %v1312
      %v1329 = vadd.f32 %v1281, %v1313
      %v1330 = vadd.f32 %v1282, %v1314
      %v1331 = vpack.c.bf16 %v1316, %v1315
      %v1332 = vpack.c.bf16 %v1318, %v1317
      %v1333 = vpack.c.bf16 %v1320, %v1319
      %v1334 = vpack.c.bf16 %v1322, %v1321
      %v1335 = vpack.c.bf16 %v1324, %v1323
      %v1336 = vpack.c.bf16 %v1326, %v1325
      %v1337 = vpack.c.bf16 %v1328, %v1327
      %v1338 = vpack.c.bf16 %v1330, %v1329
      %s1339 = scalar_lea.vmem %s3, 256
      %v1340 = vld [vmem:[%s1339] sm:$0xf]
      %v1341 = vld [vmem:[%s1339 + $0x4] sm:$0xf]
      %v1342 = vld [vmem:[%s1339 + $0x8] sm:$0xf]
      %v1343 = vld [vmem:[%s1339 + $0xc] sm:$0xf]
      %v1344 = vld [vmem:[%s1339 + $0x10] sm:$0xf]
      %v1345 = vld [vmem:[%s1339 + $0x14] sm:$0xf]
      %v1346 = vld [vmem:[%s1339 + $0x18] sm:$0xf]
      %v1347 = vld [vmem:[%s1339 + $0x1c] sm:$0xf]
      %v1348 = vld [vmem:[%s1339 + $0x20] sm:$0xf]
      %v1349 = vld [vmem:[%s1339 + $0x24] sm:$0xf]
      %v1350 = vld [vmem:[%s1339 + $0x28] sm:$0xf]
      %v1351 = vld [vmem:[%s1339 + $0x2c] sm:$0xf]
      %v1352 = vld [vmem:[%s1339 + $0x30] sm:$0xf]
      %v1353 = vld [vmem:[%s1339 + $0x34] sm:$0xf]
      %v1354 = vld [vmem:[%s1339 + $0x38] sm:$0xf]
      %v1355 = vld [vmem:[%s1339 + $0x3c] sm:$0xf]
      %v1372 = vunpack.c.l.b16 %v1340
      %v1373 = vunpack.c.l.b16 %v1341
      %v1374 = vunpack.c.l.b16 %v1342
      %v1375 = vunpack.c.l.b16 %v1343
      %v1376 = vunpack.c.l.b16 %v1344
      %v1377 = vunpack.c.l.b16 %v1345
      %v1378 = vunpack.c.l.b16 %v1346
      %v1379 = vunpack.c.l.b16 %v1347
      %v1380 = vunpack.c.l.b16 %v1348
      %v1381 = vunpack.c.l.b16 %v1349
      %v1382 = vunpack.c.l.b16 %v1350
      %v1383 = vunpack.c.l.b16 %v1351
      %v1384 = vunpack.c.l.b16 %v1352
      %v1385 = vunpack.c.l.b16 %v1353
      %v1386 = vunpack.c.l.b16 %v1354
      %v1387 = vunpack.c.l.b16 %v1355
      %v1388 = vpack.c.b16 %v1373, %v1372
      %v1389 = vpack.c.b16 %v1375, %v1374
      %v1390 = vpack.c.b16 %v1377, %v1376
      %v1391 = vpack.c.b16 %v1379, %v1378
      %v1392 = vpack.c.b16 %v1381, %v1380
      %v1393 = vpack.c.b16 %v1383, %v1382
      %v1394 = vpack.c.b16 %v1385, %v1384
      %v1395 = vpack.c.b16 %v1387, %v1386
      %1404 = vmatprep.subr.bf16.mxu0 0
      %1405 = vmatpush1.bf16.msra.mxu0 %v1395
      %1406 = vmatprep.subr.bf16.mxu0 0
      %1407 = vmatpush1.bf16.msra.mxu0 %v1394
      %1408 = vmatprep.subr.bf16.mxu0 0
      %1409 = vmatpush1.bf16.msra.mxu0 %v1393
      %1410 = vmatprep.subr.bf16.mxu0 0
      %1411 = vmatpush1.bf16.msra.mxu0 %v1392
      %1412 = vmatprep.subr.bf16.mxu0 0
      %1413 = vmatpush1.bf16.msra.mxu0 %v1391
      %1414 = vmatprep.subr.bf16.mxu0 0
      %1415 = vmatpush1.bf16.msra.mxu0 %v1390
      %1416 = vmatprep.subr.bf16.mxu0 0
      %1417 = vmatpush1.bf16.msra.mxu0 %v1389
      %1418 = vmatprep.subr.bf16.mxu0 0
      %1419 = vmatpush1.bf16.msra.mxu0 %v1388
      %1420 = vmatprep.subr.bf16.mxu0 0
      %1421 = vmatpush2.bf16.msra.mxu0 0
      %1422 = vmatprep.subr.bf16.mxu0 0
      %1423 = vmatpush2.bf16.msra.mxu0 0
      %1424 = vmatprep.subr.bf16.mxu0 0
      %1425 = vmatpush2.bf16.msra.mxu0 0
      %1426 = vmatprep.subr.bf16.mxu0 0
      %1427 = vmatpush2.bf16.msra.mxu0 0
      %1428 = vmatprep.subr.bf16.mxu0 0
      %1429 = vmatpush2.bf16.msra.mxu0 0
      %1430 = vmatprep.subr.bf16.mxu0 0
      %1431 = vmatpush2.bf16.msra.mxu0 0
      %1432 = vmatprep.subr.bf16.mxu0 0
      %1433 = vmatpush2.bf16.msra.mxu0 0
      %1434 = vmatprep.subr.bf16.mxu0 0
      %1435 = vmatpush2.bf16.msra.mxu0 0
      %1436 = vmatprep.mubr.bf16.mxu0 0
      %1437 = vmatmul.mubr.bf16.gmra.mxu0 %v1331
      %v1438 = vpop.f32.mrf.mxu0
      %v1439 = vadd.f32 0.0, %v1438
      %v1440 = vpop.f32.mrf.mxu0
      %v1441 = vpop.f32.mrf.mxu0
      %v1442 = vadd.f32 0.0, %v1441
      %v1443 = vpop.f32.mrf.mxu0
      %1444 = vmatprep.mubr.bf16.mxu0 0
      %1445 = vmatmul.mubr.bf16.gmra.mxu0 %v1332
      %v1446 = vpop.f32.mrf.mxu0
      %v1447 = vadd.f32 0.0, %v1446
      %v1448 = vpop.f32.mrf.mxu0
      %v1449 = vpop.f32.mrf.mxu0
      %v1450 = vadd.f32 0.0, %v1449
      %v1451 = vpop.f32.mrf.mxu0
      %1452 = vmatprep.mubr.bf16.mxu0 0
      %1453 = vmatmul.mubr.bf16.gmra.mxu0 %v1333
      %v1454 = vpop.f32.mrf.mxu0
      %v1455 = vadd.f32 0.0, %v1454
      %v1456 = vpop.f32.mrf.mxu0
      %v1457 = vpop.f32.mrf.mxu0
      %v1458 = vadd.f32 0.0, %v1457
      %v1459 = vpop.f32.mrf.mxu0
      %1460 = vmatprep.mubr.bf16.mxu0 0
      %1461 = vmatmul.mubr.bf16.gmra.mxu0 %v1334
      %v1462 = vpop.f32.mrf.mxu0
      %v1463 = vadd.f32 0.0, %v1462
      %v1464 = vpop.f32.mrf.mxu0
      %v1465 = vpop.f32.mrf.mxu0
      %v1466 = vadd.f32 0.0, %v1465
      %v1467 = vpop.f32.mrf.mxu0
      %1468 = vmatprep.mubr.bf16.mxu0 0
      %1469 = vmatmul.mubr.bf16.gmra.mxu0 %v1335
      %v1470 = vpop.f32.mrf.mxu0
      %v1471 = vadd.f32 0.0, %v1470
      %v1472 = vpop.f32.mrf.mxu0
      %v1473 = vpop.f32.mrf.mxu0
      %v1474 = vadd.f32 0.0, %v1473
      %v1475 = vpop.f32.mrf.mxu0
      %1476 = vmatprep.mubr.bf16.mxu0 0
      %1477 = vmatmul.mubr.bf16.gmra.mxu0 %v1336
      %v1478 = vpop.f32.mrf.mxu0
      %v1479 = vadd.f32 0.0, %v1478
      %v1480 = vpop.f32.mrf.mxu0
      %v1481 = vpop.f32.mrf.mxu0
      %v1482 = vadd.f32 0.0, %v1481
      %v1483 = vpop.f32.mrf.mxu0
      %1484 = vmatprep.mubr.bf16.mxu0 0
      %1485 = vmatmul.mubr.bf16.gmra.mxu0 %v1337
      %v1486 = vpop.f32.mrf.mxu0
      %v1487 = vadd.f32 0.0, %v1486
      %v1488 = vpop.f32.mrf.mxu0
      %v1489 = vpop.f32.mrf.mxu0
      %v1490 = vadd.f32 0.0, %v1489
      %v1491 = vpop.f32.mrf.mxu0
      %1492 = vmatprep.mubr.bf16.mxu0 0
      %1493 = vmatmul.mubr.bf16.gmra.mxu0 %v1338
      %v1494 = vpop.f32.mrf.mxu0
      %v1495 = vadd.f32 0.0, %v1494
      %v1496 = vpop.f32.mrf.mxu0
      %v1497 = vpop.f32.mrf.mxu0
      %v1498 = vadd.f32 0.0, %v1497
      %v1499 = vpop.f32.mrf.mxu0
      %1500 = vdwg.mxu0
      %v1501 = vadd.f32 %v1251, %v1439
      %v1502 = vadd.f32 %v1252, %v1442
      %v1503 = vadd.f32 %v1253, %v1447
      %v1504 = vadd.f32 %v1254, %v1450
      %v1505 = vadd.f32 %v1255, %v1455
      %v1506 = vadd.f32 %v1256, %v1458
      %v1507 = vadd.f32 %v1257, %v1463
      %v1508 = vadd.f32 %v1258, %v1466
      %v1509 = vadd.f32 %v1259, %v1471
      %v1510 = vadd.f32 %v1260, %v1474
      %v1511 = vadd.f32 %v1261, %v1479
      %v1512 = vadd.f32 %v1262, %v1482
      %v1513 = vadd.f32 %v1263, %v1487
      %v1514 = vadd.f32 %v1264, %v1490
      %v1515 = vadd.f32 %v1265, %v1495
      %v1516 = vadd.f32 %v1266, %v1498
      %v1517 = vld [vmem:[%s1015 + $0x2] sm:$0xff]
      %v1518 = vld [vmem:[%s1015 + $0xa] sm:$0xff]
      %v1519 = vld [vmem:[%s1015 + $0x1a] sm:$0xff]
      %v1520 = vld [vmem:[%s1015 + $0x22] sm:$0xff]
      %v1521 = vld [vmem:[%s1015 + $0x32] sm:$0xff]
      %v1522 = vld [vmem:[%s1015 + $0x3a] sm:$0xff]
      %v1523 = vld [vmem:[%s1015 + $0x4a] sm:$0xff]
      %v1524 = vld [vmem:[%s1015 + $0x52] sm:$0xff]
      %v1525 = vld [vmem:[%s1015 + $0x62] sm:$0xff]
      %v1526 = vld [vmem:[%s1015 + $0x6a] sm:$0xff]
      %v1527 = vld [vmem:[%s1015 + $0x7a] sm:$0xff]
      %v1528 = vld [vmem:[%s1015 + $0x82] sm:$0xff]
      %v1529 = vld [vmem:[%s1015 + $0x92] sm:$0xff]
      %v1530 = vld [vmem:[%s1015 + $0x9a] sm:$0xff]
      %v1531 = vld [vmem:[%s1015 + $0xaa] sm:$0xff]
      %v1532 = vld [vmem:[%s1015 + $0xb2] sm:$0xff]
      %v1533 = vld [vmem:[%s1032 + $0x2] sm:$0xff]
      %v1534 = vld [vmem:[%s1032 + $0xa] sm:$0xff]
      %v1535 = vld [vmem:[%s1032 + $0x1a] sm:$0xff]
      %v1536 = vld [vmem:[%s1032 + $0x22] sm:$0xff]
      %v1537 = vld [vmem:[%s1032 + $0x32] sm:$0xff]
      %v1538 = vld [vmem:[%s1032 + $0x3a] sm:$0xff]
      %v1539 = vld [vmem:[%s1032 + $0x4a] sm:$0xff]
      %v1540 = vld [vmem:[%s1032 + $0x52] sm:$0xff]
      %v1541 = vld [vmem:[%s1032 + $0x62] sm:$0xff]
      %v1542 = vld [vmem:[%s1032 + $0x6a] sm:$0xff]
      %v1543 = vld [vmem:[%s1032 + $0x7a] sm:$0xff]
      %v1544 = vld [vmem:[%s1032 + $0x82] sm:$0xff]
      %v1545 = vld [vmem:[%s1032 + $0x92] sm:$0xff]
      %v1546 = vld [vmem:[%s1032 + $0x9a] sm:$0xff]
      %v1547 = vld [vmem:[%s1032 + $0xaa] sm:$0xff]
      %v1548 = vld [vmem:[%s1032 + $0xb2] sm:$0xff]
      %v1549 = vmul.f32 %v1533, %v326
      %v1550 = vmul.f32 %v1534, %v326
      %v1551 = vmul.f32 %v1535, %v326
      %v1552 = vmul.f32 %v1536, %v326
      %v1553 = vmul.f32 %v1537, %v326
      %v1554 = vmul.f32 %v1538, %v326
      %v1555 = vmul.f32 %v1539, %v326
      %v1556 = vmul.f32 %v1540, %v326
      %v1557 = vmul.f32 %v1541, %v326
      %v1558 = vmul.f32 %v1542, %v326
      %v1559 = vmul.f32 %v1543, %v326
      %v1560 = vmul.f32 %v1544, %v326
      %v1561 = vmul.f32 %v1545, %v326
      %v1562 = vmul.f32 %v1546, %v326
      %v1563 = vmul.f32 %v1547, %v326
      %v1564 = vmul.f32 %v1548, %v326
      %v1565 = vadd.f32 %v1517, %v1549
      %v1566 = vadd.f32 %v1518, %v1550
      %v1567 = vadd.f32 %v1519, %v1551
      %v1568 = vadd.f32 %v1520, %v1552
      %v1569 = vadd.f32 %v1521, %v1553
      %v1570 = vadd.f32 %v1522, %v1554
      %v1571 = vadd.f32 %v1523, %v1555
      %v1572 = vadd.f32 %v1524, %v1556
      %v1573 = vadd.f32 %v1525, %v1557
      %v1574 = vadd.f32 %v1526, %v1558
      %v1575 = vadd.f32 %v1527, %v1559
      %v1576 = vadd.f32 %v1528, %v1560
      %v1577 = vadd.f32 %v1529, %v1561
      %v1578 = vadd.f32 %v1530, %v1562
      %v1579 = vadd.f32 %v1531, %v1563
      %v1580 = vadd.f32 %v1532, %v1564
      %v1581 = vpack.c.bf16 %v1566, %v1565
      %v1582 = vpack.c.bf16 %v1568, %v1567
      %v1583 = vpack.c.bf16 %v1570, %v1569
      %v1584 = vpack.c.bf16 %v1572, %v1571
      %v1585 = vpack.c.bf16 %v1574, %v1573
      %v1586 = vpack.c.bf16 %v1576, %v1575
      %v1587 = vpack.c.bf16 %v1578, %v1577
      %v1588 = vpack.c.bf16 %v1580, %v1579
      %s1589 = scalar_lea.vmem %s3, 320
      %v1590 = vld [vmem:[%s1589] sm:$0xf]
      %v1591 = vld [vmem:[%s1589 + $0x4] sm:$0xf]
      %v1592 = vld [vmem:[%s1589 + $0x8] sm:$0xf]
      %v1593 = vld [vmem:[%s1589 + $0xc] sm:$0xf]
      %v1594 = vld [vmem:[%s1589 + $0x10] sm:$0xf]
      %v1595 = vld [vmem:[%s1589 + $0x14] sm:$0xf]
      %v1596 = vld [vmem:[%s1589 + $0x18] sm:$0xf]
      %v1597 = vld [vmem:[%s1589 + $0x1c] sm:$0xf]
      %v1598 = vld [vmem:[%s1589 + $0x20] sm:$0xf]
      %v1599 = vld [vmem:[%s1589 + $0x24] sm:$0xf]
      %v1600 = vld [vmem:[%s1589 + $0x28] sm:$0xf]
      %v1601 = vld [vmem:[%s1589 + $0x2c] sm:$0xf]
      %v1602 = vld [vmem:[%s1589 + $0x30] sm:$0xf]
      %v1603 = vld [vmem:[%s1589 + $0x34] sm:$0xf]
      %v1604 = vld [vmem:[%s1589 + $0x38] sm:$0xf]
      %v1605 = vld [vmem:[%s1589 + $0x3c] sm:$0xf]
      %v1622 = vunpack.c.l.b16 %v1590
      %v1623 = vunpack.c.l.b16 %v1591
      %v1624 = vunpack.c.l.b16 %v1592
      %v1625 = vunpack.c.l.b16 %v1593
      %v1626 = vunpack.c.l.b16 %v1594
      %v1627 = vunpack.c.l.b16 %v1595
      %v1628 = vunpack.c.l.b16 %v1596
      %v1629 = vunpack.c.l.b16 %v1597
      %v1630 = vunpack.c.l.b16 %v1598
      %v1631 = vunpack.c.l.b16 %v1599
      %v1632 = vunpack.c.l.b16 %v1600
      %v1633 = vunpack.c.l.b16 %v1601
      %v1634 = vunpack.c.l.b16 %v1602
      %v1635 = vunpack.c.l.b16 %v1603
      %v1636 = vunpack.c.l.b16 %v1604
      %v1637 = vunpack.c.l.b16 %v1605
      %v1638 = vpack.c.b16 %v1623, %v1622
      %v1639 = vpack.c.b16 %v1625, %v1624
      %v1640 = vpack.c.b16 %v1627, %v1626
      %v1641 = vpack.c.b16 %v1629, %v1628
      %v1642 = vpack.c.b16 %v1631, %v1630
      %v1643 = vpack.c.b16 %v1633, %v1632
      %v1644 = vpack.c.b16 %v1635, %v1634
      %v1645 = vpack.c.b16 %v1637, %v1636
      %1654 = vmatprep.subr.bf16.mxu0 0
      %1655 = vmatpush1.bf16.msra.mxu0 %v1645
      %1656 = vmatprep.subr.bf16.mxu0 0
      %1657 = vmatpush1.bf16.msra.mxu0 %v1644
      %1658 = vmatprep.subr.bf16.mxu0 0
      %1659 = vmatpush1.bf16.msra.mxu0 %v1643
      %1660 = vmatprep.subr.bf16.mxu0 0
      %1661 = vmatpush1.bf16.msra.mxu0 %v1642
      %1662 = vmatprep.subr.bf16.mxu0 0
      %1663 = vmatpush1.bf16.msra.mxu0 %v1641
      %1664 = vmatprep.subr.bf16.mxu0 0
      %1665 = vmatpush1.bf16.msra.mxu0 %v1640
      %1666 = vmatprep.subr.bf16.mxu0 0
      %1667 = vmatpush1.bf16.msra.mxu0 %v1639
      %1668 = vmatprep.subr.bf16.mxu0 0
      %1669 = vmatpush1.bf16.msra.mxu0 %v1638
      %1670 = vmatprep.subr.bf16.mxu0 0
      %1671 = vmatpush2.bf16.msra.mxu0 0
      %1672 = vmatprep.subr.bf16.mxu0 0
      %1673 = vmatpush2.bf16.msra.mxu0 0
      %1674 = vmatprep.subr.bf16.mxu0 0
      %1675 = vmatpush2.bf16.msra.mxu0 0
      %1676 = vmatprep.subr.bf16.mxu0 0
      %1677 = vmatpush2.bf16.msra.mxu0 0
      %1678 = vmatprep.subr.bf16.mxu0 0
      %1679 = vmatpush2.bf16.msra.mxu0 0
      %1680 = vmatprep.subr.bf16.mxu0 0
      %1681 = vmatpush2.bf16.msra.mxu0 0
      %1682 = vmatprep.subr.bf16.mxu0 0
      %1683 = vmatpush2.bf16.msra.mxu0 0
      %1684 = vmatprep.subr.bf16.mxu0 0
      %1685 = vmatpush2.bf16.msra.mxu0 0
      %1686 = vmatprep.mubr.bf16.mxu0 0
      %1687 = vmatmul.mubr.bf16.gmra.mxu0 %v1581
      %v1688 = vpop.f32.mrf.mxu0
      %v1689 = vadd.f32 0.0, %v1688
      %v1690 = vpop.f32.mrf.mxu0
      %v1691 = vpop.f32.mrf.mxu0
      %v1692 = vadd.f32 0.0, %v1691
      %v1693 = vpop.f32.mrf.mxu0
      %1694 = vmatprep.mubr.bf16.mxu0 0
      %1695 = vmatmul.mubr.bf16.gmra.mxu0 %v1582
      %v1696 = vpop.f32.mrf.mxu0
      %v1697 = vadd.f32 0.0, %v1696
      %v1698 = vpop.f32.mrf.mxu0
      %v1699 = vpop.f32.mrf.mxu0
      %v1700 = vadd.f32 0.0, %v1699
      %v1701 = vpop.f32.mrf.mxu0
      %1702 = vmatprep.mubr.bf16.mxu0 0
      %1703 = vmatmul.mubr.bf16.gmra.mxu0 %v1583
      %v1704 = vpop.f32.mrf.mxu0
      %v1705 = vadd.f32 0.0, %v1704
      %v1706 = vpop.f32.mrf.mxu0
      %v1707 = vpop.f32.mrf.mxu0
      %v1708 = vadd.f32 0.0, %v1707
      %v1709 = vpop.f32.mrf.mxu0
      %1710 = vmatprep.mubr.bf16.mxu0 0
      %1711 = vmatmul.mubr.bf16.gmra.mxu0 %v1584
      %v1712 = vpop.f32.mrf.mxu0
      %v1713 = vadd.f32 0.0, %v1712
      %v1714 = vpop.f32.mrf.mxu0
      %v1715 = vpop.f32.mrf.mxu0
      %v1716 = vadd.f32 0.0, %v1715
      %v1717 = vpop.f32.mrf.mxu0
      %1718 = vmatprep.mubr.bf16.mxu0 0
      %1719 = vmatmul.mubr.bf16.gmra.mxu0 %v1585
      %v1720 = vpop.f32.mrf.mxu0
      %v1721 = vadd.f32 0.0, %v1720
      %v1722 = vpop.f32.mrf.mxu0
      %v1723 = vpop.f32.mrf.mxu0
      %v1724 = vadd.f32 0.0, %v1723
      %v1725 = vpop.f32.mrf.mxu0
      %1726 = vmatprep.mubr.bf16.mxu0 0
      %1727 = vmatmul.mubr.bf16.gmra.mxu0 %v1586
      %v1728 = vpop.f32.mrf.mxu0
      %v1729 = vadd.f32 0.0, %v1728
      %v1730 = vpop.f32.mrf.mxu0
      %v1731 = vpop.f32.mrf.mxu0
      %v1732 = vadd.f32 0.0, %v1731
      %v1733 = vpop.f32.mrf.mxu0
      %1734 = vmatprep.mubr.bf16.mxu0 0
      %1735 = vmatmul.mubr.bf16.gmra.mxu0 %v1587
      %v1736 = vpop.f32.mrf.mxu0
      %v1737 = vadd.f32 0.0, %v1736
      %v1738 = vpop.f32.mrf.mxu0
      %v1739 = vpop.f32.mrf.mxu0
      %v1740 = vadd.f32 0.0, %v1739
      %v1741 = vpop.f32.mrf.mxu0
      %1742 = vmatprep.mubr.bf16.mxu0 0
      %1743 = vmatmul.mubr.bf16.gmra.mxu0 %v1588
      %v1744 = vpop.f32.mrf.mxu0
      %v1745 = vadd.f32 0.0, %v1744
      %v1746 = vpop.f32.mrf.mxu0
      %v1747 = vpop.f32.mrf.mxu0
      %v1748 = vadd.f32 0.0, %v1747
      %v1749 = vpop.f32.mrf.mxu0
      %1750 = vdwg.mxu0
      %v1751 = vadd.f32 %v1501, %v1689
      %v1752 = vadd.f32 %v1502, %v1692
      %v1753 = vadd.f32 %v1503, %v1697
      %v1754 = vadd.f32 %v1504, %v1700
      %v1755 = vadd.f32 %v1505, %v1705
      %v1756 = vadd.f32 %v1506, %v1708
      %v1757 = vadd.f32 %v1507, %v1713
      %v1758 = vadd.f32 %v1508, %v1716
      %v1759 = vadd.f32 %v1509, %v1721
      %v1760 = vadd.f32 %v1510, %v1724
      %v1761 = vadd.f32 %v1511, %v1729
      %v1762 = vadd.f32 %v1512, %v1732
      %v1763 = vadd.f32 %v1513, %v1737
      %v1764 = vadd.f32 %v1514, %v1740
      %v1765 = vadd.f32 %v1515, %v1745
      %v1766 = vadd.f32 %v1516, %v1748
      %s1767 = sadd.s32 %s285, 2
      %s1768 = smul.u32 %s1767, 24
      %s1769 = scalar_lea.vmem %s264, %s1768
      %v1770 = vld [vmem:[%s1769] sm:$0xff]
      %v1771 = vld [vmem:[%s1769 + $0x8] sm:$0xff]
      %v1772 = vld [vmem:[%s1769 + $0x18] sm:$0xff]
      %v1773 = vld [vmem:[%s1769 + $0x20] sm:$0xff]
      %v1774 = vld [vmem:[%s1769 + $0x30] sm:$0xff]
      %v1775 = vld [vmem:[%s1769 + $0x38] sm:$0xff]
      %v1776 = vld [vmem:[%s1769 + $0x48] sm:$0xff]
      %v1777 = vld [vmem:[%s1769 + $0x50] sm:$0xff]
      %v1778 = vld [vmem:[%s1769 + $0x60] sm:$0xff]
      %v1779 = vld [vmem:[%s1769 + $0x68] sm:$0xff]
      %v1780 = vld [vmem:[%s1769 + $0x78] sm:$0xff]
      %v1781 = vld [vmem:[%s1769 + $0x80] sm:$0xff]
      %v1782 = vld [vmem:[%s1769 + $0x90] sm:$0xff]
      %v1783 = vld [vmem:[%s1769 + $0x98] sm:$0xff]
      %v1784 = vld [vmem:[%s1769 + $0xa8] sm:$0xff]
      %v1785 = vld [vmem:[%s1769 + $0xb0] sm:$0xff]
      %s1786 = scalar_lea.vmem %s269, %s1768
      %v1787 = vld [vmem:[%s1786] sm:$0xff]
      %v1788 = vld [vmem:[%s1786 + $0x8] sm:$0xff]
      %v1789 = vld [vmem:[%s1786 + $0x18] sm:$0xff]
      %v1790 = vld [vmem:[%s1786 + $0x20] sm:$0xff]
      %v1791 = vld [vmem:[%s1786 + $0x30] sm:$0xff]
      %v1792 = vld [vmem:[%s1786 + $0x38] sm:$0xff]
      %v1793 = vld [vmem:[%s1786 + $0x48] sm:$0xff]
      %v1794 = vld [vmem:[%s1786 + $0x50] sm:$0xff]
      %v1795 = vld [vmem:[%s1786 + $0x60] sm:$0xff]
      %v1796 = vld [vmem:[%s1786 + $0x68] sm:$0xff]
      %v1797 = vld [vmem:[%s1786 + $0x78] sm:$0xff]
      %v1798 = vld [vmem:[%s1786 + $0x80] sm:$0xff]
      %v1799 = vld [vmem:[%s1786 + $0x90] sm:$0xff]
      %v1800 = vld [vmem:[%s1786 + $0x98] sm:$0xff]
      %v1801 = vld [vmem:[%s1786 + $0xa8] sm:$0xff]
      %v1802 = vld [vmem:[%s1786 + $0xb0] sm:$0xff]
      %v1803 = vmul.f32 %v1787, %v326
      %v1804 = vmul.f32 %v1788, %v326
      %v1805 = vmul.f32 %v1789, %v326
      %v1806 = vmul.f32 %v1790, %v326
      %v1807 = vmul.f32 %v1791, %v326
      %v1808 = vmul.f32 %v1792, %v326
      %v1809 = vmul.f32 %v1793, %v326
      %v1810 = vmul.f32 %v1794, %v326
      %v1811 = vmul.f32 %v1795, %v326
      %v1812 = vmul.f32 %v1796, %v326
      %v1813 = vmul.f32 %v1797, %v326
      %v1814 = vmul.f32 %v1798, %v326
      %v1815 = vmul.f32 %v1799, %v326
      %v1816 = vmul.f32 %v1800, %v326
      %v1817 = vmul.f32 %v1801, %v326
      %v1818 = vmul.f32 %v1802, %v326
      %v1819 = vadd.f32 %v1770, %v1803
      %v1820 = vadd.f32 %v1771, %v1804
      %v1821 = vadd.f32 %v1772, %v1805
      %v1822 = vadd.f32 %v1773, %v1806
      %v1823 = vadd.f32 %v1774, %v1807
      %v1824 = vadd.f32 %v1775, %v1808
      %v1825 = vadd.f32 %v1776, %v1809
      %v1826 = vadd.f32 %v1777, %v1810
      %v1827 = vadd.f32 %v1778, %v1811
      %v1828 = vadd.f32 %v1779, %v1812
      %v1829 = vadd.f32 %v1780, %v1813
      %v1830 = vadd.f32 %v1781, %v1814
      %v1831 = vadd.f32 %v1782, %v1815
      %v1832 = vadd.f32 %v1783, %v1816
      %v1833 = vadd.f32 %v1784, %v1817
      %v1834 = vadd.f32 %v1785, %v1818
      %v1835 = vpack.c.bf16 %v1820, %v1819
      %v1836 = vpack.c.bf16 %v1822, %v1821
      %v1837 = vpack.c.bf16 %v1824, %v1823
      %v1838 = vpack.c.bf16 %v1826, %v1825
      %v1839 = vpack.c.bf16 %v1828, %v1827
      %v1840 = vpack.c.bf16 %v1830, %v1829
      %v1841 = vpack.c.bf16 %v1832, %v1831
      %v1842 = vpack.c.bf16 %v1834, %v1833
      %s1843 = scalar_lea.vmem %s3, 384
      %v1844 = vld [vmem:[%s1843] sm:$0xf]
      %v1845 = vld [vmem:[%s1843 + $0x4] sm:$0xf]
      %v1846 = vld [vmem:[%s1843 + $0x8] sm:$0xf]
      %v1847 = vld [vmem:[%s1843 + $0xc] sm:$0xf]
      %v1848 = vld [vmem:[%s1843 + $0x10] sm:$0xf]
      %v1849 = vld [vmem:[%s1843 + $0x14] sm:$0xf]
      %v1850 = vld [vmem:[%s1843 + $0x18] sm:$0xf]
      %v1851 = vld [vmem:[%s1843 + $0x1c] sm:$0xf]
      %v1852 = vld [vmem:[%s1843 + $0x20] sm:$0xf]
      %v1853 = vld [vmem:[%s1843 + $0x24] sm:$0xf]
      %v1854 = vld [vmem:[%s1843 + $0x28] sm:$0xf]
      %v1855 = vld [vmem:[%s1843 + $0x2c] sm:$0xf]
      %v1856 = vld [vmem:[%s1843 + $0x30] sm:$0xf]
      %v1857 = vld [vmem:[%s1843 + $0x34] sm:$0xf]
      %v1858 = vld [vmem:[%s1843 + $0x38] sm:$0xf]
      %v1859 = vld [vmem:[%s1843 + $0x3c] sm:$0xf]
      %v1876 = vunpack.c.l.b16 %v1844
      %v1877 = vunpack.c.l.b16 %v1845
      %v1878 = vunpack.c.l.b16 %v1846
      %v1879 = vunpack.c.l.b16 %v1847
      %v1880 = vunpack.c.l.b16 %v1848
      %v1881 = vunpack.c.l.b16 %v1849
      %v1882 = vunpack.c.l.b16 %v1850
      %v1883 = vunpack.c.l.b16 %v1851
      %v1884 = vunpack.c.l.b16 %v1852
      %v1885 = vunpack.c.l.b16 %v1853
      %v1886 = vunpack.c.l.b16 %v1854
      %v1887 = vunpack.c.l.b16 %v1855
      %v1888 = vunpack.c.l.b16 %v1856
      %v1889 = vunpack.c.l.b16 %v1857
      %v1890 = vunpack.c.l.b16 %v1858
      %v1891 = vunpack.c.l.b16 %v1859
      %v1892 = vpack.c.b16 %v1877, %v1876
      %v1893 = vpack.c.b16 %v1879, %v1878
      %v1894 = vpack.c.b16 %v1881, %v1880
      %v1895 = vpack.c.b16 %v1883, %v1882
      %v1896 = vpack.c.b16 %v1885, %v1884
      %v1897 = vpack.c.b16 %v1887, %v1886
      %v1898 = vpack.c.b16 %v1889, %v1888
      %v1899 = vpack.c.b16 %v1891, %v1890
      %1908 = vmatprep.subr.bf16.mxu0 0
      %1909 = vmatpush1.bf16.msra.mxu0 %v1899
      %1910 = vmatprep.subr.bf16.mxu0 0
      %1911 = vmatpush1.bf16.msra.mxu0 %v1898
      %1912 = vmatprep.subr.bf16.mxu0 0
      %1913 = vmatpush1.bf16.msra.mxu0 %v1897
      %1914 = vmatprep.subr.bf16.mxu0 0
      %1915 = vmatpush1.bf16.msra.mxu0 %v1896
      %1916 = vmatprep.subr.bf16.mxu0 0
      %1917 = vmatpush1.bf16.msra.mxu0 %v1895
      %1918 = vmatprep.subr.bf16.mxu0 0
      %1919 = vmatpush1.bf16.msra.mxu0 %v1894
      %1920 = vmatprep.subr.bf16.mxu0 0
      %1921 = vmatpush1.bf16.msra.mxu0 %v1893
      %1922 = vmatprep.subr.bf16.mxu0 0
      %1923 = vmatpush1.bf16.msra.mxu0 %v1892
      %1924 = vmatprep.subr.bf16.mxu0 0
      %1925 = vmatpush2.bf16.msra.mxu0 0
      %1926 = vmatprep.subr.bf16.mxu0 0
      %1927 = vmatpush2.bf16.msra.mxu0 0
      %1928 = vmatprep.subr.bf16.mxu0 0
      %1929 = vmatpush2.bf16.msra.mxu0 0
      %1930 = vmatprep.subr.bf16.mxu0 0
      %1931 = vmatpush2.bf16.msra.mxu0 0
      %1932 = vmatprep.subr.bf16.mxu0 0
      %1933 = vmatpush2.bf16.msra.mxu0 0
      %1934 = vmatprep.subr.bf16.mxu0 0
      %1935 = vmatpush2.bf16.msra.mxu0 0
      %1936 = vmatprep.subr.bf16.mxu0 0
      %1937 = vmatpush2.bf16.msra.mxu0 0
      %1938 = vmatprep.subr.bf16.mxu0 0
      %1939 = vmatpush2.bf16.msra.mxu0 0
      %1940 = vmatprep.mubr.bf16.mxu0 0
      %1941 = vmatmul.mubr.bf16.gmra.mxu0 %v1835
      %v1942 = vpop.f32.mrf.mxu0
      %v1943 = vadd.f32 0.0, %v1942
      %v1944 = vpop.f32.mrf.mxu0
      %v1945 = vpop.f32.mrf.mxu0
      %v1946 = vadd.f32 0.0, %v1945
      %v1947 = vpop.f32.mrf.mxu0
      %1948 = vmatprep.mubr.bf16.mxu0 0
      %1949 = vmatmul.mubr.bf16.gmra.mxu0 %v1836
      %v1950 = vpop.f32.mrf.mxu0
      %v1951 = vadd.f32 0.0, %v1950
      %v1952 = vpop.f32.mrf.mxu0
      %v1953 = vpop.f32.mrf.mxu0
      %v1954 = vadd.f32 0.0, %v1953
      %v1955 = vpop.f32.mrf.mxu0
      %1956 = vmatprep.mubr.bf16.mxu0 0
      %1957 = vmatmul.mubr.bf16.gmra.mxu0 %v1837
      %v1958 = vpop.f32.mrf.mxu0
      %v1959 = vadd.f32 0.0, %v1958
      %v1960 = vpop.f32.mrf.mxu0
      %v1961 = vpop.f32.mrf.mxu0
      %v1962 = vadd.f32 0.0, %v1961
      %v1963 = vpop.f32.mrf.mxu0
      %1964 = vmatprep.mubr.bf16.mxu0 0
      %1965 = vmatmul.mubr.bf16.gmra.mxu0 %v1838
      %v1966 = vpop.f32.mrf.mxu0
      %v1967 = vadd.f32 0.0, %v1966
      %v1968 = vpop.f32.mrf.mxu0
      %v1969 = vpop.f32.mrf.mxu0
      %v1970 = vadd.f32 0.0, %v1969
      %v1971 = vpop.f32.mrf.mxu0
      %1972 = vmatprep.mubr.bf16.mxu0 0
      %1973 = vmatmul.mubr.bf16.gmra.mxu0 %v1839
      %v1974 = vpop.f32.mrf.mxu0
      %v1975 = vadd.f32 0.0, %v1974
      %v1976 = vpop.f32.mrf.mxu0
      %v1977 = vpop.f32.mrf.mxu0
      %v1978 = vadd.f32 0.0, %v1977
      %v1979 = vpop.f32.mrf.mxu0
      %1980 = vmatprep.mubr.bf16.mxu0 0
      %1981 = vmatmul.mubr.bf16.gmra.mxu0 %v1840
      %v1982 = vpop.f32.mrf.mxu0
      %v1983 = vadd.f32 0.0, %v1982
      %v1984 = vpop.f32.mrf.mxu0
      %v1985 = vpop.f32.mrf.mxu0
      %v1986 = vadd.f32 0.0, %v1985
      %v1987 = vpop.f32.mrf.mxu0
      %1988 = vmatprep.mubr.bf16.mxu0 0
      %1989 = vmatmul.mubr.bf16.gmra.mxu0 %v1841
      %v1990 = vpop.f32.mrf.mxu0
      %v1991 = vadd.f32 0.0, %v1990
      %v1992 = vpop.f32.mrf.mxu0
      %v1993 = vpop.f32.mrf.mxu0
      %v1994 = vadd.f32 0.0, %v1993
      %v1995 = vpop.f32.mrf.mxu0
      %1996 = vmatprep.mubr.bf16.mxu0 0
      %1997 = vmatmul.mubr.bf16.gmra.mxu0 %v1842
      %v1998 = vpop.f32.mrf.mxu0
      %v1999 = vadd.f32 0.0, %v1998
      %v2000 = vpop.f32.mrf.mxu0
      %v2001 = vpop.f32.mrf.mxu0
      %v2002 = vadd.f32 0.0, %v2001
      %v2003 = vpop.f32.mrf.mxu0
      %2004 = vdwg.mxu0
      %v2005 = vadd.f32 %v1751, %v1943
      %v2006 = vadd.f32 %v1752, %v1946
      %v2007 = vadd.f32 %v1753, %v1951
      %v2008 = vadd.f32 %v1754, %v1954
      %v2009 = vadd.f32 %v1755, %v1959
      %v2010 = vadd.f32 %v1756, %v1962
      %v2011 = vadd.f32 %v1757, %v1967
      %v2012 = vadd.f32 %v1758, %v1970
      %v2013 = vadd.f32 %v1759, %v1975
      %v2014 = vadd.f32 %v1760, %v1978
      %v2015 = vadd.f32 %v1761, %v1983
      %v2016 = vadd.f32 %v1762, %v1986
      %v2017 = vadd.f32 %v1763, %v1991
      %v2018 = vadd.f32 %v1764, %v1994
      %v2019 = vadd.f32 %v1765, %v1999
      %v2020 = vadd.f32 %v1766, %v2002
      %v2021 = vld [vmem:[%s1769 + $0x1] sm:$0xff]
      %v2022 = vld [vmem:[%s1769 + $0x9] sm:$0xff]
      %v2023 = vld [vmem:[%s1769 + $0x19] sm:$0xff]
      %v2024 = vld [vmem:[%s1769 + $0x21] sm:$0xff]
      %v2025 = vld [vmem:[%s1769 + $0x31] sm:$0xff]
      %v2026 = vld [vmem:[%s1769 + $0x39] sm:$0xff]
      %v2027 = vld [vmem:[%s1769 + $0x49] sm:$0xff]
      %v2028 = vld [vmem:[%s1769 + $0x51] sm:$0xff]
      %v2029 = vld [vmem:[%s1769 + $0x61] sm:$0xff]
      %v2030 = vld [vmem:[%s1769 + $0x69] sm:$0xff]
      %v2031 = vld [vmem:[%s1769 + $0x79] sm:$0xff]
      %v2032 = vld [vmem:[%s1769 + $0x81] sm:$0xff]
      %v2033 = vld [vmem:[%s1769 + $0x91] sm:$0xff]
      %v2034 = vld [vmem:[%s1769 + $0x99] sm:$0xff]
      %v2035 = vld [vmem:[%s1769 + $0xa9] sm:$0xff]
      %v2036 = vld [vmem:[%s1769 + $0xb1] sm:$0xff]
      %v2037 = vld [vmem:[%s1786 + $0x1] sm:$0xff]
      %v2038 = vld [vmem:[%s1786 + $0x9] sm:$0xff]
      %v2039 = vld [vmem:[%s1786 + $0x19] sm:$0xff]
      %v2040 = vld [vmem:[%s1786 + $0x21] sm:$0xff]
      %v2041 = vld [vmem:[%s1786 + $0x31] sm:$0xff]
      %v2042 = vld [vmem:[%s1786 + $0x39] sm:$0xff]
      %v2043 = vld [vmem:[%s1786 + $0x49] sm:$0xff]
      %v2044 = vld [vmem:[%s1786 + $0x51] sm:$0xff]
      %v2045 = vld [vmem:[%s1786 + $0x61] sm:$0xff]
      %v2046 = vld [vmem:[%s1786 + $0x69] sm:$0xff]
      %v2047 = vld [vmem:[%s1786 + $0x79] sm:$0xff]
      %v2048 = vld [vmem:[%s1786 + $0x81] sm:$0xff]
      %v2049 = vld [vmem:[%s1786 + $0x91] sm:$0xff]
      %v2050 = vld [vmem:[%s1786 + $0x99] sm:$0xff]
      %v2051 = vld [vmem:[%s1786 + $0xa9] sm:$0xff]
      %v2052 = vld [vmem:[%s1786 + $0xb1] sm:$0xff]
      %v2053 = vmul.f32 %v2037, %v326
      %v2054 = vmul.f32 %v2038, %v326
      %v2055 = vmul.f32 %v2039, %v326
      %v2056 = vmul.f32 %v2040, %v326
      %v2057 = vmul.f32 %v2041, %v326
      %v2058 = vmul.f32 %v2042, %v326
      %v2059 = vmul.f32 %v2043, %v326
      %v2060 = vmul.f32 %v2044, %v326
      %v2061 = vmul.f32 %v2045, %v326
      %v2062 = vmul.f32 %v2046, %v326
      %v2063 = vmul.f32 %v2047, %v326
      %v2064 = vmul.f32 %v2048, %v326
      %v2065 = vmul.f32 %v2049, %v326
      %v2066 = vmul.f32 %v2050, %v326
      %v2067 = vmul.f32 %v2051, %v326
      %v2068 = vmul.f32 %v2052, %v326
      %v2069 = vadd.f32 %v2021, %v2053
      %v2070 = vadd.f32 %v2022, %v2054
      %v2071 = vadd.f32 %v2023, %v2055
      %v2072 = vadd.f32 %v2024, %v2056
      %v2073 = vadd.f32 %v2025, %v2057
      %v2074 = vadd.f32 %v2026, %v2058
      %v2075 = vadd.f32 %v2027, %v2059
      %v2076 = vadd.f32 %v2028, %v2060
      %v2077 = vadd.f32 %v2029, %v2061
      %v2078 = vadd.f32 %v2030, %v2062
      %v2079 = vadd.f32 %v2031, %v2063
      %v2080 = vadd.f32 %v2032, %v2064
      %v2081 = vadd.f32 %v2033, %v2065
      %v2082 = vadd.f32 %v2034, %v2066
      %v2083 = vadd.f32 %v2035, %v2067
      %v2084 = vadd.f32 %v2036, %v2068
      %v2085 = vpack.c.bf16 %v2070, %v2069
      %v2086 = vpack.c.bf16 %v2072, %v2071
      %v2087 = vpack.c.bf16 %v2074, %v2073
      %v2088 = vpack.c.bf16 %v2076, %v2075
      %v2089 = vpack.c.bf16 %v2078, %v2077
      %v2090 = vpack.c.bf16 %v2080, %v2079
      %v2091 = vpack.c.bf16 %v2082, %v2081
      %v2092 = vpack.c.bf16 %v2084, %v2083
      %s2093 = scalar_lea.vmem %s3, 448
      %v2094 = vld [vmem:[%s2093] sm:$0xf]
      %v2095 = vld [vmem:[%s2093 + $0x4] sm:$0xf]
      %v2096 = vld [vmem:[%s2093 + $0x8] sm:$0xf]
      %v2097 = vld [vmem:[%s2093 + $0xc] sm:$0xf]
      %v2098 = vld [vmem:[%s2093 + $0x10] sm:$0xf]
      %v2099 = vld [vmem:[%s2093 + $0x14] sm:$0xf]
      %v2100 = vld [vmem:[%s2093 + $0x18] sm:$0xf]
      %v2101 = vld [vmem:[%s2093 + $0x1c] sm:$0xf]
      %v2102 = vld [vmem:[%s2093 + $0x20] sm:$0xf]
      %v2103 = vld [vmem:[%s2093 + $0x24] sm:$0xf]
      %v2104 = vld [vmem:[%s2093 + $0x28] sm:$0xf]
      %v2105 = vld [vmem:[%s2093 + $0x2c] sm:$0xf]
      %v2106 = vld [vmem:[%s2093 + $0x30] sm:$0xf]
      %v2107 = vld [vmem:[%s2093 + $0x34] sm:$0xf]
      %v2108 = vld [vmem:[%s2093 + $0x38] sm:$0xf]
      %v2109 = vld [vmem:[%s2093 + $0x3c] sm:$0xf]
      %v2126 = vunpack.c.l.b16 %v2094
      %v2127 = vunpack.c.l.b16 %v2095
      %v2128 = vunpack.c.l.b16 %v2096
      %v2129 = vunpack.c.l.b16 %v2097
      %v2130 = vunpack.c.l.b16 %v2098
      %v2131 = vunpack.c.l.b16 %v2099
      %v2132 = vunpack.c.l.b16 %v2100
      %v2133 = vunpack.c.l.b16 %v2101
      %v2134 = vunpack.c.l.b16 %v2102
      %v2135 = vunpack.c.l.b16 %v2103
      %v2136 = vunpack.c.l.b16 %v2104
      %v2137 = vunpack.c.l.b16 %v2105
      %v2138 = vunpack.c.l.b16 %v2106
      %v2139 = vunpack.c.l.b16 %v2107
      %v2140 = vunpack.c.l.b16 %v2108
      %v2141 = vunpack.c.l.b16 %v2109
      %v2142 = vpack.c.b16 %v2127, %v2126
      %v2143 = vpack.c.b16 %v2129, %v2128
      %v2144 = vpack.c.b16 %v2131, %v2130
      %v2145 = vpack.c.b16 %v2133, %v2132
      %v2146 = vpack.c.b16 %v2135, %v2134
      %v2147 = vpack.c.b16 %v2137, %v2136
      %v2148 = vpack.c.b16 %v2139, %v2138
      %v2149 = vpack.c.b16 %v2141, %v2140
      %2158 = vmatprep.subr.bf16.mxu0 0
      %2159 = vmatpush1.bf16.msra.mxu0 %v2149
      %2160 = vmatprep.subr.bf16.mxu0 0
      %2161 = vmatpush1.bf16.msra.mxu0 %v2148
      %2162 = vmatprep.subr.bf16.mxu0 0
      %2163 = vmatpush1.bf16.msra.mxu0 %v2147
      %2164 = vmatprep.subr.bf16.mxu0 0
      %2165 = vmatpush1.bf16.msra.mxu0 %v2146
      %2166 = vmatprep.subr.bf16.mxu0 0
      %2167 = vmatpush1.bf16.msra.mxu0 %v2145
      %2168 = vmatprep.subr.bf16.mxu0 0
      %2169 = vmatpush1.bf16.msra.mxu0 %v2144
      %2170 = vmatprep.subr.bf16.mxu0 0
      %2171 = vmatpush1.bf16.msra.mxu0 %v2143
      %2172 = vmatprep.subr.bf16.mxu0 0
      %2173 = vmatpush1.bf16.msra.mxu0 %v2142
      %2174 = vmatprep.subr.bf16.mxu0 0
      %2175 = vmatpush2.bf16.msra.mxu0 0
      %2176 = vmatprep.subr.bf16.mxu0 0
      %2177 = vmatpush2.bf16.msra.mxu0 0
      %2178 = vmatprep.subr.bf16.mxu0 0
      %2179 = vmatpush2.bf16.msra.mxu0 0
      %2180 = vmatprep.subr.bf16.mxu0 0
      %2181 = vmatpush2.bf16.msra.mxu0 0
      %2182 = vmatprep.subr.bf16.mxu0 0
      %2183 = vmatpush2.bf16.msra.mxu0 0
      %2184 = vmatprep.subr.bf16.mxu0 0
      %2185 = vmatpush2.bf16.msra.mxu0 0
      %2186 = vmatprep.subr.bf16.mxu0 0
      %2187 = vmatpush2.bf16.msra.mxu0 0
      %2188 = vmatprep.subr.bf16.mxu0 0
      %2189 = vmatpush2.bf16.msra.mxu0 0
      %2190 = vmatprep.mubr.bf16.mxu0 0
      %2191 = vmatmul.mubr.bf16.gmra.mxu0 %v2085
      %v2192 = vpop.f32.mrf.mxu0
      %v2193 = vadd.f32 0.0, %v2192
      %v2194 = vpop.f32.mrf.mxu0
      %v2195 = vpop.f32.mrf.mxu0
      %v2196 = vadd.f32 0.0, %v2195
      %v2197 = vpop.f32.mrf.mxu0
      %2198 = vmatprep.mubr.bf16.mxu0 0
      %2199 = vmatmul.mubr.bf16.gmra.mxu0 %v2086
      %v2200 = vpop.f32.mrf.mxu0
      %v2201 = vadd.f32 0.0, %v2200
      %v2202 = vpop.f32.mrf.mxu0
      %v2203 = vpop.f32.mrf.mxu0
      %v2204 = vadd.f32 0.0, %v2203
      %v2205 = vpop.f32.mrf.mxu0
      %2206 = vmatprep.mubr.bf16.mxu0 0
      %2207 = vmatmul.mubr.bf16.gmra.mxu0 %v2087
      %v2208 = vpop.f32.mrf.mxu0
      %v2209 = vadd.f32 0.0, %v2208
      %v2210 = vpop.f32.mrf.mxu0
      %v2211 = vpop.f32.mrf.mxu0
      %v2212 = vadd.f32 0.0, %v2211
      %v2213 = vpop.f32.mrf.mxu0
      %2214 = vmatprep.mubr.bf16.mxu0 0
      %2215 = vmatmul.mubr.bf16.gmra.mxu0 %v2088
      %v2216 = vpop.f32.mrf.mxu0
      %v2217 = vadd.f32 0.0, %v2216
      %v2218 = vpop.f32.mrf.mxu0
      %v2219 = vpop.f32.mrf.mxu0
      %v2220 = vadd.f32 0.0, %v2219
      %v2221 = vpop.f32.mrf.mxu0
      %2222 = vmatprep.mubr.bf16.mxu0 0
      %2223 = vmatmul.mubr.bf16.gmra.mxu0 %v2089
      %v2224 = vpop.f32.mrf.mxu0
      %v2225 = vadd.f32 0.0, %v2224
      %v2226 = vpop.f32.mrf.mxu0
      %v2227 = vpop.f32.mrf.mxu0
      %v2228 = vadd.f32 0.0, %v2227
      %v2229 = vpop.f32.mrf.mxu0
      %2230 = vmatprep.mubr.bf16.mxu0 0
      %2231 = vmatmul.mubr.bf16.gmra.mxu0 %v2090
      %v2232 = vpop.f32.mrf.mxu0
      %v2233 = vadd.f32 0.0, %v2232
      %v2234 = vpop.f32.mrf.mxu0
      %v2235 = vpop.f32.mrf.mxu0
      %v2236 = vadd.f32 0.0, %v2235
      %v2237 = vpop.f32.mrf.mxu0
      %2238 = vmatprep.mubr.bf16.mxu0 0
      %2239 = vmatmul.mubr.bf16.gmra.mxu0 %v2091
      %v2240 = vpop.f32.mrf.mxu0
      %v2241 = vadd.f32 0.0, %v2240
      %v2242 = vpop.f32.mrf.mxu0
      %v2243 = vpop.f32.mrf.mxu0
      %v2244 = vadd.f32 0.0, %v2243
      %v2245 = vpop.f32.mrf.mxu0
      %2246 = vmatprep.mubr.bf16.mxu0 0
      %2247 = vmatmul.mubr.bf16.gmra.mxu0 %v2092
      %v2248 = vpop.f32.mrf.mxu0
      %v2249 = vadd.f32 0.0, %v2248
      %v2250 = vpop.f32.mrf.mxu0
      %v2251 = vpop.f32.mrf.mxu0
      %v2252 = vadd.f32 0.0, %v2251
      %v2253 = vpop.f32.mrf.mxu0
      %2254 = vdwg.mxu0
      %v2255 = vadd.f32 %v2005, %v2193
      %v2256 = vadd.f32 %v2006, %v2196
      %v2257 = vadd.f32 %v2007, %v2201
      %v2258 = vadd.f32 %v2008, %v2204
      %v2259 = vadd.f32 %v2009, %v2209
      %v2260 = vadd.f32 %v2010, %v2212
      %v2261 = vadd.f32 %v2011, %v2217
      %v2262 = vadd.f32 %v2012, %v2220
      %v2263 = vadd.f32 %v2013, %v2225
      %v2264 = vadd.f32 %v2014, %v2228
      %v2265 = vadd.f32 %v2015, %v2233
      %v2266 = vadd.f32 %v2016, %v2236
      %v2267 = vadd.f32 %v2017, %v2241
      %v2268 = vadd.f32 %v2018, %v2244
      %v2269 = vadd.f32 %v2019, %v2249
      %v2270 = vadd.f32 %v2020, %v2252
      %v2271 = vld [vmem:[%s1769 + $0x2] sm:$0xff]
      %v2272 = vld [vmem:[%s1769 + $0xa] sm:$0xff]
      %v2273 = vld [vmem:[%s1769 + $0x1a] sm:$0xff]
      %v2274 = vld [vmem:[%s1769 + $0x22] sm:$0xff]
      %v2275 = vld [vmem:[%s1769 + $0x32] sm:$0xff]
      %v2276 = vld [vmem:[%s1769 + $0x3a] sm:$0xff]
      %v2277 = vld [vmem:[%s1769 + $0x4a] sm:$0xff]
      %v2278 = vld [vmem:[%s1769 + $0x52] sm:$0xff]
      %v2279 = vld [vmem:[%s1769 + $0x62] sm:$0xff]
      %v2280 = vld [vmem:[%s1769 + $0x6a] sm:$0xff]
      %v2281 = vld [vmem:[%s1769 + $0x7a] sm:$0xff]
      %v2282 = vld [vmem:[%s1769 + $0x82] sm:$0xff]
      %v2283 = vld [vmem:[%s1769 + $0x92] sm:$0xff]
      %v2284 = vld [vmem:[%s1769 + $0x9a] sm:$0xff]
      %v2285 = vld [vmem:[%s1769 + $0xaa] sm:$0xff]
      %v2286 = vld [vmem:[%s1769 + $0xb2] sm:$0xff]
      %v2287 = vld [vmem:[%s1786 + $0x2] sm:$0xff]
      %v2288 = vld [vmem:[%s1786 + $0xa] sm:$0xff]
      %v2289 = vld [vmem:[%s1786 + $0x1a] sm:$0xff]
      %v2290 = vld [vmem:[%s1786 + $0x22] sm:$0xff]
      %v2291 = vld [vmem:[%s1786 + $0x32] sm:$0xff]
      %v2292 = vld [vmem:[%s1786 + $0x3a] sm:$0xff]
      %v2293 = vld [vmem:[%s1786 + $0x4a] sm:$0xff]
      %v2294 = vld [vmem:[%s1786 + $0x52] sm:$0xff]
      %v2295 = vld [vmem:[%s1786 + $0x62] sm:$0xff]
      %v2296 = vld [vmem:[%s1786 + $0x6a] sm:$0xff]
      %v2297 = vld [vmem:[%s1786 + $0x7a] sm:$0xff]
      %v2298 = vld [vmem:[%s1786 + $0x82] sm:$0xff]
      %v2299 = vld [vmem:[%s1786 + $0x92] sm:$0xff]
      %v2300 = vld [vmem:[%s1786 + $0x9a] sm:$0xff]
      %v2301 = vld [vmem:[%s1786 + $0xaa] sm:$0xff]
      %v2302 = vld [vmem:[%s1786 + $0xb2] sm:$0xff]
      %v2303 = vmul.f32 %v2287, %v326
      %v2304 = vmul.f32 %v2288, %v326
      %v2305 = vmul.f32 %v2289, %v326
      %v2306 = vmul.f32 %v2290, %v326
      %v2307 = vmul.f32 %v2291, %v326
      %v2308 = vmul.f32 %v2292, %v326
      %v2309 = vmul.f32 %v2293, %v326
      %v2310 = vmul.f32 %v2294, %v326
      %v2311 = vmul.f32 %v2295, %v326
      %v2312 = vmul.f32 %v2296, %v326
      %v2313 = vmul.f32 %v2297, %v326
      %v2314 = vmul.f32 %v2298, %v326
      %v2315 = vmul.f32 %v2299, %v326
      %v2316 = vmul.f32 %v2300, %v326
      %v2317 = vmul.f32 %v2301, %v326
      %v2318 = vmul.f32 %v2302, %v326
      %v2319 = vadd.f32 %v2271, %v2303
      %v2320 = vadd.f32 %v2272, %v2304
      %v2321 = vadd.f32 %v2273, %v2305
      %v2322 = vadd.f32 %v2274, %v2306
      %v2323 = vadd.f32 %v2275, %v2307
      %v2324 = vadd.f32 %v2276, %v2308
      %v2325 = vadd.f32 %v2277, %v2309
      %v2326 = vadd.f32 %v2278, %v2310
      %v2327 = vadd.f32 %v2279, %v2311
      %v2328 = vadd.f32 %v2280, %v2312
      %v2329 = vadd.f32 %v2281, %v2313
      %v2330 = vadd.f32 %v2282, %v2314
      %v2331 = vadd.f32 %v2283, %v2315
      %v2332 = vadd.f32 %v2284, %v2316
      %v2333 = vadd.f32 %v2285, %v2317
      %v2334 = vadd.f32 %v2286, %v2318
      %v2335 = vpack.c.bf16 %v2320, %v2319
      %v2336 = vpack.c.bf16 %v2322, %v2321
      %v2337 = vpack.c.bf16 %v2324, %v2323
      %v2338 = vpack.c.bf16 %v2326, %v2325
      %v2339 = vpack.c.bf16 %v2328, %v2327
      %v2340 = vpack.c.bf16 %v2330, %v2329
      %v2341 = vpack.c.bf16 %v2332, %v2331
      %v2342 = vpack.c.bf16 %v2334, %v2333
      %s2343 = scalar_lea.vmem %s3, 512
      %v2344 = vld [vmem:[%s2343] sm:$0xf]
      %v2345 = vld [vmem:[%s2343 + $0x4] sm:$0xf]
      %v2346 = vld [vmem:[%s2343 + $0x8] sm:$0xf]
      %v2347 = vld [vmem:[%s2343 + $0xc] sm:$0xf]
      %v2348 = vld [vmem:[%s2343 + $0x10] sm:$0xf]
      %v2349 = vld [vmem:[%s2343 + $0x14] sm:$0xf]
      %v2350 = vld [vmem:[%s2343 + $0x18] sm:$0xf]
      %v2351 = vld [vmem:[%s2343 + $0x1c] sm:$0xf]
      %v2352 = vld [vmem:[%s2343 + $0x20] sm:$0xf]
      %v2353 = vld [vmem:[%s2343 + $0x24] sm:$0xf]
      %v2354 = vld [vmem:[%s2343 + $0x28] sm:$0xf]
      %v2355 = vld [vmem:[%s2343 + $0x2c] sm:$0xf]
      %v2356 = vld [vmem:[%s2343 + $0x30] sm:$0xf]
      %v2357 = vld [vmem:[%s2343 + $0x34] sm:$0xf]
      %v2358 = vld [vmem:[%s2343 + $0x38] sm:$0xf]
      %v2359 = vld [vmem:[%s2343 + $0x3c] sm:$0xf]
      %v2376 = vunpack.c.l.b16 %v2344
      %v2377 = vunpack.c.l.b16 %v2345
      %v2378 = vunpack.c.l.b16 %v2346
      %v2379 = vunpack.c.l.b16 %v2347
      %v2380 = vunpack.c.l.b16 %v2348
      %v2381 = vunpack.c.l.b16 %v2349
      %v2382 = vunpack.c.l.b16 %v2350
      %v2383 = vunpack.c.l.b16 %v2351
      %v2384 = vunpack.c.l.b16 %v2352
      %v2385 = vunpack.c.l.b16 %v2353
      %v2386 = vunpack.c.l.b16 %v2354
      %v2387 = vunpack.c.l.b16 %v2355
      %v2388 = vunpack.c.l.b16 %v2356
      %v2389 = vunpack.c.l.b16 %v2357
      %v2390 = vunpack.c.l.b16 %v2358
      %v2391 = vunpack.c.l.b16 %v2359
      %v2392 = vpack.c.b16 %v2377, %v2376
      %v2393 = vpack.c.b16 %v2379, %v2378
      %v2394 = vpack.c.b16 %v2381, %v2380
      %v2395 = vpack.c.b16 %v2383, %v2382
      %v2396 = vpack.c.b16 %v2385, %v2384
      %v2397 = vpack.c.b16 %v2387, %v2386
      %v2398 = vpack.c.b16 %v2389, %v2388
      %v2399 = vpack.c.b16 %v2391, %v2390
      %2408 = vmatprep.subr.bf16.mxu0 0
      %2409 = vmatpush1.bf16.msra.mxu0 %v2399
      %2410 = vmatprep.subr.bf16.mxu0 0
      %2411 = vmatpush1.bf16.msra.mxu0 %v2398
      %2412 = vmatprep.subr.bf16.mxu0 0
      %2413 = vmatpush1.bf16.msra.mxu0 %v2397
      %2414 = vmatprep.subr.bf16.mxu0 0
      %2415 = vmatpush1.bf16.msra.mxu0 %v2396
      %2416 = vmatprep.subr.bf16.mxu0 0
      %2417 = vmatpush1.bf16.msra.mxu0 %v2395
      %2418 = vmatprep.subr.bf16.mxu0 0
      %2419 = vmatpush1.bf16.msra.mxu0 %v2394
      %2420 = vmatprep.subr.bf16.mxu0 0
      %2421 = vmatpush1.bf16.msra.mxu0 %v2393
      %2422 = vmatprep.subr.bf16.mxu0 0
      %2423 = vmatpush1.bf16.msra.mxu0 %v2392
      %2424 = vmatprep.subr.bf16.mxu0 0
      %2425 = vmatpush2.bf16.msra.mxu0 0
      %2426 = vmatprep.subr.bf16.mxu0 0
      %2427 = vmatpush2.bf16.msra.mxu0 0
      %2428 = vmatprep.subr.bf16.mxu0 0
      %2429 = vmatpush2.bf16.msra.mxu0 0
      %2430 = vmatprep.subr.bf16.mxu0 0
      %2431 = vmatpush2.bf16.msra.mxu0 0
      %2432 = vmatprep.subr.bf16.mxu0 0
      %2433 = vmatpush2.bf16.msra.mxu0 0
      %2434 = vmatprep.subr.bf16.mxu0 0
      %2435 = vmatpush2.bf16.msra.mxu0 0
      %2436 = vmatprep.subr.bf16.mxu0 0
      %2437 = vmatpush2.bf16.msra.mxu0 0
      %2438 = vmatprep.subr.bf16.mxu0 0
      %2439 = vmatpush2.bf16.msra.mxu0 0
      %2440 = vmatprep.mubr.bf16.mxu0 0
      %2441 = vmatmul.mubr.bf16.gmra.mxu0 %v2335
      %v2442 = vpop.f32.mrf.mxu0
      %v2443 = vadd.f32 0.0, %v2442
      %v2444 = vpop.f32.mrf.mxu0
      %v2445 = vpop.f32.mrf.mxu0
      %v2446 = vadd.f32 0.0, %v2445
      %v2447 = vpop.f32.mrf.mxu0
      %2448 = vmatprep.mubr.bf16.mxu0 0
      %2449 = vmatmul.mubr.bf16.gmra.mxu0 %v2336
      %v2450 = vpop.f32.mrf.mxu0
      %v2451 = vadd.f32 0.0, %v2450
      %v2452 = vpop.f32.mrf.mxu0
      %v2453 = vpop.f32.mrf.mxu0
      %v2454 = vadd.f32 0.0, %v2453
      %v2455 = vpop.f32.mrf.mxu0
      %2456 = vmatprep.mubr.bf16.mxu0 0
      %2457 = vmatmul.mubr.bf16.gmra.mxu0 %v2337
      %v2458 = vpop.f32.mrf.mxu0
      %v2459 = vadd.f32 0.0, %v2458
      %v2460 = vpop.f32.mrf.mxu0
      %v2461 = vpop.f32.mrf.mxu0
      %v2462 = vadd.f32 0.0, %v2461
      %v2463 = vpop.f32.mrf.mxu0
      %2464 = vmatprep.mubr.bf16.mxu0 0
      %2465 = vmatmul.mubr.bf16.gmra.mxu0 %v2338
      %v2466 = vpop.f32.mrf.mxu0
      %v2467 = vadd.f32 0.0, %v2466
      %v2468 = vpop.f32.mrf.mxu0
      %v2469 = vpop.f32.mrf.mxu0
      %v2470 = vadd.f32 0.0, %v2469
      %v2471 = vpop.f32.mrf.mxu0
      %2472 = vmatprep.mubr.bf16.mxu0 0
      %2473 = vmatmul.mubr.bf16.gmra.mxu0 %v2339
      %v2474 = vpop.f32.mrf.mxu0
      %v2475 = vadd.f32 0.0, %v2474
      %v2476 = vpop.f32.mrf.mxu0
      %v2477 = vpop.f32.mrf.mxu0
      %v2478 = vadd.f32 0.0, %v2477
      %v2479 = vpop.f32.mrf.mxu0
      %2480 = vmatprep.mubr.bf16.mxu0 0
      %2481 = vmatmul.mubr.bf16.gmra.mxu0 %v2340
      %v2482 = vpop.f32.mrf.mxu0
      %v2483 = vadd.f32 0.0, %v2482
      %v2484 = vpop.f32.mrf.mxu0
      %v2485 = vpop.f32.mrf.mxu0
      %v2486 = vadd.f32 0.0, %v2485
      %v2487 = vpop.f32.mrf.mxu0
      %2488 = vmatprep.mubr.bf16.mxu0 0
      %2489 = vmatmul.mubr.bf16.gmra.mxu0 %v2341
      %v2490 = vpop.f32.mrf.mxu0
      %v2491 = vadd.f32 0.0, %v2490
      %v2492 = vpop.f32.mrf.mxu0
      %v2493 = vpop.f32.mrf.mxu0
      %v2494 = vadd.f32 0.0, %v2493
      %v2495 = vpop.f32.mrf.mxu0
      %2496 = vmatprep.mubr.bf16.mxu0 0
      %2497 = vmatmul.mubr.bf16.gmra.mxu0 %v2342
      %v2498 = vpop.f32.mrf.mxu0
      %v2499 = vadd.f32 0.0, %v2498
      %v2500 = vpop.f32.mrf.mxu0
      %v2501 = vpop.f32.mrf.mxu0
      %v2502 = vadd.f32 0.0, %v2501
      %v2503 = vpop.f32.mrf.mxu0
      %2504 = vdwg.mxu0
      %v2505 = vadd.f32 %v2255, %v2443
      %v2506 = vadd.f32 %v2256, %v2446
      %v2507 = vadd.f32 %v2257, %v2451
      %v2508 = vadd.f32 %v2258, %v2454
      %v2509 = vadd.f32 %v2259, %v2459
      %v2510 = vadd.f32 %v2260, %v2462
      %v2511 = vadd.f32 %v2261, %v2467
      %v2512 = vadd.f32 %v2262, %v2470
      %v2513 = vadd.f32 %v2263, %v2475
      %v2514 = vadd.f32 %v2264, %v2478
      %v2515 = vadd.f32 %v2265, %v2483
      %v2516 = vadd.f32 %v2266, %v2486
      %v2517 = vadd.f32 %v2267, %v2491
      %v2518 = vadd.f32 %v2268, %v2494
      %v2519 = vadd.f32 %v2269, %v2499
      %v2520 = vadd.f32 %v2270, %v2502
      %v2521 = vld [vmem:[%s4] sm:$0x1]
      %v2523 = vlaneseq
      %v2524 = vshrl.u32 %v2523, 7
      %v2525 = vsub.s32 0, %v2524
      %v2526 = vrot.slane %v2521, %v2525
      %v2528 = vadd.f32 %v2505, %v2526
      %v2529 = vadd.f32 %v2506, %v2526
      %v2530 = vadd.f32 %v2507, %v2526
      %v2531 = vadd.f32 %v2508, %v2526
      %v2532 = vadd.f32 %v2509, %v2526
      %v2533 = vadd.f32 %v2510, %v2526
      %v2534 = vadd.f32 %v2511, %v2526
      %v2535 = vadd.f32 %v2512, %v2526
      %v2536 = vadd.f32 %v2513, %v2526
      %v2537 = vadd.f32 %v2514, %v2526
      %v2538 = vadd.f32 %v2515, %v2526
      %v2539 = vadd.f32 %v2516, %v2526
      %v2540 = vadd.f32 %v2517, %v2526
      %v2541 = vadd.f32 %v2518, %v2526
      %v2542 = vadd.f32 %v2519, %v2526
      %v2543 = vadd.f32 %v2520, %v2526
      %v2544 = vmax.f32 %v2528, 0.0
      %v2545 = vmax.f32 %v2529, 0.0
      %v2546 = vmax.f32 %v2530, 0.0
      %v2547 = vmax.f32 %v2531, 0.0
      %v2548 = vmax.f32 %v2532, 0.0
      %v2549 = vmax.f32 %v2533, 0.0
      %v2550 = vmax.f32 %v2534, 0.0
      %v2551 = vmax.f32 %v2535, 0.0
      %v2552 = vmax.f32 %v2536, 0.0
      %v2553 = vmax.f32 %v2537, 0.0
      %v2554 = vmax.f32 %v2538, 0.0
      %v2555 = vmax.f32 %v2539, 0.0
      %v2556 = vmax.f32 %v2540, 0.0
      %v2557 = vmax.f32 %v2541, 0.0
      %v2558 = vmax.f32 %v2542, 0.0
      %v2559 = vmax.f32 %v2543, 0.0
      %v2560 = vpack.c.bf16 %v2545, %v2544
      %v2561 = vpack.c.bf16 %v2547, %v2546
      %v2562 = vpack.c.bf16 %v2549, %v2548
      %v2563 = vpack.c.bf16 %v2551, %v2550
      %v2564 = vpack.c.bf16 %v2553, %v2552
      %v2565 = vpack.c.bf16 %v2555, %v2554
      %v2566 = vpack.c.bf16 %v2557, %v2556
      %v2567 = vpack.c.bf16 %v2559, %v2558
      %v2576 = vunpack.c.l.b16 %v2560
      %v2577 = vunpack.c.h.b16 %v2560
      %v2578 = vunpack.c.l.b16 %v2561
      %v2579 = vunpack.c.h.b16 %v2561
      %v2580 = vunpack.c.l.b16 %v2562
      %v2581 = vunpack.c.h.b16 %v2562
      %v2582 = vunpack.c.l.b16 %v2563
      %v2583 = vunpack.c.h.b16 %v2563
      %v2584 = vunpack.c.l.b16 %v2564
      %v2585 = vunpack.c.h.b16 %v2564
      %v2586 = vunpack.c.l.b16 %v2565
      %v2587 = vunpack.c.h.b16 %v2565
      %v2588 = vunpack.c.l.b16 %v2566
      %v2589 = vunpack.c.h.b16 %v2566
      %v2590 = vunpack.c.l.b16 %v2567
      %v2591 = vunpack.c.h.b16 %v2567
      %v2592 = vpack.c.b16 %v2576, %v2576
      %v2593 = vpack.c.b16 %v2577, %v2577
      %v2594 = vpack.c.b16 %v2578, %v2578
      %v2595 = vpack.c.b16 %v2579, %v2579
      %v2596 = vpack.c.b16 %v2580, %v2580
      %v2597 = vpack.c.b16 %v2581, %v2581
      %v2598 = vpack.c.b16 %v2582, %v2582
      %v2599 = vpack.c.b16 %v2583, %v2583
      %v2600 = vpack.c.b16 %v2584, %v2584
      %v2601 = vpack.c.b16 %v2585, %v2585
      %v2602 = vpack.c.b16 %v2586, %v2586
      %v2603 = vpack.c.b16 %v2587, %v2587
      %v2604 = vpack.c.b16 %v2588, %v2588
      %v2605 = vpack.c.b16 %v2589, %v2589
      %v2606 = vpack.c.b16 %v2590, %v2590
      %v2607 = vpack.c.b16 %v2591, %v2591
      %2624 = vst [vmem:[%s282] sm:$0xf] %v2592
      %2625 = vst [vmem:[%s282 + $0x4] sm:$0xf] %v2593
      %2626 = vst [vmem:[%s282 + $0x8] sm:$0xf] %v2594
      %2627 = vst [vmem:[%s282 + $0xc] sm:$0xf] %v2595
      %2628 = vst [vmem:[%s282 + $0x10] sm:$0xf] %v2596
      %2629 = vst [vmem:[%s282 + $0x14] sm:$0xf] %v2597
      %2630 = vst [vmem:[%s282 + $0x18] sm:$0xf] %v2598
      %2631 = vst [vmem:[%s282 + $0x1c] sm:$0xf] %v2599
      %2632 = vst [vmem:[%s282 + $0x20] sm:$0xf] %v2600
      %2633 = vst [vmem:[%s282 + $0x24] sm:$0xf] %v2601
      %2634 = vst [vmem:[%s282 + $0x28] sm:$0xf] %v2602
      %2635 = vst [vmem:[%s282 + $0x2c] sm:$0xf] %v2603
      %2636 = vst [vmem:[%s282 + $0x30] sm:$0xf] %v2604
      %2637 = vst [vmem:[%s282 + $0x34] sm:$0xf] %v2605
      %2638 = vst [vmem:[%s282 + $0x38] sm:$0xf] %v2606
      %2639 = vst [vmem:[%s282 + $0x3c] sm:$0xf] %v2607
      %s2640 = smul.u32 8, %s21
      %p2641 = scmp.lt.s32.totalorder %s20, 1
      %s2642 = scalar_select %p2641, %s20, 1
      %p2643 = scmp.lt.s32.totalorder %s2640, 15
      %s2644 = scalar_select %p2643, %s2640, 15
      %s2645 = smul.addr %s2644, 2
      %s2646 = smul.addr %s2642, 32
      %s2647 = sadd.s32 %s2645, %s2646
      %s2648 = smul.addr %s2647, 4
      %s2649 = scalar_lea.vmem %s5, %s2648
      // Predicated region
      $region41: #{fourier_cnn_forward.3} parent=39 // pred_check
        %p2650 = pneg %p168
      $region42: #{fourier_cnn_forward.3} parent=39 // pred_check_branch
        %2652 = sbr.rel (%p2650) target = $region44
      $region43: #{fourier_cnn_forward.3} parent=39 // pred_region
        %s2653 = smul.u32 8, %s21
      $region44: #{fourier_cnn_forward.3} parent=39 // pred_fallthru
        _
    $region40: #{fourier_cnn_forward.3} parent=5 // pred_fallthru
      _
    %p2654 = scmp.le.s32.totalorder 2, %s11
    // Predicated region
    $region45: #{fourier_cnn_forward.3} parent=5 // pred_check
      %p2655 = pneg %p2654
    $region46: #{fourier_cnn_forward.3} parent=5 // pred_check_branch
      %2657 = sbr.rel (%p2655) target = $region48
    $region47: #{fourier_cnn_forward.3} parent=5 // pred_region
      %s2658 = ssub.s32 %s11, 2
      // Predicated region
      $region49: #{fourier_cnn_forward.3} parent=47 // pred_check
        %p2659 = pneg %p174
      $region50: #{fourier_cnn_forward.3} parent=47 // pred_check_branch
        %2661 = sbr.rel (%p2659) target = $region52
      $region51: #{fourier_cnn_forward.3} parent=47 // pred_region
        %s2662 = smul.u32 8, %s23
        %p2663 = scmp.lt.s32.totalorder %s22, 1
        %s2664 = scalar_select %p2663, %s22, 1
        %p2665 = scmp.lt.s32.totalorder %s2662, 15
        %s2666 = scalar_select %p2665, %s2662, 15
        %s2667 = smul.addr %s2666, 2
        %s2668 = smul.addr %s2664, 32
        %s2669 = sadd.s32 %s2667, %s2668
        %s2670 = smul.addr %s2669, 4
        %s2671 = scalar_lea.vmem %s5, %s2670
      $region52: #{fourier_cnn_forward.3} parent=47 // pred_fallthru
        _
    $region48: #{fourier_cnn_forward.3} parent=5 // pred_fallthru
      _
  $region6: #{fourier_cnn_forward.3} parent=0 // loop_footer
    %s15 = sadd.s32 1, %s11
  $region7: #{fourier_cnn_forward.3} parent=0 // loop_footer_branch
    %10 = sbr.rel target = $region3
  $region8: #{fourier_cnn_forward.3} parent=0 // loop_exit
    _

// kernel: fourier_cnn_forward.4
$region0: #{fourier_cnn_forward.4}
  #allocation0 [shape = 'u32[]', space=smem, size = 0x4, offset = 0x4, fixed_abs, tag = 'smem constant byte address 0x4 - core index']
  #allocation1 [shape = 'u32[144,128]{1,0:T(1,128)}', space=vmem, size = 0x12000, scoped, tag = 'internal scratch']
  %s0 = inlined_call_operand.vmem [shape: bf16[2,18,18,128], index: 0, kind: input, shape index: {}]
  %s1 = inlined_call_operand.vmem [shape: bf16[9,128,128], index: 1, kind: input, shape index: {}]
  %s2 = inlined_call_operand.vmem [shape: f32[1,128], index: 2, kind: input, shape index: {}]
  %s3 = inlined_call_operand.vmem [shape: bf16[2,16,16,128], index: 3, kind: output, shape index: {}]
  %s4 = sld [smem:[#allocation0]]
  $region45: #{fourier_cnn_forward.4} parent=0
    _
  %s6 = ssub.s32 1, %s4
  %s7 = scalar_select 0, %s6, %s4
  loop: start=0, step=1, limit=6
  $region2: #{fourier_cnn_forward.4} parent=0 // loop_pre_header
    _
  $region3: #{fourier_cnn_forward.4} parent=0 // loop_header
    %s9 = sphi 0, %s13
    %p10 = scmp.ge.s32.totalorder %s9, 6
    %s16 = sphi 0, %s28
    %s17 = sphi 0, %s24
    %s18 = sphi 0, %s16
    %s19 = sphi 0, %s17
    %s20 = sphi 0, %s18
    %s21 = sphi 0, %s19
    %s31 = sphi 0, %s33
    %s34 = sphi 0, %s31
    %s35 = sphi 0, %s34
    %s51 = sphi 0, %s35
    %s55 = sphi 0, %s55
    %s57 = sphi 0, %s55
    %s58 = sphi 0, %s57
    %s72 = sphi 0, %s58
    %s76 = sphi 0, %s76
    %s78 = sphi 0, %s76
    %s79 = sphi 0, %s78
    %s93 = sphi 0, %s79
    %s101 = sphi 0, %s103
    %s104 = sphi 0, %s101
    %s105 = sphi 0, %s104
    %s121 = sphi 0, %s105
  $region4: #{fourier_cnn_forward.4} parent=0 // loop_header_branch
    %12 = sbr.rel (%p10) target = $region8
  $region5: #{fourier_cnn_forward.4} parent=0 // loop_body
    %s14 = ssub.s32 %s9, 1
    %s15 = ssub.s32 %s9, 2
    %s22 = sadd.s32 1, %s17
    %p23 = scmp.ge.s32.totalorder %s22, 2
    %s24 = scalar_select %p23, 0, %s22
    %s25 = sadd.s32 1, %s16
    %s26 = scalar_select %p23, %s25, %s16
    %p27 = scmp.ge.s32.totalorder %s26, 2
    %s28 = scalar_select %p27, 0, %s26
    %s29 = ssub.s32 %s16, %s28
    %p30 = scmp.eq.s32.totalorder %s29, 0
    %s32 = sadd.s32 %s31, 1
    %s33 = scalar_select %p30, %s31, %s32
    %p36 = pneg %p30
    %p37 = scmp.eq.s32.totalorder %s9, 3
    %p38 = por %p36, %p37
    %p39 = scmp.ne.s32.totalorder %s31, %s34
    %p40 = scmp.eq.s32.totalorder %s9, 0
    %p41 = por %p39, %p40
    %p42 = scmp.ne.s32.totalorder %s31, %s34
    %p43 = scmp.eq.s32.totalorder %s14, 3
    %p44 = por %p42, %p43
    %p45 = scmp.ne.s32.totalorder %s34, %s35
    %p46 = scmp.eq.s32.totalorder %s14, 0
    %p47 = por %p45, %p46
    %p48 = scmp.ne.s32.totalorder %s34, %s35
    %p49 = scmp.eq.s32.totalorder %s15, 3
    %p50 = por %p48, %p49
    %p52 = scmp.ne.s32.totalorder %s35, %s51
    %p53 = scmp.eq.s32.totalorder %s15, 0
    %p54 = por %p52, %p53
    %s56 = sadd.s32 %s55, 1
    %p59 = scmp.eq.s32.totalorder %s9, 3
    %p60 = scmp.ne.s32.totalorder %s55, %s57
    %p61 = scmp.eq.s32.totalorder %s9, 0
    %p62 = por %p60, %p61
    %p63 = scmp.ne.s32.totalorder %s55, %s57
    %p64 = scmp.eq.s32.totalorder %s14, 3
    %p65 = por %p63, %p64
    %p66 = scmp.ne.s32.totalorder %s57, %s58
    %p67 = scmp.eq.s32.totalorder %s14, 0
    %p68 = por %p66, %p67
    %p69 = scmp.ne.s32.totalorder %s57, %s58
    %p70 = scmp.eq.s32.totalorder %s15, 3
    %p71 = por %p69, %p70
    %p73 = scmp.ne.s32.totalorder %s58, %s72
    %p74 = scmp.eq.s32.totalorder %s15, 0
    %p75 = por %p73, %p74
    %s77 = sadd.s32 %s76, 1
    %p80 = scmp.eq.s32.totalorder %s9, 3
    %p81 = scmp.ne.s32.totalorder %s76, %s78
    %p82 = scmp.eq.s32.totalorder %s9, 0
    %p83 = por %p81, %p82
    %p84 = scmp.ne.s32.totalorder %s76, %s78
    %p85 = scmp.eq.s32.totalorder %s14, 3
    %p86 = por %p84, %p85
    %p87 = scmp.ne.s32.totalorder %s78, %s79
    %p88 = scmp.eq.s32.totalorder %s14, 0
    %p89 = por %p87, %p88
    %p90 = scmp.ne.s32.totalorder %s78, %s79
    %p91 = scmp.eq.s32.totalorder %s15, 3
    %p92 = por %p90, %p91
    %p94 = scmp.ne.s32.totalorder %s79, %s93
    %p95 = scmp.eq.s32.totalorder %s15, 0
    %p96 = por %p94, %p95
    %s97 = ssub.s32 %s16, %s28
    %s98 = ssub.s32 %s17, %s24
    %s99 = sor.u32 %s97, %s98
    %p100 = scmp.eq.s32.totalorder %s99, 0
    %s102 = sadd.s32 %s101, 1
    %s103 = scalar_select %p100, %s101, %s102
    %p106 = pneg %p100
    %p107 = scmp.eq.s32.totalorder %s9, 3
    %p108 = por %p106, %p107
    %p109 = scmp.ne.s32.totalorder %s101, %s104
    %p110 = scmp.eq.s32.totalorder %s9, 0
    %p111 = por %p109, %p110
    %p112 = scmp.ne.s32.totalorder %s101, %s104
    %p113 = scmp.eq.s32.totalorder %s14, 3
    %p114 = por %p112, %p113
    %p115 = scmp.ne.s32.totalorder %s104, %s105
    %p116 = scmp.eq.s32.totalorder %s14, 0
    %p117 = por %p115, %p116
    %p118 = scmp.ne.s32.totalorder %s104, %s105
    %p119 = scmp.eq.s32.totalorder %s15, 3
    %p120 = por %p118, %p119
    %p122 = scmp.ne.s32.totalorder %s105, %s121
    %p123 = scmp.eq.s32.totalorder %s15, 0
    %p124 = por %p122, %p123
    %p125 = scmp.le.s32.totalorder 1, %s9
    %p126 = scmp.lt.s32.totalorder %s9, 5
    %p127 = pnand %p125, %p126
    %p128 = pneg %p127
    // Predicated region
    $region9: #{fourier_cnn_forward.4} parent=5 // pred_check
      _
    $region10: #{fourier_cnn_forward.4} parent=5 // pred_check_branch
      %130 = sbr.rel (%p127) target = $region12
    $region11: #{fourier_cnn_forward.4} parent=5 // pred_region
      %s131 = ssub.s32 %s9, 1
      // Predicated region
      $region13: #{fourier_cnn_forward.4} parent=11 // pred_check
        %p132 = pneg %p68
      $region14: #{fourier_cnn_forward.4} parent=11 // pred_check_branch
        %134 = sbr.rel (%p132) target = $region16
      $region15: #{fourier_cnn_forward.4} parent=11 // pred_region
        _
      $region16: #{fourier_cnn_forward.4} parent=11 // pred_fallthru
        _
      // Predicated region
      $region17: #{fourier_cnn_forward.4} parent=11 // pred_check
        %p135 = pneg %p89
      $region18: #{fourier_cnn_forward.4} parent=11 // pred_check_branch
        %137 = sbr.rel (%p135) target = $region20
      $region19: #{fourier_cnn_forward.4} parent=11 // pred_region
        _
      $region20: #{fourier_cnn_forward.4} parent=11 // pred_fallthru
        _
    $region12: #{fourier_cnn_forward.4} parent=5 // pred_fallthru
      _
    %p138 = scmp.lt.s32.totalorder %s9, 4
    // Predicated region
    $region21: #{fourier_cnn_forward.4} parent=5 // pred_check
      %p139 = pneg %p138
    $region22: #{fourier_cnn_forward.4} parent=5 // pred_check_branch
      %141 = sbr.rel (%p139) target = $region24
    $region23: #{fourier_cnn_forward.4} parent=5 // pred_region
      // Predicated region
      $region25: #{fourier_cnn_forward.4} parent=23 // pred_check
        %p142 = pneg %p41
      $region26: #{fourier_cnn_forward.4} parent=23 // pred_check_branch
        %144 = sbr.rel (%p142) target = $region28
      $region27: #{fourier_cnn_forward.4} parent=23 // pred_region
        %p145 = scmp.lt.s32.totalorder %s16, 1
        %s146 = scalar_select %p145, %s16, 1
        %s147 = smul.addr %s146, 54
        %s148 = smul.addr %s147, 4
        %s149 = scalar_lea.vmem %s0, %s148
      $region28: #{fourier_cnn_forward.4} parent=23 // pred_fallthru
        _
    $region24: #{fourier_cnn_forward.4} parent=5 // pred_fallthru
      _
    %p150 = scmp.le.s32.totalorder 1, %s9
    %p151 = scmp.lt.s32.totalorder %s9, 5
    %p152 = pnand %p150, %p151
    %p153 = pneg %p152
    // Predicated region
    $region29: #{fourier_cnn_forward.4} parent=5 // pred_check
      _
    $region30: #{fourier_cnn_forward.4} parent=5 // pred_check_branch
      %155 = sbr.rel (%p152) target = $region32
    $region31: #{fourier_cnn_forward.4} parent=5 // pred_region
      %s156 = ssub.s32 %s9, 1
      %p157 = scmp.lt.s32.totalorder %s18, 1
      %s158 = scalar_select %p157, %s18, 1
      %s159 = smul.addr %s158, 54
      %s160 = smul.addr %s159, 4
      %s161 = scalar_lea.vmem %s0, %s160
      %p162 = pneg %p47
      %p163 = pneg %p44
      %p164 = pneg %p68
      %p165 = pneg %p65
      %p166 = pneg %p89
      %p167 = pneg %p86
      %p168 = pneg %p117
      %p169 = pneg %p114
      %s170 = smul.u32 8, %s19
      %p171 = scmp.lt.s32.totalorder %s18, 1
      %s172 = scalar_select %p171, %s18, 1
      %p173 = scmp.lt.s32.totalorder %s170, 15
      %s174 = scalar_select %p173, %s170, 15
      %s175 = smul.addr %s174, 2
      %s176 = smul.addr %s172, 32
      %s177 = sadd.s32 %s175, %s176
      %s178 = smul.addr %s177, 4
      %s179 = scalar_lea.vmem %s3, %s178
      %p180 = scmp.lt.s32.totalorder %s18, 1
      %s181 = scalar_select %p180, %s18, 1
      %s182 = smul.addr %s181, 54
      %s183 = smul.addr %s182, 4
      %s184 = scalar_lea.vmem %s0, %s183
      %s185 = smul.u32 8, %s19
      %p186 = scmp.lt.s32.totalorder %s18, 1
      %s187 = scalar_select %p186, %s18, 1
      %p188 = scmp.lt.s32.totalorder %s185, 15
      %s189 = scalar_select %p188, %s185, 15
      %s190 = smul.addr %s189, 2
      %s191 = smul.addr %s187, 32
      %s192 = sadd.s32 %s190, %s191
      %s193 = smul.addr %s192, 4
      %s194 = scalar_lea.vmem %s3, %s193
      %s195 = smul.u32 8, %s19
      %s197 = smul.u32 %s19, 8
      %s198 = smul.u32 %s197, 3
      %s199 = smul.addr %s198, 4
      %s200 = scalar_lea.vmem %s184, %s199
      %v201 = vld [vmem:[%s200] sm:$0xf]
      %v202 = vld [vmem:[%s200 + $0x4] sm:$0xf]
      %v203 = vld [vmem:[%s200 + $0xc] sm:$0xf]
      %v204 = vld [vmem:[%s200 + $0x10] sm:$0xf]
      %v205 = vld [vmem:[%s200 + $0x18] sm:$0xf]
      %v206 = vld [vmem:[%s200 + $0x1c] sm:$0xf]
      %v207 = vld [vmem:[%s200 + $0x24] sm:$0xf]
      %v208 = vld [vmem:[%s200 + $0x28] sm:$0xf]
      %v209 = vld [vmem:[%s200 + $0x30] sm:$0xf]
      %v210 = vld [vmem:[%s200 + $0x34] sm:$0xf]
      %v211 = vld [vmem:[%s200 + $0x3c] sm:$0xf]
      %v212 = vld [vmem:[%s200 + $0x40] sm:$0xf]
      %v213 = vld [vmem:[%s200 + $0x48] sm:$0xf]
      %v214 = vld [vmem:[%s200 + $0x4c] sm:$0xf]
      %v215 = vld [vmem:[%s200 + $0x54] sm:$0xf]
      %v216 = vld [vmem:[%s200 + $0x58] sm:$0xf]
      %v217 = vld [vmem:[%s1] sm:$0xf]
      %v218 = vld [vmem:[%s1 + $0x4] sm:$0xf]
      %v219 = vld [vmem:[%s1 + $0x8] sm:$0xf]
      %v220 = vld [vmem:[%s1 + $0xc] sm:$0xf]
      %v221 = vld [vmem:[%s1 + $0x10] sm:$0xf]
      %v222 = vld [vmem:[%s1 + $0x14] sm:$0xf]
      %v223 = vld [vmem:[%s1 + $0x18] sm:$0xf]
      %v224 = vld [vmem:[%s1 + $0x1c] sm:$0xf]
      %v225 = vld [vmem:[%s1 + $0x20] sm:$0xf]
      %v226 = vld [vmem:[%s1 + $0x24] sm:$0xf]
      %v227 = vld [vmem:[%s1 + $0x28] sm:$0xf]
      %v228 = vld [vmem:[%s1 + $0x2c] sm:$0xf]
      %v229 = vld [vmem:[%s1 + $0x30] sm:$0xf]
      %v230 = vld [vmem:[%s1 + $0x34] sm:$0xf]
      %v231 = vld [vmem:[%s1 + $0x38] sm:$0xf]
      %v232 = vld [vmem:[%s1 + $0x3c] sm:$0xf]
      %v233 = vld [vmem:[%s200 + $0x8] sm:$0x1]
      %v234 = vld [vmem:[%s200 + $0x14] sm:$0x1]
      %v235 = vld [vmem:[%s200 + $0x20] sm:$0x1]
      %v236 = vld [vmem:[%s200 + $0x2c] sm:$0x1]
      %v237 = vld [vmem:[%s200 + $0x38] sm:$0x1]
      %v238 = vld [vmem:[%s200 + $0x44] sm:$0x1]
      %v239 = vld [vmem:[%s200 + $0x50] sm:$0x1]
      %v240 = vld [vmem:[%s200 + $0x5c] sm:$0x1]
      %vm241 = vsmask.f32 3328
      %vm242 = vsmask.f32 7440
      %vm243 = vmor %vm241, %vm242
      %v245 = vshrl.u32 %v201, 16
      %v247 = vrot.slane %v245, 4
      %v248 = vshll.u32 %v201, 16
      %v250 = vrot.slane %v248, 5
      %v251 = vor.u32 %v247, %v250
      %v252 = vrot.slane %v251, 4
      %v254 = vshll.u32 %v202, 16
      %v256 = vrot.slane %v254, 5
      %v257 = vsel %vm243, %v252, %v256
      %v258 = vshrl.u32 %v202, 16
      %v260 = vrot.slane %v258, 4
      %v261 = vor.u32 %v260, %v256
      %v262 = vrot.slane %v261, 4
      %v264 = vshll.u32 %v233, 16
      %v266 = vrot.slane %v264, 5
      %v267 = vsel %vm243, %v262, %v266
      %v269 = vshrl.u32 %v203, 16
      %v271 = vrot.slane %v269, 4
      %v272 = vshll.u32 %v203, 16
      %v274 = vrot.slane %v272, 5
      %v275 = vor.u32 %v271, %v274
      %v276 = vrot.slane %v275, 4
      %v278 = vshll.u32 %v204, 16
      %v280 = vrot.slane %v278, 5
      %v281 = vsel %vm243, %v276, %v280
      %v282 = vshrl.u32 %v204, 16
      %v284 = vrot.slane %v282, 4
      %v285 = vor.u32 %v284, %v280
      %v286 = vrot.slane %v285, 4
      %v288 = vshll.u32 %v234, 16
      %v290 = vrot.slane %v288, 5
      %v291 = vsel %vm243, %v286, %v290
      %v293 = vshrl.u32 %v205, 16
      %v295 = vrot.slane %v293, 4
      %v296 = vshll.u32 %v205, 16
      %v298 = vrot.slane %v296, 5
      %v299 = vor.u32 %v295, %v298
      %v300 = vrot.slane %v299, 4
      %v302 = vshll.u32 %v206, 16
      %v304 = vrot.slane %v302, 5
      %v305 = vsel %vm243, %v300, %v304
      %v306 = vshrl.u32 %v206, 16
      %v308 = vrot.slane %v306, 4
      %v309 = vor.u32 %v308, %v304
      %v310 = vrot.slane %v309, 4
      %v312 = vshll.u32 %v235, 16
      %v314 = vrot.slane %v312, 5
      %v315 = vsel %vm243, %v310, %v314
      %v317 = vshrl.u32 %v207, 16
      %v319 = vrot.slane %v317, 4
      %v320 = vshll.u32 %v207, 16
      %v322 = vrot.slane %v320, 5
      %v323 = vor.u32 %v319, %v322
      %v324 = vrot.slane %v323, 4
      %v326 = vshll.u32 %v208, 16
      %v328 = vrot.slane %v326, 5
      %v329 = vsel %vm243, %v324, %v328
      %v330 = vshrl.u32 %v208, 16
      %v332 = vrot.slane %v330, 4
      %v333 = vor.u32 %v332, %v328
      %v334 = vrot.slane %v333, 4
      %v336 = vshll.u32 %v236, 16
      %v338 = vrot.slane %v336, 5
      %v339 = vsel %vm243, %v334, %v338
      %v341 = vshrl.u32 %v209, 16
      %v343 = vrot.slane %v341, 4
      %v344 = vshll.u32 %v209, 16
      %v346 = vrot.slane %v344, 5
      %v347 = vor.u32 %v343, %v346
      %v348 = vrot.slane %v347, 4
      %v350 = vshll.u32 %v210, 16
      %v352 = vrot.slane %v350, 5
      %v353 = vsel %vm243, %v348, %v352
      %v354 = vshrl.u32 %v210, 16
      %v356 = vrot.slane %v354, 4
      %v357 = vor.u32 %v356, %v352
      %v358 = vrot.slane %v357, 4
      %v360 = vshll.u32 %v237, 16
      %v362 = vrot.slane %v360, 5
      %v363 = vsel %vm243, %v358, %v362
      %v365 = vshrl.u32 %v211, 16
      %v367 = vrot.slane %v365, 4
      %v368 = vshll.u32 %v211, 16
      %v370 = vrot.slane %v368, 5
      %v371 = vor.u32 %v367, %v370
      %v372 = vrot.slane %v371, 4
      %v374 = vshll.u32 %v212, 16
      %v376 = vrot.slane %v374, 5
      %v377 = vsel %vm243, %v372, %v376
      %v378 = vshrl.u32 %v212, 16
      %v380 = vrot.slane %v378, 4
      %v381 = vor.u32 %v380, %v376
      %v382 = vrot.slane %v381, 4
      %v384 = vshll.u32 %v238, 16
      %v386 = vrot.slane %v384, 5
      %v387 = vsel %vm243, %v382, %v386
      %v389 = vshrl.u32 %v213, 16
      %v391 = vrot.slane %v389, 4
      %v392 = vshll.u32 %v213, 16
      %v394 = vrot.slane %v392, 5
      %v395 = vor.u32 %v391, %v394
      %v396 = vrot.slane %v395, 4
      %v398 = vshll.u32 %v214, 16
      %v400 = vrot.slane %v398, 5
      %v401 = vsel %vm243, %v396, %v400
      %v402 = vshrl.u32 %v214, 16
      %v404 = vrot.slane %v402, 4
      %v405 = vor.u32 %v404, %v400
      %v406 = vrot.slane %v405, 4
      %v408 = vshll.u32 %v239, 16
      %v410 = vrot.slane %v408, 5
      %v411 = vsel %vm243, %v406, %v410
      %v413 = vshrl.u32 %v215, 16
      %v415 = vrot.slane %v413, 4
      %v416 = vshll.u32 %v215, 16
      %v418 = vrot.slane %v416, 5
      %v419 = vor.u32 %v415, %v418
      %v420 = vrot.slane %v419, 4
      %v422 = vshll.u32 %v216, 16
      %v424 = vrot.slane %v422, 5
      %v425 = vsel %vm243, %v420, %v424
      %v426 = vshrl.u32 %v216, 16
      %v428 = vrot.slane %v426, 4
      %v429 = vor.u32 %v428, %v424
      %v430 = vrot.slane %v429, 4
      %v432 = vshll.u32 %v240, 16
      %v434 = vrot.slane %v432, 5
      %v435 = vsel %vm243, %v430, %v434
      %s436 = scalar_lea.vmem %s1, 64
      %v437 = vld [vmem:[%s436] sm:$0xf]
      %v438 = vld [vmem:[%s436 + $0x4] sm:$0xf]
      %v439 = vld [vmem:[%s436 + $0x8] sm:$0xf]
      %v440 = vld [vmem:[%s436 + $0xc] sm:$0xf]
      %v441 = vld [vmem:[%s436 + $0x10] sm:$0xf]
      %v442 = vld [vmem:[%s436 + $0x14] sm:$0xf]
      %v443 = vld [vmem:[%s436 + $0x18] sm:$0xf]
      %v444 = vld [vmem:[%s436 + $0x1c] sm:$0xf]
      %v445 = vld [vmem:[%s436 + $0x20] sm:$0xf]
      %v446 = vld [vmem:[%s436 + $0x24] sm:$0xf]
      %v447 = vld [vmem:[%s436 + $0x28] sm:$0xf]
      %v448 = vld [vmem:[%s436 + $0x2c] sm:$0xf]
      %v449 = vld [vmem:[%s436 + $0x30] sm:$0xf]
      %v450 = vld [vmem:[%s436 + $0x34] sm:$0xf]
      %v451 = vld [vmem:[%s436 + $0x38] sm:$0xf]
      %v452 = vld [vmem:[%s436 + $0x3c] sm:$0xf]
      %v453 = vunpack.c.l.b16 %v257
      %v454 = vunpack.c.l.b16 %v267
      %v455 = vunpack.c.l.b16 %v281
      %v456 = vunpack.c.l.b16 %v291
      %v457 = vunpack.c.l.b16 %v305
      %v458 = vunpack.c.l.b16 %v315
      %v459 = vunpack.c.l.b16 %v329
      %v460 = vunpack.c.l.b16 %v339
      %v461 = vunpack.c.l.b16 %v353
      %v462 = vunpack.c.l.b16 %v363
      %v463 = vunpack.c.l.b16 %v377
      %v464 = vunpack.c.l.b16 %v387
      %v465 = vunpack.c.l.b16 %v401
      %v466 = vunpack.c.l.b16 %v411
      %v467 = vunpack.c.l.b16 %v425
      %v468 = vunpack.c.l.b16 %v435
      %v469 = vpack.c.b16 %v454, %v453
      %v470 = vpack.c.b16 %v456, %v455
      %v471 = vpack.c.b16 %v458, %v457
      %v472 = vpack.c.b16 %v460, %v459
      %v473 = vpack.c.b16 %v462, %v461
      %v474 = vpack.c.b16 %v464, %v463
      %v475 = vpack.c.b16 %v466, %v465
      %v476 = vpack.c.b16 %v468, %v467
      %v501 = vunpack.c.l.b16 %v437
      %v502 = vunpack.c.l.b16 %v438
      %v503 = vunpack.c.l.b16 %v439
      %v504 = vunpack.c.l.b16 %v440
      %v505 = vunpack.c.l.b16 %v441
      %v506 = vunpack.c.l.b16 %v442
      %v507 = vunpack.c.l.b16 %v443
      %v508 = vunpack.c.l.b16 %v444
      %v509 = vunpack.c.l.b16 %v445
      %v510 = vunpack.c.l.b16 %v446
      %v511 = vunpack.c.l.b16 %v447
      %v512 = vunpack.c.l.b16 %v448
      %v513 = vunpack.c.l.b16 %v449
      %v514 = vunpack.c.l.b16 %v450
      %v515 = vunpack.c.l.b16 %v451
      %v516 = vunpack.c.l.b16 %v452
      %v517 = vpack.c.b16 %v502, %v501
      %v518 = vpack.c.b16 %v504, %v503
      %v519 = vpack.c.b16 %v506, %v505
      %v520 = vpack.c.b16 %v508, %v507
      %v521 = vpack.c.b16 %v510, %v509
      %v522 = vpack.c.b16 %v512, %v511
      %v523 = vpack.c.b16 %v514, %v513
      %v524 = vpack.c.b16 %v516, %v515
      %533 = vmatprep.subr.bf16.mxu0 0
      %534 = vmatpush1.bf16.msra.mxu0 %v524
      %535 = vmatprep.subr.bf16.mxu0 0
      %536 = vmatpush1.bf16.msra.mxu0 %v523
      %537 = vmatprep.subr.bf16.mxu0 0
      %538 = vmatpush1.bf16.msra.mxu0 %v522
      %539 = vmatprep.subr.bf16.mxu0 0
      %540 = vmatpush1.bf16.msra.mxu0 %v521
      %541 = vmatprep.subr.bf16.mxu0 0
      %542 = vmatpush1.bf16.msra.mxu0 %v520
      %543 = vmatprep.subr.bf16.mxu0 0
      %544 = vmatpush1.bf16.msra.mxu0 %v519
      %545 = vmatprep.subr.bf16.mxu0 0
      %546 = vmatpush1.bf16.msra.mxu0 %v518
      %547 = vmatprep.subr.bf16.mxu0 0
      %548 = vmatpush1.bf16.msra.mxu0 %v517
      %549 = vmatprep.subr.bf16.mxu0 0
      %550 = vmatpush2.bf16.msra.mxu0 0
      %551 = vmatprep.subr.bf16.mxu0 0
      %552 = vmatpush2.bf16.msra.mxu0 0
      %553 = vmatprep.subr.bf16.mxu0 0
      %554 = vmatpush2.bf16.msra.mxu0 0
      %555 = vmatprep.subr.bf16.mxu0 0
      %556 = vmatpush2.bf16.msra.mxu0 0
      %557 = vmatprep.subr.bf16.mxu0 0
      %558 = vmatpush2.bf16.msra.mxu0 0
      %559 = vmatprep.subr.bf16.mxu0 0
      %560 = vmatpush2.bf16.msra.mxu0 0
      %561 = vmatprep.subr.bf16.mxu0 0
      %562 = vmatpush2.bf16.msra.mxu0 0
      %563 = vmatprep.subr.bf16.mxu0 0
      %564 = vmatpush2.bf16.msra.mxu0 0
      %565 = vmatprep.mubr.bf16.mxu0 0
      %566 = vmatmul.mubr.bf16.gmra.mxu0 %v469
      %v567 = vpop.f32.mrf.mxu0
      %v568 = vadd.f32 0.0, %v567
      %v569 = vpop.f32.mrf.mxu0
      %v570 = vpop.f32.mrf.mxu0
      %v571 = vadd.f32 0.0, %v570
      %v572 = vpop.f32.mrf.mxu0
      %573 = vmatprep.mubr.bf16.mxu0 0
      %574 = vmatmul.mubr.bf16.gmra.mxu0 %v470
      %v575 = vpop.f32.mrf.mxu0
      %v576 = vadd.f32 0.0, %v575
      %v577 = vpop.f32.mrf.mxu0
      %v578 = vpop.f32.mrf.mxu0
      %v579 = vadd.f32 0.0, %v578
      %v580 = vpop.f32.mrf.mxu0
      %581 = vmatprep.mubr.bf16.mxu0 0
      %582 = vmatmul.mubr.bf16.gmra.mxu0 %v471
      %v583 = vpop.f32.mrf.mxu0
      %v584 = vadd.f32 0.0, %v583
      %v585 = vpop.f32.mrf.mxu0
      %v586 = vpop.f32.mrf.mxu0
      %v587 = vadd.f32 0.0, %v586
      %v588 = vpop.f32.mrf.mxu0
      %589 = vmatprep.mubr.bf16.mxu0 0
      %590 = vmatmul.mubr.bf16.gmra.mxu0 %v472
      %v591 = vpop.f32.mrf.mxu0
      %v592 = vadd.f32 0.0, %v591
      %v593 = vpop.f32.mrf.mxu0
      %v594 = vpop.f32.mrf.mxu0
      %v595 = vadd.f32 0.0, %v594
      %v596 = vpop.f32.mrf.mxu0
      %597 = vmatprep.mubr.bf16.mxu0 0
      %598 = vmatmul.mubr.bf16.gmra.mxu0 %v473
      %v599 = vpop.f32.mrf.mxu0
      %v600 = vadd.f32 0.0, %v599
      %v601 = vpop.f32.mrf.mxu0
      %v602 = vpop.f32.mrf.mxu0
      %v603 = vadd.f32 0.0, %v602
      %v604 = vpop.f32.mrf.mxu0
      %605 = vmatprep.mubr.bf16.mxu0 0
      %606 = vmatmul.mubr.bf16.gmra.mxu0 %v474
      %v607 = vpop.f32.mrf.mxu0
      %v608 = vadd.f32 0.0, %v607
      %v609 = vpop.f32.mrf.mxu0
      %v610 = vpop.f32.mrf.mxu0
      %v611 = vadd.f32 0.0, %v610
      %v612 = vpop.f32.mrf.mxu0
      %613 = vmatprep.mubr.bf16.mxu0 0
      %614 = vmatmul.mubr.bf16.gmra.mxu0 %v475
      %v615 = vpop.f32.mrf.mxu0
      %v616 = vadd.f32 0.0, %v615
      %v617 = vpop.f32.mrf.mxu0
      %v618 = vpop.f32.mrf.mxu0
      %v619 = vadd.f32 0.0, %v618
      %v620 = vpop.f32.mrf.mxu0
      %621 = vmatprep.mubr.bf16.mxu0 0
      %622 = vmatmul.mubr.bf16.gmra.mxu0 %v476
      %v623 = vpop.f32.mrf.mxu0
      %v624 = vadd.f32 0.0, %v623
      %v625 = vpop.f32.mrf.mxu0
      %v626 = vpop.f32.mrf.mxu0
      %v627 = vadd.f32 0.0, %v626
      %v628 = vpop.f32.mrf.mxu0
      %629 = vdwg.mxu0
      %v646 = vunpack.c.l.b16 %v201
      %v647 = vunpack.c.l.b16 %v202
      %v648 = vunpack.c.l.b16 %v203
      %v649 = vunpack.c.l.b16 %v204
      %v650 = vunpack.c.l.b16 %v205
      %v651 = vunpack.c.l.b16 %v206
      %v652 = vunpack.c.l.b16 %v207
      %v653 = vunpack.c.l.b16 %v208
      %v654 = vunpack.c.l.b16 %v209
      %v655 = vunpack.c.l.b16 %v210
      %v656 = vunpack.c.l.b16 %v211
      %v657 = vunpack.c.l.b16 %v212
      %v658 = vunpack.c.l.b16 %v213
      %v659 = vunpack.c.l.b16 %v214
      %v660 = vunpack.c.l.b16 %v215
      %v661 = vunpack.c.l.b16 %v216
      %v662 = vpack.c.b16 %v647, %v646
      %v663 = vpack.c.b16 %v649, %v648
      %v664 = vpack.c.b16 %v651, %v650
      %v665 = vpack.c.b16 %v653, %v652
      %v666 = vpack.c.b16 %v655, %v654
      %v667 = vpack.c.b16 %v657, %v656
      %v668 = vpack.c.b16 %v659, %v658
      %v669 = vpack.c.b16 %v661, %v660
      %v694 = vunpack.c.l.b16 %v217
      %v695 = vunpack.c.l.b16 %v218
      %v696 = vunpack.c.l.b16 %v219
      %v697 = vunpack.c.l.b16 %v220
      %v698 = vunpack.c.l.b16 %v221
      %v699 = vunpack.c.l.b16 %v222
      %v700 = vunpack.c.l.b16 %v223
      %v701 = vunpack.c.l.b16 %v224
      %v702 = vunpack.c.l.b16 %v225
      %v703 = vunpack.c.l.b16 %v226
      %v704 = vunpack.c.l.b16 %v227
      %v705 = vunpack.c.l.b16 %v228
      %v706 = vunpack.c.l.b16 %v229
      %v707 = vunpack.c.l.b16 %v230
      %v708 = vunpack.c.l.b16 %v231
      %v709 = vunpack.c.l.b16 %v232
      %v710 = vpack.c.b16 %v695, %v694
      %v711 = vpack.c.b16 %v697, %v696
      %v712 = vpack.c.b16 %v699, %v698
      %v713 = vpack.c.b16 %v701, %v700
      %v714 = vpack.c.b16 %v703, %v702
      %v715 = vpack.c.b16 %v705, %v704
      %v716 = vpack.c.b16 %v707, %v706
      %v717 = vpack.c.b16 %v709, %v708
      %726 = vmatprep.subr.bf16.mxu0 0
      %727 = vmatpush1.bf16.msra.mxu0 %v717
      %728 = vmatprep.subr.bf16.mxu0 0
      %729 = vmatpush1.bf16.msra.mxu0 %v716
      %730 = vmatprep.subr.bf16.mxu0 0
      %731 = vmatpush1.bf16.msra.mxu0 %v715
      %732 = vmatprep.subr.bf16.mxu0 0
      %733 = vmatpush1.bf16.msra.mxu0 %v714
      %734 = vmatprep.subr.bf16.mxu0 0
      %735 = vmatpush1.bf16.msra.mxu0 %v713
      %736 = vmatprep.subr.bf16.mxu0 0
      %737 = vmatpush1.bf16.msra.mxu0 %v712
      %738 = vmatprep.subr.bf16.mxu0 0
      %739 = vmatpush1.bf16.msra.mxu0 %v711
      %740 = vmatprep.subr.bf16.mxu0 0
      %741 = vmatpush1.bf16.msra.mxu0 %v710
      %742 = vmatprep.subr.bf16.mxu0 0
      %743 = vmatpush2.bf16.msra.mxu0 0
      %744 = vmatprep.subr.bf16.mxu0 0
      %745 = vmatpush2.bf16.msra.mxu0 0
      %746 = vmatprep.subr.bf16.mxu0 0
      %747 = vmatpush2.bf16.msra.mxu0 0
      %748 = vmatprep.subr.bf16.mxu0 0
      %749 = vmatpush2.bf16.msra.mxu0 0
      %750 = vmatprep.subr.bf16.mxu0 0
      %751 = vmatpush2.bf16.msra.mxu0 0
      %752 = vmatprep.subr.bf16.mxu0 0
      %753 = vmatpush2.bf16.msra.mxu0 0
      %754 = vmatprep.subr.bf16.mxu0 0
      %755 = vmatpush2.bf16.msra.mxu0 0
      %756 = vmatprep.subr.bf16.mxu0 0
      %757 = vmatpush2.bf16.msra.mxu0 0
      %758 = vmatprep.mubr.bf16.mxu0 0
      %759 = vmatmul.mubr.bf16.gmra.mxu0 %v662
      %v760 = vpop.f32.mrf.mxu0
      %v761 = vadd.f32 %v568, %v760
      %v762 = vpop.f32.mrf.mxu0
      %v763 = vpop.f32.mrf.mxu0
      %v764 = vadd.f32 %v571, %v763
      %v765 = vpop.f32.mrf.mxu0
      %766 = vmatprep.mubr.bf16.mxu0 0
      %767 = vmatmul.mubr.bf16.gmra.mxu0 %v663
      %v768 = vpop.f32.mrf.mxu0
      %v769 = vadd.f32 %v576, %v768
      %v770 = vpop.f32.mrf.mxu0
      %v771 = vpop.f32.mrf.mxu0
      %v772 = vadd.f32 %v579, %v771
      %v773 = vpop.f32.mrf.mxu0
      %774 = vmatprep.mubr.bf16.mxu0 0
      %775 = vmatmul.mubr.bf16.gmra.mxu0 %v664
      %v776 = vpop.f32.mrf.mxu0
      %v777 = vadd.f32 %v584, %v776
      %v778 = vpop.f32.mrf.mxu0
      %v779 = vpop.f32.mrf.mxu0
      %v780 = vadd.f32 %v587, %v779
      %v781 = vpop.f32.mrf.mxu0
      %782 = vmatprep.mubr.bf16.mxu0 0
      %783 = vmatmul.mubr.bf16.gmra.mxu0 %v665
      %v784 = vpop.f32.mrf.mxu0
      %v785 = vadd.f32 %v592, %v784
      %v786 = vpop.f32.mrf.mxu0
      %v787 = vpop.f32.mrf.mxu0
      %v788 = vadd.f32 %v595, %v787
      %v789 = vpop.f32.mrf.mxu0
      %790 = vmatprep.mubr.bf16.mxu0 0
      %791 = vmatmul.mubr.bf16.gmra.mxu0 %v666
      %v792 = vpop.f32.mrf.mxu0
      %v793 = vadd.f32 %v600, %v792
      %v794 = vpop.f32.mrf.mxu0
      %v795 = vpop.f32.mrf.mxu0
      %v796 = vadd.f32 %v603, %v795
      %v797 = vpop.f32.mrf.mxu0
      %798 = vmatprep.mubr.bf16.mxu0 0
      %799 = vmatmul.mubr.bf16.gmra.mxu0 %v667
      %v800 = vpop.f32.mrf.mxu0
      %v801 = vadd.f32 %v608, %v800
      %v802 = vpop.f32.mrf.mxu0
      %v803 = vpop.f32.mrf.mxu0
      %v804 = vadd.f32 %v611, %v803
      %v805 = vpop.f32.mrf.mxu0
      %806 = vmatprep.mubr.bf16.mxu0 0
      %807 = vmatmul.mubr.bf16.gmra.mxu0 %v668
      %v808 = vpop.f32.mrf.mxu0
      %v809 = vadd.f32 %v616, %v808
      %v810 = vpop.f32.mrf.mxu0
      %v811 = vpop.f32.mrf.mxu0
      %v812 = vadd.f32 %v619, %v811
      %v813 = vpop.f32.mrf.mxu0
      %814 = vmatprep.mubr.bf16.mxu0 0
      %815 = vmatmul.mubr.bf16.gmra.mxu0 %v669
      %v816 = vpop.f32.mrf.mxu0
      %v817 = vadd.f32 %v624, %v816
      %v818 = vpop.f32.mrf.mxu0
      %v819 = vpop.f32.mrf.mxu0
      %v820 = vadd.f32 %v627, %v819
      %v821 = vpop.f32.mrf.mxu0
      %822 = vdwg.mxu0
      %v823 = vld [vmem:[%s200] sm:$0xe]
      %v824 = vld [vmem:[%s200 + $0xc] sm:$0xe]
      %v825 = vld [vmem:[%s200 + $0x18] sm:$0xe]
      %v826 = vld [vmem:[%s200 + $0x24] sm:$0xe]
      %v827 = vld [vmem:[%s200 + $0x30] sm:$0xe]
      %v828 = vld [vmem:[%s200 + $0x3c] sm:$0xe]
      %v829 = vld [vmem:[%s200 + $0x48] sm:$0xe]
      %v830 = vld [vmem:[%s200 + $0x54] sm:$0xe]
      %vm847 = vcmask 1042432
      %vm848 = vcmask 1046532
      %vm849 = vmor %vm847, %vm848
      %v850 = vrot.slane %v823, 5
      %v851 = vrot.slane %v850, 4
      %v852 = vrot.slane %v202, 5
      %v853 = vsel %vm849, %v851, %v852
      %v854 = vrot.slane %v852, 4
      %v855 = vrot.slane %v233, 5
      %v856 = vsel %vm849, %v854, %v855
      %v857 = vrot.slane %v824, 5
      %v858 = vrot.slane %v857, 4
      %v859 = vrot.slane %v204, 5
      %v860 = vsel %vm849, %v858, %v859
      %v861 = vrot.slane %v859, 4
      %v862 = vrot.slane %v234, 5
      %v863 = vsel %vm849, %v861, %v862
      %v864 = vrot.slane %v825, 5
      %v865 = vrot.slane %v864, 4
      %v866 = vrot.slane %v206, 5
      %v867 = vsel %vm849, %v865, %v866
      %v868 = vrot.slane %v866, 4
      %v869 = vrot.slane %v235, 5
      %v870 = vsel %vm849, %v868, %v869
      %v871 = vrot.slane %v826, 5
      %v872 = vrot.slane %v871, 4
      %v873 = vrot.slane %v208, 5
      %v874 = vsel %vm849, %v872, %v873
      %v875 = vrot.slane %v873, 4
      %v876 = vrot.slane %v236, 5
      %v877 = vsel %vm849, %v875, %v876
      %v878 = vrot.slane %v827, 5
      %v879 = vrot.slane %v878, 4
      %v880 = vrot.slane %v210, 5
      %v881 = vsel %vm849, %v879, %v880
      %v882 = vrot.slane %v880, 4
      %v883 = vrot.slane %v237, 5
      %v884 = vsel %vm849, %v882, %v883
      %v885 = vrot.slane %v828, 5
      %v886 = vrot.slane %v885, 4
      %v887 = vrot.slane %v212, 5
      %v888 = vsel %vm849, %v886, %v887
      %v889 = vrot.slane %v887, 4
      %v890 = vrot.slane %v238, 5
      %v891 = vsel %vm849, %v889, %v890
      %v892 = vrot.slane %v829, 5
      %v893 = vrot.slane %v892, 4
      %v894 = vrot.slane %v214, 5
      %v895 = vsel %vm849, %v893, %v894
      %v896 = vrot.slane %v894, 4
      %v897 = vrot.slane %v239, 5
      %v898 = vsel %vm849, %v896, %v897
      %v899 = vrot.slane %v830, 5
      %v900 = vrot.slane %v899, 4
      %v901 = vrot.slane %v216, 5
      %v902 = vsel %vm849, %v900, %v901
      %v903 = vrot.slane %v901, 4
      %v904 = vrot.slane %v240, 5
      %v905 = vsel %vm849, %v903, %v904
      %s906 = scalar_lea.vmem %s1, 128
      %v907 = vld [vmem:[%s906] sm:$0xf]
      %v908 = vld [vmem:[%s906 + $0x4] sm:$0xf]
      %v909 = vld [vmem:[%s906 + $0x8] sm:$0xf]
      %v910 = vld [vmem:[%s906 + $0xc] sm:$0xf]
      %v911 = vld [vmem:[%s906 + $0x10] sm:$0xf]
      %v912 = vld [vmem:[%s906 + $0x14] sm:$0xf]
      %v913 = vld [vmem:[%s906 + $0x18] sm:$0xf]
      %v914 = vld [vmem:[%s906 + $0x1c] sm:$0xf]
      %v915 = vld [vmem:[%s906 + $0x20] sm:$0xf]
      %v916 = vld [vmem:[%s906 + $0x24] sm:$0xf]
      %v917 = vld [vmem:[%s906 + $0x28] sm:$0xf]
      %v918 = vld [vmem:[%s906 + $0x2c] sm:$0xf]
      %v919 = vld [vmem:[%s906 + $0x30] sm:$0xf]
      %v920 = vld [vmem:[%s906 + $0x34] sm:$0xf]
      %v921 = vld [vmem:[%s906 + $0x38] sm:$0xf]
      %v922 = vld [vmem:[%s906 + $0x3c] sm:$0xf]
      %v923 = vunpack.c.l.b16 %v853
      %v924 = vunpack.c.l.b16 %v856
      %v925 = vunpack.c.l.b16 %v860
      %v926 = vunpack.c.l.b16 %v863
      %v927 = vunpack.c.l.b16 %v867
      %v928 = vunpack.c.l.b16 %v870
      %v929 = vunpack.c.l.b16 %v874
      %v930 = vunpack.c.l.b16 %v877
      %v931 = vunpack.c.l.b16 %v881
      %v932 = vunpack.c.l.b16 %v884
      %v933 = vunpack.c.l.b16 %v888
      %v934 = vunpack.c.l.b16 %v891
      %v935 = vunpack.c.l.b16 %v895
      %v936 = vunpack.c.l.b16 %v898
      %v937 = vunpack.c.l.b16 %v902
      %v938 = vunpack.c.l.b16 %v905
      %v939 = vpack.c.b16 %v924, %v923
      %v940 = vpack.c.b16 %v926, %v925
      %v941 = vpack.c.b16 %v928, %v927
      %v942 = vpack.c.b16 %v930, %v929
      %v943 = vpack.c.b16 %v932, %v931
      %v944 = vpack.c.b16 %v934, %v933
      %v945 = vpack.c.b16 %v936, %v935
      %v946 = vpack.c.b16 %v938, %v937
      %v971 = vunpack.c.l.b16 %v907
      %v972 = vunpack.c.l.b16 %v908
      %v973 = vunpack.c.l.b16 %v909
      %v974 = vunpack.c.l.b16 %v910
      %v975 = vunpack.c.l.b16 %v911
      %v976 = vunpack.c.l.b16 %v912
      %v977 = vunpack.c.l.b16 %v913
      %v978 = vunpack.c.l.b16 %v914
      %v979 = vunpack.c.l.b16 %v915
      %v980 = vunpack.c.l.b16 %v916
      %v981 = vunpack.c.l.b16 %v917
      %v982 = vunpack.c.l.b16 %v918
      %v983 = vunpack.c.l.b16 %v919
      %v984 = vunpack.c.l.b16 %v920
      %v985 = vunpack.c.l.b16 %v921
      %v986 = vunpack.c.l.b16 %v922
      %v987 = vpack.c.b16 %v972, %v971
      %v988 = vpack.c.b16 %v974, %v973
      %v989 = vpack.c.b16 %v976, %v975
      %v990 = vpack.c.b16 %v978, %v977
      %v991 = vpack.c.b16 %v980, %v979
      %v992 = vpack.c.b16 %v982, %v981
      %v993 = vpack.c.b16 %v984, %v983
      %v994 = vpack.c.b16 %v986, %v985
      %1003 = vmatprep.subr.bf16.mxu0 0
      %1004 = vmatpush1.bf16.msra.mxu0 %v994
      %1005 = vmatprep.subr.bf16.mxu0 0
      %1006 = vmatpush1.bf16.msra.mxu0 %v993
      %1007 = vmatprep.subr.bf16.mxu0 0
      %1008 = vmatpush1.bf16.msra.mxu0 %v992
      %1009 = vmatprep.subr.bf16.mxu0 0
      %1010 = vmatpush1.bf16.msra.mxu0 %v991
      %1011 = vmatprep.subr.bf16.mxu0 0
      %1012 = vmatpush1.bf16.msra.mxu0 %v990
      %1013 = vmatprep.subr.bf16.mxu0 0
      %1014 = vmatpush1.bf16.msra.mxu0 %v989
      %1015 = vmatprep.subr.bf16.mxu0 0
      %1016 = vmatpush1.bf16.msra.mxu0 %v988
      %1017 = vmatprep.subr.bf16.mxu0 0
      %1018 = vmatpush1.bf16.msra.mxu0 %v987
      %1019 = vmatprep.subr.bf16.mxu0 0
      %1020 = vmatpush2.bf16.msra.mxu0 0
      %1021 = vmatprep.subr.bf16.mxu0 0
      %1022 = vmatpush2.bf16.msra.mxu0 0
      %1023 = vmatprep.subr.bf16.mxu0 0
      %1024 = vmatpush2.bf16.msra.mxu0 0
      %1025 = vmatprep.subr.bf16.mxu0 0
      %1026 = vmatpush2.bf16.msra.mxu0 0
      %1027 = vmatprep.subr.bf16.mxu0 0
      %1028 = vmatpush2.bf16.msra.mxu0 0
      %1029 = vmatprep.subr.bf16.mxu0 0
      %1030 = vmatpush2.bf16.msra.mxu0 0
      %1031 = vmatprep.subr.bf16.mxu0 0
      %1032 = vmatpush2.bf16.msra.mxu0 0
      %1033 = vmatprep.subr.bf16.mxu0 0
      %1034 = vmatpush2.bf16.msra.mxu0 0
      %1035 = vmatprep.mubr.bf16.mxu0 0
      %1036 = vmatmul.mubr.bf16.gmra.mxu0 %v939
      %v1037 = vpop.f32.mrf.mxu0
      %v1038 = vadd.f32 0.0, %v1037
      %v1039 = vpop.f32.mrf.mxu0
      %v1040 = vpop.f32.mrf.mxu0
      %v1041 = vadd.f32 0.0, %v1040
      %v1042 = vpop.f32.mrf.mxu0
      %1043 = vmatprep.mubr.bf16.mxu0 0
      %1044 = vmatmul.mubr.bf16.gmra.mxu0 %v940
      %v1045 = vpop.f32.mrf.mxu0
      %v1046 = vadd.f32 0.0, %v1045
      %v1047 = vpop.f32.mrf.mxu0
      %v1048 = vpop.f32.mrf.mxu0
      %v1049 = vadd.f32 0.0, %v1048
      %v1050 = vpop.f32.mrf.mxu0
      %1051 = vmatprep.mubr.bf16.mxu0 0
      %1052 = vmatmul.mubr.bf16.gmra.mxu0 %v941
      %v1053 = vpop.f32.mrf.mxu0
      %v1054 = vadd.f32 0.0, %v1053
      %v1055 = vpop.f32.mrf.mxu0
      %v1056 = vpop.f32.mrf.mxu0
      %v1057 = vadd.f32 0.0, %v1056
      %v1058 = vpop.f32.mrf.mxu0
      %1059 = vmatprep.mubr.bf16.mxu0 0
      %1060 = vmatmul.mubr.bf16.gmra.mxu0 %v942
      %v1061 = vpop.f32.mrf.mxu0
      %v1062 = vadd.f32 0.0, %v1061
      %v1063 = vpop.f32.mrf.mxu0
      %v1064 = vpop.f32.mrf.mxu0
      %v1065 = vadd.f32 0.0, %v1064
      %v1066 = vpop.f32.mrf.mxu0
      %1067 = vmatprep.mubr.bf16.mxu0 0
      %1068 = vmatmul.mubr.bf16.gmra.mxu0 %v943
      %v1069 = vpop.f32.mrf.mxu0
      %v1070 = vadd.f32 0.0, %v1069
      %v1071 = vpop.f32.mrf.mxu0
      %v1072 = vpop.f32.mrf.mxu0
      %v1073 = vadd.f32 0.0, %v1072
      %v1074 = vpop.f32.mrf.mxu0
      %1075 = vmatprep.mubr.bf16.mxu0 0
      %1076 = vmatmul.mubr.bf16.gmra.mxu0 %v944
      %v1077 = vpop.f32.mrf.mxu0
      %v1078 = vadd.f32 0.0, %v1077
      %v1079 = vpop.f32.mrf.mxu0
      %v1080 = vpop.f32.mrf.mxu0
      %v1081 = vadd.f32 0.0, %v1080
      %v1082 = vpop.f32.mrf.mxu0
      %1083 = vmatprep.mubr.bf16.mxu0 0
      %1084 = vmatmul.mubr.bf16.gmra.mxu0 %v945
      %v1085 = vpop.f32.mrf.mxu0
      %v1086 = vadd.f32 0.0, %v1085
      %v1087 = vpop.f32.mrf.mxu0
      %v1088 = vpop.f32.mrf.mxu0
      %v1089 = vadd.f32 0.0, %v1088
      %v1090 = vpop.f32.mrf.mxu0
      %1091 = vmatprep.mubr.bf16.mxu0 0
      %1092 = vmatmul.mubr.bf16.gmra.mxu0 %v946
      %v1093 = vpop.f32.mrf.mxu0
      %v1094 = vadd.f32 0.0, %v1093
      %v1095 = vpop.f32.mrf.mxu0
      %v1096 = vpop.f32.mrf.mxu0
      %v1097 = vadd.f32 0.0, %v1096
      %v1098 = vpop.f32.mrf.mxu0
      %1099 = vdwg.mxu0
      %v1100 = vadd.f32 %v761, %v1038
      %v1101 = vadd.f32 %v764, %v1041
      %v1102 = vadd.f32 %v769, %v1046
      %v1103 = vadd.f32 %v772, %v1049
      %v1104 = vadd.f32 %v777, %v1054
      %v1105 = vadd.f32 %v780, %v1057
      %v1106 = vadd.f32 %v785, %v1062
      %v1107 = vadd.f32 %v788, %v1065
      %v1108 = vadd.f32 %v793, %v1070
      %v1109 = vadd.f32 %v796, %v1073
      %v1110 = vadd.f32 %v801, %v1078
      %v1111 = vadd.f32 %v804, %v1081
      %v1112 = vadd.f32 %v809, %v1086
      %v1113 = vadd.f32 %v812, %v1089
      %v1114 = vadd.f32 %v817, %v1094
      %v1115 = vadd.f32 %v820, %v1097
      %s1116 = sadd.s32 %s197, 1
      %s1117 = smul.u32 %s1116, 3
      %s1118 = smul.addr %s1117, 4
      %s1119 = scalar_lea.vmem %s184, %s1118
      %v1120 = vld [vmem:[%s1119] sm:$0xf]
      %v1121 = vld [vmem:[%s1119 + $0x4] sm:$0xf]
      %v1122 = vld [vmem:[%s1119 + $0xc] sm:$0xf]
      %v1123 = vld [vmem:[%s1119 + $0x10] sm:$0xf]
      %v1124 = vld [vmem:[%s1119 + $0x18] sm:$0xf]
      %v1125 = vld [vmem:[%s1119 + $0x1c] sm:$0xf]
      %v1126 = vld [vmem:[%s1119 + $0x24] sm:$0xf]
      %v1127 = vld [vmem:[%s1119 + $0x28] sm:$0xf]
      %v1128 = vld [vmem:[%s1119 + $0x30] sm:$0xf]
      %v1129 = vld [vmem:[%s1119 + $0x34] sm:$0xf]
      %v1130 = vld [vmem:[%s1119 + $0x3c] sm:$0xf]
      %v1131 = vld [vmem:[%s1119 + $0x40] sm:$0xf]
      %v1132 = vld [vmem:[%s1119 + $0x48] sm:$0xf]
      %v1133 = vld [vmem:[%s1119 + $0x4c] sm:$0xf]
      %v1134 = vld [vmem:[%s1119 + $0x54] sm:$0xf]
      %v1135 = vld [vmem:[%s1119 + $0x58] sm:$0xf]
      %s1136 = scalar_lea.vmem %s1, 192
      %v1137 = vld [vmem:[%s1136] sm:$0xf]
      %v1138 = vld [vmem:[%s1136 + $0x4] sm:$0xf]
      %v1139 = vld [vmem:[%s1136 + $0x8] sm:$0xf]
      %v1140 = vld [vmem:[%s1136 + $0xc] sm:$0xf]
      %v1141 = vld [vmem:[%s1136 + $0x10] sm:$0xf]
      %v1142 = vld [vmem:[%s1136 + $0x14] sm:$0xf]
      %v1143 = vld [vmem:[%s1136 + $0x18] sm:$0xf]
      %v1144 = vld [vmem:[%s1136 + $0x1c] sm:$0xf]
      %v1145 = vld [vmem:[%s1136 + $0x20] sm:$0xf]
      %v1146 = vld [vmem:[%s1136 + $0x24] sm:$0xf]
      %v1147 = vld [vmem:[%s1136 + $0x28] sm:$0xf]
      %v1148 = vld [vmem:[%s1136 + $0x2c] sm:$0xf]
      %v1149 = vld [vmem:[%s1136 + $0x30] sm:$0xf]
      %v1150 = vld [vmem:[%s1136 + $0x34] sm:$0xf]
      %v1151 = vld [vmem:[%s1136 + $0x38] sm:$0xf]
      %v1152 = vld [vmem:[%s1136 + $0x3c] sm:$0xf]
      %v1169 = vunpack.c.l.b16 %v1120
      %v1170 = vunpack.c.l.b16 %v1121
      %v1171 = vunpack.c.l.b16 %v1122
      %v1172 = vunpack.c.l.b16 %v1123
      %v1173 = vunpack.c.l.b16 %v1124
      %v1174 = vunpack.c.l.b16 %v1125
      %v1175 = vunpack.c.l.b16 %v1126
      %v1176 = vunpack.c.l.b16 %v1127
      %v1177 = vunpack.c.l.b16 %v1128
      %v1178 = vunpack.c.l.b16 %v1129
      %v1179 = vunpack.c.l.b16 %v1130
      %v1180 = vunpack.c.l.b16 %v1131
      %v1181 = vunpack.c.l.b16 %v1132
      %v1182 = vunpack.c.l.b16 %v1133
      %v1183 = vunpack.c.l.b16 %v1134
      %v1184 = vunpack.c.l.b16 %v1135
      %v1185 = vpack.c.b16 %v1170, %v1169
      %v1186 = vpack.c.b16 %v1172, %v1171
      %v1187 = vpack.c.b16 %v1174, %v1173
      %v1188 = vpack.c.b16 %v1176, %v1175
      %v1189 = vpack.c.b16 %v1178, %v1177
      %v1190 = vpack.c.b16 %v1180, %v1179
      %v1191 = vpack.c.b16 %v1182, %v1181
      %v1192 = vpack.c.b16 %v1184, %v1183
      %v1217 = vunpack.c.l.b16 %v1137
      %v1218 = vunpack.c.l.b16 %v1138
      %v1219 = vunpack.c.l.b16 %v1139
      %v1220 = vunpack.c.l.b16 %v1140
      %v1221 = vunpack.c.l.b16 %v1141
      %v1222 = vunpack.c.l.b16 %v1142
      %v1223 = vunpack.c.l.b16 %v1143
      %v1224 = vunpack.c.l.b16 %v1144
      %v1225 = vunpack.c.l.b16 %v1145
      %v1226 = vunpack.c.l.b16 %v1146
      %v1227 = vunpack.c.l.b16 %v1147
      %v1228 = vunpack.c.l.b16 %v1148
      %v1229 = vunpack.c.l.b16 %v1149
      %v1230 = vunpack.c.l.b16 %v1150
      %v1231 = vunpack.c.l.b16 %v1151
      %v1232 = vunpack.c.l.b16 %v1152
      %v1233 = vpack.c.b16 %v1218, %v1217
      %v1234 = vpack.c.b16 %v1220, %v1219
      %v1235 = vpack.c.b16 %v1222, %v1221
      %v1236 = vpack.c.b16 %v1224, %v1223
      %v1237 = vpack.c.b16 %v1226, %v1225
      %v1238 = vpack.c.b16 %v1228, %v1227
      %v1239 = vpack.c.b16 %v1230, %v1229
      %v1240 = vpack.c.b16 %v1232, %v1231
      %1249 = vmatprep.subr.bf16.mxu0 0
      %1250 = vmatpush1.bf16.msra.mxu0 %v1240
      %1251 = vmatprep.subr.bf16.mxu0 0
      %1252 = vmatpush1.bf16.msra.mxu0 %v1239
      %1253 = vmatprep.subr.bf16.mxu0 0
      %1254 = vmatpush1.bf16.msra.mxu0 %v1238
      %1255 = vmatprep.subr.bf16.mxu0 0
      %1256 = vmatpush1.bf16.msra.mxu0 %v1237
      %1257 = vmatprep.subr.bf16.mxu0 0
      %1258 = vmatpush1.bf16.msra.mxu0 %v1236
      %1259 = vmatprep.subr.bf16.mxu0 0
      %1260 = vmatpush1.bf16.msra.mxu0 %v1235
      %1261 = vmatprep.subr.bf16.mxu0 0
      %1262 = vmatpush1.bf16.msra.mxu0 %v1234
      %1263 = vmatprep.subr.bf16.mxu0 0
      %1264 = vmatpush1.bf16.msra.mxu0 %v1233
      %1265 = vmatprep.subr.bf16.mxu0 0
      %1266 = vmatpush2.bf16.msra.mxu0 0
      %1267 = vmatprep.subr.bf16.mxu0 0
      %1268 = vmatpush2.bf16.msra.mxu0 0
      %1269 = vmatprep.subr.bf16.mxu0 0
      %1270 = vmatpush2.bf16.msra.mxu0 0
      %1271 = vmatprep.subr.bf16.mxu0 0
      %1272 = vmatpush2.bf16.msra.mxu0 0
      %1273 = vmatprep.subr.bf16.mxu0 0
      %1274 = vmatpush2.bf16.msra.mxu0 0
      %1275 = vmatprep.subr.bf16.mxu0 0
      %1276 = vmatpush2.bf16.msra.mxu0 0
      %1277 = vmatprep.subr.bf16.mxu0 0
      %1278 = vmatpush2.bf16.msra.mxu0 0
      %1279 = vmatprep.subr.bf16.mxu0 0
      %1280 = vmatpush2.bf16.msra.mxu0 0
      %1281 = vmatprep.mubr.bf16.mxu0 0
      %1282 = vmatmul.mubr.bf16.gmra.mxu0 %v1185
      %v1283 = vpop.f32.mrf.mxu0
      %v1284 = vadd.f32 0.0, %v1283
      %v1285 = vpop.f32.mrf.mxu0
      %v1286 = vpop.f32.mrf.mxu0
      %v1287 = vadd.f32 0.0, %v1286
      %v1288 = vpop.f32.mrf.mxu0
      %1289 = vmatprep.mubr.bf16.mxu0 0
      %1290 = vmatmul.mubr.bf16.gmra.mxu0 %v1186
      %v1291 = vpop.f32.mrf.mxu0
      %v1292 = vadd.f32 0.0, %v1291
      %v1293 = vpop.f32.mrf.mxu0
      %v1294 = vpop.f32.mrf.mxu0
      %v1295 = vadd.f32 0.0, %v1294
      %v1296 = vpop.f32.mrf.mxu0
      %1297 = vmatprep.mubr.bf16.mxu0 0
      %1298 = vmatmul.mubr.bf16.gmra.mxu0 %v1187
      %v1299 = vpop.f32.mrf.mxu0
      %v1300 = vadd.f32 0.0, %v1299
      %v1301 = vpop.f32.mrf.mxu0
      %v1302 = vpop.f32.mrf.mxu0
      %v1303 = vadd.f32 0.0, %v1302
      %v1304 = vpop.f32.mrf.mxu0
      %1305 = vmatprep.mubr.bf16.mxu0 0
      %1306 = vmatmul.mubr.bf16.gmra.mxu0 %v1188
      %v1307 = vpop.f32.mrf.mxu0
      %v1308 = vadd.f32 0.0, %v1307
      %v1309 = vpop.f32.mrf.mxu0
      %v1310 = vpop.f32.mrf.mxu0
      %v1311 = vadd.f32 0.0, %v1310
      %v1312 = vpop.f32.mrf.mxu0
      %1313 = vmatprep.mubr.bf16.mxu0 0
      %1314 = vmatmul.mubr.bf16.gmra.mxu0 %v1189
      %v1315 = vpop.f32.mrf.mxu0
      %v1316 = vadd.f32 0.0, %v1315
      %v1317 = vpop.f32.mrf.mxu0
      %v1318 = vpop.f32.mrf.mxu0
      %v1319 = vadd.f32 0.0, %v1318
      %v1320 = vpop.f32.mrf.mxu0
      %1321 = vmatprep.mubr.bf16.mxu0 0
      %1322 = vmatmul.mubr.bf16.gmra.mxu0 %v1190
      %v1323 = vpop.f32.mrf.mxu0
      %v1324 = vadd.f32 0.0, %v1323
      %v1325 = vpop.f32.mrf.mxu0
      %v1326 = vpop.f32.mrf.mxu0
      %v1327 = vadd.f32 0.0, %v1326
      %v1328 = vpop.f32.mrf.mxu0
      %1329 = vmatprep.mubr.bf16.mxu0 0
      %1330 = vmatmul.mubr.bf16.gmra.mxu0 %v1191
      %v1331 = vpop.f32.mrf.mxu0
      %v1332 = vadd.f32 0.0, %v1331
      %v1333 = vpop.f32.mrf.mxu0
      %v1334 = vpop.f32.mrf.mxu0
      %v1335 = vadd.f32 0.0, %v1334
      %v1336 = vpop.f32.mrf.mxu0
      %1337 = vmatprep.mubr.bf16.mxu0 0
      %1338 = vmatmul.mubr.bf16.gmra.mxu0 %v1192
      %v1339 = vpop.f32.mrf.mxu0
      %v1340 = vadd.f32 0.0, %v1339
      %v1341 = vpop.f32.mrf.mxu0
      %v1342 = vpop.f32.mrf.mxu0
      %v1343 = vadd.f32 0.0, %v1342
      %v1344 = vpop.f32.mrf.mxu0
      %1345 = vdwg.mxu0
      %v1346 = vadd.f32 %v1100, %v1284
      %v1347 = vadd.f32 %v1101, %v1287
      %v1348 = vadd.f32 %v1102, %v1292
      %v1349 = vadd.f32 %v1103, %v1295
      %v1350 = vadd.f32 %v1104, %v1300
      %v1351 = vadd.f32 %v1105, %v1303
      %v1352 = vadd.f32 %v1106, %v1308
      %v1353 = vadd.f32 %v1107, %v1311
      %v1354 = vadd.f32 %v1108, %v1316
      %v1355 = vadd.f32 %v1109, %v1319
      %v1356 = vadd.f32 %v1110, %v1324
      %v1357 = vadd.f32 %v1111, %v1327
      %v1358 = vadd.f32 %v1112, %v1332
      %v1359 = vadd.f32 %v1113, %v1335
      %v1360 = vadd.f32 %v1114, %v1340
      %v1361 = vadd.f32 %v1115, %v1343
      %v1362 = vld [vmem:[%s1119] sm:$0xf]
      %v1363 = vld [vmem:[%s1119 + $0x4] sm:$0xf]
      %v1364 = vld [vmem:[%s1119 + $0x8] sm:$0x1]
      %v1365 = vld [vmem:[%s1119 + $0xc] sm:$0xf]
      %v1366 = vld [vmem:[%s1119 + $0x10] sm:$0xf]
      %v1367 = vld [vmem:[%s1119 + $0x14] sm:$0x1]
      %v1368 = vld [vmem:[%s1119 + $0x18] sm:$0xf]
      %v1369 = vld [vmem:[%s1119 + $0x1c] sm:$0xf]
      %v1370 = vld [vmem:[%s1119 + $0x20] sm:$0x1]
      %v1371 = vld [vmem:[%s1119 + $0x24] sm:$0xf]
      %v1372 = vld [vmem:[%s1119 + $0x28] sm:$0xf]
      %v1373 = vld [vmem:[%s1119 + $0x2c] sm:$0x1]
      %v1374 = vld [vmem:[%s1119 + $0x30] sm:$0xf]
      %v1375 = vld [vmem:[%s1119 + $0x34] sm:$0xf]
      %v1376 = vld [vmem:[%s1119 + $0x38] sm:$0x1]
      %v1377 = vld [vmem:[%s1119 + $0x3c] sm:$0xf]
      %v1378 = vld [vmem:[%s1119 + $0x40] sm:$0xf]
      %v1379 = vld [vmem:[%s1119 + $0x44] sm:$0x1]
      %v1380 = vld [vmem:[%s1119 + $0x48] sm:$0xf]
      %v1381 = vld [vmem:[%s1119 + $0x4c] sm:$0xf]
      %v1382 = vld [vmem:[%s1119 + $0x50] sm:$0x1]
      %v1383 = vld [vmem:[%s1119 + $0x54] sm:$0xf]
      %v1384 = vld [vmem:[%s1119 + $0x58] sm:$0xf]
      %v1385 = vld [vmem:[%s1119 + $0x5c] sm:$0x1]
      %v1387 = vshrl.u32 %v1362, 16
      %v1389 = vrot.slane %v1387, 4
      %v1390 = vshll.u32 %v1362, 16
      %v1392 = vrot.slane %v1390, 5
      %v1393 = vor.u32 %v1389, %v1392
      %v1394 = vrot.slane %v1393, 4
      %v1396 = vshll.u32 %v1363, 16
      %v1398 = vrot.slane %v1396, 5
      %v1399 = vsel %vm243, %v1394, %v1398
      %v1400 = vshrl.u32 %v1363, 16
      %v1402 = vrot.slane %v1400, 4
      %v1403 = vor.u32 %v1402, %v1398
      %v1404 = vrot.slane %v1403, 4
      %v1406 = vshll.u32 %v1364, 16
      %v1408 = vrot.slane %v1406, 5
      %v1409 = vsel %vm243, %v1404, %v1408
      %v1411 = vshrl.u32 %v1365, 16
      %v1413 = vrot.slane %v1411, 4
      %v1414 = vshll.u32 %v1365, 16
      %v1416 = vrot.slane %v1414, 5
      %v1417 = vor.u32 %v1413, %v1416
      %v1418 = vrot.slane %v1417, 4
      %v1420 = vshll.u32 %v1366, 16
      %v1422 = vrot.slane %v1420, 5
      %v1423 = vsel %vm243, %v1418, %v1422
      %v1424 = vshrl.u32 %v1366, 16
      %v1426 = vrot.slane %v1424, 4
      %v1427 = vor.u32 %v1426, %v1422
      %v1428 = vrot.slane %v1427, 4
      %v1430 = vshll.u32 %v1367, 16
      %v1432 = vrot.slane %v1430, 5
      %v1433 = vsel %vm243, %v1428, %v1432
      %v1435 = vshrl.u32 %v1368, 16
      %v1437 = vrot.slane %v1435, 4
      %v1438 = vshll.u32 %v1368, 16
      %v1440 = vrot.slane %v1438, 5
      %v1441 = vor.u32 %v1437, %v1440
      %v1442 = vrot.slane %v1441, 4
      %v1444 = vshll.u32 %v1369, 16
      %v1446 = vrot.slane %v1444, 5
      %v1447 = vsel %vm243, %v1442, %v1446
      %v1448 = vshrl.u32 %v1369, 16
      %v1450 = vrot.slane %v1448, 4
      %v1451 = vor.u32 %v1450, %v1446
      %v1452 = vrot.slane %v1451, 4
      %v1454 = vshll.u32 %v1370, 16
      %v1456 = vrot.slane %v1454, 5
      %v1457 = vsel %vm243, %v1452, %v1456
      %v1459 = vshrl.u32 %v1371, 16
      %v1461 = vrot.slane %v1459, 4
      %v1462 = vshll.u32 %v1371, 16
      %v1464 = vrot.slane %v1462, 5
      %v1465 = vor.u32 %v1461, %v1464
      %v1466 = vrot.slane %v1465, 4
      %v1468 = vshll.u32 %v1372, 16
      %v1470 = vrot.slane %v1468, 5
      %v1471 = vsel %vm243, %v1466, %v1470
      %v1472 = vshrl.u32 %v1372, 16
      %v1474 = vrot.slane %v1472, 4
      %v1475 = vor.u32 %v1474, %v1470
      %v1476 = vrot.slane %v1475, 4
      %v1478 = vshll.u32 %v1373, 16
      %v1480 = vrot.slane %v1478, 5
      %v1481 = vsel %vm243, %v1476, %v1480
      %v1483 = vshrl.u32 %v1374, 16
      %v1485 = vrot.slane %v1483, 4
      %v1486 = vshll.u32 %v1374, 16
      %v1488 = vrot.slane %v1486, 5
      %v1489 = vor.u32 %v1485, %v1488
      %v1490 = vrot.slane %v1489, 4
      %v1492 = vshll.u32 %v1375, 16
      %v1494 = vrot.slane %v1492, 5
      %v1495 = vsel %vm243, %v1490, %v1494
      %v1496 = vshrl.u32 %v1375, 16
      %v1498 = vrot.slane %v1496, 4
      %v1499 = vor.u32 %v1498, %v1494
      %v1500 = vrot.slane %v1499, 4
      %v1502 = vshll.u32 %v1376, 16
      %v1504 = vrot.slane %v1502, 5
      %v1505 = vsel %vm243, %v1500, %v1504
      %v1507 = vshrl.u32 %v1377, 16
      %v1509 = vrot.slane %v1507, 4
      %v1510 = vshll.u32 %v1377, 16
      %v1512 = vrot.slane %v1510, 5
      %v1513 = vor.u32 %v1509, %v1512
      %v1514 = vrot.slane %v1513, 4
      %v1516 = vshll.u32 %v1378, 16
      %v1518 = vrot.slane %v1516, 5
      %v1519 = vsel %vm243, %v1514, %v1518
      %v1520 = vshrl.u32 %v1378, 16
      %v1522 = vrot.slane %v1520, 4
      %v1523 = vor.u32 %v1522, %v1518
      %v1524 = vrot.slane %v1523, 4
      %v1526 = vshll.u32 %v1379, 16
      %v1528 = vrot.slane %v1526, 5
      %v1529 = vsel %vm243, %v1524, %v1528
      %v1531 = vshrl.u32 %v1380, 16
      %v1533 = vrot.slane %v1531, 4
      %v1534 = vshll.u32 %v1380, 16
      %v1536 = vrot.slane %v1534, 5
      %v1537 = vor.u32 %v1533, %v1536
      %v1538 = vrot.slane %v1537, 4
      %v1540 = vshll.u32 %v1381, 16
      %v1542 = vrot.slane %v1540, 5
      %v1543 = vsel %vm243, %v1538, %v1542
      %v1544 = vshrl.u32 %v1381, 16
      %v1546 = vrot.slane %v1544, 4
      %v1547 = vor.u32 %v1546, %v1542
      %v1548 = vrot.slane %v1547, 4
      %v1550 = vshll.u32 %v1382, 16
      %v1552 = vrot.slane %v1550, 5
      %v1553 = vsel %vm243, %v1548, %v1552
      %v1555 = vshrl.u32 %v1383, 16
      %v1557 = vrot.slane %v1555, 4
      %v1558 = vshll.u32 %v1383, 16
      %v1560 = vrot.slane %v1558, 5
      %v1561 = vor.u32 %v1557, %v1560
      %v1562 = vrot.slane %v1561, 4
      %v1564 = vshll.u32 %v1384, 16
      %v1566 = vrot.slane %v1564, 5
      %v1567 = vsel %vm243, %v1562, %v1566
      %v1568 = vshrl.u32 %v1384, 16
      %v1570 = vrot.slane %v1568, 4
      %v1571 = vor.u32 %v1570, %v1566
      %v1572 = vrot.slane %v1571, 4
      %v1574 = vshll.u32 %v1385, 16
      %v1576 = vrot.slane %v1574, 5
      %v1577 = vsel %vm243, %v1572, %v1576
      %s1578 = scalar_lea.vmem %s1, 256
      %v1579 = vld [vmem:[%s1578] sm:$0xf]
      %v1580 = vld [vmem:[%s1578 + $0x4] sm:$0xf]
      %v1581 = vld [vmem:[%s1578 + $0x8] sm:$0xf]
      %v1582 = vld [vmem:[%s1578 + $0xc] sm:$0xf]
      %v1583 = vld [vmem:[%s1578 + $0x10] sm:$0xf]
      %v1584 = vld [vmem:[%s1578 + $0x14] sm:$0xf]
      %v1585 = vld [vmem:[%s1578 + $0x18] sm:$0xf]
      %v1586 = vld [vmem:[%s1578 + $0x1c] sm:$0xf]
      %v1587 = vld [vmem:[%s1578 + $0x20] sm:$0xf]
      %v1588 = vld [vmem:[%s1578 + $0x24] sm:$0xf]
      %v1589 = vld [vmem:[%s1578 + $0x28] sm:$0xf]
      %v1590 = vld [vmem:[%s1578 + $0x2c] sm:$0xf]
      %v1591 = vld [vmem:[%s1578 + $0x30] sm:$0xf]
      %v1592 = vld [vmem:[%s1578 + $0x34] sm:$0xf]
      %v1593 = vld [vmem:[%s1578 + $0x38] sm:$0xf]
      %v1594 = vld [vmem:[%s1578 + $0x3c] sm:$0xf]
      %v1595 = vunpack.c.l.b16 %v1399
      %v1596 = vunpack.c.l.b16 %v1409
      %v1597 = vunpack.c.l.b16 %v1423
      %v1598 = vunpack.c.l.b16 %v1433
      %v1599 = vunpack.c.l.b16 %v1447
      %v1600 = vunpack.c.l.b16 %v1457
      %v1601 = vunpack.c.l.b16 %v1471
      %v1602 = vunpack.c.l.b16 %v1481
      %v1603 = vunpack.c.l.b16 %v1495
      %v1604 = vunpack.c.l.b16 %v1505
      %v1605 = vunpack.c.l.b16 %v1519
      %v1606 = vunpack.c.l.b16 %v1529
      %v1607 = vunpack.c.l.b16 %v1543
      %v1608 = vunpack.c.l.b16 %v1553
      %v1609 = vunpack.c.l.b16 %v1567
      %v1610 = vunpack.c.l.b16 %v1577
      %v1611 = vpack.c.b16 %v1596, %v1595
      %v1612 = vpack.c.b16 %v1598, %v1597
      %v1613 = vpack.c.b16 %v1600, %v1599
      %v1614 = vpack.c.b16 %v1602, %v1601
      %v1615 = vpack.c.b16 %v1604, %v1603
      %v1616 = vpack.c.b16 %v1606, %v1605
      %v1617 = vpack.c.b16 %v1608, %v1607
      %v1618 = vpack.c.b16 %v1610, %v1609
      %v1643 = vunpack.c.l.b16 %v1579
      %v1644 = vunpack.c.l.b16 %v1580
      %v1645 = vunpack.c.l.b16 %v1581
      %v1646 = vunpack.c.l.b16 %v1582
      %v1647 = vunpack.c.l.b16 %v1583
      %v1648 = vunpack.c.l.b16 %v1584
      %v1649 = vunpack.c.l.b16 %v1585
      %v1650 = vunpack.c.l.b16 %v1586
      %v1651 = vunpack.c.l.b16 %v1587
      %v1652 = vunpack.c.l.b16 %v1588
      %v1653 = vunpack.c.l.b16 %v1589
      %v1654 = vunpack.c.l.b16 %v1590
      %v1655 = vunpack.c.l.b16 %v1591
      %v1656 = vunpack.c.l.b16 %v1592
      %v1657 = vunpack.c.l.b16 %v1593
      %v1658 = vunpack.c.l.b16 %v1594
      %v1659 = vpack.c.b16 %v1644, %v1643
      %v1660 = vpack.c.b16 %v1646, %v1645
      %v1661 = vpack.c.b16 %v1648, %v1647
      %v1662 = vpack.c.b16 %v1650, %v1649
      %v1663 = vpack.c.b16 %v1652, %v1651
      %v1664 = vpack.c.b16 %v1654, %v1653
      %v1665 = vpack.c.b16 %v1656, %v1655
      %v1666 = vpack.c.b16 %v1658, %v1657
      %1675 = vmatprep.subr.bf16.mxu0 0
      %1676 = vmatpush1.bf16.msra.mxu0 %v1666
      %1677 = vmatprep.subr.bf16.mxu0 0
      %1678 = vmatpush1.bf16.msra.mxu0 %v1665
      %1679 = vmatprep.subr.bf16.mxu0 0
      %1680 = vmatpush1.bf16.msra.mxu0 %v1664
      %1681 = vmatprep.subr.bf16.mxu0 0
      %1682 = vmatpush1.bf16.msra.mxu0 %v1663
      %1683 = vmatprep.subr.bf16.mxu0 0
      %1684 = vmatpush1.bf16.msra.mxu0 %v1662
      %1685 = vmatprep.subr.bf16.mxu0 0
      %1686 = vmatpush1.bf16.msra.mxu0 %v1661
      %1687 = vmatprep.subr.bf16.mxu0 0
      %1688 = vmatpush1.bf16.msra.mxu0 %v1660
      %1689 = vmatprep.subr.bf16.mxu0 0
      %1690 = vmatpush1.bf16.msra.mxu0 %v1659
      %1691 = vmatprep.subr.bf16.mxu0 0
      %1692 = vmatpush2.bf16.msra.mxu0 0
      %1693 = vmatprep.subr.bf16.mxu0 0
      %1694 = vmatpush2.bf16.msra.mxu0 0
      %1695 = vmatprep.subr.bf16.mxu0 0
      %1696 = vmatpush2.bf16.msra.mxu0 0
      %1697 = vmatprep.subr.bf16.mxu0 0
      %1698 = vmatpush2.bf16.msra.mxu0 0
      %1699 = vmatprep.subr.bf16.mxu0 0
      %1700 = vmatpush2.bf16.msra.mxu0 0
      %1701 = vmatprep.subr.bf16.mxu0 0
      %1702 = vmatpush2.bf16.msra.mxu0 0
      %1703 = vmatprep.subr.bf16.mxu0 0
      %1704 = vmatpush2.bf16.msra.mxu0 0
      %1705 = vmatprep.subr.bf16.mxu0 0
      %1706 = vmatpush2.bf16.msra.mxu0 0
      %1707 = vmatprep.mubr.bf16.mxu0 0
      %1708 = vmatmul.mubr.bf16.gmra.mxu0 %v1611
      %v1709 = vpop.f32.mrf.mxu0
      %v1710 = vadd.f32 0.0, %v1709
      %v1711 = vpop.f32.mrf.mxu0
      %v1712 = vpop.f32.mrf.mxu0
      %v1713 = vadd.f32 0.0, %v1712
      %v1714 = vpop.f32.mrf.mxu0
      %1715 = vmatprep.mubr.bf16.mxu0 0
      %1716 = vmatmul.mubr.bf16.gmra.mxu0 %v1612
      %v1717 = vpop.f32.mrf.mxu0
      %v1718 = vadd.f32 0.0, %v1717
      %v1719 = vpop.f32.mrf.mxu0
      %v1720 = vpop.f32.mrf.mxu0
      %v1721 = vadd.f32 0.0, %v1720
      %v1722 = vpop.f32.mrf.mxu0
      %1723 = vmatprep.mubr.bf16.mxu0 0
      %1724 = vmatmul.mubr.bf16.gmra.mxu0 %v1613
      %v1725 = vpop.f32.mrf.mxu0
      %v1726 = vadd.f32 0.0, %v1725
      %v1727 = vpop.f32.mrf.mxu0
      %v1728 = vpop.f32.mrf.mxu0
      %v1729 = vadd.f32 0.0, %v1728
      %v1730 = vpop.f32.mrf.mxu0
      %1731 = vmatprep.mubr.bf16.mxu0 0
      %1732 = vmatmul.mubr.bf16.gmra.mxu0 %v1614
      %v1733 = vpop.f32.mrf.mxu0
      %v1734 = vadd.f32 0.0, %v1733
      %v1735 = vpop.f32.mrf.mxu0
      %v1736 = vpop.f32.mrf.mxu0
      %v1737 = vadd.f32 0.0, %v1736
      %v1738 = vpop.f32.mrf.mxu0
      %1739 = vmatprep.mubr.bf16.mxu0 0
      %1740 = vmatmul.mubr.bf16.gmra.mxu0 %v1615
      %v1741 = vpop.f32.mrf.mxu0
      %v1742 = vadd.f32 0.0, %v1741
      %v1743 = vpop.f32.mrf.mxu0
      %v1744 = vpop.f32.mrf.mxu0
      %v1745 = vadd.f32 0.0, %v1744
      %v1746 = vpop.f32.mrf.mxu0
      %1747 = vmatprep.mubr.bf16.mxu0 0
      %1748 = vmatmul.mubr.bf16.gmra.mxu0 %v1616
      %v1749 = vpop.f32.mrf.mxu0
      %v1750 = vadd.f32 0.0, %v1749
      %v1751 = vpop.f32.mrf.mxu0
      %v1752 = vpop.f32.mrf.mxu0
      %v1753 = vadd.f32 0.0, %v1752
      %v1754 = vpop.f32.mrf.mxu0
      %1755 = vmatprep.mubr.bf16.mxu0 0
      %1756 = vmatmul.mubr.bf16.gmra.mxu0 %v1617
      %v1757 = vpop.f32.mrf.mxu0
      %v1758 = vadd.f32 0.0, %v1757
      %v1759 = vpop.f32.mrf.mxu0
      %v1760 = vpop.f32.mrf.mxu0
      %v1761 = vadd.f32 0.0, %v1760
      %v1762 = vpop.f32.mrf.mxu0
      %1763 = vmatprep.mubr.bf16.mxu0 0
      %1764 = vmatmul.mubr.bf16.gmra.mxu0 %v1618
      %v1765 = vpop.f32.mrf.mxu0
      %v1766 = vadd.f32 0.0, %v1765
      %v1767 = vpop.f32.mrf.mxu0
      %v1768 = vpop.f32.mrf.mxu0
      %v1769 = vadd.f32 0.0, %v1768
      %v1770 = vpop.f32.mrf.mxu0
      %1771 = vdwg.mxu0
      %v1772 = vadd.f32 %v1346, %v1710
      %v1773 = vadd.f32 %v1347, %v1713
      %v1774 = vadd.f32 %v1348, %v1718
      %v1775 = vadd.f32 %v1349, %v1721
      %v1776 = vadd.f32 %v1350, %v1726
      %v1777 = vadd.f32 %v1351, %v1729
      %v1778 = vadd.f32 %v1352, %v1734
      %v1779 = vadd.f32 %v1353, %v1737
      %v1780 = vadd.f32 %v1354, %v1742
      %v1781 = vadd.f32 %v1355, %v1745
      %v1782 = vadd.f32 %v1356, %v1750
      %v1783 = vadd.f32 %v1357, %v1753
      %v1784 = vadd.f32 %v1358, %v1758
      %v1785 = vadd.f32 %v1359, %v1761
      %v1786 = vadd.f32 %v1360, %v1766
      %v1787 = vadd.f32 %v1361, %v1769
      %v1788 = vld [vmem:[%s1119] sm:$0xe]
      %v1789 = vld [vmem:[%s1119 + $0xc] sm:$0xe]
      %v1790 = vld [vmem:[%s1119 + $0x18] sm:$0xe]
      %v1791 = vld [vmem:[%s1119 + $0x24] sm:$0xe]
      %v1792 = vld [vmem:[%s1119 + $0x30] sm:$0xe]
      %v1793 = vld [vmem:[%s1119 + $0x3c] sm:$0xe]
      %v1794 = vld [vmem:[%s1119 + $0x48] sm:$0xe]
      %v1795 = vld [vmem:[%s1119 + $0x54] sm:$0xe]
      %v1820 = vrot.slane %v1788, 5
      %v1821 = vrot.slane %v1820, 4
      %v1822 = vrot.slane %v1363, 5
      %v1823 = vsel %vm849, %v1821, %v1822
      %v1824 = vrot.slane %v1822, 4
      %v1825 = vrot.slane %v1364, 5
      %v1826 = vsel %vm849, %v1824, %v1825
      %v1827 = vrot.slane %v1789, 5
      %v1828 = vrot.slane %v1827, 4
      %v1829 = vrot.slane %v1366, 5
      %v1830 = vsel %vm849, %v1828, %v1829
      %v1831 = vrot.slane %v1829, 4
      %v1832 = vrot.slane %v1367, 5
      %v1833 = vsel %vm849, %v1831, %v1832
      %v1834 = vrot.slane %v1790, 5
      %v1835 = vrot.slane %v1834, 4
      %v1836 = vrot.slane %v1369, 5
      %v1837 = vsel %vm849, %v1835, %v1836
      %v1838 = vrot.slane %v1836, 4
      %v1839 = vrot.slane %v1370, 5
      %v1840 = vsel %vm849, %v1838, %v1839
      %v1841 = vrot.slane %v1791, 5
      %v1842 = vrot.slane %v1841, 4
      %v1843 = vrot.slane %v1372, 5
      %v1844 = vsel %vm849, %v1842, %v1843
      %v1845 = vrot.slane %v1843, 4
      %v1846 = vrot.slane %v1373, 5
      %v1847 = vsel %vm849, %v1845, %v1846
      %v1848 = vrot.slane %v1792, 5
      %v1849 = vrot.slane %v1848, 4
      %v1850 = vrot.slane %v1375, 5
      %v1851 = vsel %vm849, %v1849, %v1850
      %v1852 = vrot.slane %v1850, 4
      %v1853 = vrot.slane %v1376, 5
      %v1854 = vsel %vm849, %v1852, %v1853
      %v1855 = vrot.slane %v1793, 5
      %v1856 = vrot.slane %v1855, 4
      %v1857 = vrot.slane %v1378, 5
      %v1858 = vsel %vm849, %v1856, %v1857
      %v1859 = vrot.slane %v1857, 4
      %v1860 = vrot.slane %v1379, 5
      %v1861 = vsel %vm849, %v1859, %v1860
      %v1862 = vrot.slane %v1794, 5
      %v1863 = vrot.slane %v1862, 4
      %v1864 = vrot.slane %v1381, 5
      %v1865 = vsel %vm849, %v1863, %v1864
      %v1866 = vrot.slane %v1864, 4
      %v1867 = vrot.slane %v1382, 5
      %v1868 = vsel %vm849, %v1866, %v1867
      %v1869 = vrot.slane %v1795, 5
      %v1870 = vrot.slane %v1869, 4
      %v1871 = vrot.slane %v1384, 5
      %v1872 = vsel %vm849, %v1870, %v1871
      %v1873 = vrot.slane %v1871, 4
      %v1874 = vrot.slane %v1385, 5
      %v1875 = vsel %vm849, %v1873, %v1874
      %s1876 = scalar_lea.vmem %s1, 320
      %v1877 = vld [vmem:[%s1876] sm:$0xf]
      %v1878 = vld [vmem:[%s1876 + $0x4] sm:$0xf]
      %v1879 = vld [vmem:[%s1876 + $0x8] sm:$0xf]
      %v1880 = vld [vmem:[%s1876 + $0xc] sm:$0xf]
      %v1881 = vld [vmem:[%s1876 + $0x10] sm:$0xf]
      %v1882 = vld [vmem:[%s1876 + $0x14] sm:$0xf]
      %v1883 = vld [vmem:[%s1876 + $0x18] sm:$0xf]
      %v1884 = vld [vmem:[%s1876 + $0x1c] sm:$0xf]
      %v1885 = vld [vmem:[%s1876 + $0x20] sm:$0xf]
      %v1886 = vld [vmem:[%s1876 + $0x24] sm:$0xf]
      %v1887 = vld [vmem:[%s1876 + $0x28] sm:$0xf]
      %v1888 = vld [vmem:[%s1876 + $0x2c] sm:$0xf]
      %v1889 = vld [vmem:[%s1876 + $0x30] sm:$0xf]
      %v1890 = vld [vmem:[%s1876 + $0x34] sm:$0xf]
      %v1891 = vld [vmem:[%s1876 + $0x38] sm:$0xf]
      %v1892 = vld [vmem:[%s1876 + $0x3c] sm:$0xf]
      %v1893 = vunpack.c.l.b16 %v1823
      %v1894 = vunpack.c.l.b16 %v1826
      %v1895 = vunpack.c.l.b16 %v1830
      %v1896 = vunpack.c.l.b16 %v1833
      %v1897 = vunpack.c.l.b16 %v1837
      %v1898 = vunpack.c.l.b16 %v1840
      %v1899 = vunpack.c.l.b16 %v1844
      %v1900 = vunpack.c.l.b16 %v1847
      %v1901 = vunpack.c.l.b16 %v1851
      %v1902 = vunpack.c.l.b16 %v1854
      %v1903 = vunpack.c.l.b16 %v1858
      %v1904 = vunpack.c.l.b16 %v1861
      %v1905 = vunpack.c.l.b16 %v1865
      %v1906 = vunpack.c.l.b16 %v1868
      %v1907 = vunpack.c.l.b16 %v1872
      %v1908 = vunpack.c.l.b16 %v1875
      %v1909 = vpack.c.b16 %v1894, %v1893
      %v1910 = vpack.c.b16 %v1896, %v1895
      %v1911 = vpack.c.b16 %v1898, %v1897
      %v1912 = vpack.c.b16 %v1900, %v1899
      %v1913 = vpack.c.b16 %v1902, %v1901
      %v1914 = vpack.c.b16 %v1904, %v1903
      %v1915 = vpack.c.b16 %v1906, %v1905
      %v1916 = vpack.c.b16 %v1908, %v1907
      %v1941 = vunpack.c.l.b16 %v1877
      %v1942 = vunpack.c.l.b16 %v1878
      %v1943 = vunpack.c.l.b16 %v1879
      %v1944 = vunpack.c.l.b16 %v1880
      %v1945 = vunpack.c.l.b16 %v1881
      %v1946 = vunpack.c.l.b16 %v1882
      %v1947 = vunpack.c.l.b16 %v1883
      %v1948 = vunpack.c.l.b16 %v1884
      %v1949 = vunpack.c.l.b16 %v1885
      %v1950 = vunpack.c.l.b16 %v1886
      %v1951 = vunpack.c.l.b16 %v1887
      %v1952 = vunpack.c.l.b16 %v1888
      %v1953 = vunpack.c.l.b16 %v1889
      %v1954 = vunpack.c.l.b16 %v1890
      %v1955 = vunpack.c.l.b16 %v1891
      %v1956 = vunpack.c.l.b16 %v1892
      %v1957 = vpack.c.b16 %v1942, %v1941
      %v1958 = vpack.c.b16 %v1944, %v1943
      %v1959 = vpack.c.b16 %v1946, %v1945
      %v1960 = vpack.c.b16 %v1948, %v1947
      %v1961 = vpack.c.b16 %v1950, %v1949
      %v1962 = vpack.c.b16 %v1952, %v1951
      %v1963 = vpack.c.b16 %v1954, %v1953
      %v1964 = vpack.c.b16 %v1956, %v1955
      %1973 = vmatprep.subr.bf16.mxu0 0
      %1974 = vmatpush1.bf16.msra.mxu0 %v1964
      %1975 = vmatprep.subr.bf16.mxu0 0
      %1976 = vmatpush1.bf16.msra.mxu0 %v1963
      %1977 = vmatprep.subr.bf16.mxu0 0
      %1978 = vmatpush1.bf16.msra.mxu0 %v1962
      %1979 = vmatprep.subr.bf16.mxu0 0
      %1980 = vmatpush1.bf16.msra.mxu0 %v1961
      %1981 = vmatprep.subr.bf16.mxu0 0
      %1982 = vmatpush1.bf16.msra.mxu0 %v1960
      %1983 = vmatprep.subr.bf16.mxu0 0
      %1984 = vmatpush1.bf16.msra.mxu0 %v1959
      %1985 = vmatprep.subr.bf16.mxu0 0
      %1986 = vmatpush1.bf16.msra.mxu0 %v1958
      %1987 = vmatprep.subr.bf16.mxu0 0
      %1988 = vmatpush1.bf16.msra.mxu0 %v1957
      %1989 = vmatprep.subr.bf16.mxu0 0
      %1990 = vmatpush2.bf16.msra.mxu0 0
      %1991 = vmatprep.subr.bf16.mxu0 0
      %1992 = vmatpush2.bf16.msra.mxu0 0
      %1993 = vmatprep.subr.bf16.mxu0 0
      %1994 = vmatpush2.bf16.msra.mxu0 0
      %1995 = vmatprep.subr.bf16.mxu0 0
      %1996 = vmatpush2.bf16.msra.mxu0 0
      %1997 = vmatprep.subr.bf16.mxu0 0
      %1998 = vmatpush2.bf16.msra.mxu0 0
      %1999 = vmatprep.subr.bf16.mxu0 0
      %2000 = vmatpush2.bf16.msra.mxu0 0
      %2001 = vmatprep.subr.bf16.mxu0 0
      %2002 = vmatpush2.bf16.msra.mxu0 0
      %2003 = vmatprep.subr.bf16.mxu0 0
      %2004 = vmatpush2.bf16.msra.mxu0 0
      %2005 = vmatprep.mubr.bf16.mxu0 0
      %2006 = vmatmul.mubr.bf16.gmra.mxu0 %v1909
      %v2007 = vpop.f32.mrf.mxu0
      %v2008 = vadd.f32 0.0, %v2007
      %v2009 = vpop.f32.mrf.mxu0
      %v2010 = vpop.f32.mrf.mxu0
      %v2011 = vadd.f32 0.0, %v2010
      %v2012 = vpop.f32.mrf.mxu0
      %2013 = vmatprep.mubr.bf16.mxu0 0
      %2014 = vmatmul.mubr.bf16.gmra.mxu0 %v1910
      %v2015 = vpop.f32.mrf.mxu0
      %v2016 = vadd.f32 0.0, %v2015
      %v2017 = vpop.f32.mrf.mxu0
      %v2018 = vpop.f32.mrf.mxu0
      %v2019 = vadd.f32 0.0, %v2018
      %v2020 = vpop.f32.mrf.mxu0
      %2021 = vmatprep.mubr.bf16.mxu0 0
      %2022 = vmatmul.mubr.bf16.gmra.mxu0 %v1911
      %v2023 = vpop.f32.mrf.mxu0
      %v2024 = vadd.f32 0.0, %v2023
      %v2025 = vpop.f32.mrf.mxu0
      %v2026 = vpop.f32.mrf.mxu0
      %v2027 = vadd.f32 0.0, %v2026
      %v2028 = vpop.f32.mrf.mxu0
      %2029 = vmatprep.mubr.bf16.mxu0 0
      %2030 = vmatmul.mubr.bf16.gmra.mxu0 %v1912
      %v2031 = vpop.f32.mrf.mxu0
      %v2032 = vadd.f32 0.0, %v2031
      %v2033 = vpop.f32.mrf.mxu0
      %v2034 = vpop.f32.mrf.mxu0
      %v2035 = vadd.f32 0.0, %v2034
      %v2036 = vpop.f32.mrf.mxu0
      %2037 = vmatprep.mubr.bf16.mxu0 0
      %2038 = vmatmul.mubr.bf16.gmra.mxu0 %v1913
      %v2039 = vpop.f32.mrf.mxu0
      %v2040 = vadd.f32 0.0, %v2039
      %v2041 = vpop.f32.mrf.mxu0
      %v2042 = vpop.f32.mrf.mxu0
      %v2043 = vadd.f32 0.0, %v2042
      %v2044 = vpop.f32.mrf.mxu0
      %2045 = vmatprep.mubr.bf16.mxu0 0
      %2046 = vmatmul.mubr.bf16.gmra.mxu0 %v1914
      %v2047 = vpop.f32.mrf.mxu0
      %v2048 = vadd.f32 0.0, %v2047
      %v2049 = vpop.f32.mrf.mxu0
      %v2050 = vpop.f32.mrf.mxu0
      %v2051 = vadd.f32 0.0, %v2050
      %v2052 = vpop.f32.mrf.mxu0
      %2053 = vmatprep.mubr.bf16.mxu0 0
      %2054 = vmatmul.mubr.bf16.gmra.mxu0 %v1915
      %v2055 = vpop.f32.mrf.mxu0
      %v2056 = vadd.f32 0.0, %v2055
      %v2057 = vpop.f32.mrf.mxu0
      %v2058 = vpop.f32.mrf.mxu0
      %v2059 = vadd.f32 0.0, %v2058
      %v2060 = vpop.f32.mrf.mxu0
      %2061 = vmatprep.mubr.bf16.mxu0 0
      %2062 = vmatmul.mubr.bf16.gmra.mxu0 %v1916
      %v2063 = vpop.f32.mrf.mxu0
      %v2064 = vadd.f32 0.0, %v2063
      %v2065 = vpop.f32.mrf.mxu0
      %v2066 = vpop.f32.mrf.mxu0
      %v2067 = vadd.f32 0.0, %v2066
      %v2068 = vpop.f32.mrf.mxu0
      %2069 = vdwg.mxu0
      %v2070 = vadd.f32 %v1772, %v2008
      %v2071 = vadd.f32 %v1773, %v2011
      %v2072 = vadd.f32 %v1774, %v2016
      %v2073 = vadd.f32 %v1775, %v2019
      %v2074 = vadd.f32 %v1776, %v2024
      %v2075 = vadd.f32 %v1777, %v2027
      %v2076 = vadd.f32 %v1778, %v2032
      %v2077 = vadd.f32 %v1779, %v2035
      %v2078 = vadd.f32 %v1780, %v2040
      %v2079 = vadd.f32 %v1781, %v2043
      %v2080 = vadd.f32 %v1782, %v2048
      %v2081 = vadd.f32 %v1783, %v2051
      %v2082 = vadd.f32 %v1784, %v2056
      %v2083 = vadd.f32 %v1785, %v2059
      %v2084 = vadd.f32 %v1786, %v2064
      %v2085 = vadd.f32 %v1787, %v2067
      %s2086 = sadd.s32 %s197, 2
      %s2087 = smul.u32 %s2086, 3
      %s2088 = smul.addr %s2087, 4
      %s2089 = scalar_lea.vmem %s184, %s2088
      %v2090 = vld [vmem:[%s2089] sm:$0xf]
      %v2091 = vld [vmem:[%s2089 + $0x4] sm:$0xf]
      %v2092 = vld [vmem:[%s2089 + $0xc] sm:$0xf]
      %v2093 = vld [vmem:[%s2089 + $0x10] sm:$0xf]
      %v2094 = vld [vmem:[%s2089 + $0x18] sm:$0xf]
      %v2095 = vld [vmem:[%s2089 + $0x1c] sm:$0xf]
      %v2096 = vld [vmem:[%s2089 + $0x24] sm:$0xf]
      %v2097 = vld [vmem:[%s2089 + $0x28] sm:$0xf]
      %v2098 = vld [vmem:[%s2089 + $0x30] sm:$0xf]
      %v2099 = vld [vmem:[%s2089 + $0x34] sm:$0xf]
      %v2100 = vld [vmem:[%s2089 + $0x3c] sm:$0xf]
      %v2101 = vld [vmem:[%s2089 + $0x40] sm:$0xf]
      %v2102 = vld [vmem:[%s2089 + $0x48] sm:$0xf]
      %v2103 = vld [vmem:[%s2089 + $0x4c] sm:$0xf]
      %v2104 = vld [vmem:[%s2089 + $0x54] sm:$0xf]
      %v2105 = vld [vmem:[%s2089 + $0x58] sm:$0xf]
      %s2106 = scalar_lea.vmem %s1, 384
      %v2107 = vld [vmem:[%s2106] sm:$0xf]
      %v2108 = vld [vmem:[%s2106 + $0x4] sm:$0xf]
      %v2109 = vld [vmem:[%s2106 + $0x8] sm:$0xf]
      %v2110 = vld [vmem:[%s2106 + $0xc] sm:$0xf]
      %v2111 = vld [vmem:[%s2106 + $0x10] sm:$0xf]
      %v2112 = vld [vmem:[%s2106 + $0x14] sm:$0xf]
      %v2113 = vld [vmem:[%s2106 + $0x18] sm:$0xf]
      %v2114 = vld [vmem:[%s2106 + $0x1c] sm:$0xf]
      %v2115 = vld [vmem:[%s2106 + $0x20] sm:$0xf]
      %v2116 = vld [vmem:[%s2106 + $0x24] sm:$0xf]
      %v2117 = vld [vmem:[%s2106 + $0x28] sm:$0xf]
      %v2118 = vld [vmem:[%s2106 + $0x2c] sm:$0xf]
      %v2119 = vld [vmem:[%s2106 + $0x30] sm:$0xf]
      %v2120 = vld [vmem:[%s2106 + $0x34] sm:$0xf]
      %v2121 = vld [vmem:[%s2106 + $0x38] sm:$0xf]
      %v2122 = vld [vmem:[%s2106 + $0x3c] sm:$0xf]
      %v2139 = vunpack.c.l.b16 %v2090
      %v2140 = vunpack.c.l.b16 %v2091
      %v2141 = vunpack.c.l.b16 %v2092
      %v2142 = vunpack.c.l.b16 %v2093
      %v2143 = vunpack.c.l.b16 %v2094
      %v2144 = vunpack.c.l.b16 %v2095
      %v2145 = vunpack.c.l.b16 %v2096
      %v2146 = vunpack.c.l.b16 %v2097
      %v2147 = vunpack.c.l.b16 %v2098
      %v2148 = vunpack.c.l.b16 %v2099
      %v2149 = vunpack.c.l.b16 %v2100
      %v2150 = vunpack.c.l.b16 %v2101
      %v2151 = vunpack.c.l.b16 %v2102
      %v2152 = vunpack.c.l.b16 %v2103
      %v2153 = vunpack.c.l.b16 %v2104
      %v2154 = vunpack.c.l.b16 %v2105
      %v2155 = vpack.c.b16 %v2140, %v2139
      %v2156 = vpack.c.b16 %v2142, %v2141
      %v2157 = vpack.c.b16 %v2144, %v2143
      %v2158 = vpack.c.b16 %v2146, %v2145
      %v2159 = vpack.c.b16 %v2148, %v2147
      %v2160 = vpack.c.b16 %v2150, %v2149
      %v2161 = vpack.c.b16 %v2152, %v2151
      %v2162 = vpack.c.b16 %v2154, %v2153
      %v2187 = vunpack.c.l.b16 %v2107
      %v2188 = vunpack.c.l.b16 %v2108
      %v2189 = vunpack.c.l.b16 %v2109
      %v2190 = vunpack.c.l.b16 %v2110
      %v2191 = vunpack.c.l.b16 %v2111
      %v2192 = vunpack.c.l.b16 %v2112
      %v2193 = vunpack.c.l.b16 %v2113
      %v2194 = vunpack.c.l.b16 %v2114
      %v2195 = vunpack.c.l.b16 %v2115
      %v2196 = vunpack.c.l.b16 %v2116
      %v2197 = vunpack.c.l.b16 %v2117
      %v2198 = vunpack.c.l.b16 %v2118
      %v2199 = vunpack.c.l.b16 %v2119
      %v2200 = vunpack.c.l.b16 %v2120
      %v2201 = vunpack.c.l.b16 %v2121
      %v2202 = vunpack.c.l.b16 %v2122
      %v2203 = vpack.c.b16 %v2188, %v2187
      %v2204 = vpack.c.b16 %v2190, %v2189
      %v2205 = vpack.c.b16 %v2192, %v2191
      %v2206 = vpack.c.b16 %v2194, %v2193
      %v2207 = vpack.c.b16 %v2196, %v2195
      %v2208 = vpack.c.b16 %v2198, %v2197
      %v2209 = vpack.c.b16 %v2200, %v2199
      %v2210 = vpack.c.b16 %v2202, %v2201
      %2219 = vmatprep.subr.bf16.mxu0 0
      %2220 = vmatpush1.bf16.msra.mxu0 %v2210
      %2221 = vmatprep.subr.bf16.mxu0 0
      %2222 = vmatpush1.bf16.msra.mxu0 %v2209
      %2223 = vmatprep.subr.bf16.mxu0 0
      %2224 = vmatpush1.bf16.msra.mxu0 %v2208
      %2225 = vmatprep.subr.bf16.mxu0 0
      %2226 = vmatpush1.bf16.msra.mxu0 %v2207
      %2227 = vmatprep.subr.bf16.mxu0 0
      %2228 = vmatpush1.bf16.msra.mxu0 %v2206
      %2229 = vmatprep.subr.bf16.mxu0 0
      %2230 = vmatpush1.bf16.msra.mxu0 %v2205
      %2231 = vmatprep.subr.bf16.mxu0 0
      %2232 = vmatpush1.bf16.msra.mxu0 %v2204
      %2233 = vmatprep.subr.bf16.mxu0 0
      %2234 = vmatpush1.bf16.msra.mxu0 %v2203
      %2235 = vmatprep.subr.bf16.mxu0 0
      %2236 = vmatpush2.bf16.msra.mxu0 0
      %2237 = vmatprep.subr.bf16.mxu0 0
      %2238 = vmatpush2.bf16.msra.mxu0 0
      %2239 = vmatprep.subr.bf16.mxu0 0
      %2240 = vmatpush2.bf16.msra.mxu0 0
      %2241 = vmatprep.subr.bf16.mxu0 0
      %2242 = vmatpush2.bf16.msra.mxu0 0
      %2243 = vmatprep.subr.bf16.mxu0 0
      %2244 = vmatpush2.bf16.msra.mxu0 0
      %2245 = vmatprep.subr.bf16.mxu0 0
      %2246 = vmatpush2.bf16.msra.mxu0 0
      %2247 = vmatprep.subr.bf16.mxu0 0
      %2248 = vmatpush2.bf16.msra.mxu0 0
      %2249 = vmatprep.subr.bf16.mxu0 0
      %2250 = vmatpush2.bf16.msra.mxu0 0
      %2251 = vmatprep.mubr.bf16.mxu0 0
      %2252 = vmatmul.mubr.bf16.gmra.mxu0 %v2155
      %v2253 = vpop.f32.mrf.mxu0
      %v2254 = vadd.f32 0.0, %v2253
      %v2255 = vpop.f32.mrf.mxu0
      %v2256 = vpop.f32.mrf.mxu0
      %v2257 = vadd.f32 0.0, %v2256
      %v2258 = vpop.f32.mrf.mxu0
      %2259 = vmatprep.mubr.bf16.mxu0 0
      %2260 = vmatmul.mubr.bf16.gmra.mxu0 %v2156
      %v2261 = vpop.f32.mrf.mxu0
      %v2262 = vadd.f32 0.0, %v2261
      %v2263 = vpop.f32.mrf.mxu0
      %v2264 = vpop.f32.mrf.mxu0
      %v2265 = vadd.f32 0.0, %v2264
      %v2266 = vpop.f32.mrf.mxu0
      %2267 = vmatprep.mubr.bf16.mxu0 0
      %2268 = vmatmul.mubr.bf16.gmra.mxu0 %v2157
      %v2269 = vpop.f32.mrf.mxu0
      %v2270 = vadd.f32 0.0, %v2269
      %v2271 = vpop.f32.mrf.mxu0
      %v2272 = vpop.f32.mrf.mxu0
      %v2273 = vadd.f32 0.0, %v2272
      %v2274 = vpop.f32.mrf.mxu0
      %2275 = vmatprep.mubr.bf16.mxu0 0
      %2276 = vmatmul.mubr.bf16.gmra.mxu0 %v2158
      %v2277 = vpop.f32.mrf.mxu0
      %v2278 = vadd.f32 0.0, %v2277
      %v2279 = vpop.f32.mrf.mxu0
      %v2280 = vpop.f32.mrf.mxu0
      %v2281 = vadd.f32 0.0, %v2280
      %v2282 = vpop.f32.mrf.mxu0
      %2283 = vmatprep.mubr.bf16.mxu0 0
      %2284 = vmatmul.mubr.bf16.gmra.mxu0 %v2159
      %v2285 = vpop.f32.mrf.mxu0
      %v2286 = vadd.f32 0.0, %v2285
      %v2287 = vpop.f32.mrf.mxu0
      %v2288 = vpop.f32.mrf.mxu0
      %v2289 = vadd.f32 0.0, %v2288
      %v2290 = vpop.f32.mrf.mxu0
      %2291 = vmatprep.mubr.bf16.mxu0 0
      %2292 = vmatmul.mubr.bf16.gmra.mxu0 %v2160
      %v2293 = vpop.f32.mrf.mxu0
      %v2294 = vadd.f32 0.0, %v2293
      %v2295 = vpop.f32.mrf.mxu0
      %v2296 = vpop.f32.mrf.mxu0
      %v2297 = vadd.f32 0.0, %v2296
      %v2298 = vpop.f32.mrf.mxu0
      %2299 = vmatprep.mubr.bf16.mxu0 0
      %2300 = vmatmul.mubr.bf16.gmra.mxu0 %v2161
      %v2301 = vpop.f32.mrf.mxu0
      %v2302 = vadd.f32 0.0, %v2301
      %v2303 = vpop.f32.mrf.mxu0
      %v2304 = vpop.f32.mrf.mxu0
      %v2305 = vadd.f32 0.0, %v2304
      %v2306 = vpop.f32.mrf.mxu0
      %2307 = vmatprep.mubr.bf16.mxu0 0
      %2308 = vmatmul.mubr.bf16.gmra.mxu0 %v2162
      %v2309 = vpop.f32.mrf.mxu0
      %v2310 = vadd.f32 0.0, %v2309
      %v2311 = vpop.f32.mrf.mxu0
      %v2312 = vpop.f32.mrf.mxu0
      %v2313 = vadd.f32 0.0, %v2312
      %v2314 = vpop.f32.mrf.mxu0
      %2315 = vdwg.mxu0
      %v2316 = vadd.f32 %v2070, %v2254
      %v2317 = vadd.f32 %v2071, %v2257
      %v2318 = vadd.f32 %v2072, %v2262
      %v2319 = vadd.f32 %v2073, %v2265
      %v2320 = vadd.f32 %v2074, %v2270
      %v2321 = vadd.f32 %v2075, %v2273
      %v2322 = vadd.f32 %v2076, %v2278
      %v2323 = vadd.f32 %v2077, %v2281
      %v2324 = vadd.f32 %v2078, %v2286
      %v2325 = vadd.f32 %v2079, %v2289
      %v2326 = vadd.f32 %v2080, %v2294
      %v2327 = vadd.f32 %v2081, %v2297
      %v2328 = vadd.f32 %v2082, %v2302
      %v2329 = vadd.f32 %v2083, %v2305
      %v2330 = vadd.f32 %v2084, %v2310
      %v2331 = vadd.f32 %v2085, %v2313
      %v2332 = vld [vmem:[%s2089] sm:$0xf]
      %v2333 = vld [vmem:[%s2089 + $0x4] sm:$0xf]
      %v2334 = vld [vmem:[%s2089 + $0x8] sm:$0x1]
      %v2335 = vld [vmem:[%s2089 + $0xc] sm:$0xf]
      %v2336 = vld [vmem:[%s2089 + $0x10] sm:$0xf]
      %v2337 = vld [vmem:[%s2089 + $0x14] sm:$0x1]
      %v2338 = vld [vmem:[%s2089 + $0x18] sm:$0xf]
      %v2339 = vld [vmem:[%s2089 + $0x1c] sm:$0xf]
      %v2340 = vld [vmem:[%s2089 + $0x20] sm:$0x1]
      %v2341 = vld [vmem:[%s2089 + $0x24] sm:$0xf]
      %v2342 = vld [vmem:[%s2089 + $0x28] sm:$0xf]
      %v2343 = vld [vmem:[%s2089 + $0x2c] sm:$0x1]
      %v2344 = vld [vmem:[%s2089 + $0x30] sm:$0xf]
      %v2345 = vld [vmem:[%s2089 + $0x34] sm:$0xf]
      %v2346 = vld [vmem:[%s2089 + $0x38] sm:$0x1]
      %v2347 = vld [vmem:[%s2089 + $0x3c] sm:$0xf]
      %v2348 = vld [vmem:[%s2089 + $0x40] sm:$0xf]
      %v2349 = vld [vmem:[%s2089 + $0x44] sm:$0x1]
      %v2350 = vld [vmem:[%s2089 + $0x48] sm:$0xf]
      %v2351 = vld [vmem:[%s2089 + $0x4c] sm:$0xf]
      %v2352 = vld [vmem:[%s2089 + $0x50] sm:$0x1]
      %v2353 = vld [vmem:[%s2089 + $0x54] sm:$0xf]
      %v2354 = vld [vmem:[%s2089 + $0x58] sm:$0xf]
      %v2355 = vld [vmem:[%s2089 + $0x5c] sm:$0x1]
      %v2357 = vshrl.u32 %v2332, 16
      %v2359 = vrot.slane %v2357, 4
      %v2360 = vshll.u32 %v2332, 16
      %v2362 = vrot.slane %v2360, 5
      %v2363 = vor.u32 %v2359, %v2362
      %v2364 = vrot.slane %v2363, 4
      %v2366 = vshll.u32 %v2333, 16
      %v2368 = vrot.slane %v2366, 5
      %v2369 = vsel %vm243, %v2364, %v2368
      %v2370 = vshrl.u32 %v2333, 16
      %v2372 = vrot.slane %v2370, 4
      %v2373 = vor.u32 %v2372, %v2368
      %v2374 = vrot.slane %v2373, 4
      %v2376 = vshll.u32 %v2334, 16
      %v2378 = vrot.slane %v2376, 5
      %v2379 = vsel %vm243, %v2374, %v2378
      %v2381 = vshrl.u32 %v2335, 16
      %v2383 = vrot.slane %v2381, 4
      %v2384 = vshll.u32 %v2335, 16
      %v2386 = vrot.slane %v2384, 5
      %v2387 = vor.u32 %v2383, %v2386
      %v2388 = vrot.slane %v2387, 4
      %v2390 = vshll.u32 %v2336, 16
      %v2392 = vrot.slane %v2390, 5
      %v2393 = vsel %vm243, %v2388, %v2392
      %v2394 = vshrl.u32 %v2336, 16
      %v2396 = vrot.slane %v2394, 4
      %v2397 = vor.u32 %v2396, %v2392
      %v2398 = vrot.slane %v2397, 4
      %v2400 = vshll.u32 %v2337, 16
      %v2402 = vrot.slane %v2400, 5
      %v2403 = vsel %vm243, %v2398, %v2402
      %v2405 = vshrl.u32 %v2338, 16
      %v2407 = vrot.slane %v2405, 4
      %v2408 = vshll.u32 %v2338, 16
      %v2410 = vrot.slane %v2408, 5
      %v2411 = vor.u32 %v2407, %v2410
      %v2412 = vrot.slane %v2411, 4
      %v2414 = vshll.u32 %v2339, 16
      %v2416 = vrot.slane %v2414, 5
      %v2417 = vsel %vm243, %v2412, %v2416
      %v2418 = vshrl.u32 %v2339, 16
      %v2420 = vrot.slane %v2418, 4
      %v2421 = vor.u32 %v2420, %v2416
      %v2422 = vrot.slane %v2421, 4
      %v2424 = vshll.u32 %v2340, 16
      %v2426 = vrot.slane %v2424, 5
      %v2427 = vsel %vm243, %v2422, %v2426
      %v2429 = vshrl.u32 %v2341, 16
      %v2431 = vrot.slane %v2429, 4
      %v2432 = vshll.u32 %v2341, 16
      %v2434 = vrot.slane %v2432, 5
      %v2435 = vor.u32 %v2431, %v2434
      %v2436 = vrot.slane %v2435, 4
      %v2438 = vshll.u32 %v2342, 16
      %v2440 = vrot.slane %v2438, 5
      %v2441 = vsel %vm243, %v2436, %v2440
      %v2442 = vshrl.u32 %v2342, 16
      %v2444 = vrot.slane %v2442, 4
      %v2445 = vor.u32 %v2444, %v2440
      %v2446 = vrot.slane %v2445, 4
      %v2448 = vshll.u32 %v2343, 16
      %v2450 = vrot.slane %v2448, 5
      %v2451 = vsel %vm243, %v2446, %v2450
      %v2453 = vshrl.u32 %v2344, 16
      %v2455 = vrot.slane %v2453, 4
      %v2456 = vshll.u32 %v2344, 16
      %v2458 = vrot.slane %v2456, 5
      %v2459 = vor.u32 %v2455, %v2458
      %v2460 = vrot.slane %v2459, 4
      %v2462 = vshll.u32 %v2345, 16
      %v2464 = vrot.slane %v2462, 5
      %v2465 = vsel %vm243, %v2460, %v2464
      %v2466 = vshrl.u32 %v2345, 16
      %v2468 = vrot.slane %v2466, 4
      %v2469 = vor.u32 %v2468, %v2464
      %v2470 = vrot.slane %v2469, 4
      %v2472 = vshll.u32 %v2346, 16
      %v2474 = vrot.slane %v2472, 5
      %v2475 = vsel %vm243, %v2470, %v2474
      %v2477 = vshrl.u32 %v2347, 16
      %v2479 = vrot.slane %v2477, 4
      %v2480 = vshll.u32 %v2347, 16
      %v2482 = vrot.slane %v2480, 5
      %v2483 = vor.u32 %v2479, %v2482
      %v2484 = vrot.slane %v2483, 4
      %v2486 = vshll.u32 %v2348, 16
      %v2488 = vrot.slane %v2486, 5
      %v2489 = vsel %vm243, %v2484, %v2488
      %v2490 = vshrl.u32 %v2348, 16
      %v2492 = vrot.slane %v2490, 4
      %v2493 = vor.u32 %v2492, %v2488
      %v2494 = vrot.slane %v2493, 4
      %v2496 = vshll.u32 %v2349, 16
      %v2498 = vrot.slane %v2496, 5
      %v2499 = vsel %vm243, %v2494, %v2498
      %v2501 = vshrl.u32 %v2350, 16
      %v2503 = vrot.slane %v2501, 4
      %v2504 = vshll.u32 %v2350, 16
      %v2506 = vrot.slane %v2504, 5
      %v2507 = vor.u32 %v2503, %v2506
      %v2508 = vrot.slane %v2507, 4
      %v2510 = vshll.u32 %v2351, 16
      %v2512 = vrot.slane %v2510, 5
      %v2513 = vsel %vm243, %v2508, %v2512
      %v2514 = vshrl.u32 %v2351, 16
      %v2516 = vrot.slane %v2514, 4
      %v2517 = vor.u32 %v2516, %v2512
      %v2518 = vrot.slane %v2517, 4
      %v2520 = vshll.u32 %v2352, 16
      %v2522 = vrot.slane %v2520, 5
      %v2523 = vsel %vm243, %v2518, %v2522
      %v2525 = vshrl.u32 %v2353, 16
      %v2527 = vrot.slane %v2525, 4
      %v2528 = vshll.u32 %v2353, 16
      %v2530 = vrot.slane %v2528, 5
      %v2531 = vor.u32 %v2527, %v2530
      %v2532 = vrot.slane %v2531, 4
      %v2534 = vshll.u32 %v2354, 16
      %v2536 = vrot.slane %v2534, 5
      %v2537 = vsel %vm243, %v2532, %v2536
      %v2538 = vshrl.u32 %v2354, 16
      %v2540 = vrot.slane %v2538, 4
      %v2541 = vor.u32 %v2540, %v2536
      %v2542 = vrot.slane %v2541, 4
      %v2544 = vshll.u32 %v2355, 16
      %v2546 = vrot.slane %v2544, 5
      %v2547 = vsel %vm243, %v2542, %v2546
      %s2548 = scalar_lea.vmem %s1, 448
      %v2549 = vld [vmem:[%s2548] sm:$0xf]
      %v2550 = vld [vmem:[%s2548 + $0x4] sm:$0xf]
      %v2551 = vld [vmem:[%s2548 + $0x8] sm:$0xf]
      %v2552 = vld [vmem:[%s2548 + $0xc] sm:$0xf]
      %v2553 = vld [vmem:[%s2548 + $0x10] sm:$0xf]
      %v2554 = vld [vmem:[%s2548 + $0x14] sm:$0xf]
      %v2555 = vld [vmem:[%s2548 + $0x18] sm:$0xf]
      %v2556 = vld [vmem:[%s2548 + $0x1c] sm:$0xf]
      %v2557 = vld [vmem:[%s2548 + $0x20] sm:$0xf]
      %v2558 = vld [vmem:[%s2548 + $0x24] sm:$0xf]
      %v2559 = vld [vmem:[%s2548 + $0x28] sm:$0xf]
      %v2560 = vld [vmem:[%s2548 + $0x2c] sm:$0xf]
      %v2561 = vld [vmem:[%s2548 + $0x30] sm:$0xf]
      %v2562 = vld [vmem:[%s2548 + $0x34] sm:$0xf]
      %v2563 = vld [vmem:[%s2548 + $0x38] sm:$0xf]
      %v2564 = vld [vmem:[%s2548 + $0x3c] sm:$0xf]
      %v2565 = vunpack.c.l.b16 %v2369
      %v2566 = vunpack.c.l.b16 %v2379
      %v2567 = vunpack.c.l.b16 %v2393
      %v2568 = vunpack.c.l.b16 %v2403
      %v2569 = vunpack.c.l.b16 %v2417
      %v2570 = vunpack.c.l.b16 %v2427
      %v2571 = vunpack.c.l.b16 %v2441
      %v2572 = vunpack.c.l.b16 %v2451
      %v2573 = vunpack.c.l.b16 %v2465
      %v2574 = vunpack.c.l.b16 %v2475
      %v2575 = vunpack.c.l.b16 %v2489
      %v2576 = vunpack.c.l.b16 %v2499
      %v2577 = vunpack.c.l.b16 %v2513
      %v2578 = vunpack.c.l.b16 %v2523
      %v2579 = vunpack.c.l.b16 %v2537
      %v2580 = vunpack.c.l.b16 %v2547
      %v2581 = vpack.c.b16 %v2566, %v2565
      %v2582 = vpack.c.b16 %v2568, %v2567
      %v2583 = vpack.c.b16 %v2570, %v2569
      %v2584 = vpack.c.b16 %v2572, %v2571
      %v2585 = vpack.c.b16 %v2574, %v2573
      %v2586 = vpack.c.b16 %v2576, %v2575
      %v2587 = vpack.c.b16 %v2578, %v2577
      %v2588 = vpack.c.b16 %v2580, %v2579
      %v2613 = vunpack.c.l.b16 %v2549
      %v2614 = vunpack.c.l.b16 %v2550
      %v2615 = vunpack.c.l.b16 %v2551
      %v2616 = vunpack.c.l.b16 %v2552
      %v2617 = vunpack.c.l.b16 %v2553
      %v2618 = vunpack.c.l.b16 %v2554
      %v2619 = vunpack.c.l.b16 %v2555
      %v2620 = vunpack.c.l.b16 %v2556
      %v2621 = vunpack.c.l.b16 %v2557
      %v2622 = vunpack.c.l.b16 %v2558
      %v2623 = vunpack.c.l.b16 %v2559
      %v2624 = vunpack.c.l.b16 %v2560
      %v2625 = vunpack.c.l.b16 %v2561
      %v2626 = vunpack.c.l.b16 %v2562
      %v2627 = vunpack.c.l.b16 %v2563
      %v2628 = vunpack.c.l.b16 %v2564
      %v2629 = vpack.c.b16 %v2614, %v2613
      %v2630 = vpack.c.b16 %v2616, %v2615
      %v2631 = vpack.c.b16 %v2618, %v2617
      %v2632 = vpack.c.b16 %v2620, %v2619
      %v2633 = vpack.c.b16 %v2622, %v2621
      %v2634 = vpack.c.b16 %v2624, %v2623
      %v2635 = vpack.c.b16 %v2626, %v2625
      %v2636 = vpack.c.b16 %v2628, %v2627
      %2645 = vmatprep.subr.bf16.mxu0 0
      %2646 = vmatpush1.bf16.msra.mxu0 %v2636
      %2647 = vmatprep.subr.bf16.mxu0 0
      %2648 = vmatpush1.bf16.msra.mxu0 %v2635
      %2649 = vmatprep.subr.bf16.mxu0 0
      %2650 = vmatpush1.bf16.msra.mxu0 %v2634
      %2651 = vmatprep.subr.bf16.mxu0 0
      %2652 = vmatpush1.bf16.msra.mxu0 %v2633
      %2653 = vmatprep.subr.bf16.mxu0 0
      %2654 = vmatpush1.bf16.msra.mxu0 %v2632
      %2655 = vmatprep.subr.bf16.mxu0 0
      %2656 = vmatpush1.bf16.msra.mxu0 %v2631
      %2657 = vmatprep.subr.bf16.mxu0 0
      %2658 = vmatpush1.bf16.msra.mxu0 %v2630
      %2659 = vmatprep.subr.bf16.mxu0 0
      %2660 = vmatpush1.bf16.msra.mxu0 %v2629
      %2661 = vmatprep.subr.bf16.mxu0 0
      %2662 = vmatpush2.bf16.msra.mxu0 0
      %2663 = vmatprep.subr.bf16.mxu0 0
      %2664 = vmatpush2.bf16.msra.mxu0 0
      %2665 = vmatprep.subr.bf16.mxu0 0
      %2666 = vmatpush2.bf16.msra.mxu0 0
      %2667 = vmatprep.subr.bf16.mxu0 0
      %2668 = vmatpush2.bf16.msra.mxu0 0
      %2669 = vmatprep.subr.bf16.mxu0 0
      %2670 = vmatpush2.bf16.msra.mxu0 0
      %2671 = vmatprep.subr.bf16.mxu0 0
      %2672 = vmatpush2.bf16.msra.mxu0 0
      %2673 = vmatprep.subr.bf16.mxu0 0
      %2674 = vmatpush2.bf16.msra.mxu0 0
      %2675 = vmatprep.subr.bf16.mxu0 0
      %2676 = vmatpush2.bf16.msra.mxu0 0
      %2677 = vmatprep.mubr.bf16.mxu0 0
      %2678 = vmatmul.mubr.bf16.gmra.mxu0 %v2581
      %v2679 = vpop.f32.mrf.mxu0
      %v2680 = vadd.f32 0.0, %v2679
      %v2681 = vpop.f32.mrf.mxu0
      %v2682 = vpop.f32.mrf.mxu0
      %v2683 = vadd.f32 0.0, %v2682
      %v2684 = vpop.f32.mrf.mxu0
      %2685 = vmatprep.mubr.bf16.mxu0 0
      %2686 = vmatmul.mubr.bf16.gmra.mxu0 %v2582
      %v2687 = vpop.f32.mrf.mxu0
      %v2688 = vadd.f32 0.0, %v2687
      %v2689 = vpop.f32.mrf.mxu0
      %v2690 = vpop.f32.mrf.mxu0
      %v2691 = vadd.f32 0.0, %v2690
      %v2692 = vpop.f32.mrf.mxu0
      %2693 = vmatprep.mubr.bf16.mxu0 0
      %2694 = vmatmul.mubr.bf16.gmra.mxu0 %v2583
      %v2695 = vpop.f32.mrf.mxu0
      %v2696 = vadd.f32 0.0, %v2695
      %v2697 = vpop.f32.mrf.mxu0
      %v2698 = vpop.f32.mrf.mxu0
      %v2699 = vadd.f32 0.0, %v2698
      %v2700 = vpop.f32.mrf.mxu0
      %2701 = vmatprep.mubr.bf16.mxu0 0
      %2702 = vmatmul.mubr.bf16.gmra.mxu0 %v2584
      %v2703 = vpop.f32.mrf.mxu0
      %v2704 = vadd.f32 0.0, %v2703
      %v2705 = vpop.f32.mrf.mxu0
      %v2706 = vpop.f32.mrf.mxu0
      %v2707 = vadd.f32 0.0, %v2706
      %v2708 = vpop.f32.mrf.mxu0
      %2709 = vmatprep.mubr.bf16.mxu0 0
      %2710 = vmatmul.mubr.bf16.gmra.mxu0 %v2585
      %v2711 = vpop.f32.mrf.mxu0
      %v2712 = vadd.f32 0.0, %v2711
      %v2713 = vpop.f32.mrf.mxu0
      %v2714 = vpop.f32.mrf.mxu0
      %v2715 = vadd.f32 0.0, %v2714
      %v2716 = vpop.f32.mrf.mxu0
      %2717 = vmatprep.mubr.bf16.mxu0 0
      %2718 = vmatmul.mubr.bf16.gmra.mxu0 %v2586
      %v2719 = vpop.f32.mrf.mxu0
      %v2720 = vadd.f32 0.0, %v2719
      %v2721 = vpop.f32.mrf.mxu0
      %v2722 = vpop.f32.mrf.mxu0
      %v2723 = vadd.f32 0.0, %v2722
      %v2724 = vpop.f32.mrf.mxu0
      %2725 = vmatprep.mubr.bf16.mxu0 0
      %2726 = vmatmul.mubr.bf16.gmra.mxu0 %v2587
      %v2727 = vpop.f32.mrf.mxu0
      %v2728 = vadd.f32 0.0, %v2727
      %v2729 = vpop.f32.mrf.mxu0
      %v2730 = vpop.f32.mrf.mxu0
      %v2731 = vadd.f32 0.0, %v2730
      %v2732 = vpop.f32.mrf.mxu0
      %2733 = vmatprep.mubr.bf16.mxu0 0
      %2734 = vmatmul.mubr.bf16.gmra.mxu0 %v2588
      %v2735 = vpop.f32.mrf.mxu0
      %v2736 = vadd.f32 0.0, %v2735
      %v2737 = vpop.f32.mrf.mxu0
      %v2738 = vpop.f32.mrf.mxu0
      %v2739 = vadd.f32 0.0, %v2738
      %v2740 = vpop.f32.mrf.mxu0
      %2741 = vdwg.mxu0
      %v2742 = vadd.f32 %v2316, %v2680
      %v2743 = vadd.f32 %v2317, %v2683
      %v2744 = vadd.f32 %v2318, %v2688
      %v2745 = vadd.f32 %v2319, %v2691
      %v2746 = vadd.f32 %v2320, %v2696
      %v2747 = vadd.f32 %v2321, %v2699
      %v2748 = vadd.f32 %v2322, %v2704
      %v2749 = vadd.f32 %v2323, %v2707
      %v2750 = vadd.f32 %v2324, %v2712
      %v2751 = vadd.f32 %v2325, %v2715
      %v2752 = vadd.f32 %v2326, %v2720
      %v2753 = vadd.f32 %v2327, %v2723
      %v2754 = vadd.f32 %v2328, %v2728
      %v2755 = vadd.f32 %v2329, %v2731
      %v2756 = vadd.f32 %v2330, %v2736
      %v2757 = vadd.f32 %v2331, %v2739
      %v2758 = vld [vmem:[%s2089] sm:$0xe]
      %v2759 = vld [vmem:[%s2089 + $0xc] sm:$0xe]
      %v2760 = vld [vmem:[%s2089 + $0x18] sm:$0xe]
      %v2761 = vld [vmem:[%s2089 + $0x24] sm:$0xe]
      %v2762 = vld [vmem:[%s2089 + $0x30] sm:$0xe]
      %v2763 = vld [vmem:[%s2089 + $0x3c] sm:$0xe]
      %v2764 = vld [vmem:[%s2089 + $0x48] sm:$0xe]
      %v2765 = vld [vmem:[%s2089 + $0x54] sm:$0xe]
      %v2790 = vrot.slane %v2758, 5
      %v2791 = vrot.slane %v2790, 4
      %v2792 = vrot.slane %v2333, 5
      %v2793 = vsel %vm849, %v2791, %v2792
      %v2794 = vrot.slane %v2792, 4
      %v2795 = vrot.slane %v2334, 5
      %v2796 = vsel %vm849, %v2794, %v2795
      %v2797 = vrot.slane %v2759, 5
      %v2798 = vrot.slane %v2797, 4
      %v2799 = vrot.slane %v2336, 5
      %v2800 = vsel %vm849, %v2798, %v2799
      %v2801 = vrot.slane %v2799, 4
      %v2802 = vrot.slane %v2337, 5
      %v2803 = vsel %vm849, %v2801, %v2802
      %v2804 = vrot.slane %v2760, 5
      %v2805 = vrot.slane %v2804, 4
      %v2806 = vrot.slane %v2339, 5
      %v2807 = vsel %vm849, %v2805, %v2806
      %v2808 = vrot.slane %v2806, 4
      %v2809 = vrot.slane %v2340, 5
      %v2810 = vsel %vm849, %v2808, %v2809
      %v2811 = vrot.slane %v2761, 5
      %v2812 = vrot.slane %v2811, 4
      %v2813 = vrot.slane %v2342, 5
      %v2814 = vsel %vm849, %v2812, %v2813
      %v2815 = vrot.slane %v2813, 4
      %v2816 = vrot.slane %v2343, 5
      %v2817 = vsel %vm849, %v2815, %v2816
      %v2818 = vrot.slane %v2762, 5
      %v2819 = vrot.slane %v2818, 4
      %v2820 = vrot.slane %v2345, 5
      %v2821 = vsel %vm849, %v2819, %v2820
      %v2822 = vrot.slane %v2820, 4
      %v2823 = vrot.slane %v2346, 5
      %v2824 = vsel %vm849, %v2822, %v2823
      %v2825 = vrot.slane %v2763, 5
      %v2826 = vrot.slane %v2825, 4
      %v2827 = vrot.slane %v2348, 5
      %v2828 = vsel %vm849, %v2826, %v2827
      %v2829 = vrot.slane %v2827, 4
      %v2830 = vrot.slane %v2349, 5
      %v2831 = vsel %vm849, %v2829, %v2830
      %v2832 = vrot.slane %v2764, 5
      %v2833 = vrot.slane %v2832, 4
      %v2834 = vrot.slane %v2351, 5
      %v2835 = vsel %vm849, %v2833, %v2834
      %v2836 = vrot.slane %v2834, 4
      %v2837 = vrot.slane %v2352, 5
      %v2838 = vsel %vm849, %v2836, %v2837
      %v2839 = vrot.slane %v2765, 5
      %v2840 = vrot.slane %v2839, 4
      %v2841 = vrot.slane %v2354, 5
      %v2842 = vsel %vm849, %v2840, %v2841
      %v2843 = vrot.slane %v2841, 4
      %v2844 = vrot.slane %v2355, 5
      %v2845 = vsel %vm849, %v2843, %v2844
      %s2846 = scalar_lea.vmem %s1, 512
      %v2847 = vld [vmem:[%s2846] sm:$0xf]
      %v2848 = vld [vmem:[%s2846 + $0x4] sm:$0xf]
      %v2849 = vld [vmem:[%s2846 + $0x8] sm:$0xf]
      %v2850 = vld [vmem:[%s2846 + $0xc] sm:$0xf]
      %v2851 = vld [vmem:[%s2846 + $0x10] sm:$0xf]
      %v2852 = vld [vmem:[%s2846 + $0x14] sm:$0xf]
      %v2853 = vld [vmem:[%s2846 + $0x18] sm:$0xf]
      %v2854 = vld [vmem:[%s2846 + $0x1c] sm:$0xf]
      %v2855 = vld [vmem:[%s2846 + $0x20] sm:$0xf]
      %v2856 = vld [vmem:[%s2846 + $0x24] sm:$0xf]
      %v2857 = vld [vmem:[%s2846 + $0x28] sm:$0xf]
      %v2858 = vld [vmem:[%s2846 + $0x2c] sm:$0xf]
      %v2859 = vld [vmem:[%s2846 + $0x30] sm:$0xf]
      %v2860 = vld [vmem:[%s2846 + $0x34] sm:$0xf]
      %v2861 = vld [vmem:[%s2846 + $0x38] sm:$0xf]
      %v2862 = vld [vmem:[%s2846 + $0x3c] sm:$0xf]
      %v2863 = vunpack.c.l.b16 %v2793
      %v2864 = vunpack.c.l.b16 %v2796
      %v2865 = vunpack.c.l.b16 %v2800
      %v2866 = vunpack.c.l.b16 %v2803
      %v2867 = vunpack.c.l.b16 %v2807
      %v2868 = vunpack.c.l.b16 %v2810
      %v2869 = vunpack.c.l.b16 %v2814
      %v2870 = vunpack.c.l.b16 %v2817
      %v2871 = vunpack.c.l.b16 %v2821
      %v2872 = vunpack.c.l.b16 %v2824
      %v2873 = vunpack.c.l.b16 %v2828
      %v2874 = vunpack.c.l.b16 %v2831
      %v2875 = vunpack.c.l.b16 %v2835
      %v2876 = vunpack.c.l.b16 %v2838
      %v2877 = vunpack.c.l.b16 %v2842
      %v2878 = vunpack.c.l.b16 %v2845
      %v2879 = vpack.c.b16 %v2864, %v2863
      %v2880 = vpack.c.b16 %v2866, %v2865
      %v2881 = vpack.c.b16 %v2868, %v2867
      %v2882 = vpack.c.b16 %v2870, %v2869
      %v2883 = vpack.c.b16 %v2872, %v2871
      %v2884 = vpack.c.b16 %v2874, %v2873
      %v2885 = vpack.c.b16 %v2876, %v2875
      %v2886 = vpack.c.b16 %v2878, %v2877
      %v2911 = vunpack.c.l.b16 %v2847
      %v2912 = vunpack.c.l.b16 %v2848
      %v2913 = vunpack.c.l.b16 %v2849
      %v2914 = vunpack.c.l.b16 %v2850
      %v2915 = vunpack.c.l.b16 %v2851
      %v2916 = vunpack.c.l.b16 %v2852
      %v2917 = vunpack.c.l.b16 %v2853
      %v2918 = vunpack.c.l.b16 %v2854
      %v2919 = vunpack.c.l.b16 %v2855
      %v2920 = vunpack.c.l.b16 %v2856
      %v2921 = vunpack.c.l.b16 %v2857
      %v2922 = vunpack.c.l.b16 %v2858
      %v2923 = vunpack.c.l.b16 %v2859
      %v2924 = vunpack.c.l.b16 %v2860
      %v2925 = vunpack.c.l.b16 %v2861
      %v2926 = vunpack.c.l.b16 %v2862
      %v2927 = vpack.c.b16 %v2912, %v2911
      %v2928 = vpack.c.b16 %v2914, %v2913
      %v2929 = vpack.c.b16 %v2916, %v2915
      %v2930 = vpack.c.b16 %v2918, %v2917
      %v2931 = vpack.c.b16 %v2920, %v2919
      %v2932 = vpack.c.b16 %v2922, %v2921
      %v2933 = vpack.c.b16 %v2924, %v2923
      %v2934 = vpack.c.b16 %v2926, %v2925
      %2943 = vmatprep.subr.bf16.mxu0 0
      %2944 = vmatpush1.bf16.msra.mxu0 %v2934
      %2945 = vmatprep.subr.bf16.mxu0 0
      %2946 = vmatpush1.bf16.msra.mxu0 %v2933
      %2947 = vmatprep.subr.bf16.mxu0 0
      %2948 = vmatpush1.bf16.msra.mxu0 %v2932
      %2949 = vmatprep.subr.bf16.mxu0 0
      %2950 = vmatpush1.bf16.msra.mxu0 %v2931
      %2951 = vmatprep.subr.bf16.mxu0 0
      %2952 = vmatpush1.bf16.msra.mxu0 %v2930
      %2953 = vmatprep.subr.bf16.mxu0 0
      %2954 = vmatpush1.bf16.msra.mxu0 %v2929
      %2955 = vmatprep.subr.bf16.mxu0 0
      %2956 = vmatpush1.bf16.msra.mxu0 %v2928
      %2957 = vmatprep.subr.bf16.mxu0 0
      %2958 = vmatpush1.bf16.msra.mxu0 %v2927
      %2959 = vmatprep.subr.bf16.mxu0 0
      %2960 = vmatpush2.bf16.msra.mxu0 0
      %2961 = vmatprep.subr.bf16.mxu0 0
      %2962 = vmatpush2.bf16.msra.mxu0 0
      %2963 = vmatprep.subr.bf16.mxu0 0
      %2964 = vmatpush2.bf16.msra.mxu0 0
      %2965 = vmatprep.subr.bf16.mxu0 0
      %2966 = vmatpush2.bf16.msra.mxu0 0
      %2967 = vmatprep.subr.bf16.mxu0 0
      %2968 = vmatpush2.bf16.msra.mxu0 0
      %2969 = vmatprep.subr.bf16.mxu0 0
      %2970 = vmatpush2.bf16.msra.mxu0 0
      %2971 = vmatprep.subr.bf16.mxu0 0
      %2972 = vmatpush2.bf16.msra.mxu0 0
      %2973 = vmatprep.subr.bf16.mxu0 0
      %2974 = vmatpush2.bf16.msra.mxu0 0
      %2975 = vmatprep.mubr.bf16.mxu0 0
      %2976 = vmatmul.mubr.bf16.gmra.mxu0 %v2879
      %v2977 = vpop.f32.mrf.mxu0
      %v2978 = vadd.f32 0.0, %v2977
      %v2979 = vpop.f32.mrf.mxu0
      %v2980 = vpop.f32.mrf.mxu0
      %v2981 = vadd.f32 0.0, %v2980
      %v2982 = vpop.f32.mrf.mxu0
      %2983 = vmatprep.mubr.bf16.mxu0 0
      %2984 = vmatmul.mubr.bf16.gmra.mxu0 %v2880
      %v2985 = vpop.f32.mrf.mxu0
      %v2986 = vadd.f32 0.0, %v2985
      %v2987 = vpop.f32.mrf.mxu0
      %v2988 = vpop.f32.mrf.mxu0
      %v2989 = vadd.f32 0.0, %v2988
      %v2990 = vpop.f32.mrf.mxu0
      %2991 = vmatprep.mubr.bf16.mxu0 0
      %2992 = vmatmul.mubr.bf16.gmra.mxu0 %v2881
      %v2993 = vpop.f32.mrf.mxu0
      %v2994 = vadd.f32 0.0, %v2993
      %v2995 = vpop.f32.mrf.mxu0
      %v2996 = vpop.f32.mrf.mxu0
      %v2997 = vadd.f32 0.0, %v2996
      %v2998 = vpop.f32.mrf.mxu0
      %2999 = vmatprep.mubr.bf16.mxu0 0
      %3000 = vmatmul.mubr.bf16.gmra.mxu0 %v2882
      %v3001 = vpop.f32.mrf.mxu0
      %v3002 = vadd.f32 0.0, %v3001
      %v3003 = vpop.f32.mrf.mxu0
      %v3004 = vpop.f32.mrf.mxu0
      %v3005 = vadd.f32 0.0, %v3004
      %v3006 = vpop.f32.mrf.mxu0
      %3007 = vmatprep.mubr.bf16.mxu0 0
      %3008 = vmatmul.mubr.bf16.gmra.mxu0 %v2883
      %v3009 = vpop.f32.mrf.mxu0
      %v3010 = vadd.f32 0.0, %v3009
      %v3011 = vpop.f32.mrf.mxu0
      %v3012 = vpop.f32.mrf.mxu0
      %v3013 = vadd.f32 0.0, %v3012
      %v3014 = vpop.f32.mrf.mxu0
      %3015 = vmatprep.mubr.bf16.mxu0 0
      %3016 = vmatmul.mubr.bf16.gmra.mxu0 %v2884
      %v3017 = vpop.f32.mrf.mxu0
      %v3018 = vadd.f32 0.0, %v3017
      %v3019 = vpop.f32.mrf.mxu0
      %v3020 = vpop.f32.mrf.mxu0
      %v3021 = vadd.f32 0.0, %v3020
      %v3022 = vpop.f32.mrf.mxu0
      %3023 = vmatprep.mubr.bf16.mxu0 0
      %3024 = vmatmul.mubr.bf16.gmra.mxu0 %v2885
      %v3025 = vpop.f32.mrf.mxu0
      %v3026 = vadd.f32 0.0, %v3025
      %v3027 = vpop.f32.mrf.mxu0
      %v3028 = vpop.f32.mrf.mxu0
      %v3029 = vadd.f32 0.0, %v3028
      %v3030 = vpop.f32.mrf.mxu0
      %3031 = vmatprep.mubr.bf16.mxu0 0
      %3032 = vmatmul.mubr.bf16.gmra.mxu0 %v2886
      %v3033 = vpop.f32.mrf.mxu0
      %v3034 = vadd.f32 0.0, %v3033
      %v3035 = vpop.f32.mrf.mxu0
      %v3036 = vpop.f32.mrf.mxu0
      %v3037 = vadd.f32 0.0, %v3036
      %v3038 = vpop.f32.mrf.mxu0
      %3039 = vdwg.mxu0
      %v3040 = vadd.f32 %v2742, %v2978
      %v3041 = vadd.f32 %v2743, %v2981
      %v3042 = vadd.f32 %v2744, %v2986
      %v3043 = vadd.f32 %v2745, %v2989
      %v3044 = vadd.f32 %v2746, %v2994
      %v3045 = vadd.f32 %v2747, %v2997
      %v3046 = vadd.f32 %v2748, %v3002
      %v3047 = vadd.f32 %v2749, %v3005
      %v3048 = vadd.f32 %v2750, %v3010
      %v3049 = vadd.f32 %v2751, %v3013
      %v3050 = vadd.f32 %v2752, %v3018
      %v3051 = vadd.f32 %v2753, %v3021
      %v3052 = vadd.f32 %v2754, %v3026
      %v3053 = vadd.f32 %v2755, %v3029
      %v3054 = vadd.f32 %v2756, %v3034
      %v3055 = vadd.f32 %v2757, %v3037
      %v3056 = vld [vmem:[%s2] sm:$0x1]
      %v3058 = vlaneseq
      %v3059 = vshrl.u32 %v3058, 7
      %v3060 = vsub.s32 0, %v3059
      %v3061 = vrot.slane %v3056, %v3060
      %v3063 = vadd.f32 %v3040, %v3061
      %v3064 = vadd.f32 %v3041, %v3061
      %v3065 = vadd.f32 %v3042, %v3061
      %v3066 = vadd.f32 %v3043, %v3061
      %v3067 = vadd.f32 %v3044, %v3061
      %v3068 = vadd.f32 %v3045, %v3061
      %v3069 = vadd.f32 %v3046, %v3061
      %v3070 = vadd.f32 %v3047, %v3061
      %v3071 = vadd.f32 %v3048, %v3061
      %v3072 = vadd.f32 %v3049, %v3061
      %v3073 = vadd.f32 %v3050, %v3061
      %v3074 = vadd.f32 %v3051, %v3061
      %v3075 = vadd.f32 %v3052, %v3061
      %v3076 = vadd.f32 %v3053, %v3061
      %v3077 = vadd.f32 %v3054, %v3061
      %v3078 = vadd.f32 %v3055, %v3061
      %v3079 = vmax.f32 %v3063, 0.0
      %v3080 = vmax.f32 %v3064, 0.0
      %v3081 = vmax.f32 %v3065, 0.0
      %v3082 = vmax.f32 %v3066, 0.0
      %v3083 = vmax.f32 %v3067, 0.0
      %v3084 = vmax.f32 %v3068, 0.0
      %v3085 = vmax.f32 %v3069, 0.0
      %v3086 = vmax.f32 %v3070, 0.0
      %v3087 = vmax.f32 %v3071, 0.0
      %v3088 = vmax.f32 %v3072, 0.0
      %v3089 = vmax.f32 %v3073, 0.0
      %v3090 = vmax.f32 %v3074, 0.0
      %v3091 = vmax.f32 %v3075, 0.0
      %v3092 = vmax.f32 %v3076, 0.0
      %v3093 = vmax.f32 %v3077, 0.0
      %v3094 = vmax.f32 %v3078, 0.0
      %v3095 = vpack.c.bf16 %v3080, %v3079
      %v3096 = vpack.c.bf16 %v3082, %v3081
      %v3097 = vpack.c.bf16 %v3084, %v3083
      %v3098 = vpack.c.bf16 %v3086, %v3085
      %v3099 = vpack.c.bf16 %v3088, %v3087
      %v3100 = vpack.c.bf16 %v3090, %v3089
      %v3101 = vpack.c.bf16 %v3092, %v3091
      %v3102 = vpack.c.bf16 %v3094, %v3093
      %v3111 = vunpack.c.l.b16 %v3095
      %v3112 = vunpack.c.h.b16 %v3095
      %v3113 = vunpack.c.l.b16 %v3096
      %v3114 = vunpack.c.h.b16 %v3096
      %v3115 = vunpack.c.l.b16 %v3097
      %v3116 = vunpack.c.h.b16 %v3097
      %v3117 = vunpack.c.l.b16 %v3098
      %v3118 = vunpack.c.h.b16 %v3098
      %v3119 = vunpack.c.l.b16 %v3099
      %v3120 = vunpack.c.h.b16 %v3099
      %v3121 = vunpack.c.l.b16 %v3100
      %v3122 = vunpack.c.h.b16 %v3100
      %v3123 = vunpack.c.l.b16 %v3101
      %v3124 = vunpack.c.h.b16 %v3101
      %v3125 = vunpack.c.l.b16 %v3102
      %v3126 = vunpack.c.h.b16 %v3102
      %v3127 = vpack.c.b16 %v3111, %v3111
      %v3128 = vpack.c.b16 %v3112, %v3112
      %v3129 = vpack.c.b16 %v3113, %v3113
      %v3130 = vpack.c.b16 %v3114, %v3114
      %v3131 = vpack.c.b16 %v3115, %v3115
      %v3132 = vpack.c.b16 %v3116, %v3116
      %v3133 = vpack.c.b16 %v3117, %v3117
      %v3134 = vpack.c.b16 %v3118, %v3118
      %v3135 = vpack.c.b16 %v3119, %v3119
      %v3136 = vpack.c.b16 %v3120, %v3120
      %v3137 = vpack.c.b16 %v3121, %v3121
      %v3138 = vpack.c.b16 %v3122, %v3122
      %v3139 = vpack.c.b16 %v3123, %v3123
      %v3140 = vpack.c.b16 %v3124, %v3124
      %v3141 = vpack.c.b16 %v3125, %v3125
      %v3142 = vpack.c.b16 %v3126, %v3126
      %3159 = vst [vmem:[%s194] sm:$0xf] %v3127
      %3160 = vst [vmem:[%s194 + $0x4] sm:$0xf] %v3128
      %3161 = vst [vmem:[%s194 + $0x8] sm:$0xf] %v3129
      %3162 = vst [vmem:[%s194 + $0xc] sm:$0xf] %v3130
      %3163 = vst [vmem:[%s194 + $0x10] sm:$0xf] %v3131
      %3164 = vst [vmem:[%s194 + $0x14] sm:$0xf] %v3132
      %3165 = vst [vmem:[%s194 + $0x18] sm:$0xf] %v3133
      %3166 = vst [vmem:[%s194 + $0x1c] sm:$0xf] %v3134
      %3167 = vst [vmem:[%s194 + $0x20] sm:$0xf] %v3135
      %3168 = vst [vmem:[%s194 + $0x24] sm:$0xf] %v3136
      %3169 = vst [vmem:[%s194 + $0x28] sm:$0xf] %v3137
      %3170 = vst [vmem:[%s194 + $0x2c] sm:$0xf] %v3138
      %3171 = vst [vmem:[%s194 + $0x30] sm:$0xf] %v3139
      %3172 = vst [vmem:[%s194 + $0x34] sm:$0xf] %v3140
      %3173 = vst [vmem:[%s194 + $0x38] sm:$0xf] %v3141
      %3174 = vst [vmem:[%s194 + $0x3c] sm:$0xf] %v3142
      %s3175 = smul.u32 8, %s19
      %p3176 = scmp.lt.s32.totalorder %s18, 1
      %s3177 = scalar_select %p3176, %s18, 1
      %p3178 = scmp.lt.s32.totalorder %s3175, 15
      %s3179 = scalar_select %p3178, %s3175, 15
      %s3180 = smul.addr %s3179, 2
      %s3181 = smul.addr %s3177, 32
      %s3182 = sadd.s32 %s3180, %s3181
      %s3183 = smul.addr %s3182, 4
      %s3184 = scalar_lea.vmem %s3, %s3183
      // Predicated region
      $region33: #{fourier_cnn_forward.4} parent=31 // pred_check
        %p3185 = pneg %p114
      $region34: #{fourier_cnn_forward.4} parent=31 // pred_check_branch
        %3187 = sbr.rel (%p3185) target = $region36
      $region35: #{fourier_cnn_forward.4} parent=31 // pred_region
        %s3188 = smul.u32 8, %s19
      $region36: #{fourier_cnn_forward.4} parent=31 // pred_fallthru
        _
    $region32: #{fourier_cnn_forward.4} parent=5 // pred_fallthru
      _
    %p3189 = scmp.le.s32.totalorder 2, %s9
    // Predicated region
    $region37: #{fourier_cnn_forward.4} parent=5 // pred_check
      %p3190 = pneg %p3189
    $region38: #{fourier_cnn_forward.4} parent=5 // pred_check_branch
      %3192 = sbr.rel (%p3190) target = $region40
    $region39: #{fourier_cnn_forward.4} parent=5 // pred_region
      %s3193 = ssub.s32 %s9, 2
      // Predicated region
      $region41: #{fourier_cnn_forward.4} parent=39 // pred_check
        %p3194 = pneg %p120
      $region42: #{fourier_cnn_forward.4} parent=39 // pred_check_branch
        %3196 = sbr.rel (%p3194) target = $region44
      $region43: #{fourier_cnn_forward.4} parent=39 // pred_region
        %s3197 = smul.u32 8, %s21
        %p3198 = scmp.lt.s32.totalorder %s20, 1
        %s3199 = scalar_select %p3198, %s20, 1
        %p3200 = scmp.lt.s32.totalorder %s3197, 15
        %s3201 = scalar_select %p3200, %s3197, 15
        %s3202 = smul.addr %s3201, 2
        %s3203 = smul.addr %s3199, 32
        %s3204 = sadd.s32 %s3202, %s3203
        %s3205 = smul.addr %s3204, 4
        %s3206 = scalar_lea.vmem %s3, %s3205
      $region44: #{fourier_cnn_forward.4} parent=39 // pred_fallthru
        _
    $region40: #{fourier_cnn_forward.4} parent=5 // pred_fallthru
      _
  $region6: #{fourier_cnn_forward.4} parent=0 // loop_footer
    %s13 = sadd.s32 1, %s9
  $region7: #{fourier_cnn_forward.4} parent=0 // loop_footer_branch
    %8 = sbr.rel target = $region3
  $region8: #{fourier_cnn_forward.4} parent=0 // loop_exit
    _

// kernel: fourier_cnn_forward.5
$region0: #{fourier_cnn_forward.5}
  #allocation0 [shape = 'u32[]', space=smem, size = 0x4, offset = 0x4, fixed_abs, tag = 'smem constant byte address 0x4 - core index']
  #allocation1 [shape = 'u32[144,128]{1,0:T(1,128)}', space=vmem, size = 0x12000, scoped, tag = 'internal scratch']
  %s0 = inlined_call_operand.vmem [shape: bf16[2,18,18,128], index: 0, kind: input, shape index: {}]
  %s1 = inlined_call_operand.vmem [shape: bf16[9,128,128], index: 1, kind: input, shape index: {}]
  %s2 = inlined_call_operand.vmem [shape: f32[1,128], index: 2, kind: input, shape index: {}]
  %s3 = inlined_call_operand.vmem [shape: f32[2,16,16,128], index: 3, kind: output, shape index: {}]
  %s4 = sld [smem:[#allocation0]]
  $region45: #{fourier_cnn_forward.5} parent=0
    _
  %s6 = ssub.s32 1, %s4
  %s7 = scalar_select 0, %s6, %s4
  loop: start=0, step=1, limit=6
  $region2: #{fourier_cnn_forward.5} parent=0 // loop_pre_header
    _
  $region3: #{fourier_cnn_forward.5} parent=0 // loop_header
    %s9 = sphi 0, %s13
    %p10 = scmp.ge.s32.totalorder %s9, 6
    %s16 = sphi 0, %s28
    %s17 = sphi 0, %s24
    %s18 = sphi 0, %s16
    %s19 = sphi 0, %s17
    %s20 = sphi 0, %s18
    %s21 = sphi 0, %s19
    %s31 = sphi 0, %s33
    %s34 = sphi 0, %s31
    %s35 = sphi 0, %s34
    %s51 = sphi 0, %s35
    %s55 = sphi 0, %s55
    %s57 = sphi 0, %s55
    %s58 = sphi 0, %s57
    %s72 = sphi 0, %s58
    %s76 = sphi 0, %s76
    %s78 = sphi 0, %s76
    %s79 = sphi 0, %s78
    %s93 = sphi 0, %s79
    %s101 = sphi 0, %s103
    %s104 = sphi 0, %s101
    %s105 = sphi 0, %s104
    %s121 = sphi 0, %s105
  $region4: #{fourier_cnn_forward.5} parent=0 // loop_header_branch
    %12 = sbr.rel (%p10) target = $region8
  $region5: #{fourier_cnn_forward.5} parent=0 // loop_body
    %s14 = ssub.s32 %s9, 1
    %s15 = ssub.s32 %s9, 2
    %s22 = sadd.s32 1, %s17
    %p23 = scmp.ge.s32.totalorder %s22, 2
    %s24 = scalar_select %p23, 0, %s22
    %s25 = sadd.s32 1, %s16
    %s26 = scalar_select %p23, %s25, %s16
    %p27 = scmp.ge.s32.totalorder %s26, 2
    %s28 = scalar_select %p27, 0, %s26
    %s29 = ssub.s32 %s16, %s28
    %p30 = scmp.eq.s32.totalorder %s29, 0
    %s32 = sadd.s32 %s31, 1
    %s33 = scalar_select %p30, %s31, %s32
    %p36 = pneg %p30
    %p37 = scmp.eq.s32.totalorder %s9, 3
    %p38 = por %p36, %p37
    %p39 = scmp.ne.s32.totalorder %s31, %s34
    %p40 = scmp.eq.s32.totalorder %s9, 0
    %p41 = por %p39, %p40
    %p42 = scmp.ne.s32.totalorder %s31, %s34
    %p43 = scmp.eq.s32.totalorder %s14, 3
    %p44 = por %p42, %p43
    %p45 = scmp.ne.s32.totalorder %s34, %s35
    %p46 = scmp.eq.s32.totalorder %s14, 0
    %p47 = por %p45, %p46
    %p48 = scmp.ne.s32.totalorder %s34, %s35
    %p49 = scmp.eq.s32.totalorder %s15, 3
    %p50 = por %p48, %p49
    %p52 = scmp.ne.s32.totalorder %s35, %s51
    %p53 = scmp.eq.s32.totalorder %s15, 0
    %p54 = por %p52, %p53
    %s56 = sadd.s32 %s55, 1
    %p59 = scmp.eq.s32.totalorder %s9, 3
    %p60 = scmp.ne.s32.totalorder %s55, %s57
    %p61 = scmp.eq.s32.totalorder %s9, 0
    %p62 = por %p60, %p61
    %p63 = scmp.ne.s32.totalorder %s55, %s57
    %p64 = scmp.eq.s32.totalorder %s14, 3
    %p65 = por %p63, %p64
    %p66 = scmp.ne.s32.totalorder %s57, %s58
    %p67 = scmp.eq.s32.totalorder %s14, 0
    %p68 = por %p66, %p67
    %p69 = scmp.ne.s32.totalorder %s57, %s58
    %p70 = scmp.eq.s32.totalorder %s15, 3
    %p71 = por %p69, %p70
    %p73 = scmp.ne.s32.totalorder %s58, %s72
    %p74 = scmp.eq.s32.totalorder %s15, 0
    %p75 = por %p73, %p74
    %s77 = sadd.s32 %s76, 1
    %p80 = scmp.eq.s32.totalorder %s9, 3
    %p81 = scmp.ne.s32.totalorder %s76, %s78
    %p82 = scmp.eq.s32.totalorder %s9, 0
    %p83 = por %p81, %p82
    %p84 = scmp.ne.s32.totalorder %s76, %s78
    %p85 = scmp.eq.s32.totalorder %s14, 3
    %p86 = por %p84, %p85
    %p87 = scmp.ne.s32.totalorder %s78, %s79
    %p88 = scmp.eq.s32.totalorder %s14, 0
    %p89 = por %p87, %p88
    %p90 = scmp.ne.s32.totalorder %s78, %s79
    %p91 = scmp.eq.s32.totalorder %s15, 3
    %p92 = por %p90, %p91
    %p94 = scmp.ne.s32.totalorder %s79, %s93
    %p95 = scmp.eq.s32.totalorder %s15, 0
    %p96 = por %p94, %p95
    %s97 = ssub.s32 %s16, %s28
    %s98 = ssub.s32 %s17, %s24
    %s99 = sor.u32 %s97, %s98
    %p100 = scmp.eq.s32.totalorder %s99, 0
    %s102 = sadd.s32 %s101, 1
    %s103 = scalar_select %p100, %s101, %s102
    %p106 = pneg %p100
    %p107 = scmp.eq.s32.totalorder %s9, 3
    %p108 = por %p106, %p107
    %p109 = scmp.ne.s32.totalorder %s101, %s104
    %p110 = scmp.eq.s32.totalorder %s9, 0
    %p111 = por %p109, %p110
    %p112 = scmp.ne.s32.totalorder %s101, %s104
    %p113 = scmp.eq.s32.totalorder %s14, 3
    %p114 = por %p112, %p113
    %p115 = scmp.ne.s32.totalorder %s104, %s105
    %p116 = scmp.eq.s32.totalorder %s14, 0
    %p117 = por %p115, %p116
    %p118 = scmp.ne.s32.totalorder %s104, %s105
    %p119 = scmp.eq.s32.totalorder %s15, 3
    %p120 = por %p118, %p119
    %p122 = scmp.ne.s32.totalorder %s105, %s121
    %p123 = scmp.eq.s32.totalorder %s15, 0
    %p124 = por %p122, %p123
    %p125 = scmp.le.s32.totalorder 1, %s9
    %p126 = scmp.lt.s32.totalorder %s9, 5
    %p127 = pnand %p125, %p126
    %p128 = pneg %p127
    // Predicated region
    $region9: #{fourier_cnn_forward.5} parent=5 // pred_check
      _
    $region10: #{fourier_cnn_forward.5} parent=5 // pred_check_branch
      %130 = sbr.rel (%p127) target = $region12
    $region11: #{fourier_cnn_forward.5} parent=5 // pred_region
      %s131 = ssub.s32 %s9, 1
      // Predicated region
      $region13: #{fourier_cnn_forward.5} parent=11 // pred_check
        %p132 = pneg %p68
      $region14: #{fourier_cnn_forward.5} parent=11 // pred_check_branch
        %134 = sbr.rel (%p132) target = $region16
      $region15: #{fourier_cnn_forward.5} parent=11 // pred_region
        _
      $region16: #{fourier_cnn_forward.5} parent=11 // pred_fallthru
        _
      // Predicated region
      $region17: #{fourier_cnn_forward.5} parent=11 // pred_check
        %p135 = pneg %p89
      $region18: #{fourier_cnn_forward.5} parent=11 // pred_check_branch
        %137 = sbr.rel (%p135) target = $region20
      $region19: #{fourier_cnn_forward.5} parent=11 // pred_region
        _
      $region20: #{fourier_cnn_forward.5} parent=11 // pred_fallthru
        _
    $region12: #{fourier_cnn_forward.5} parent=5 // pred_fallthru
      _
    %p138 = scmp.lt.s32.totalorder %s9, 4
    // Predicated region
    $region21: #{fourier_cnn_forward.5} parent=5 // pred_check
      %p139 = pneg %p138
    $region22: #{fourier_cnn_forward.5} parent=5 // pred_check_branch
      %141 = sbr.rel (%p139) target = $region24
    $region23: #{fourier_cnn_forward.5} parent=5 // pred_region
      // Predicated region
      $region25: #{fourier_cnn_forward.5} parent=23 // pred_check
        %p142 = pneg %p41
      $region26: #{fourier_cnn_forward.5} parent=23 // pred_check_branch
        %144 = sbr.rel (%p142) target = $region28
      $region27: #{fourier_cnn_forward.5} parent=23 // pred_region
        %p145 = scmp.lt.s32.totalorder %s16, 1
        %s146 = scalar_select %p145, %s16, 1
        %s147 = smul.addr %s146, 54
        %s148 = smul.addr %s147, 4
        %s149 = scalar_lea.vmem %s0, %s148
      $region28: #{fourier_cnn_forward.5} parent=23 // pred_fallthru
        _
    $region24: #{fourier_cnn_forward.5} parent=5 // pred_fallthru
      _
    %p150 = scmp.le.s32.totalorder 1, %s9
    %p151 = scmp.lt.s32.totalorder %s9, 5
    %p152 = pnand %p150, %p151
    %p153 = pneg %p152
    // Predicated region
    $region29: #{fourier_cnn_forward.5} parent=5 // pred_check
      _
    $region30: #{fourier_cnn_forward.5} parent=5 // pred_check_branch
      %155 = sbr.rel (%p152) target = $region32
    $region31: #{fourier_cnn_forward.5} parent=5 // pred_region
      %s156 = ssub.s32 %s9, 1
      %p157 = scmp.lt.s32.totalorder %s18, 1
      %s158 = scalar_select %p157, %s18, 1
      %s159 = smul.addr %s158, 54
      %s160 = smul.addr %s159, 4
      %s161 = scalar_lea.vmem %s0, %s160
      %p162 = pneg %p47
      %p163 = pneg %p44
      %p164 = pneg %p68
      %p165 = pneg %p65
      %p166 = pneg %p89
      %p167 = pneg %p86
      %p168 = pneg %p117
      %p169 = pneg %p114
      %s170 = smul.u32 8, %s19
      %p171 = scmp.lt.s32.totalorder %s18, 1
      %s172 = scalar_select %p171, %s18, 1
      %p173 = scmp.lt.s32.totalorder %s170, 15
      %s174 = scalar_select %p173, %s170, 15
      %s175 = smul.addr %s174, 2
      %s176 = smul.addr %s172, 32
      %s177 = sadd.s32 %s175, %s176
      %s178 = smul.addr %s177, 8
      %s179 = scalar_lea.vmem %s3, %s178
      %p180 = scmp.lt.s32.totalorder %s18, 1
      %s181 = scalar_select %p180, %s18, 1
      %s182 = smul.addr %s181, 54
      %s183 = smul.addr %s182, 4
      %s184 = scalar_lea.vmem %s0, %s183
      %s185 = smul.u32 8, %s19
      %p186 = scmp.lt.s32.totalorder %s18, 1
      %s187 = scalar_select %p186, %s18, 1
      %p188 = scmp.lt.s32.totalorder %s185, 15
      %s189 = scalar_select %p188, %s185, 15
      %s190 = smul.addr %s189, 2
      %s191 = smul.addr %s187, 32
      %s192 = sadd.s32 %s190, %s191
      %s193 = smul.addr %s192, 8
      %s194 = scalar_lea.vmem %s3, %s193
      %s195 = smul.u32 8, %s19
      %s197 = smul.u32 %s19, 8
      %s198 = smul.u32 %s197, 3
      %s199 = smul.addr %s198, 4
      %s200 = scalar_lea.vmem %s184, %s199
      %v201 = vld [vmem:[%s200] sm:$0xf]
      %v202 = vld [vmem:[%s200 + $0x4] sm:$0xf]
      %v203 = vld [vmem:[%s200 + $0xc] sm:$0xf]
      %v204 = vld [vmem:[%s200 + $0x10] sm:$0xf]
      %v205 = vld [vmem:[%s200 + $0x18] sm:$0xf]
      %v206 = vld [vmem:[%s200 + $0x1c] sm:$0xf]
      %v207 = vld [vmem:[%s200 + $0x24] sm:$0xf]
      %v208 = vld [vmem:[%s200 + $0x28] sm:$0xf]
      %v209 = vld [vmem:[%s200 + $0x30] sm:$0xf]
      %v210 = vld [vmem:[%s200 + $0x34] sm:$0xf]
      %v211 = vld [vmem:[%s200 + $0x3c] sm:$0xf]
      %v212 = vld [vmem:[%s200 + $0x40] sm:$0xf]
      %v213 = vld [vmem:[%s200 + $0x48] sm:$0xf]
      %v214 = vld [vmem:[%s200 + $0x4c] sm:$0xf]
      %v215 = vld [vmem:[%s200 + $0x54] sm:$0xf]
      %v216 = vld [vmem:[%s200 + $0x58] sm:$0xf]
      %v217 = vld [vmem:[%s1] sm:$0xf]
      %v218 = vld [vmem:[%s1 + $0x4] sm:$0xf]
      %v219 = vld [vmem:[%s1 + $0x8] sm:$0xf]
      %v220 = vld [vmem:[%s1 + $0xc] sm:$0xf]
      %v221 = vld [vmem:[%s1 + $0x10] sm:$0xf]
      %v222 = vld [vmem:[%s1 + $0x14] sm:$0xf]
      %v223 = vld [vmem:[%s1 + $0x18] sm:$0xf]
      %v224 = vld [vmem:[%s1 + $0x1c] sm:$0xf]
      %v225 = vld [vmem:[%s1 + $0x20] sm:$0xf]
      %v226 = vld [vmem:[%s1 + $0x24] sm:$0xf]
      %v227 = vld [vmem:[%s1 + $0x28] sm:$0xf]
      %v228 = vld [vmem:[%s1 + $0x2c] sm:$0xf]
      %v229 = vld [vmem:[%s1 + $0x30] sm:$0xf]
      %v230 = vld [vmem:[%s1 + $0x34] sm:$0xf]
      %v231 = vld [vmem:[%s1 + $0x38] sm:$0xf]
      %v232 = vld [vmem:[%s1 + $0x3c] sm:$0xf]
      %v233 = vld [vmem:[%s200 + $0x8] sm:$0x1]
      %v234 = vld [vmem:[%s200 + $0x14] sm:$0x1]
      %v235 = vld [vmem:[%s200 + $0x20] sm:$0x1]
      %v236 = vld [vmem:[%s200 + $0x2c] sm:$0x1]
      %v237 = vld [vmem:[%s200 + $0x38] sm:$0x1]
      %v238 = vld [vmem:[%s200 + $0x44] sm:$0x1]
      %v239 = vld [vmem:[%s200 + $0x50] sm:$0x1]
      %v240 = vld [vmem:[%s200 + $0x5c] sm:$0x1]
      %vm241 = vsmask.f32 3328
      %vm242 = vsmask.f32 7440
      %vm243 = vmor %vm241, %vm242
      %v245 = vshrl.u32 %v201, 16
      %v247 = vrot.slane %v245, 4
      %v248 = vshll.u32 %v201, 16
      %v250 = vrot.slane %v248, 5
      %v251 = vor.u32 %v247, %v250
      %v252 = vrot.slane %v251, 4
      %v254 = vshll.u32 %v202, 16
      %v256 = vrot.slane %v254, 5
      %v257 = vsel %vm243, %v252, %v256
      %v258 = vshrl.u32 %v202, 16
      %v260 = vrot.slane %v258, 4
      %v261 = vor.u32 %v260, %v256
      %v262 = vrot.slane %v261, 4
      %v264 = vshll.u32 %v233, 16
      %v266 = vrot.slane %v264, 5
      %v267 = vsel %vm243, %v262, %v266
      %v269 = vshrl.u32 %v203, 16
      %v271 = vrot.slane %v269, 4
      %v272 = vshll.u32 %v203, 16
      %v274 = vrot.slane %v272, 5
      %v275 = vor.u32 %v271, %v274
      %v276 = vrot.slane %v275, 4
      %v278 = vshll.u32 %v204, 16
      %v280 = vrot.slane %v278, 5
      %v281 = vsel %vm243, %v276, %v280
      %v282 = vshrl.u32 %v204, 16
      %v284 = vrot.slane %v282, 4
      %v285 = vor.u32 %v284, %v280
      %v286 = vrot.slane %v285, 4
      %v288 = vshll.u32 %v234, 16
      %v290 = vrot.slane %v288, 5
      %v291 = vsel %vm243, %v286, %v290
      %v293 = vshrl.u32 %v205, 16
      %v295 = vrot.slane %v293, 4
      %v296 = vshll.u32 %v205, 16
      %v298 = vrot.slane %v296, 5
      %v299 = vor.u32 %v295, %v298
      %v300 = vrot.slane %v299, 4
      %v302 = vshll.u32 %v206, 16
      %v304 = vrot.slane %v302, 5
      %v305 = vsel %vm243, %v300, %v304
      %v306 = vshrl.u32 %v206, 16
      %v308 = vrot.slane %v306, 4
      %v309 = vor.u32 %v308, %v304
      %v310 = vrot.slane %v309, 4
      %v312 = vshll.u32 %v235, 16
      %v314 = vrot.slane %v312, 5
      %v315 = vsel %vm243, %v310, %v314
      %v317 = vshrl.u32 %v207, 16
      %v319 = vrot.slane %v317, 4
      %v320 = vshll.u32 %v207, 16
      %v322 = vrot.slane %v320, 5
      %v323 = vor.u32 %v319, %v322
      %v324 = vrot.slane %v323, 4
      %v326 = vshll.u32 %v208, 16
      %v328 = vrot.slane %v326, 5
      %v329 = vsel %vm243, %v324, %v328
      %v330 = vshrl.u32 %v208, 16
      %v332 = vrot.slane %v330, 4
      %v333 = vor.u32 %v332, %v328
      %v334 = vrot.slane %v333, 4
      %v336 = vshll.u32 %v236, 16
      %v338 = vrot.slane %v336, 5
      %v339 = vsel %vm243, %v334, %v338
      %v341 = vshrl.u32 %v209, 16
      %v343 = vrot.slane %v341, 4
      %v344 = vshll.u32 %v209, 16
      %v346 = vrot.slane %v344, 5
      %v347 = vor.u32 %v343, %v346
      %v348 = vrot.slane %v347, 4
      %v350 = vshll.u32 %v210, 16
      %v352 = vrot.slane %v350, 5
      %v353 = vsel %vm243, %v348, %v352
      %v354 = vshrl.u32 %v210, 16
      %v356 = vrot.slane %v354, 4
      %v357 = vor.u32 %v356, %v352
      %v358 = vrot.slane %v357, 4
      %v360 = vshll.u32 %v237, 16
      %v362 = vrot.slane %v360, 5
      %v363 = vsel %vm243, %v358, %v362
      %v365 = vshrl.u32 %v211, 16
      %v367 = vrot.slane %v365, 4
      %v368 = vshll.u32 %v211, 16
      %v370 = vrot.slane %v368, 5
      %v371 = vor.u32 %v367, %v370
      %v372 = vrot.slane %v371, 4
      %v374 = vshll.u32 %v212, 16
      %v376 = vrot.slane %v374, 5
      %v377 = vsel %vm243, %v372, %v376
      %v378 = vshrl.u32 %v212, 16
      %v380 = vrot.slane %v378, 4
      %v381 = vor.u32 %v380, %v376
      %v382 = vrot.slane %v381, 4
      %v384 = vshll.u32 %v238, 16
      %v386 = vrot.slane %v384, 5
      %v387 = vsel %vm243, %v382, %v386
      %v389 = vshrl.u32 %v213, 16
      %v391 = vrot.slane %v389, 4
      %v392 = vshll.u32 %v213, 16
      %v394 = vrot.slane %v392, 5
      %v395 = vor.u32 %v391, %v394
      %v396 = vrot.slane %v395, 4
      %v398 = vshll.u32 %v214, 16
      %v400 = vrot.slane %v398, 5
      %v401 = vsel %vm243, %v396, %v400
      %v402 = vshrl.u32 %v214, 16
      %v404 = vrot.slane %v402, 4
      %v405 = vor.u32 %v404, %v400
      %v406 = vrot.slane %v405, 4
      %v408 = vshll.u32 %v239, 16
      %v410 = vrot.slane %v408, 5
      %v411 = vsel %vm243, %v406, %v410
      %v413 = vshrl.u32 %v215, 16
      %v415 = vrot.slane %v413, 4
      %v416 = vshll.u32 %v215, 16
      %v418 = vrot.slane %v416, 5
      %v419 = vor.u32 %v415, %v418
      %v420 = vrot.slane %v419, 4
      %v422 = vshll.u32 %v216, 16
      %v424 = vrot.slane %v422, 5
      %v425 = vsel %vm243, %v420, %v424
      %v426 = vshrl.u32 %v216, 16
      %v428 = vrot.slane %v426, 4
      %v429 = vor.u32 %v428, %v424
      %v430 = vrot.slane %v429, 4
      %v432 = vshll.u32 %v240, 16
      %v434 = vrot.slane %v432, 5
      %v435 = vsel %vm243, %v430, %v434
      %s436 = scalar_lea.vmem %s1, 64
      %v437 = vld [vmem:[%s436] sm:$0xf]
      %v438 = vld [vmem:[%s436 + $0x4] sm:$0xf]
      %v439 = vld [vmem:[%s436 + $0x8] sm:$0xf]
      %v440 = vld [vmem:[%s436 + $0xc] sm:$0xf]
      %v441 = vld [vmem:[%s436 + $0x10] sm:$0xf]
      %v442 = vld [vmem:[%s436 + $0x14] sm:$0xf]
      %v443 = vld [vmem:[%s436 + $0x18] sm:$0xf]
      %v444 = vld [vmem:[%s436 + $0x1c] sm:$0xf]
      %v445 = vld [vmem:[%s436 + $0x20] sm:$0xf]
      %v446 = vld [vmem:[%s436 + $0x24] sm:$0xf]
      %v447 = vld [vmem:[%s436 + $0x28] sm:$0xf]
      %v448 = vld [vmem:[%s436 + $0x2c] sm:$0xf]
      %v449 = vld [vmem:[%s436 + $0x30] sm:$0xf]
      %v450 = vld [vmem:[%s436 + $0x34] sm:$0xf]
      %v451 = vld [vmem:[%s436 + $0x38] sm:$0xf]
      %v452 = vld [vmem:[%s436 + $0x3c] sm:$0xf]
      %v453 = vunpack.c.l.b16 %v257
      %v454 = vunpack.c.l.b16 %v267
      %v455 = vunpack.c.l.b16 %v281
      %v456 = vunpack.c.l.b16 %v291
      %v457 = vunpack.c.l.b16 %v305
      %v458 = vunpack.c.l.b16 %v315
      %v459 = vunpack.c.l.b16 %v329
      %v460 = vunpack.c.l.b16 %v339
      %v461 = vunpack.c.l.b16 %v353
      %v462 = vunpack.c.l.b16 %v363
      %v463 = vunpack.c.l.b16 %v377
      %v464 = vunpack.c.l.b16 %v387
      %v465 = vunpack.c.l.b16 %v401
      %v466 = vunpack.c.l.b16 %v411
      %v467 = vunpack.c.l.b16 %v425
      %v468 = vunpack.c.l.b16 %v435
      %v469 = vpack.c.b16 %v454, %v453
      %v470 = vpack.c.b16 %v456, %v455
      %v471 = vpack.c.b16 %v458, %v457
      %v472 = vpack.c.b16 %v460, %v459
      %v473 = vpack.c.b16 %v462, %v461
      %v474 = vpack.c.b16 %v464, %v463
      %v475 = vpack.c.b16 %v466, %v465
      %v476 = vpack.c.b16 %v468, %v467
      %v501 = vunpack.c.l.b16 %v437
      %v502 = vunpack.c.l.b16 %v438
      %v503 = vunpack.c.l.b16 %v439
      %v504 = vunpack.c.l.b16 %v440
      %v505 = vunpack.c.l.b16 %v441
      %v506 = vunpack.c.l.b16 %v442
      %v507 = vunpack.c.l.b16 %v443
      %v508 = vunpack.c.l.b16 %v444
      %v509 = vunpack.c.l.b16 %v445
      %v510 = vunpack.c.l.b16 %v446
      %v511 = vunpack.c.l.b16 %v447
      %v512 = vunpack.c.l.b16 %v448
      %v513 = vunpack.c.l.b16 %v449
      %v514 = vunpack.c.l.b16 %v450
      %v515 = vunpack.c.l.b16 %v451
      %v516 = vunpack.c.l.b16 %v452
      %v517 = vpack.c.b16 %v502, %v501
      %v518 = vpack.c.b16 %v504, %v503
      %v519 = vpack.c.b16 %v506, %v505
      %v520 = vpack.c.b16 %v508, %v507
      %v521 = vpack.c.b16 %v510, %v509
      %v522 = vpack.c.b16 %v512, %v511
      %v523 = vpack.c.b16 %v514, %v513
      %v524 = vpack.c.b16 %v516, %v515
      %533 = vmatprep.subr.bf16.mxu0 0
      %534 = vmatpush1.bf16.msra.mxu0 %v524
      %535 = vmatprep.subr.bf16.mxu0 0
      %536 = vmatpush1.bf16.msra.mxu0 %v523
      %537 = vmatprep.subr.bf16.mxu0 0
      %538 = vmatpush1.bf16.msra.mxu0 %v522
      %539 = vmatprep.subr.bf16.mxu0 0
      %540 = vmatpush1.bf16.msra.mxu0 %v521
      %541 = vmatprep.subr.bf16.mxu0 0
      %542 = vmatpush1.bf16.msra.mxu0 %v520
      %543 = vmatprep.subr.bf16.mxu0 0
      %544 = vmatpush1.bf16.msra.mxu0 %v519
      %545 = vmatprep.subr.bf16.mxu0 0
      %546 = vmatpush1.bf16.msra.mxu0 %v518
      %547 = vmatprep.subr.bf16.mxu0 0
      %548 = vmatpush1.bf16.msra.mxu0 %v517
      %549 = vmatprep.subr.bf16.mxu0 0
      %550 = vmatpush2.bf16.msra.mxu0 0
      %551 = vmatprep.subr.bf16.mxu0 0
      %552 = vmatpush2.bf16.msra.mxu0 0
      %553 = vmatprep.subr.bf16.mxu0 0
      %554 = vmatpush2.bf16.msra.mxu0 0
      %555 = vmatprep.subr.bf16.mxu0 0
      %556 = vmatpush2.bf16.msra.mxu0 0
      %557 = vmatprep.subr.bf16.mxu0 0
      %558 = vmatpush2.bf16.msra.mxu0 0
      %559 = vmatprep.subr.bf16.mxu0 0
      %560 = vmatpush2.bf16.msra.mxu0 0
      %561 = vmatprep.subr.bf16.mxu0 0
      %562 = vmatpush2.bf16.msra.mxu0 0
      %563 = vmatprep.subr.bf16.mxu0 0
      %564 = vmatpush2.bf16.msra.mxu0 0
      %565 = vmatprep.mubr.bf16.mxu0 0
      %566 = vmatmul.mubr.bf16.gmra.mxu0 %v469
      %v567 = vpop.f32.mrf.mxu0
      %v568 = vadd.f32 0.0, %v567
      %v569 = vpop.f32.mrf.mxu0
      %v570 = vpop.f32.mrf.mxu0
      %v571 = vadd.f32 0.0, %v570
      %v572 = vpop.f32.mrf.mxu0
      %573 = vmatprep.mubr.bf16.mxu0 0
      %574 = vmatmul.mubr.bf16.gmra.mxu0 %v470
      %v575 = vpop.f32.mrf.mxu0
      %v576 = vadd.f32 0.0, %v575
      %v577 = vpop.f32.mrf.mxu0
      %v578 = vpop.f32.mrf.mxu0
      %v579 = vadd.f32 0.0, %v578
      %v580 = vpop.f32.mrf.mxu0
      %581 = vmatprep.mubr.bf16.mxu0 0
      %582 = vmatmul.mubr.bf16.gmra.mxu0 %v471
      %v583 = vpop.f32.mrf.mxu0
      %v584 = vadd.f32 0.0, %v583
      %v585 = vpop.f32.mrf.mxu0
      %v586 = vpop.f32.mrf.mxu0
      %v587 = vadd.f32 0.0, %v586
      %v588 = vpop.f32.mrf.mxu0
      %589 = vmatprep.mubr.bf16.mxu0 0
      %590 = vmatmul.mubr.bf16.gmra.mxu0 %v472
      %v591 = vpop.f32.mrf.mxu0
      %v592 = vadd.f32 0.0, %v591
      %v593 = vpop.f32.mrf.mxu0
      %v594 = vpop.f32.mrf.mxu0
      %v595 = vadd.f32 0.0, %v594
      %v596 = vpop.f32.mrf.mxu0
      %597 = vmatprep.mubr.bf16.mxu0 0
      %598 = vmatmul.mubr.bf16.gmra.mxu0 %v473
      %v599 = vpop.f32.mrf.mxu0
      %v600 = vadd.f32 0.0, %v599
      %v601 = vpop.f32.mrf.mxu0
      %v602 = vpop.f32.mrf.mxu0
      %v603 = vadd.f32 0.0, %v602
      %v604 = vpop.f32.mrf.mxu0
      %605 = vmatprep.mubr.bf16.mxu0 0
      %606 = vmatmul.mubr.bf16.gmra.mxu0 %v474
      %v607 = vpop.f32.mrf.mxu0
      %v608 = vadd.f32 0.0, %v607
      %v609 = vpop.f32.mrf.mxu0
      %v610 = vpop.f32.mrf.mxu0
      %v611 = vadd.f32 0.0, %v610
      %v612 = vpop.f32.mrf.mxu0
      %613 = vmatprep.mubr.bf16.mxu0 0
      %614 = vmatmul.mubr.bf16.gmra.mxu0 %v475
      %v615 = vpop.f32.mrf.mxu0
      %v616 = vadd.f32 0.0, %v615
      %v617 = vpop.f32.mrf.mxu0
      %v618 = vpop.f32.mrf.mxu0
      %v619 = vadd.f32 0.0, %v618
      %v620 = vpop.f32.mrf.mxu0
      %621 = vmatprep.mubr.bf16.mxu0 0
      %622 = vmatmul.mubr.bf16.gmra.mxu0 %v476
      %v623 = vpop.f32.mrf.mxu0
      %v624 = vadd.f32 0.0, %v623
      %v625 = vpop.f32.mrf.mxu0
      %v626 = vpop.f32.mrf.mxu0
      %v627 = vadd.f32 0.0, %v626
      %v628 = vpop.f32.mrf.mxu0
      %629 = vdwg.mxu0
      %v646 = vunpack.c.l.b16 %v201
      %v647 = vunpack.c.l.b16 %v202
      %v648 = vunpack.c.l.b16 %v203
      %v649 = vunpack.c.l.b16 %v204
      %v650 = vunpack.c.l.b16 %v205
      %v651 = vunpack.c.l.b16 %v206
      %v652 = vunpack.c.l.b16 %v207
      %v653 = vunpack.c.l.b16 %v208
      %v654 = vunpack.c.l.b16 %v209
      %v655 = vunpack.c.l.b16 %v210
      %v656 = vunpack.c.l.b16 %v211
      %v657 = vunpack.c.l.b16 %v212
      %v658 = vunpack.c.l.b16 %v213
      %v659 = vunpack.c.l.b16 %v214
      %v660 = vunpack.c.l.b16 %v215
      %v661 = vunpack.c.l.b16 %v216
      %v662 = vpack.c.b16 %v647, %v646
      %v663 = vpack.c.b16 %v649, %v648
      %v664 = vpack.c.b16 %v651, %v650
      %v665 = vpack.c.b16 %v653, %v652
      %v666 = vpack.c.b16 %v655, %v654
      %v667 = vpack.c.b16 %v657, %v656
      %v668 = vpack.c.b16 %v659, %v658
      %v669 = vpack.c.b16 %v661, %v660
      %v694 = vunpack.c.l.b16 %v217
      %v695 = vunpack.c.l.b16 %v218
      %v696 = vunpack.c.l.b16 %v219
      %v697 = vunpack.c.l.b16 %v220
      %v698 = vunpack.c.l.b16 %v221
      %v699 = vunpack.c.l.b16 %v222
      %v700 = vunpack.c.l.b16 %v223
      %v701 = vunpack.c.l.b16 %v224
      %v702 = vunpack.c.l.b16 %v225
      %v703 = vunpack.c.l.b16 %v226
      %v704 = vunpack.c.l.b16 %v227
      %v705 = vunpack.c.l.b16 %v228
      %v706 = vunpack.c.l.b16 %v229
      %v707 = vunpack.c.l.b16 %v230
      %v708 = vunpack.c.l.b16 %v231
      %v709 = vunpack.c.l.b16 %v232
      %v710 = vpack.c.b16 %v695, %v694
      %v711 = vpack.c.b16 %v697, %v696
      %v712 = vpack.c.b16 %v699, %v698
      %v713 = vpack.c.b16 %v701, %v700
      %v714 = vpack.c.b16 %v703, %v702
      %v715 = vpack.c.b16 %v705, %v704
      %v716 = vpack.c.b16 %v707, %v706
      %v717 = vpack.c.b16 %v709, %v708
      %726 = vmatprep.subr.bf16.mxu0 0
      %727 = vmatpush1.bf16.msra.mxu0 %v717
      %728 = vmatprep.subr.bf16.mxu0 0
      %729 = vmatpush1.bf16.msra.mxu0 %v716
      %730 = vmatprep.subr.bf16.mxu0 0
      %731 = vmatpush1.bf16.msra.mxu0 %v715
      %732 = vmatprep.subr.bf16.mxu0 0
      %733 = vmatpush1.bf16.msra.mxu0 %v714
      %734 = vmatprep.subr.bf16.mxu0 0
      %735 = vmatpush1.bf16.msra.mxu0 %v713
      %736 = vmatprep.subr.bf16.mxu0 0
      %737 = vmatpush1.bf16.msra.mxu0 %v712
      %738 = vmatprep.subr.bf16.mxu0 0
      %739 = vmatpush1.bf16.msra.mxu0 %v711
      %740 = vmatprep.subr.bf16.mxu0 0
      %741 = vmatpush1.bf16.msra.mxu0 %v710
      %742 = vmatprep.subr.bf16.mxu0 0
      %743 = vmatpush2.bf16.msra.mxu0 0
      %744 = vmatprep.subr.bf16.mxu0 0
      %745 = vmatpush2.bf16.msra.mxu0 0
      %746 = vmatprep.subr.bf16.mxu0 0
      %747 = vmatpush2.bf16.msra.mxu0 0
      %748 = vmatprep.subr.bf16.mxu0 0
      %749 = vmatpush2.bf16.msra.mxu0 0
      %750 = vmatprep.subr.bf16.mxu0 0
      %751 = vmatpush2.bf16.msra.mxu0 0
      %752 = vmatprep.subr.bf16.mxu0 0
      %753 = vmatpush2.bf16.msra.mxu0 0
      %754 = vmatprep.subr.bf16.mxu0 0
      %755 = vmatpush2.bf16.msra.mxu0 0
      %756 = vmatprep.subr.bf16.mxu0 0
      %757 = vmatpush2.bf16.msra.mxu0 0
      %758 = vmatprep.mubr.bf16.mxu0 0
      %759 = vmatmul.mubr.bf16.gmra.mxu0 %v662
      %v760 = vpop.f32.mrf.mxu0
      %v761 = vadd.f32 %v568, %v760
      %v762 = vpop.f32.mrf.mxu0
      %v763 = vpop.f32.mrf.mxu0
      %v764 = vadd.f32 %v571, %v763
      %v765 = vpop.f32.mrf.mxu0
      %766 = vmatprep.mubr.bf16.mxu0 0
      %767 = vmatmul.mubr.bf16.gmra.mxu0 %v663
      %v768 = vpop.f32.mrf.mxu0
      %v769 = vadd.f32 %v576, %v768
      %v770 = vpop.f32.mrf.mxu0
      %v771 = vpop.f32.mrf.mxu0
      %v772 = vadd.f32 %v579, %v771
      %v773 = vpop.f32.mrf.mxu0
      %774 = vmatprep.mubr.bf16.mxu0 0
      %775 = vmatmul.mubr.bf16.gmra.mxu0 %v664
      %v776 = vpop.f32.mrf.mxu0
      %v777 = vadd.f32 %v584, %v776
      %v778 = vpop.f32.mrf.mxu0
      %v779 = vpop.f32.mrf.mxu0
      %v780 = vadd.f32 %v587, %v779
      %v781 = vpop.f32.mrf.mxu0
      %782 = vmatprep.mubr.bf16.mxu0 0
      %783 = vmatmul.mubr.bf16.gmra.mxu0 %v665
      %v784 = vpop.f32.mrf.mxu0
      %v785 = vadd.f32 %v592, %v784
      %v786 = vpop.f32.mrf.mxu0
      %v787 = vpop.f32.mrf.mxu0
      %v788 = vadd.f32 %v595, %v787
      %v789 = vpop.f32.mrf.mxu0
      %790 = vmatprep.mubr.bf16.mxu0 0
      %791 = vmatmul.mubr.bf16.gmra.mxu0 %v666
      %v792 = vpop.f32.mrf.mxu0
      %v793 = vadd.f32 %v600, %v792
      %v794 = vpop.f32.mrf.mxu0
      %v795 = vpop.f32.mrf.mxu0
      %v796 = vadd.f32 %v603, %v795
      %v797 = vpop.f32.mrf.mxu0
      %798 = vmatprep.mubr.bf16.mxu0 0
      %799 = vmatmul.mubr.bf16.gmra.mxu0 %v667
      %v800 = vpop.f32.mrf.mxu0
      %v801 = vadd.f32 %v608, %v800
      %v802 = vpop.f32.mrf.mxu0
      %v803 = vpop.f32.mrf.mxu0
      %v804 = vadd.f32 %v611, %v803
      %v805 = vpop.f32.mrf.mxu0
      %806 = vmatprep.mubr.bf16.mxu0 0
      %807 = vmatmul.mubr.bf16.gmra.mxu0 %v668
      %v808 = vpop.f32.mrf.mxu0
      %v809 = vadd.f32 %v616, %v808
      %v810 = vpop.f32.mrf.mxu0
      %v811 = vpop.f32.mrf.mxu0
      %v812 = vadd.f32 %v619, %v811
      %v813 = vpop.f32.mrf.mxu0
      %814 = vmatprep.mubr.bf16.mxu0 0
      %815 = vmatmul.mubr.bf16.gmra.mxu0 %v669
      %v816 = vpop.f32.mrf.mxu0
      %v817 = vadd.f32 %v624, %v816
      %v818 = vpop.f32.mrf.mxu0
      %v819 = vpop.f32.mrf.mxu0
      %v820 = vadd.f32 %v627, %v819
      %v821 = vpop.f32.mrf.mxu0
      %822 = vdwg.mxu0
      %v823 = vld [vmem:[%s200] sm:$0xe]
      %v824 = vld [vmem:[%s200 + $0xc] sm:$0xe]
      %v825 = vld [vmem:[%s200 + $0x18] sm:$0xe]
      %v826 = vld [vmem:[%s200 + $0x24] sm:$0xe]
      %v827 = vld [vmem:[%s200 + $0x30] sm:$0xe]
      %v828 = vld [vmem:[%s200 + $0x3c] sm:$0xe]
      %v829 = vld [vmem:[%s200 + $0x48] sm:$0xe]
      %v830 = vld [vmem:[%s200 + $0x54] sm:$0xe]
      %vm847 = vcmask 1042432
      %vm848 = vcmask 1046532
      %vm849 = vmor %vm847, %vm848
      %v850 = vrot.slane %v823, 5
      %v851 = vrot.slane %v850, 4
      %v852 = vrot.slane %v202, 5
      %v853 = vsel %vm849, %v851, %v852
      %v854 = vrot.slane %v852, 4
      %v855 = vrot.slane %v233, 5
      %v856 = vsel %vm849, %v854, %v855
      %v857 = vrot.slane %v824, 5
      %v858 = vrot.slane %v857, 4
      %v859 = vrot.slane %v204, 5
      %v860 = vsel %vm849, %v858, %v859
      %v861 = vrot.slane %v859, 4
      %v862 = vrot.slane %v234, 5
      %v863 = vsel %vm849, %v861, %v862
      %v864 = vrot.slane %v825, 5
      %v865 = vrot.slane %v864, 4
      %v866 = vrot.slane %v206, 5
      %v867 = vsel %vm849, %v865, %v866
      %v868 = vrot.slane %v866, 4
      %v869 = vrot.slane %v235, 5
      %v870 = vsel %vm849, %v868, %v869
      %v871 = vrot.slane %v826, 5
      %v872 = vrot.slane %v871, 4
      %v873 = vrot.slane %v208, 5
      %v874 = vsel %vm849, %v872, %v873
      %v875 = vrot.slane %v873, 4
      %v876 = vrot.slane %v236, 5
      %v877 = vsel %vm849, %v875, %v876
      %v878 = vrot.slane %v827, 5
      %v879 = vrot.slane %v878, 4
      %v880 = vrot.slane %v210, 5
      %v881 = vsel %vm849, %v879, %v880
      %v882 = vrot.slane %v880, 4
      %v883 = vrot.slane %v237, 5
      %v884 = vsel %vm849, %v882, %v883
      %v885 = vrot.slane %v828, 5
      %v886 = vrot.slane %v885, 4
      %v887 = vrot.slane %v212, 5
      %v888 = vsel %vm849, %v886, %v887
      %v889 = vrot.slane %v887, 4
      %v890 = vrot.slane %v238, 5
      %v891 = vsel %vm849, %v889, %v890
      %v892 = vrot.slane %v829, 5
      %v893 = vrot.slane %v892, 4
      %v894 = vrot.slane %v214, 5
      %v895 = vsel %vm849, %v893, %v894
      %v896 = vrot.slane %v894, 4
      %v897 = vrot.slane %v239, 5
      %v898 = vsel %vm849, %v896, %v897
      %v899 = vrot.slane %v830, 5
      %v900 = vrot.slane %v899, 4
      %v901 = vrot.slane %v216, 5
      %v902 = vsel %vm849, %v900, %v901
      %v903 = vrot.slane %v901, 4
      %v904 = vrot.slane %v240, 5
      %v905 = vsel %vm849, %v903, %v904
      %s906 = scalar_lea.vmem %s1, 128
      %v907 = vld [vmem:[%s906] sm:$0xf]
      %v908 = vld [vmem:[%s906 + $0x4] sm:$0xf]
      %v909 = vld [vmem:[%s906 + $0x8] sm:$0xf]
      %v910 = vld [vmem:[%s906 + $0xc] sm:$0xf]
      %v911 = vld [vmem:[%s906 + $0x10] sm:$0xf]
      %v912 = vld [vmem:[%s906 + $0x14] sm:$0xf]
      %v913 = vld [vmem:[%s906 + $0x18] sm:$0xf]
      %v914 = vld [vmem:[%s906 + $0x1c] sm:$0xf]
      %v915 = vld [vmem:[%s906 + $0x20] sm:$0xf]
      %v916 = vld [vmem:[%s906 + $0x24] sm:$0xf]
      %v917 = vld [vmem:[%s906 + $0x28] sm:$0xf]
      %v918 = vld [vmem:[%s906 + $0x2c] sm:$0xf]
      %v919 = vld [vmem:[%s906 + $0x30] sm:$0xf]
      %v920 = vld [vmem:[%s906 + $0x34] sm:$0xf]
      %v921 = vld [vmem:[%s906 + $0x38] sm:$0xf]
      %v922 = vld [vmem:[%s906 + $0x3c] sm:$0xf]
      %v923 = vunpack.c.l.b16 %v853
      %v924 = vunpack.c.l.b16 %v856
      %v925 = vunpack.c.l.b16 %v860
      %v926 = vunpack.c.l.b16 %v863
      %v927 = vunpack.c.l.b16 %v867
      %v928 = vunpack.c.l.b16 %v870
      %v929 = vunpack.c.l.b16 %v874
      %v930 = vunpack.c.l.b16 %v877
      %v931 = vunpack.c.l.b16 %v881
      %v932 = vunpack.c.l.b16 %v884
      %v933 = vunpack.c.l.b16 %v888
      %v934 = vunpack.c.l.b16 %v891
      %v935 = vunpack.c.l.b16 %v895
      %v936 = vunpack.c.l.b16 %v898
      %v937 = vunpack.c.l.b16 %v902
      %v938 = vunpack.c.l.b16 %v905
      %v939 = vpack.c.b16 %v924, %v923
      %v940 = vpack.c.b16 %v926, %v925
      %v941 = vpack.c.b16 %v928, %v927
      %v942 = vpack.c.b16 %v930, %v929
      %v943 = vpack.c.b16 %v932, %v931
      %v944 = vpack.c.b16 %v934, %v933
      %v945 = vpack.c.b16 %v936, %v935
      %v946 = vpack.c.b16 %v938, %v937
      %v971 = vunpack.c.l.b16 %v907
      %v972 = vunpack.c.l.b16 %v908
      %v973 = vunpack.c.l.b16 %v909
      %v974 = vunpack.c.l.b16 %v910
      %v975 = vunpack.c.l.b16 %v911
      %v976 = vunpack.c.l.b16 %v912
      %v977 = vunpack.c.l.b16 %v913
      %v978 = vunpack.c.l.b16 %v914
      %v979 = vunpack.c.l.b16 %v915
      %v980 = vunpack.c.l.b16 %v916
      %v981 = vunpack.c.l.b16 %v917
      %v982 = vunpack.c.l.b16 %v918
      %v983 = vunpack.c.l.b16 %v919
      %v984 = vunpack.c.l.b16 %v920
      %v985 = vunpack.c.l.b16 %v921
      %v986 = vunpack.c.l.b16 %v922
      %v987 = vpack.c.b16 %v972, %v971
      %v988 = vpack.c.b16 %v974, %v973
      %v989 = vpack.c.b16 %v976, %v975
      %v990 = vpack.c.b16 %v978, %v977
      %v991 = vpack.c.b16 %v980, %v979
      %v992 = vpack.c.b16 %v982, %v981
      %v993 = vpack.c.b16 %v984, %v983
      %v994 = vpack.c.b16 %v986, %v985
      %1003 = vmatprep.subr.bf16.mxu0 0
      %1004 = vmatpush1.bf16.msra.mxu0 %v994
      %1005 = vmatprep.subr.bf16.mxu0 0
      %1006 = vmatpush1.bf16.msra.mxu0 %v993
      %1007 = vmatprep.subr.bf16.mxu0 0
      %1008 = vmatpush1.bf16.msra.mxu0 %v992
      %1009 = vmatprep.subr.bf16.mxu0 0
      %1010 = vmatpush1.bf16.msra.mxu0 %v991
      %1011 = vmatprep.subr.bf16.mxu0 0
      %1012 = vmatpush1.bf16.msra.mxu0 %v990
      %1013 = vmatprep.subr.bf16.mxu0 0
      %1014 = vmatpush1.bf16.msra.mxu0 %v989
      %1015 = vmatprep.subr.bf16.mxu0 0
      %1016 = vmatpush1.bf16.msra.mxu0 %v988
      %1017 = vmatprep.subr.bf16.mxu0 0
      %1018 = vmatpush1.bf16.msra.mxu0 %v987
      %1019 = vmatprep.subr.bf16.mxu0 0
      %1020 = vmatpush2.bf16.msra.mxu0 0
      %1021 = vmatprep.subr.bf16.mxu0 0
      %1022 = vmatpush2.bf16.msra.mxu0 0
      %1023 = vmatprep.subr.bf16.mxu0 0
      %1024 = vmatpush2.bf16.msra.mxu0 0
      %1025 = vmatprep.subr.bf16.mxu0 0
      %1026 = vmatpush2.bf16.msra.mxu0 0
      %1027 = vmatprep.subr.bf16.mxu0 0
      %1028 = vmatpush2.bf16.msra.mxu0 0
      %1029 = vmatprep.subr.bf16.mxu0 0
      %1030 = vmatpush2.bf16.msra.mxu0 0
      %1031 = vmatprep.subr.bf16.mxu0 0
      %1032 = vmatpush2.bf16.msra.mxu0 0
      %1033 = vmatprep.subr.bf16.mxu0 0
      %1034 = vmatpush2.bf16.msra.mxu0 0
      %1035 = vmatprep.mubr.bf16.mxu0 0
      %1036 = vmatmul.mubr.bf16.gmra.mxu0 %v939
      %v1037 = vpop.f32.mrf.mxu0
      %v1038 = vadd.f32 0.0, %v1037
      %v1039 = vpop.f32.mrf.mxu0
      %v1040 = vpop.f32.mrf.mxu0
      %v1041 = vadd.f32 0.0, %v1040
      %v1042 = vpop.f32.mrf.mxu0
      %1043 = vmatprep.mubr.bf16.mxu0 0
      %1044 = vmatmul.mubr.bf16.gmra.mxu0 %v940
      %v1045 = vpop.f32.mrf.mxu0
      %v1046 = vadd.f32 0.0, %v1045
      %v1047 = vpop.f32.mrf.mxu0
      %v1048 = vpop.f32.mrf.mxu0
      %v1049 = vadd.f32 0.0, %v1048
      %v1050 = vpop.f32.mrf.mxu0
      %1051 = vmatprep.mubr.bf16.mxu0 0
      %1052 = vmatmul.mubr.bf16.gmra.mxu0 %v941
      %v1053 = vpop.f32.mrf.mxu0
      %v1054 = vadd.f32 0.0, %v1053
      %v1055 = vpop.f32.mrf.mxu0
      %v1056 = vpop.f32.mrf.mxu0
      %v1057 = vadd.f32 0.0, %v1056
      %v1058 = vpop.f32.mrf.mxu0
      %1059 = vmatprep.mubr.bf16.mxu0 0
      %1060 = vmatmul.mubr.bf16.gmra.mxu0 %v942
      %v1061 = vpop.f32.mrf.mxu0
      %v1062 = vadd.f32 0.0, %v1061
      %v1063 = vpop.f32.mrf.mxu0
      %v1064 = vpop.f32.mrf.mxu0
      %v1065 = vadd.f32 0.0, %v1064
      %v1066 = vpop.f32.mrf.mxu0
      %1067 = vmatprep.mubr.bf16.mxu0 0
      %1068 = vmatmul.mubr.bf16.gmra.mxu0 %v943
      %v1069 = vpop.f32.mrf.mxu0
      %v1070 = vadd.f32 0.0, %v1069
      %v1071 = vpop.f32.mrf.mxu0
      %v1072 = vpop.f32.mrf.mxu0
      %v1073 = vadd.f32 0.0, %v1072
      %v1074 = vpop.f32.mrf.mxu0
      %1075 = vmatprep.mubr.bf16.mxu0 0
      %1076 = vmatmul.mubr.bf16.gmra.mxu0 %v944
      %v1077 = vpop.f32.mrf.mxu0
      %v1078 = vadd.f32 0.0, %v1077
      %v1079 = vpop.f32.mrf.mxu0
      %v1080 = vpop.f32.mrf.mxu0
      %v1081 = vadd.f32 0.0, %v1080
      %v1082 = vpop.f32.mrf.mxu0
      %1083 = vmatprep.mubr.bf16.mxu0 0
      %1084 = vmatmul.mubr.bf16.gmra.mxu0 %v945
      %v1085 = vpop.f32.mrf.mxu0
      %v1086 = vadd.f32 0.0, %v1085
      %v1087 = vpop.f32.mrf.mxu0
      %v1088 = vpop.f32.mrf.mxu0
      %v1089 = vadd.f32 0.0, %v1088
      %v1090 = vpop.f32.mrf.mxu0
      %1091 = vmatprep.mubr.bf16.mxu0 0
      %1092 = vmatmul.mubr.bf16.gmra.mxu0 %v946
      %v1093 = vpop.f32.mrf.mxu0
      %v1094 = vadd.f32 0.0, %v1093
      %v1095 = vpop.f32.mrf.mxu0
      %v1096 = vpop.f32.mrf.mxu0
      %v1097 = vadd.f32 0.0, %v1096
      %v1098 = vpop.f32.mrf.mxu0
      %1099 = vdwg.mxu0
      %v1100 = vadd.f32 %v761, %v1038
      %v1101 = vadd.f32 %v764, %v1041
      %v1102 = vadd.f32 %v769, %v1046
      %v1103 = vadd.f32 %v772, %v1049
      %v1104 = vadd.f32 %v777, %v1054
      %v1105 = vadd.f32 %v780, %v1057
      %v1106 = vadd.f32 %v785, %v1062
      %v1107 = vadd.f32 %v788, %v1065
      %v1108 = vadd.f32 %v793, %v1070
      %v1109 = vadd.f32 %v796, %v1073
      %v1110 = vadd.f32 %v801, %v1078
      %v1111 = vadd.f32 %v804, %v1081
      %v1112 = vadd.f32 %v809, %v1086
      %v1113 = vadd.f32 %v812, %v1089
      %v1114 = vadd.f32 %v817, %v1094
      %v1115 = vadd.f32 %v820, %v1097
      %s1116 = sadd.s32 %s197, 1
      %s1117 = smul.u32 %s1116, 3
      %s1118 = smul.addr %s1117, 4
      %s1119 = scalar_lea.vmem %s184, %s1118
      %v1120 = vld [vmem:[%s1119] sm:$0xf]
      %v1121 = vld [vmem:[%s1119 + $0x4] sm:$0xf]
      %v1122 = vld [vmem:[%s1119 + $0xc] sm:$0xf]
      %v1123 = vld [vmem:[%s1119 + $0x10] sm:$0xf]
      %v1124 = vld [vmem:[%s1119 + $0x18] sm:$0xf]
      %v1125 = vld [vmem:[%s1119 + $0x1c] sm:$0xf]
      %v1126 = vld [vmem:[%s1119 + $0x24] sm:$0xf]
      %v1127 = vld [vmem:[%s1119 + $0x28] sm:$0xf]
      %v1128 = vld [vmem:[%s1119 + $0x30] sm:$0xf]
      %v1129 = vld [vmem:[%s1119 + $0x34] sm:$0xf]
      %v1130 = vld [vmem:[%s1119 + $0x3c] sm:$0xf]
      %v1131 = vld [vmem:[%s1119 + $0x40] sm:$0xf]
      %v1132 = vld [vmem:[%s1119 + $0x48] sm:$0xf]
      %v1133 = vld [vmem:[%s1119 + $0x4c] sm:$0xf]
      %v1134 = vld [vmem:[%s1119 + $0x54] sm:$0xf]
      %v1135 = vld [vmem:[%s1119 + $0x58] sm:$0xf]
      %s1136 = scalar_lea.vmem %s1, 192
      %v1137 = vld [vmem:[%s1136] sm:$0xf]
      %v1138 = vld [vmem:[%s1136 + $0x4] sm:$0xf]
      %v1139 = vld [vmem:[%s1136 + $0x8] sm:$0xf]
      %v1140 = vld [vmem:[%s1136 + $0xc] sm:$0xf]
      %v1141 = vld [vmem:[%s1136 + $0x10] sm:$0xf]
      %v1142 = vld [vmem:[%s1136 + $0x14] sm:$0xf]
      %v1143 = vld [vmem:[%s1136 + $0x18] sm:$0xf]
      %v1144 = vld [vmem:[%s1136 + $0x1c] sm:$0xf]
      %v1145 = vld [vmem:[%s1136 + $0x20] sm:$0xf]
      %v1146 = vld [vmem:[%s1136 + $0x24] sm:$0xf]
      %v1147 = vld [vmem:[%s1136 + $0x28] sm:$0xf]
      %v1148 = vld [vmem:[%s1136 + $0x2c] sm:$0xf]
      %v1149 = vld [vmem:[%s1136 + $0x30] sm:$0xf]
      %v1150 = vld [vmem:[%s1136 + $0x34] sm:$0xf]
      %v1151 = vld [vmem:[%s1136 + $0x38] sm:$0xf]
      %v1152 = vld [vmem:[%s1136 + $0x3c] sm:$0xf]
      %v1169 = vunpack.c.l.b16 %v1120
      %v1170 = vunpack.c.l.b16 %v1121
      %v1171 = vunpack.c.l.b16 %v1122
      %v1172 = vunpack.c.l.b16 %v1123
      %v1173 = vunpack.c.l.b16 %v1124
      %v1174 = vunpack.c.l.b16 %v1125
      %v1175 = vunpack.c.l.b16 %v1126
      %v1176 = vunpack.c.l.b16 %v1127
      %v1177 = vunpack.c.l.b16 %v1128
      %v1178 = vunpack.c.l.b16 %v1129
      %v1179 = vunpack.c.l.b16 %v1130
      %v1180 = vunpack.c.l.b16 %v1131
      %v1181 = vunpack.c.l.b16 %v1132
      %v1182 = vunpack.c.l.b16 %v1133
      %v1183 = vunpack.c.l.b16 %v1134
      %v1184 = vunpack.c.l.b16 %v1135
      %v1185 = vpack.c.b16 %v1170, %v1169
      %v1186 = vpack.c.b16 %v1172, %v1171
      %v1187 = vpack.c.b16 %v1174, %v1173
      %v1188 = vpack.c.b16 %v1176, %v1175
      %v1189 = vpack.c.b16 %v1178, %v1177
      %v1190 = vpack.c.b16 %v1180, %v1179
      %v1191 = vpack.c.b16 %v1182, %v1181
      %v1192 = vpack.c.b16 %v1184, %v1183
      %v1217 = vunpack.c.l.b16 %v1137
      %v1218 = vunpack.c.l.b16 %v1138
      %v1219 = vunpack.c.l.b16 %v1139
      %v1220 = vunpack.c.l.b16 %v1140
      %v1221 = vunpack.c.l.b16 %v1141
      %v1222 = vunpack.c.l.b16 %v1142
      %v1223 = vunpack.c.l.b16 %v1143
      %v1224 = vunpack.c.l.b16 %v1144
      %v1225 = vunpack.c.l.b16 %v1145
      %v1226 = vunpack.c.l.b16 %v1146
      %v1227 = vunpack.c.l.b16 %v1147
      %v1228 = vunpack.c.l.b16 %v1148
      %v1229 = vunpack.c.l.b16 %v1149
      %v1230 = vunpack.c.l.b16 %v1150
      %v1231 = vunpack.c.l.b16 %v1151
      %v1232 = vunpack.c.l.b16 %v1152
      %v1233 = vpack.c.b16 %v1218, %v1217
      %v1234 = vpack.c.b16 %v1220, %v1219
      %v1235 = vpack.c.b16 %v1222, %v1221
      %v1236 = vpack.c.b16 %v1224, %v1223
      %v1237 = vpack.c.b16 %v1226, %v1225
      %v1238 = vpack.c.b16 %v1228, %v1227
      %v1239 = vpack.c.b16 %v1230, %v1229
      %v1240 = vpack.c.b16 %v1232, %v1231
      %1249 = vmatprep.subr.bf16.mxu0 0
      %1250 = vmatpush1.bf16.msra.mxu0 %v1240
      %1251 = vmatprep.subr.bf16.mxu0 0
      %1252 = vmatpush1.bf16.msra.mxu0 %v1239
      %1253 = vmatprep.subr.bf16.mxu0 0
      %1254 = vmatpush1.bf16.msra.mxu0 %v1238
      %1255 = vmatprep.subr.bf16.mxu0 0
      %1256 = vmatpush1.bf16.msra.mxu0 %v1237
      %1257 = vmatprep.subr.bf16.mxu0 0
      %1258 = vmatpush1.bf16.msra.mxu0 %v1236
      %1259 = vmatprep.subr.bf16.mxu0 0
      %1260 = vmatpush1.bf16.msra.mxu0 %v1235
      %1261 = vmatprep.subr.bf16.mxu0 0
      %1262 = vmatpush1.bf16.msra.mxu0 %v1234
      %1263 = vmatprep.subr.bf16.mxu0 0
      %1264 = vmatpush1.bf16.msra.mxu0 %v1233
      %1265 = vmatprep.subr.bf16.mxu0 0
      %1266 = vmatpush2.bf16.msra.mxu0 0
      %1267 = vmatprep.subr.bf16.mxu0 0
      %1268 = vmatpush2.bf16.msra.mxu0 0
      %1269 = vmatprep.subr.bf16.mxu0 0
      %1270 = vmatpush2.bf16.msra.mxu0 0
      %1271 = vmatprep.subr.bf16.mxu0 0
      %1272 = vmatpush2.bf16.msra.mxu0 0
      %1273 = vmatprep.subr.bf16.mxu0 0
      %1274 = vmatpush2.bf16.msra.mxu0 0
      %1275 = vmatprep.subr.bf16.mxu0 0
      %1276 = vmatpush2.bf16.msra.mxu0 0
      %1277 = vmatprep.subr.bf16.mxu0 0
      %1278 = vmatpush2.bf16.msra.mxu0 0
      %1279 = vmatprep.subr.bf16.mxu0 0
      %1280 = vmatpush2.bf16.msra.mxu0 0
      %1281 = vmatprep.mubr.bf16.mxu0 0
      %1282 = vmatmul.mubr.bf16.gmra.mxu0 %v1185
      %v1283 = vpop.f32.mrf.mxu0
      %v1284 = vadd.f32 0.0, %v1283
      %v1285 = vpop.f32.mrf.mxu0
      %v1286 = vpop.f32.mrf.mxu0
      %v1287 = vadd.f32 0.0, %v1286
      %v1288 = vpop.f32.mrf.mxu0
      %1289 = vmatprep.mubr.bf16.mxu0 0
      %1290 = vmatmul.mubr.bf16.gmra.mxu0 %v1186
      %v1291 = vpop.f32.mrf.mxu0
      %v1292 = vadd.f32 0.0, %v1291
      %v1293 = vpop.f32.mrf.mxu0
      %v1294 = vpop.f32.mrf.mxu0
      %v1295 = vadd.f32 0.0, %v1294
      %v1296 = vpop.f32.mrf.mxu0
      %1297 = vmatprep.mubr.bf16.mxu0 0
      %1298 = vmatmul.mubr.bf16.gmra.mxu0 %v1187
      %v1299 = vpop.f32.mrf.mxu0
      %v1300 = vadd.f32 0.0, %v1299
      %v1301 = vpop.f32.mrf.mxu0
      %v1302 = vpop.f32.mrf.mxu0
      %v1303 = vadd.f32 0.0, %v1302
      %v1304 = vpop.f32.mrf.mxu0
      %1305 = vmatprep.mubr.bf16.mxu0 0
      %1306 = vmatmul.mubr.bf16.gmra.mxu0 %v1188
      %v1307 = vpop.f32.mrf.mxu0
      %v1308 = vadd.f32 0.0, %v1307
      %v1309 = vpop.f32.mrf.mxu0
      %v1310 = vpop.f32.mrf.mxu0
      %v1311 = vadd.f32 0.0, %v1310
      %v1312 = vpop.f32.mrf.mxu0
      %1313 = vmatprep.mubr.bf16.mxu0 0
      %1314 = vmatmul.mubr.bf16.gmra.mxu0 %v1189
      %v1315 = vpop.f32.mrf.mxu0
      %v1316 = vadd.f32 0.0, %v1315
      %v1317 = vpop.f32.mrf.mxu0
      %v1318 = vpop.f32.mrf.mxu0
      %v1319 = vadd.f32 0.0, %v1318
      %v1320 = vpop.f32.mrf.mxu0
      %1321 = vmatprep.mubr.bf16.mxu0 0
      %1322 = vmatmul.mubr.bf16.gmra.mxu0 %v1190
      %v1323 = vpop.f32.mrf.mxu0
      %v1324 = vadd.f32 0.0, %v1323
      %v1325 = vpop.f32.mrf.mxu0
      %v1326 = vpop.f32.mrf.mxu0
      %v1327 = vadd.f32 0.0, %v1326
      %v1328 = vpop.f32.mrf.mxu0
      %1329 = vmatprep.mubr.bf16.mxu0 0
      %1330 = vmatmul.mubr.bf16.gmra.mxu0 %v1191
      %v1331 = vpop.f32.mrf.mxu0
      %v1332 = vadd.f32 0.0, %v1331
      %v1333 = vpop.f32.mrf.mxu0
      %v1334 = vpop.f32.mrf.mxu0
      %v1335 = vadd.f32 0.0, %v1334
      %v1336 = vpop.f32.mrf.mxu0
      %1337 = vmatprep.mubr.bf16.mxu0 0
      %1338 = vmatmul.mubr.bf16.gmra.mxu0 %v1192
      %v1339 = vpop.f32.mrf.mxu0
      %v1340 = vadd.f32 0.0, %v1339
      %v1341 = vpop.f32.mrf.mxu0
      %v1342 = vpop.f32.mrf.mxu0
      %v1343 = vadd.f32 0.0, %v1342
      %v1344 = vpop.f32.mrf.mxu0
      %1345 = vdwg.mxu0
      %v1346 = vadd.f32 %v1100, %v1284
      %v1347 = vadd.f32 %v1101, %v1287
      %v1348 = vadd.f32 %v1102, %v1292
      %v1349 = vadd.f32 %v1103, %v1295
      %v1350 = vadd.f32 %v1104, %v1300
      %v1351 = vadd.f32 %v1105, %v1303
      %v1352 = vadd.f32 %v1106, %v1308
      %v1353 = vadd.f32 %v1107, %v1311
      %v1354 = vadd.f32 %v1108, %v1316
      %v1355 = vadd.f32 %v1109, %v1319
      %v1356 = vadd.f32 %v1110, %v1324
      %v1357 = vadd.f32 %v1111, %v1327
      %v1358 = vadd.f32 %v1112, %v1332
      %v1359 = vadd.f32 %v1113, %v1335
      %v1360 = vadd.f32 %v1114, %v1340
      %v1361 = vadd.f32 %v1115, %v1343
      %v1362 = vld [vmem:[%s1119] sm:$0xf]
      %v1363 = vld [vmem:[%s1119 + $0x4] sm:$0xf]
      %v1364 = vld [vmem:[%s1119 + $0x8] sm:$0x1]
      %v1365 = vld [vmem:[%s1119 + $0xc] sm:$0xf]
      %v1366 = vld [vmem:[%s1119 + $0x10] sm:$0xf]
      %v1367 = vld [vmem:[%s1119 + $0x14] sm:$0x1]
      %v1368 = vld [vmem:[%s1119 + $0x18] sm:$0xf]
      %v1369 = vld [vmem:[%s1119 + $0x1c] sm:$0xf]
      %v1370 = vld [vmem:[%s1119 + $0x20] sm:$0x1]
      %v1371 = vld [vmem:[%s1119 + $0x24] sm:$0xf]
      %v1372 = vld [vmem:[%s1119 + $0x28] sm:$0xf]
      %v1373 = vld [vmem:[%s1119 + $0x2c] sm:$0x1]
      %v1374 = vld [vmem:[%s1119 + $0x30] sm:$0xf]
      %v1375 = vld [vmem:[%s1119 + $0x34] sm:$0xf]
      %v1376 = vld [vmem:[%s1119 + $0x38] sm:$0x1]
      %v1377 = vld [vmem:[%s1119 + $0x3c] sm:$0xf]
      %v1378 = vld [vmem:[%s1119 + $0x40] sm:$0xf]
      %v1379 = vld [vmem:[%s1119 + $0x44] sm:$0x1]
      %v1380 = vld [vmem:[%s1119 + $0x48] sm:$0xf]
      %v1381 = vld [vmem:[%s1119 + $0x4c] sm:$0xf]
      %v1382 = vld [vmem:[%s1119 + $0x50] sm:$0x1]
      %v1383 = vld [vmem:[%s1119 + $0x54] sm:$0xf]
      %v1384 = vld [vmem:[%s1119 + $0x58] sm:$0xf]
      %v1385 = vld [vmem:[%s1119 + $0x5c] sm:$0x1]
      %v1387 = vshrl.u32 %v1362, 16
      %v1389 = vrot.slane %v1387, 4
      %v1390 = vshll.u32 %v1362, 16
      %v1392 = vrot.slane %v1390, 5
      %v1393 = vor.u32 %v1389, %v1392
      %v1394 = vrot.slane %v1393, 4
      %v1396 = vshll.u32 %v1363, 16
      %v1398 = vrot.slane %v1396, 5
      %v1399 = vsel %vm243, %v1394, %v1398
      %v1400 = vshrl.u32 %v1363, 16
      %v1402 = vrot.slane %v1400, 4
      %v1403 = vor.u32 %v1402, %v1398
      %v1404 = vrot.slane %v1403, 4
      %v1406 = vshll.u32 %v1364, 16
      %v1408 = vrot.slane %v1406, 5
      %v1409 = vsel %vm243, %v1404, %v1408
      %v1411 = vshrl.u32 %v1365, 16
      %v1413 = vrot.slane %v1411, 4
      %v1414 = vshll.u32 %v1365, 16
      %v1416 = vrot.slane %v1414, 5
      %v1417 = vor.u32 %v1413, %v1416
      %v1418 = vrot.slane %v1417, 4
      %v1420 = vshll.u32 %v1366, 16
      %v1422 = vrot.slane %v1420, 5
      %v1423 = vsel %vm243, %v1418, %v1422
      %v1424 = vshrl.u32 %v1366, 16
      %v1426 = vrot.slane %v1424, 4
      %v1427 = vor.u32 %v1426, %v1422
      %v1428 = vrot.slane %v1427, 4
      %v1430 = vshll.u32 %v1367, 16
      %v1432 = vrot.slane %v1430, 5
      %v1433 = vsel %vm243, %v1428, %v1432
      %v1435 = vshrl.u32 %v1368, 16
      %v1437 = vrot.slane %v1435, 4
      %v1438 = vshll.u32 %v1368, 16
      %v1440 = vrot.slane %v1438, 5
      %v1441 = vor.u32 %v1437, %v1440
      %v1442 = vrot.slane %v1441, 4
      %v1444 = vshll.u32 %v1369, 16
      %v1446 = vrot.slane %v1444, 5
      %v1447 = vsel %vm243, %v1442, %v1446
      %v1448 = vshrl.u32 %v1369, 16
      %v1450 = vrot.slane %v1448, 4
      %v1451 = vor.u32 %v1450, %v1446
      %v1452 = vrot.slane %v1451, 4
      %v1454 = vshll.u32 %v1370, 16
      %v1456 = vrot.slane %v1454, 5
      %v1457 = vsel %vm243, %v1452, %v1456
      %v1459 = vshrl.u32 %v1371, 16
      %v1461 = vrot.slane %v1459, 4
      %v1462 = vshll.u32 %v1371, 16
      %v1464 = vrot.slane %v1462, 5
      %v1465 = vor.u32 %v1461, %v1464
      %v1466 = vrot.slane %v1465, 4
      %v1468 = vshll.u32 %v1372, 16
      %v1470 = vrot.slane %v1468, 5
      %v1471 = vsel %vm243, %v1466, %v1470
      %v1472 = vshrl.u32 %v1372, 16
      %v1474 = vrot.slane %v1472, 4
      %v1475 = vor.u32 %v1474, %v1470
      %v1476 = vrot.slane %v1475, 4
      %v1478 = vshll.u32 %v1373, 16
      %v1480 = vrot.slane %v1478, 5
      %v1481 = vsel %vm243, %v1476, %v1480
      %v1483 = vshrl.u32 %v1374, 16
      %v1485 = vrot.slane %v1483, 4
      %v1486 = vshll.u32 %v1374, 16
      %v1488 = vrot.slane %v1486, 5
      %v1489 = vor.u32 %v1485, %v1488
      %v1490 = vrot.slane %v1489, 4
      %v1492 = vshll.u32 %v1375, 16
      %v1494 = vrot.slane %v1492, 5
      %v1495 = vsel %vm243, %v1490, %v1494
      %v1496 = vshrl.u32 %v1375, 16
      %v1498 = vrot.slane %v1496, 4
      %v1499 = vor.u32 %v1498, %v1494
      %v1500 = vrot.slane %v1499, 4
      %v1502 = vshll.u32 %v1376, 16
      %v1504 = vrot.slane %v1502, 5
      %v1505 = vsel %vm243, %v1500, %v1504
      %v1507 = vshrl.u32 %v1377, 16
      %v1509 = vrot.slane %v1507, 4
      %v1510 = vshll.u32 %v1377, 16
      %v1512 = vrot.slane %v1510, 5
      %v1513 = vor.u32 %v1509, %v1512
      %v1514 = vrot.slane %v1513, 4
      %v1516 = vshll.u32 %v1378, 16
      %v1518 = vrot.slane %v1516, 5
      %v1519 = vsel %vm243, %v1514, %v1518
      %v1520 = vshrl.u32 %v1378, 16
      %v1522 = vrot.slane %v1520, 4
      %v1523 = vor.u32 %v1522, %v1518
      %v1524 = vrot.slane %v1523, 4
      %v1526 = vshll.u32 %v1379, 16
      %v1528 = vrot.slane %v1526, 5
      %v1529 = vsel %vm243, %v1524, %v1528
      %v1531 = vshrl.u32 %v1380, 16
      %v1533 = vrot.slane %v1531, 4
      %v1534 = vshll.u32 %v1380, 16
      %v1536 = vrot.slane %v1534, 5
      %v1537 = vor.u32 %v1533, %v1536
      %v1538 = vrot.slane %v1537, 4
      %v1540 = vshll.u32 %v1381, 16
      %v1542 = vrot.slane %v1540, 5
      %v1543 = vsel %vm243, %v1538, %v1542
      %v1544 = vshrl.u32 %v1381, 16
      %v1546 = vrot.slane %v1544, 4
      %v1547 = vor.u32 %v1546, %v1542
      %v1548 = vrot.slane %v1547, 4
      %v1550 = vshll.u32 %v1382, 16
      %v1552 = vrot.slane %v1550, 5
      %v1553 = vsel %vm243, %v1548, %v1552
      %v1555 = vshrl.u32 %v1383, 16
      %v1557 = vrot.slane %v1555, 4
      %v1558 = vshll.u32 %v1383, 16
      %v1560 = vrot.slane %v1558, 5
      %v1561 = vor.u32 %v1557, %v1560
      %v1562 = vrot.slane %v1561, 4
      %v1564 = vshll.u32 %v1384, 16
      %v1566 = vrot.slane %v1564, 5
      %v1567 = vsel %vm243, %v1562, %v1566
      %v1568 = vshrl.u32 %v1384, 16
      %v1570 = vrot.slane %v1568, 4
      %v1571 = vor.u32 %v1570, %v1566
      %v1572 = vrot.slane %v1571, 4
      %v1574 = vshll.u32 %v1385, 16
      %v1576 = vrot.slane %v1574, 5
      %v1577 = vsel %vm243, %v1572, %v1576
      %s1578 = scalar_lea.vmem %s1, 256
      %v1579 = vld [vmem:[%s1578] sm:$0xf]
      %v1580 = vld [vmem:[%s1578 + $0x4] sm:$0xf]
      %v1581 = vld [vmem:[%s1578 + $0x8] sm:$0xf]
      %v1582 = vld [vmem:[%s1578 + $0xc] sm:$0xf]
      %v1583 = vld [vmem:[%s1578 + $0x10] sm:$0xf]
      %v1584 = vld [vmem:[%s1578 + $0x14] sm:$0xf]
      %v1585 = vld [vmem:[%s1578 + $0x18] sm:$0xf]
      %v1586 = vld [vmem:[%s1578 + $0x1c] sm:$0xf]
      %v1587 = vld [vmem:[%s1578 + $0x20] sm:$0xf]
      %v1588 = vld [vmem:[%s1578 + $0x24] sm:$0xf]
      %v1589 = vld [vmem:[%s1578 + $0x28] sm:$0xf]
      %v1590 = vld [vmem:[%s1578 + $0x2c] sm:$0xf]
      %v1591 = vld [vmem:[%s1578 + $0x30] sm:$0xf]
      %v1592 = vld [vmem:[%s1578 + $0x34] sm:$0xf]
      %v1593 = vld [vmem:[%s1578 + $0x38] sm:$0xf]
      %v1594 = vld [vmem:[%s1578 + $0x3c] sm:$0xf]
      %v1595 = vunpack.c.l.b16 %v1399
      %v1596 = vunpack.c.l.b16 %v1409
      %v1597 = vunpack.c.l.b16 %v1423
      %v1598 = vunpack.c.l.b16 %v1433
      %v1599 = vunpack.c.l.b16 %v1447
      %v1600 = vunpack.c.l.b16 %v1457
      %v1601 = vunpack.c.l.b16 %v1471
      %v1602 = vunpack.c.l.b16 %v1481
      %v1603 = vunpack.c.l.b16 %v1495
      %v1604 = vunpack.c.l.b16 %v1505
      %v1605 = vunpack.c.l.b16 %v1519
      %v1606 = vunpack.c.l.b16 %v1529
      %v1607 = vunpack.c.l.b16 %v1543
      %v1608 = vunpack.c.l.b16 %v1553
      %v1609 = vunpack.c.l.b16 %v1567
      %v1610 = vunpack.c.l.b16 %v1577
      %v1611 = vpack.c.b16 %v1596, %v1595
      %v1612 = vpack.c.b16 %v1598, %v1597
      %v1613 = vpack.c.b16 %v1600, %v1599
      %v1614 = vpack.c.b16 %v1602, %v1601
      %v1615 = vpack.c.b16 %v1604, %v1603
      %v1616 = vpack.c.b16 %v1606, %v1605
      %v1617 = vpack.c.b16 %v1608, %v1607
      %v1618 = vpack.c.b16 %v1610, %v1609
      %v1643 = vunpack.c.l.b16 %v1579
      %v1644 = vunpack.c.l.b16 %v1580
      %v1645 = vunpack.c.l.b16 %v1581
      %v1646 = vunpack.c.l.b16 %v1582
      %v1647 = vunpack.c.l.b16 %v1583
      %v1648 = vunpack.c.l.b16 %v1584
      %v1649 = vunpack.c.l.b16 %v1585
      %v1650 = vunpack.c.l.b16 %v1586
      %v1651 = vunpack.c.l.b16 %v1587
      %v1652 = vunpack.c.l.b16 %v1588
      %v1653 = vunpack.c.l.b16 %v1589
      %v1654 = vunpack.c.l.b16 %v1590
      %v1655 = vunpack.c.l.b16 %v1591
      %v1656 = vunpack.c.l.b16 %v1592
      %v1657 = vunpack.c.l.b16 %v1593
      %v1658 = vunpack.c.l.b16 %v1594
      %v1659 = vpack.c.b16 %v1644, %v1643
      %v1660 = vpack.c.b16 %v1646, %v1645
      %v1661 = vpack.c.b16 %v1648, %v1647
      %v1662 = vpack.c.b16 %v1650, %v1649
      %v1663 = vpack.c.b16 %v1652, %v1651
      %v1664 = vpack.c.b16 %v1654, %v1653
      %v1665 = vpack.c.b16 %v1656, %v1655
      %v1666 = vpack.c.b16 %v1658, %v1657
      %1675 = vmatprep.subr.bf16.mxu0 0
      %1676 = vmatpush1.bf16.msra.mxu0 %v1666
      %1677 = vmatprep.subr.bf16.mxu0 0
      %1678 = vmatpush1.bf16.msra.mxu0 %v1665
      %1679 = vmatprep.subr.bf16.mxu0 0
      %1680 = vmatpush1.bf16.msra.mxu0 %v1664
      %1681 = vmatprep.subr.bf16.mxu0 0
      %1682 = vmatpush1.bf16.msra.mxu0 %v1663
      %1683 = vmatprep.subr.bf16.mxu0 0
      %1684 = vmatpush1.bf16.msra.mxu0 %v1662
      %1685 = vmatprep.subr.bf16.mxu0 0
      %1686 = vmatpush1.bf16.msra.mxu0 %v1661
      %1687 = vmatprep.subr.bf16.mxu0 0
      %1688 = vmatpush1.bf16.msra.mxu0 %v1660
      %1689 = vmatprep.subr.bf16.mxu0 0
      %1690 = vmatpush1.bf16.msra.mxu0 %v1659
      %1691 = vmatprep.subr.bf16.mxu0 0
      %1692 = vmatpush2.bf16.msra.mxu0 0
      %1693 = vmatprep.subr.bf16.mxu0 0
      %1694 = vmatpush2.bf16.msra.mxu0 0
      %1695 = vmatprep.subr.bf16.mxu0 0
      %1696 = vmatpush2.bf16.msra.mxu0 0
      %1697 = vmatprep.subr.bf16.mxu0 0
      %1698 = vmatpush2.bf16.msra.mxu0 0
      %1699 = vmatprep.subr.bf16.mxu0 0
      %1700 = vmatpush2.bf16.msra.mxu0 0
      %1701 = vmatprep.subr.bf16.mxu0 0
      %1702 = vmatpush2.bf16.msra.mxu0 0
      %1703 = vmatprep.subr.bf16.mxu0 0
      %1704 = vmatpush2.bf16.msra.mxu0 0
      %1705 = vmatprep.subr.bf16.mxu0 0
      %1706 = vmatpush2.bf16.msra.mxu0 0
      %1707 = vmatprep.mubr.bf16.mxu0 0
      %1708 = vmatmul.mubr.bf16.gmra.mxu0 %v1611
      %v1709 = vpop.f32.mrf.mxu0
      %v1710 = vadd.f32 0.0, %v1709
      %v1711 = vpop.f32.mrf.mxu0
      %v1712 = vpop.f32.mrf.mxu0
      %v1713 = vadd.f32 0.0, %v1712
      %v1714 = vpop.f32.mrf.mxu0
      %1715 = vmatprep.mubr.bf16.mxu0 0
      %1716 = vmatmul.mubr.bf16.gmra.mxu0 %v1612
      %v1717 = vpop.f32.mrf.mxu0
      %v1718 = vadd.f32 0.0, %v1717
      %v1719 = vpop.f32.mrf.mxu0
      %v1720 = vpop.f32.mrf.mxu0
      %v1721 = vadd.f32 0.0, %v1720
      %v1722 = vpop.f32.mrf.mxu0
      %1723 = vmatprep.mubr.bf16.mxu0 0
      %1724 = vmatmul.mubr.bf16.gmra.mxu0 %v1613
      %v1725 = vpop.f32.mrf.mxu0
      %v1726 = vadd.f32 0.0, %v1725
      %v1727 = vpop.f32.mrf.mxu0
      %v1728 = vpop.f32.mrf.mxu0
      %v1729 = vadd.f32 0.0, %v1728
      %v1730 = vpop.f32.mrf.mxu0
      %1731 = vmatprep.mubr.bf16.mxu0 0
      %1732 = vmatmul.mubr.bf16.gmra.mxu0 %v1614
      %v1733 = vpop.f32.mrf.mxu0
      %v1734 = vadd.f32 0.0, %v1733
      %v1735 = vpop.f32.mrf.mxu0
      %v1736 = vpop.f32.mrf.mxu0
      %v1737 = vadd.f32 0.0, %v1736
      %v1738 = vpop.f32.mrf.mxu0
      %1739 = vmatprep.mubr.bf16.mxu0 0
      %1740 = vmatmul.mubr.bf16.gmra.mxu0 %v1615
      %v1741 = vpop.f32.mrf.mxu0
      %v1742 = vadd.f32 0.0, %v1741
      %v1743 = vpop.f32.mrf.mxu0
      %v1744 = vpop.f32.mrf.mxu0
      %v1745 = vadd.f32 0.0, %v1744
      %v1746 = vpop.f32.mrf.mxu0
      %1747 = vmatprep.mubr.bf16.mxu0 0
      %1748 = vmatmul.mubr.bf16.gmra.mxu0 %v1616
      %v1749 = vpop.f32.mrf.mxu0
      %v1750 = vadd.f32 0.0, %v1749
      %v1751 = vpop.f32.mrf.mxu0
      %v1752 = vpop.f32.mrf.mxu0
      %v1753 = vadd.f32 0.0, %v1752
      %v1754 = vpop.f32.mrf.mxu0
      %1755 = vmatprep.mubr.bf16.mxu0 0
      %1756 = vmatmul.mubr.bf16.gmra.mxu0 %v1617
      %v1757 = vpop.f32.mrf.mxu0
      %v1758 = vadd.f32 0.0, %v1757
      %v1759 = vpop.f32.mrf.mxu0
      %v1760 = vpop.f32.mrf.mxu0
      %v1761 = vadd.f32 0.0, %v1760
      %v1762 = vpop.f32.mrf.mxu0
      %1763 = vmatprep.mubr.bf16.mxu0 0
      %1764 = vmatmul.mubr.bf16.gmra.mxu0 %v1618
      %v1765 = vpop.f32.mrf.mxu0
      %v1766 = vadd.f32 0.0, %v1765
      %v1767 = vpop.f32.mrf.mxu0
      %v1768 = vpop.f32.mrf.mxu0
      %v1769 = vadd.f32 0.0, %v1768
      %v1770 = vpop.f32.mrf.mxu0
      %1771 = vdwg.mxu0
      %v1772 = vadd.f32 %v1346, %v1710
      %v1773 = vadd.f32 %v1347, %v1713
      %v1774 = vadd.f32 %v1348, %v1718
      %v1775 = vadd.f32 %v1349, %v1721
      %v1776 = vadd.f32 %v1350, %v1726
      %v1777 = vadd.f32 %v1351, %v1729
      %v1778 = vadd.f32 %v1352, %v1734
      %v1779 = vadd.f32 %v1353, %v1737
      %v1780 = vadd.f32 %v1354, %v1742
      %v1781 = vadd.f32 %v1355, %v1745
      %v1782 = vadd.f32 %v1356, %v1750
      %v1783 = vadd.f32 %v1357, %v1753
      %v1784 = vadd.f32 %v1358, %v1758
      %v1785 = vadd.f32 %v1359, %v1761
      %v1786 = vadd.f32 %v1360, %v1766
      %v1787 = vadd.f32 %v1361, %v1769
      %v1788 = vld [vmem:[%s1119] sm:$0xe]
      %v1789 = vld [vmem:[%s1119 + $0xc] sm:$0xe]
      %v1790 = vld [vmem:[%s1119 + $0x18] sm:$0xe]
      %v1791 = vld [vmem:[%s1119 + $0x24] sm:$0xe]
      %v1792 = vld [vmem:[%s1119 + $0x30] sm:$0xe]
      %v1793 = vld [vmem:[%s1119 + $0x3c] sm:$0xe]
      %v1794 = vld [vmem:[%s1119 + $0x48] sm:$0xe]
      %v1795 = vld [vmem:[%s1119 + $0x54] sm:$0xe]
      %v1820 = vrot.slane %v1788, 5
      %v1821 = vrot.slane %v1820, 4
      %v1822 = vrot.slane %v1363, 5
      %v1823 = vsel %vm849, %v1821, %v1822
      %v1824 = vrot.slane %v1822, 4
      %v1825 = vrot.slane %v1364, 5
      %v1826 = vsel %vm849, %v1824, %v1825
      %v1827 = vrot.slane %v1789, 5
      %v1828 = vrot.slane %v1827, 4
      %v1829 = vrot.slane %v1366, 5
      %v1830 = vsel %vm849, %v1828, %v1829
      %v1831 = vrot.slane %v1829, 4
      %v1832 = vrot.slane %v1367, 5
      %v1833 = vsel %vm849, %v1831, %v1832
      %v1834 = vrot.slane %v1790, 5
      %v1835 = vrot.slane %v1834, 4
      %v1836 = vrot.slane %v1369, 5
      %v1837 = vsel %vm849, %v1835, %v1836
      %v1838 = vrot.slane %v1836, 4
      %v1839 = vrot.slane %v1370, 5
      %v1840 = vsel %vm849, %v1838, %v1839
      %v1841 = vrot.slane %v1791, 5
      %v1842 = vrot.slane %v1841, 4
      %v1843 = vrot.slane %v1372, 5
      %v1844 = vsel %vm849, %v1842, %v1843
      %v1845 = vrot.slane %v1843, 4
      %v1846 = vrot.slane %v1373, 5
      %v1847 = vsel %vm849, %v1845, %v1846
      %v1848 = vrot.slane %v1792, 5
      %v1849 = vrot.slane %v1848, 4
      %v1850 = vrot.slane %v1375, 5
      %v1851 = vsel %vm849, %v1849, %v1850
      %v1852 = vrot.slane %v1850, 4
      %v1853 = vrot.slane %v1376, 5
      %v1854 = vsel %vm849, %v1852, %v1853
      %v1855 = vrot.slane %v1793, 5
      %v1856 = vrot.slane %v1855, 4
      %v1857 = vrot.slane %v1378, 5
      %v1858 = vsel %vm849, %v1856, %v1857
      %v1859 = vrot.slane %v1857, 4
      %v1860 = vrot.slane %v1379, 5
      %v1861 = vsel %vm849, %v1859, %v1860
      %v1862 = vrot.slane %v1794, 5
      %v1863 = vrot.slane %v1862, 4
      %v1864 = vrot.slane %v1381, 5
      %v1865 = vsel %vm849, %v1863, %v1864
      %v1866 = vrot.slane %v1864, 4
      %v1867 = vrot.slane %v1382, 5
      %v1868 = vsel %vm849, %v1866, %v1867
      %v1869 = vrot.slane %v1795, 5
      %v1870 = vrot.slane %v1869, 4
      %v1871 = vrot.slane %v1384, 5
      %v1872 = vsel %vm849, %v1870, %v1871
      %v1873 = vrot.slane %v1871, 4
      %v1874 = vrot.slane %v1385, 5
      %v1875 = vsel %vm849, %v1873, %v1874
      %s1876 = scalar_lea.vmem %s1, 320
      %v1877 = vld [vmem:[%s1876] sm:$0xf]
      %v1878 = vld [vmem:[%s1876 + $0x4] sm:$0xf]
      %v1879 = vld [vmem:[%s1876 + $0x8] sm:$0xf]
      %v1880 = vld [vmem:[%s1876 + $0xc] sm:$0xf]
      %v1881 = vld [vmem:[%s1876 + $0x10] sm:$0xf]
      %v1882 = vld [vmem:[%s1876 + $0x14] sm:$0xf]
      %v1883 = vld [vmem:[%s1876 + $0x18] sm:$0xf]
      %v1884 = vld [vmem:[%s1876 + $0x1c] sm:$0xf]
      %v1885 = vld [vmem:[%s1876 + $0x20] sm:$0xf]
      %v1886 = vld [vmem:[%s1876 + $0x24] sm:$0xf]
      %v1887 = vld [vmem:[%s1876 + $0x28] sm:$0xf]
      %v1888 = vld [vmem:[%s1876 + $0x2c] sm:$0xf]
      %v1889 = vld [vmem:[%s1876 + $0x30] sm:$0xf]
      %v1890 = vld [vmem:[%s1876 + $0x34] sm:$0xf]
      %v1891 = vld [vmem:[%s1876 + $0x38] sm:$0xf]
      %v1892 = vld [vmem:[%s1876 + $0x3c] sm:$0xf]
      %v1893 = vunpack.c.l.b16 %v1823
      %v1894 = vunpack.c.l.b16 %v1826
      %v1895 = vunpack.c.l.b16 %v1830
      %v1896 = vunpack.c.l.b16 %v1833
      %v1897 = vunpack.c.l.b16 %v1837
      %v1898 = vunpack.c.l.b16 %v1840
      %v1899 = vunpack.c.l.b16 %v1844
      %v1900 = vunpack.c.l.b16 %v1847
      %v1901 = vunpack.c.l.b16 %v1851
      %v1902 = vunpack.c.l.b16 %v1854
      %v1903 = vunpack.c.l.b16 %v1858
      %v1904 = vunpack.c.l.b16 %v1861
      %v1905 = vunpack.c.l.b16 %v1865
      %v1906 = vunpack.c.l.b16 %v1868
      %v1907 = vunpack.c.l.b16 %v1872
      %v1908 = vunpack.c.l.b16 %v1875
      %v1909 = vpack.c.b16 %v1894, %v1893
      %v1910 = vpack.c.b16 %v1896, %v1895
      %v1911 = vpack.c.b16 %v1898, %v1897
      %v1912 = vpack.c.b16 %v1900, %v1899
      %v1913 = vpack.c.b16 %v1902, %v1901
      %v1914 = vpack.c.b16 %v1904, %v1903
      %v1915 = vpack.c.b16 %v1906, %v1905
      %v1916 = vpack.c.b16 %v1908, %v1907
      %v1941 = vunpack.c.l.b16 %v1877
      %v1942 = vunpack.c.l.b16 %v1878
      %v1943 = vunpack.c.l.b16 %v1879
      %v1944 = vunpack.c.l.b16 %v1880
      %v1945 = vunpack.c.l.b16 %v1881
      %v1946 = vunpack.c.l.b16 %v1882
      %v1947 = vunpack.c.l.b16 %v1883
      %v1948 = vunpack.c.l.b16 %v1884
      %v1949 = vunpack.c.l.b16 %v1885
      %v1950 = vunpack.c.l.b16 %v1886
      %v1951 = vunpack.c.l.b16 %v1887
      %v1952 = vunpack.c.l.b16 %v1888
      %v1953 = vunpack.c.l.b16 %v1889
      %v1954 = vunpack.c.l.b16 %v1890
      %v1955 = vunpack.c.l.b16 %v1891
      %v1956 = vunpack.c.l.b16 %v1892
      %v1957 = vpack.c.b16 %v1942, %v1941
      %v1958 = vpack.c.b16 %v1944, %v1943
      %v1959 = vpack.c.b16 %v1946, %v1945
      %v1960 = vpack.c.b16 %v1948, %v1947
      %v1961 = vpack.c.b16 %v1950, %v1949
      %v1962 = vpack.c.b16 %v1952, %v1951
      %v1963 = vpack.c.b16 %v1954, %v1953
      %v1964 = vpack.c.b16 %v1956, %v1955
      %1973 = vmatprep.subr.bf16.mxu0 0
      %1974 = vmatpush1.bf16.msra.mxu0 %v1964
      %1975 = vmatprep.subr.bf16.mxu0 0
      %1976 = vmatpush1.bf16.msra.mxu0 %v1963
      %1977 = vmatprep.subr.bf16.mxu0 0
      %1978 = vmatpush1.bf16.msra.mxu0 %v1962
      %1979 = vmatprep.subr.bf16.mxu0 0
      %1980 = vmatpush1.bf16.msra.mxu0 %v1961
      %1981 = vmatprep.subr.bf16.mxu0 0
      %1982 = vmatpush1.bf16.msra.mxu0 %v1960
      %1983 = vmatprep.subr.bf16.mxu0 0
      %1984 = vmatpush1.bf16.msra.mxu0 %v1959
      %1985 = vmatprep.subr.bf16.mxu0 0
      %1986 = vmatpush1.bf16.msra.mxu0 %v1958
      %1987 = vmatprep.subr.bf16.mxu0 0
      %1988 = vmatpush1.bf16.msra.mxu0 %v1957
      %1989 = vmatprep.subr.bf16.mxu0 0
      %1990 = vmatpush2.bf16.msra.mxu0 0
      %1991 = vmatprep.subr.bf16.mxu0 0
      %1992 = vmatpush2.bf16.msra.mxu0 0
      %1993 = vmatprep.subr.bf16.mxu0 0
      %1994 = vmatpush2.bf16.msra.mxu0 0
      %1995 = vmatprep.subr.bf16.mxu0 0
      %1996 = vmatpush2.bf16.msra.mxu0 0
      %1997 = vmatprep.subr.bf16.mxu0 0
      %1998 = vmatpush2.bf16.msra.mxu0 0
      %1999 = vmatprep.subr.bf16.mxu0 0
      %2000 = vmatpush2.bf16.msra.mxu0 0
      %2001 = vmatprep.subr.bf16.mxu0 0
      %2002 = vmatpush2.bf16.msra.mxu0 0
      %2003 = vmatprep.subr.bf16.mxu0 0
      %2004 = vmatpush2.bf16.msra.mxu0 0
      %2005 = vmatprep.mubr.bf16.mxu0 0
      %2006 = vmatmul.mubr.bf16.gmra.mxu0 %v1909
      %v2007 = vpop.f32.mrf.mxu0
      %v2008 = vadd.f32 0.0, %v2007
      %v2009 = vpop.f32.mrf.mxu0
      %v2010 = vpop.f32.mrf.mxu0
      %v2011 = vadd.f32 0.0, %v2010
      %v2012 = vpop.f32.mrf.mxu0
      %2013 = vmatprep.mubr.bf16.mxu0 0
      %2014 = vmatmul.mubr.bf16.gmra.mxu0 %v1910
      %v2015 = vpop.f32.mrf.mxu0
      %v2016 = vadd.f32 0.0, %v2015
      %v2017 = vpop.f32.mrf.mxu0
      %v2018 = vpop.f32.mrf.mxu0
      %v2019 = vadd.f32 0.0, %v2018
      %v2020 = vpop.f32.mrf.mxu0
      %2021 = vmatprep.mubr.bf16.mxu0 0
      %2022 = vmatmul.mubr.bf16.gmra.mxu0 %v1911
      %v2023 = vpop.f32.mrf.mxu0
      %v2024 = vadd.f32 0.0, %v2023
      %v2025 = vpop.f32.mrf.mxu0
      %v2026 = vpop.f32.mrf.mxu0
      %v2027 = vadd.f32 0.0, %v2026
      %v2028 = vpop.f32.mrf.mxu0
      %2029 = vmatprep.mubr.bf16.mxu0 0
      %2030 = vmatmul.mubr.bf16.gmra.mxu0 %v1912
      %v2031 = vpop.f32.mrf.mxu0
      %v2032 = vadd.f32 0.0, %v2031
      %v2033 = vpop.f32.mrf.mxu0
      %v2034 = vpop.f32.mrf.mxu0
      %v2035 = vadd.f32 0.0, %v2034
      %v2036 = vpop.f32.mrf.mxu0
      %2037 = vmatprep.mubr.bf16.mxu0 0
      %2038 = vmatmul.mubr.bf16.gmra.mxu0 %v1913
      %v2039 = vpop.f32.mrf.mxu0
      %v2040 = vadd.f32 0.0, %v2039
      %v2041 = vpop.f32.mrf.mxu0
      %v2042 = vpop.f32.mrf.mxu0
      %v2043 = vadd.f32 0.0, %v2042
      %v2044 = vpop.f32.mrf.mxu0
      %2045 = vmatprep.mubr.bf16.mxu0 0
      %2046 = vmatmul.mubr.bf16.gmra.mxu0 %v1914
      %v2047 = vpop.f32.mrf.mxu0
      %v2048 = vadd.f32 0.0, %v2047
      %v2049 = vpop.f32.mrf.mxu0
      %v2050 = vpop.f32.mrf.mxu0
      %v2051 = vadd.f32 0.0, %v2050
      %v2052 = vpop.f32.mrf.mxu0
      %2053 = vmatprep.mubr.bf16.mxu0 0
      %2054 = vmatmul.mubr.bf16.gmra.mxu0 %v1915
      %v2055 = vpop.f32.mrf.mxu0
      %v2056 = vadd.f32 0.0, %v2055
      %v2057 = vpop.f32.mrf.mxu0
      %v2058 = vpop.f32.mrf.mxu0
      %v2059 = vadd.f32 0.0, %v2058
      %v2060 = vpop.f32.mrf.mxu0
      %2061 = vmatprep.mubr.bf16.mxu0 0
      %2062 = vmatmul.mubr.bf16.gmra.mxu0 %v1916
      %v2063 = vpop.f32.mrf.mxu0
      %v2064 = vadd.f32 0.0, %v2063
      %v2065 = vpop.f32.mrf.mxu0
      %v2066 = vpop.f32.mrf.mxu0
      %v2067 = vadd.f32 0.0, %v2066
      %v2068 = vpop.f32.mrf.mxu0
      %2069 = vdwg.mxu0
      %v2070 = vadd.f32 %v1772, %v2008
      %v2071 = vadd.f32 %v1773, %v2011
      %v2072 = vadd.f32 %v1774, %v2016
      %v2073 = vadd.f32 %v1775, %v2019
      %v2074 = vadd.f32 %v1776, %v2024
      %v2075 = vadd.f32 %v1777, %v2027
      %v2076 = vadd.f32 %v1778, %v2032
      %v2077 = vadd.f32 %v1779, %v2035
      %v2078 = vadd.f32 %v1780, %v2040
      %v2079 = vadd.f32 %v1781, %v2043
      %v2080 = vadd.f32 %v1782, %v2048
      %v2081 = vadd.f32 %v1783, %v2051
      %v2082 = vadd.f32 %v1784, %v2056
      %v2083 = vadd.f32 %v1785, %v2059
      %v2084 = vadd.f32 %v1786, %v2064
      %v2085 = vadd.f32 %v1787, %v2067
      %s2086 = sadd.s32 %s197, 2
      %s2087 = smul.u32 %s2086, 3
      %s2088 = smul.addr %s2087, 4
      %s2089 = scalar_lea.vmem %s184, %s2088
      %v2090 = vld [vmem:[%s2089] sm:$0xf]
      %v2091 = vld [vmem:[%s2089 + $0x4] sm:$0xf]
      %v2092 = vld [vmem:[%s2089 + $0xc] sm:$0xf]
      %v2093 = vld [vmem:[%s2089 + $0x10] sm:$0xf]
      %v2094 = vld [vmem:[%s2089 + $0x18] sm:$0xf]
      %v2095 = vld [vmem:[%s2089 + $0x1c] sm:$0xf]
      %v2096 = vld [vmem:[%s2089 + $0x24] sm:$0xf]
      %v2097 = vld [vmem:[%s2089 + $0x28] sm:$0xf]
      %v2098 = vld [vmem:[%s2089 + $0x30] sm:$0xf]
      %v2099 = vld [vmem:[%s2089 + $0x34] sm:$0xf]
      %v2100 = vld [vmem:[%s2089 + $0x3c] sm:$0xf]
      %v2101 = vld [vmem:[%s2089 + $0x40] sm:$0xf]
      %v2102 = vld [vmem:[%s2089 + $0x48] sm:$0xf]
      %v2103 = vld [vmem:[%s2089 + $0x4c] sm:$0xf]
      %v2104 = vld [vmem:[%s2089 + $0x54] sm:$0xf]
      %v2105 = vld [vmem:[%s2089 + $0x58] sm:$0xf]
      %s2106 = scalar_lea.vmem %s1, 384
      %v2107 = vld [vmem:[%s2106] sm:$0xf]
      %v2108 = vld [vmem:[%s2106 + $0x4] sm:$0xf]
      %v2109 = vld [vmem:[%s2106 + $0x8] sm:$0xf]
      %v2110 = vld [vmem:[%s2106 + $0xc] sm:$0xf]
      %v2111 = vld [vmem:[%s2106 + $0x10] sm:$0xf]
      %v2112 = vld [vmem:[%s2106 + $0x14] sm:$0xf]
      %v2113 = vld [vmem:[%s2106 + $0x18] sm:$0xf]
      %v2114 = vld [vmem:[%s2106 + $0x1c] sm:$0xf]
      %v2115 = vld [vmem:[%s2106 + $0x20] sm:$0xf]
      %v2116 = vld [vmem:[%s2106 + $0x24] sm:$0xf]
      %v2117 = vld [vmem:[%s2106 + $0x28] sm:$0xf]
      %v2118 = vld [vmem:[%s2106 + $0x2c] sm:$0xf]
      %v2119 = vld [vmem:[%s2106 + $0x30] sm:$0xf]
      %v2120 = vld [vmem:[%s2106 + $0x34] sm:$0xf]
      %v2121 = vld [vmem:[%s2106 + $0x38] sm:$0xf]
      %v2122 = vld [vmem:[%s2106 + $0x3c] sm:$0xf]
      %v2139 = vunpack.c.l.b16 %v2090
      %v2140 = vunpack.c.l.b16 %v2091
      %v2141 = vunpack.c.l.b16 %v2092
      %v2142 = vunpack.c.l.b16 %v2093
      %v2143 = vunpack.c.l.b16 %v2094
      %v2144 = vunpack.c.l.b16 %v2095
      %v2145 = vunpack.c.l.b16 %v2096
      %v2146 = vunpack.c.l.b16 %v2097
      %v2147 = vunpack.c.l.b16 %v2098
      %v2148 = vunpack.c.l.b16 %v2099
      %v2149 = vunpack.c.l.b16 %v2100
      %v2150 = vunpack.c.l.b16 %v2101
      %v2151 = vunpack.c.l.b16 %v2102
      %v2152 = vunpack.c.l.b16 %v2103
      %v2153 = vunpack.c.l.b16 %v2104
      %v2154 = vunpack.c.l.b16 %v2105
      %v2155 = vpack.c.b16 %v2140, %v2139
      %v2156 = vpack.c.b16 %v2142, %v2141
      %v2157 = vpack.c.b16 %v2144, %v2143
      %v2158 = vpack.c.b16 %v2146, %v2145
      %v2159 = vpack.c.b16 %v2148, %v2147
      %v2160 = vpack.c.b16 %v2150, %v2149
      %v2161 = vpack.c.b16 %v2152, %v2151
      %v2162 = vpack.c.b16 %v2154, %v2153
      %v2187 = vunpack.c.l.b16 %v2107
      %v2188 = vunpack.c.l.b16 %v2108
      %v2189 = vunpack.c.l.b16 %v2109
      %v2190 = vunpack.c.l.b16 %v2110
      %v2191 = vunpack.c.l.b16 %v2111
      %v2192 = vunpack.c.l.b16 %v2112
      %v2193 = vunpack.c.l.b16 %v2113
      %v2194 = vunpack.c.l.b16 %v2114
      %v2195 = vunpack.c.l.b16 %v2115
      %v2196 = vunpack.c.l.b16 %v2116
      %v2197 = vunpack.c.l.b16 %v2117
      %v2198 = vunpack.c.l.b16 %v2118
      %v2199 = vunpack.c.l.b16 %v2119
      %v2200 = vunpack.c.l.b16 %v2120
      %v2201 = vunpack.c.l.b16 %v2121
      %v2202 = vunpack.c.l.b16 %v2122
      %v2203 = vpack.c.b16 %v2188, %v2187
      %v2204 = vpack.c.b16 %v2190, %v2189
      %v2205 = vpack.c.b16 %v2192, %v2191
      %v2206 = vpack.c.b16 %v2194, %v2193
      %v2207 = vpack.c.b16 %v2196, %v2195
      %v2208 = vpack.c.b16 %v2198, %v2197
      %v2209 = vpack.c.b16 %v2200, %v2199
      %v2210 = vpack.c.b16 %v2202, %v2201
      %2219 = vmatprep.subr.bf16.mxu0 0
      %2220 = vmatpush1.bf16.msra.mxu0 %v2210
      %2221 = vmatprep.subr.bf16.mxu0 0
      %2222 = vmatpush1.bf16.msra.mxu0 %v2209
      %2223 = vmatprep.subr.bf16.mxu0 0
      %2224 = vmatpush1.bf16.msra.mxu0 %v2208
      %2225 = vmatprep.subr.bf16.mxu0 0
      %2226 = vmatpush1.bf16.msra.mxu0 %v2207
      %2227 = vmatprep.subr.bf16.mxu0 0
      %2228 = vmatpush1.bf16.msra.mxu0 %v2206
      %2229 = vmatprep.subr.bf16.mxu0 0
      %2230 = vmatpush1.bf16.msra.mxu0 %v2205
      %2231 = vmatprep.subr.bf16.mxu0 0
      %2232 = vmatpush1.bf16.msra.mxu0 %v2204
      %2233 = vmatprep.subr.bf16.mxu0 0
      %2234 = vmatpush1.bf16.msra.mxu0 %v2203
      %2235 = vmatprep.subr.bf16.mxu0 0
      %2236 = vmatpush2.bf16.msra.mxu0 0
      %2237 = vmatprep.subr.bf16.mxu0 0
      %2238 = vmatpush2.bf16.msra.mxu0 0
      %2239 = vmatprep.subr.bf16.mxu0 0
      %2240 = vmatpush2.bf16.msra.mxu0 0
      %2241 = vmatprep.subr.bf16.mxu0 0
      %2242 = vmatpush2.bf16.msra.mxu0 0
      %2243 = vmatprep.subr.bf16.mxu0 0
      %2244 = vmatpush2.bf16.msra.mxu0 0
      %2245 = vmatprep.subr.bf16.mxu0 0
      %2246 = vmatpush2.bf16.msra.mxu0 0
      %2247 = vmatprep.subr.bf16.mxu0 0
      %2248 = vmatpush2.bf16.msra.mxu0 0
      %2249 = vmatprep.subr.bf16.mxu0 0
      %2250 = vmatpush2.bf16.msra.mxu0 0
      %2251 = vmatprep.mubr.bf16.mxu0 0
      %2252 = vmatmul.mubr.bf16.gmra.mxu0 %v2155
      %v2253 = vpop.f32.mrf.mxu0
      %v2254 = vadd.f32 0.0, %v2253
      %v2255 = vpop.f32.mrf.mxu0
      %v2256 = vpop.f32.mrf.mxu0
      %v2257 = vadd.f32 0.0, %v2256
      %v2258 = vpop.f32.mrf.mxu0
      %2259 = vmatprep.mubr.bf16.mxu0 0
      %2260 = vmatmul.mubr.bf16.gmra.mxu0 %v2156
      %v2261 = vpop.f32.mrf.mxu0
      %v2262 = vadd.f32 0.0, %v2261
      %v2263 = vpop.f32.mrf.mxu0
      %v2264 = vpop.f32.mrf.mxu0
      %v2265 = vadd.f32 0.0, %v2264
      %v2266 = vpop.f32.mrf.mxu0
      %2267 = vmatprep.mubr.bf16.mxu0 0
      %2268 = vmatmul.mubr.bf16.gmra.mxu0 %v2157
      %v2269 = vpop.f32.mrf.mxu0
      %v2270 = vadd.f32 0.0, %v2269
      %v2271 = vpop.f32.mrf.mxu0
      %v2272 = vpop.f32.mrf.mxu0
      %v2273 = vadd.f32 0.0, %v2272
      %v2274 = vpop.f32.mrf.mxu0
      %2275 = vmatprep.mubr.bf16.mxu0 0
      %2276 = vmatmul.mubr.bf16.gmra.mxu0 %v2158
      %v2277 = vpop.f32.mrf.mxu0
      %v2278 = vadd.f32 0.0, %v2277
      %v2279 = vpop.f32.mrf.mxu0
      %v2280 = vpop.f32.mrf.mxu0
      %v2281 = vadd.f32 0.0, %v2280
      %v2282 = vpop.f32.mrf.mxu0
      %2283 = vmatprep.mubr.bf16.mxu0 0
      %2284 = vmatmul.mubr.bf16.gmra.mxu0 %v2159
      %v2285 = vpop.f32.mrf.mxu0
      %v2286 = vadd.f32 0.0, %v2285
      %v2287 = vpop.f32.mrf.mxu0
      %v2288 = vpop.f32.mrf.mxu0
      %v2289 = vadd.f32 0.0, %v2288
      %v2290 = vpop.f32.mrf.mxu0
      %2291 = vmatprep.mubr.bf16.mxu0 0
      %2292 = vmatmul.mubr.bf16.gmra.mxu0 %v2160
      %v2293 = vpop.f32.mrf.mxu0
      %v2294 = vadd.f32 0.0, %v2293
      %v2295 = vpop.f32.mrf.mxu0
      %v2296 = vpop.f32.mrf.mxu0
      %v2297 = vadd.f32 0.0, %v2296
      %v2298 = vpop.f32.mrf.mxu0
      %2299 = vmatprep.mubr.bf16.mxu0 0
      %2300 = vmatmul.mubr.bf16.gmra.mxu0 %v2161
      %v2301 = vpop.f32.mrf.mxu0
      %v2302 = vadd.f32 0.0, %v2301
      %v2303 = vpop.f32.mrf.mxu0
      %v2304 = vpop.f32.mrf.mxu0
      %v2305 = vadd.f32 0.0, %v2304
      %v2306 = vpop.f32.mrf.mxu0
      %2307 = vmatprep.mubr.bf16.mxu0 0
      %2308 = vmatmul.mubr.bf16.gmra.mxu0 %v2162
      %v2309 = vpop.f32.mrf.mxu0
      %v2310 = vadd.f32 0.0, %v2309
      %v2311 = vpop.f32.mrf.mxu0
      %v2312 = vpop.f32.mrf.mxu0
      %v2313 = vadd.f32 0.0, %v2312
      %v2314 = vpop.f32.mrf.mxu0
      %2315 = vdwg.mxu0
      %v2316 = vadd.f32 %v2070, %v2254
      %v2317 = vadd.f32 %v2071, %v2257
      %v2318 = vadd.f32 %v2072, %v2262
      %v2319 = vadd.f32 %v2073, %v2265
      %v2320 = vadd.f32 %v2074, %v2270
      %v2321 = vadd.f32 %v2075, %v2273
      %v2322 = vadd.f32 %v2076, %v2278
      %v2323 = vadd.f32 %v2077, %v2281
      %v2324 = vadd.f32 %v2078, %v2286
      %v2325 = vadd.f32 %v2079, %v2289
      %v2326 = vadd.f32 %v2080, %v2294
      %v2327 = vadd.f32 %v2081, %v2297
      %v2328 = vadd.f32 %v2082, %v2302
      %v2329 = vadd.f32 %v2083, %v2305
      %v2330 = vadd.f32 %v2084, %v2310
      %v2331 = vadd.f32 %v2085, %v2313
      %v2332 = vld [vmem:[%s2089] sm:$0xf]
      %v2333 = vld [vmem:[%s2089 + $0x4] sm:$0xf]
      %v2334 = vld [vmem:[%s2089 + $0x8] sm:$0x1]
      %v2335 = vld [vmem:[%s2089 + $0xc] sm:$0xf]
      %v2336 = vld [vmem:[%s2089 + $0x10] sm:$0xf]
      %v2337 = vld [vmem:[%s2089 + $0x14] sm:$0x1]
      %v2338 = vld [vmem:[%s2089 + $0x18] sm:$0xf]
      %v2339 = vld [vmem:[%s2089 + $0x1c] sm:$0xf]
      %v2340 = vld [vmem:[%s2089 + $0x20] sm:$0x1]
      %v2341 = vld [vmem:[%s2089 + $0x24] sm:$0xf]
      %v2342 = vld [vmem:[%s2089 + $0x28] sm:$0xf]
      %v2343 = vld [vmem:[%s2089 + $0x2c] sm:$0x1]
      %v2344 = vld [vmem:[%s2089 + $0x30] sm:$0xf]
      %v2345 = vld [vmem:[%s2089 + $0x34] sm:$0xf]
      %v2346 = vld [vmem:[%s2089 + $0x38] sm:$0x1]
      %v2347 = vld [vmem:[%s2089 + $0x3c] sm:$0xf]
      %v2348 = vld [vmem:[%s2089 + $0x40] sm:$0xf]
      %v2349 = vld [vmem:[%s2089 + $0x44] sm:$0x1]
      %v2350 = vld [vmem:[%s2089 + $0x48] sm:$0xf]
      %v2351 = vld [vmem:[%s2089 + $0x4c] sm:$0xf]
      %v2352 = vld [vmem:[%s2089 + $0x50] sm:$0x1]
      %v2353 = vld [vmem:[%s2089 + $0x54] sm:$0xf]
      %v2354 = vld [vmem:[%s2089 + $0x58] sm:$0xf]
      %v2355 = vld [vmem:[%s2089 + $0x5c] sm:$0x1]
      %v2357 = vshrl.u32 %v2332, 16
      %v2359 = vrot.slane %v2357, 4
      %v2360 = vshll.u32 %v2332, 16
      %v2362 = vrot.slane %v2360, 5
      %v2363 = vor.u32 %v2359, %v2362
      %v2364 = vrot.slane %v2363, 4
      %v2366 = vshll.u32 %v2333, 16
      %v2368 = vrot.slane %v2366, 5
      %v2369 = vsel %vm243, %v2364, %v2368
      %v2370 = vshrl.u32 %v2333, 16
      %v2372 = vrot.slane %v2370, 4
      %v2373 = vor.u32 %v2372, %v2368
      %v2374 = vrot.slane %v2373, 4
      %v2376 = vshll.u32 %v2334, 16
      %v2378 = vrot.slane %v2376, 5
      %v2379 = vsel %vm243, %v2374, %v2378
      %v2381 = vshrl.u32 %v2335, 16
      %v2383 = vrot.slane %v2381, 4
      %v2384 = vshll.u32 %v2335, 16
      %v2386 = vrot.slane %v2384, 5
      %v2387 = vor.u32 %v2383, %v2386
      %v2388 = vrot.slane %v2387, 4
      %v2390 = vshll.u32 %v2336, 16
      %v2392 = vrot.slane %v2390, 5
      %v2393 = vsel %vm243, %v2388, %v2392
      %v2394 = vshrl.u32 %v2336, 16
      %v2396 = vrot.slane %v2394, 4
      %v2397 = vor.u32 %v2396, %v2392
      %v2398 = vrot.slane %v2397, 4
      %v2400 = vshll.u32 %v2337, 16
      %v2402 = vrot.slane %v2400, 5
      %v2403 = vsel %vm243, %v2398, %v2402
      %v2405 = vshrl.u32 %v2338, 16
      %v2407 = vrot.slane %v2405, 4
      %v2408 = vshll.u32 %v2338, 16
      %v2410 = vrot.slane %v2408, 5
      %v2411 = vor.u32 %v2407, %v2410
      %v2412 = vrot.slane %v2411, 4
      %v2414 = vshll.u32 %v2339, 16
      %v2416 = vrot.slane %v2414, 5
      %v2417 = vsel %vm243, %v2412, %v2416
      %v2418 = vshrl.u32 %v2339, 16
      %v2420 = vrot.slane %v2418, 4
      %v2421 = vor.u32 %v2420, %v2416
      %v2422 = vrot.slane %v2421, 4
      %v2424 = vshll.u32 %v2340, 16
      %v2426 = vrot.slane %v2424, 5
      %v2427 = vsel %vm243, %v2422, %v2426
      %v2429 = vshrl.u32 %v2341, 16
      %v2431 = vrot.slane %v2429, 4
      %v2432 = vshll.u32 %v2341, 16
      %v2434 = vrot.slane %v2432, 5
      %v2435 = vor.u32 %v2431, %v2434
      %v2436 = vrot.slane %v2435, 4
      %v2438 = vshll.u32 %v2342, 16
      %v2440 = vrot.slane %v2438, 5
      %v2441 = vsel %vm243, %v2436, %v2440
      %v2442 = vshrl.u32 %v2342, 16
      %v2444 = vrot.slane %v2442, 4
      %v2445 = vor.u32 %v2444, %v2440
      %v2446 = vrot.slane %v2445, 4
      %v2448 = vshll.u32 %v2343, 16
      %v2450 = vrot.slane %v2448, 5
      %v2451 = vsel %vm243, %v2446, %v2450
      %v2453 = vshrl.u32 %v2344, 16
      %v2455 = vrot.slane %v2453, 4
      %v2456 = vshll.u32 %v2344, 16
      %v2458 = vrot.slane %v2456, 5
      %v2459 = vor.u32 %v2455, %v2458
      %v2460 = vrot.slane %v2459, 4
      %v2462 = vshll.u32 %v2345, 16
      %v2464 = vrot.slane %v2462, 5
      %v2465 = vsel %vm243, %v2460, %v2464
      %v2466 = vshrl.u32 %v2345, 16
      %v2468 = vrot.slane %v2466, 4
      %v2469 = vor.u32 %v2468, %v2464
      %v2470 = vrot.slane %v2469, 4
      %v2472 = vshll.u32 %v2346, 16
      %v2474 = vrot.slane %v2472, 5
      %v2475 = vsel %vm243, %v2470, %v2474
      %v2477 = vshrl.u32 %v2347, 16
      %v2479 = vrot.slane %v2477, 4
      %v2480 = vshll.u32 %v2347, 16
      %v2482 = vrot.slane %v2480, 5
      %v2483 = vor.u32 %v2479, %v2482
      %v2484 = vrot.slane %v2483, 4
      %v2486 = vshll.u32 %v2348, 16
      %v2488 = vrot.slane %v2486, 5
      %v2489 = vsel %vm243, %v2484, %v2488
      %v2490 = vshrl.u32 %v2348, 16
      %v2492 = vrot.slane %v2490, 4
      %v2493 = vor.u32 %v2492, %v2488
      %v2494 = vrot.slane %v2493, 4
      %v2496 = vshll.u32 %v2349, 16
      %v2498 = vrot.slane %v2496, 5
      %v2499 = vsel %vm243, %v2494, %v2498
      %v2501 = vshrl.u32 %v2350, 16
      %v2503 = vrot.slane %v2501, 4
      %v2504 = vshll.u32 %v2350, 16
      %v2506 = vrot.slane %v2504, 5
      %v2507 = vor.u32 %v2503, %v2506
      %v2508 = vrot.slane %v2507, 4
      %v2510 = vshll.u32 %v2351, 16
      %v2512 = vrot.slane %v2510, 5
      %v2513 = vsel %vm243, %v2508, %v2512
      %v2514 = vshrl.u32 %v2351, 16
      %v2516 = vrot.slane %v2514, 4
      %v2517 = vor.u32 %v2516, %v2512
      %v2518 = vrot.slane %v2517, 4
      %v2520 = vshll.u32 %v2352, 16
      %v2522 = vrot.slane %v2520, 5
      %v2523 = vsel %vm243, %v2518, %v2522
      %v2525 = vshrl.u32 %v2353, 16
      %v2527 = vrot.slane %v2525, 4
      %v2528 = vshll.u32 %v2353, 16
      %v2530 = vrot.slane %v2528, 5
      %v2531 = vor.u32 %v2527, %v2530
      %v2532 = vrot.slane %v2531, 4
      %v2534 = vshll.u32 %v2354, 16
      %v2536 = vrot.slane %v2534, 5
      %v2537 = vsel %vm243, %v2532, %v2536
      %v2538 = vshrl.u32 %v2354, 16
      %v2540 = vrot.slane %v2538, 4
      %v2541 = vor.u32 %v2540, %v2536
      %v2542 = vrot.slane %v2541, 4
      %v2544 = vshll.u32 %v2355, 16
      %v2546 = vrot.slane %v2544, 5
      %v2547 = vsel %vm243, %v2542, %v2546
      %s2548 = scalar_lea.vmem %s1, 448
      %v2549 = vld [vmem:[%s2548] sm:$0xf]
      %v2550 = vld [vmem:[%s2548 + $0x4] sm:$0xf]
      %v2551 = vld [vmem:[%s2548 + $0x8] sm:$0xf]
      %v2552 = vld [vmem:[%s2548 + $0xc] sm:$0xf]
      %v2553 = vld [vmem:[%s2548 + $0x10] sm:$0xf]
      %v2554 = vld [vmem:[%s2548 + $0x14] sm:$0xf]
      %v2555 = vld [vmem:[%s2548 + $0x18] sm:$0xf]
      %v2556 = vld [vmem:[%s2548 + $0x1c] sm:$0xf]
      %v2557 = vld [vmem:[%s2548 + $0x20] sm:$0xf]
      %v2558 = vld [vmem:[%s2548 + $0x24] sm:$0xf]
      %v2559 = vld [vmem:[%s2548 + $0x28] sm:$0xf]
      %v2560 = vld [vmem:[%s2548 + $0x2c] sm:$0xf]
      %v2561 = vld [vmem:[%s2548 + $0x30] sm:$0xf]
      %v2562 = vld [vmem:[%s2548 + $0x34] sm:$0xf]
      %v2563 = vld [vmem:[%s2548 + $0x38] sm:$0xf]
      %v2564 = vld [vmem:[%s2548 + $0x3c] sm:$0xf]
      %v2565 = vunpack.c.l.b16 %v2369
      %v2566 = vunpack.c.l.b16 %v2379
      %v2567 = vunpack.c.l.b16 %v2393
      %v2568 = vunpack.c.l.b16 %v2403
      %v2569 = vunpack.c.l.b16 %v2417
      %v2570 = vunpack.c.l.b16 %v2427
      %v2571 = vunpack.c.l.b16 %v2441
      %v2572 = vunpack.c.l.b16 %v2451
      %v2573 = vunpack.c.l.b16 %v2465
      %v2574 = vunpack.c.l.b16 %v2475
      %v2575 = vunpack.c.l.b16 %v2489
      %v2576 = vunpack.c.l.b16 %v2499
      %v2577 = vunpack.c.l.b16 %v2513
      %v2578 = vunpack.c.l.b16 %v2523
      %v2579 = vunpack.c.l.b16 %v2537
      %v2580 = vunpack.c.l.b16 %v2547
      %v2581 = vpack.c.b16 %v2566, %v2565
      %v2582 = vpack.c.b16 %v2568, %v2567
      %v2583 = vpack.c.b16 %v2570, %v2569
      %v2584 = vpack.c.b16 %v2572, %v2571
      %v2585 = vpack.c.b16 %v2574, %v2573
      %v2586 = vpack.c.b16 %v2576, %v2575
      %v2587 = vpack.c.b16 %v2578, %v2577
      %v2588 = vpack.c.b16 %v2580, %v2579
      %v2613 = vunpack.c.l.b16 %v2549
      %v2614 = vunpack.c.l.b16 %v2550
      %v2615 = vunpack.c.l.b16 %v2551
      %v2616 = vunpack.c.l.b16 %v2552
      %v2617 = vunpack.c.l.b16 %v2553
      %v2618 = vunpack.c.l.b16 %v2554
      %v2619 = vunpack.c.l.b16 %v2555
      %v2620 = vunpack.c.l.b16 %v2556
      %v2621 = vunpack.c.l.b16 %v2557
      %v2622 = vunpack.c.l.b16 %v2558
      %v2623 = vunpack.c.l.b16 %v2559
      %v2624 = vunpack.c.l.b16 %v2560
      %v2625 = vunpack.c.l.b16 %v2561
      %v2626 = vunpack.c.l.b16 %v2562
      %v2627 = vunpack.c.l.b16 %v2563
      %v2628 = vunpack.c.l.b16 %v2564
      %v2629 = vpack.c.b16 %v2614, %v2613
      %v2630 = vpack.c.b16 %v2616, %v2615
      %v2631 = vpack.c.b16 %v2618, %v2617
      %v2632 = vpack.c.b16 %v2620, %v2619
      %v2633 = vpack.c.b16 %v2622, %v2621
      %v2634 = vpack.c.b16 %v2624, %v2623
      %v2635 = vpack.c.b16 %v2626, %v2625
      %v2636 = vpack.c.b16 %v2628, %v2627
      %2645 = vmatprep.subr.bf16.mxu0 0
      %2646 = vmatpush1.bf16.msra.mxu0 %v2636
      %2647 = vmatprep.subr.bf16.mxu0 0
      %2648 = vmatpush1.bf16.msra.mxu0 %v2635
      %2649 = vmatprep.subr.bf16.mxu0 0
      %2650 = vmatpush1.bf16.msra.mxu0 %v2634
      %2651 = vmatprep.subr.bf16.mxu0 0
      %2652 = vmatpush1.bf16.msra.mxu0 %v2633
      %2653 = vmatprep.subr.bf16.mxu0 0
      %2654 = vmatpush1.bf16.msra.mxu0 %v2632
      %2655 = vmatprep.subr.bf16.mxu0 0
      %2656 = vmatpush1.bf16.msra.mxu0 %v2631
      %2657 = vmatprep.subr.bf16.mxu0 0
      %2658 = vmatpush1.bf16.msra.mxu0 %v2630
      %2659 = vmatprep.subr.bf16.mxu0 0
      %2660 = vmatpush1.bf16.msra.mxu0 %v2629
      %2661 = vmatprep.subr.bf16.mxu0 0
      %2662 = vmatpush2.bf16.msra.mxu0 0
      %2663 = vmatprep.subr.bf16.mxu0 0
      %2664 = vmatpush2.bf16.msra.mxu0 0
      %2665 = vmatprep.subr.bf16.mxu0 0
      %2666 = vmatpush2.bf16.msra.mxu0 0
      %2667 = vmatprep.subr.bf16.mxu0 0
      %2668 = vmatpush2.bf16.msra.mxu0 0
      %2669 = vmatprep.subr.bf16.mxu0 0
      %2670 = vmatpush2.bf16.msra.mxu0 0
      %2671 = vmatprep.subr.bf16.mxu0 0
      %2672 = vmatpush2.bf16.msra.mxu0 0
      %2673 = vmatprep.subr.bf16.mxu0 0
      %2674 = vmatpush2.bf16.msra.mxu0 0
      %2675 = vmatprep.subr.bf16.mxu0 0
      %2676 = vmatpush2.bf16.msra.mxu0 0
      %2677 = vmatprep.mubr.bf16.mxu0 0
      %2678 = vmatmul.mubr.bf16.gmra.mxu0 %v2581
      %v2679 = vpop.f32.mrf.mxu0
      %v2680 = vadd.f32 0.0, %v2679
      %v2681 = vpop.f32.mrf.mxu0
      %v2682 = vpop.f32.mrf.mxu0
      %v2683 = vadd.f32 0.0, %v2682
      %v2684 = vpop.f32.mrf.mxu0
      %2685 = vmatprep.mubr.bf16.mxu0 0
      %2686 = vmatmul.mubr.bf16.gmra.mxu0 %v2582
      %v2687 = vpop.f32.mrf.mxu0
      %v2688 = vadd.f32 0.0, %v2687
      %v2689 = vpop.f32.mrf.mxu0
      %v2690 = vpop.f32.mrf.mxu0
      %v2691 = vadd.f32 0.0, %v2690
      %v2692 = vpop.f32.mrf.mxu0
      %2693 = vmatprep.mubr.bf16.mxu0 0
      %2694 = vmatmul.mubr.bf16.gmra.mxu0 %v2583
      %v2695 = vpop.f32.mrf.mxu0
      %v2696 = vadd.f32 0.0, %v2695
      %v2697 = vpop.f32.mrf.mxu0
      %v2698 = vpop.f32.mrf.mxu0
      %v2699 = vadd.f32 0.0, %v2698
      %v2700 = vpop.f32.mrf.mxu0
      %2701 = vmatprep.mubr.bf16.mxu0 0
      %2702 = vmatmul.mubr.bf16.gmra.mxu0 %v2584
      %v2703 = vpop.f32.mrf.mxu0
      %v2704 = vadd.f32 0.0, %v2703
      %v2705 = vpop.f32.mrf.mxu0
      %v2706 = vpop.f32.mrf.mxu0
      %v2707 = vadd.f32 0.0, %v2706
      %v2708 = vpop.f32.mrf.mxu0
      %2709 = vmatprep.mubr.bf16.mxu0 0
      %2710 = vmatmul.mubr.bf16.gmra.mxu0 %v2585
      %v2711 = vpop.f32.mrf.mxu0
      %v2712 = vadd.f32 0.0, %v2711
      %v2713 = vpop.f32.mrf.mxu0
      %v2714 = vpop.f32.mrf.mxu0
      %v2715 = vadd.f32 0.0, %v2714
      %v2716 = vpop.f32.mrf.mxu0
      %2717 = vmatprep.mubr.bf16.mxu0 0
      %2718 = vmatmul.mubr.bf16.gmra.mxu0 %v2586
      %v2719 = vpop.f32.mrf.mxu0
      %v2720 = vadd.f32 0.0, %v2719
      %v2721 = vpop.f32.mrf.mxu0
      %v2722 = vpop.f32.mrf.mxu0
      %v2723 = vadd.f32 0.0, %v2722
      %v2724 = vpop.f32.mrf.mxu0
      %2725 = vmatprep.mubr.bf16.mxu0 0
      %2726 = vmatmul.mubr.bf16.gmra.mxu0 %v2587
      %v2727 = vpop.f32.mrf.mxu0
      %v2728 = vadd.f32 0.0, %v2727
      %v2729 = vpop.f32.mrf.mxu0
      %v2730 = vpop.f32.mrf.mxu0
      %v2731 = vadd.f32 0.0, %v2730
      %v2732 = vpop.f32.mrf.mxu0
      %2733 = vmatprep.mubr.bf16.mxu0 0
      %2734 = vmatmul.mubr.bf16.gmra.mxu0 %v2588
      %v2735 = vpop.f32.mrf.mxu0
      %v2736 = vadd.f32 0.0, %v2735
      %v2737 = vpop.f32.mrf.mxu0
      %v2738 = vpop.f32.mrf.mxu0
      %v2739 = vadd.f32 0.0, %v2738
      %v2740 = vpop.f32.mrf.mxu0
      %2741 = vdwg.mxu0
      %v2742 = vadd.f32 %v2316, %v2680
      %v2743 = vadd.f32 %v2317, %v2683
      %v2744 = vadd.f32 %v2318, %v2688
      %v2745 = vadd.f32 %v2319, %v2691
      %v2746 = vadd.f32 %v2320, %v2696
      %v2747 = vadd.f32 %v2321, %v2699
      %v2748 = vadd.f32 %v2322, %v2704
      %v2749 = vadd.f32 %v2323, %v2707
      %v2750 = vadd.f32 %v2324, %v2712
      %v2751 = vadd.f32 %v2325, %v2715
      %v2752 = vadd.f32 %v2326, %v2720
      %v2753 = vadd.f32 %v2327, %v2723
      %v2754 = vadd.f32 %v2328, %v2728
      %v2755 = vadd.f32 %v2329, %v2731
      %v2756 = vadd.f32 %v2330, %v2736
      %v2757 = vadd.f32 %v2331, %v2739
      %v2758 = vld [vmem:[%s2089] sm:$0xe]
      %v2759 = vld [vmem:[%s2089 + $0xc] sm:$0xe]
      %v2760 = vld [vmem:[%s2089 + $0x18] sm:$0xe]
      %v2761 = vld [vmem:[%s2089 + $0x24] sm:$0xe]
      %v2762 = vld [vmem:[%s2089 + $0x30] sm:$0xe]
      %v2763 = vld [vmem:[%s2089 + $0x3c] sm:$0xe]
      %v2764 = vld [vmem:[%s2089 + $0x48] sm:$0xe]
      %v2765 = vld [vmem:[%s2089 + $0x54] sm:$0xe]
      %v2790 = vrot.slane %v2758, 5
      %v2791 = vrot.slane %v2790, 4
      %v2792 = vrot.slane %v2333, 5
      %v2793 = vsel %vm849, %v2791, %v2792
      %v2794 = vrot.slane %v2792, 4
      %v2795 = vrot.slane %v2334, 5
      %v2796 = vsel %vm849, %v2794, %v2795
      %v2797 = vrot.slane %v2759, 5
      %v2798 = vrot.slane %v2797, 4
      %v2799 = vrot.slane %v2336, 5
      %v2800 = vsel %vm849, %v2798, %v2799
      %v2801 = vrot.slane %v2799, 4
      %v2802 = vrot.slane %v2337, 5
      %v2803 = vsel %vm849, %v2801, %v2802
      %v2804 = vrot.slane %v2760, 5
      %v2805 = vrot.slane %v2804, 4
      %v2806 = vrot.slane %v2339, 5
      %v2807 = vsel %vm849, %v2805, %v2806
      %v2808 = vrot.slane %v2806, 4
      %v2809 = vrot.slane %v2340, 5
      %v2810 = vsel %vm849, %v2808, %v2809
      %v2811 = vrot.slane %v2761, 5
      %v2812 = vrot.slane %v2811, 4
      %v2813 = vrot.slane %v2342, 5
      %v2814 = vsel %vm849, %v2812, %v2813
      %v2815 = vrot.slane %v2813, 4
      %v2816 = vrot.slane %v2343, 5
      %v2817 = vsel %vm849, %v2815, %v2816
      %v2818 = vrot.slane %v2762, 5
      %v2819 = vrot.slane %v2818, 4
      %v2820 = vrot.slane %v2345, 5
      %v2821 = vsel %vm849, %v2819, %v2820
      %v2822 = vrot.slane %v2820, 4
      %v2823 = vrot.slane %v2346, 5
      %v2824 = vsel %vm849, %v2822, %v2823
      %v2825 = vrot.slane %v2763, 5
      %v2826 = vrot.slane %v2825, 4
      %v2827 = vrot.slane %v2348, 5
      %v2828 = vsel %vm849, %v2826, %v2827
      %v2829 = vrot.slane %v2827, 4
      %v2830 = vrot.slane %v2349, 5
      %v2831 = vsel %vm849, %v2829, %v2830
      %v2832 = vrot.slane %v2764, 5
      %v2833 = vrot.slane %v2832, 4
      %v2834 = vrot.slane %v2351, 5
      %v2835 = vsel %vm849, %v2833, %v2834
      %v2836 = vrot.slane %v2834, 4
      %v2837 = vrot.slane %v2352, 5
      %v2838 = vsel %vm849, %v2836, %v2837
      %v2839 = vrot.slane %v2765, 5
      %v2840 = vrot.slane %v2839, 4
      %v2841 = vrot.slane %v2354, 5
      %v2842 = vsel %vm849, %v2840, %v2841
      %v2843 = vrot.slane %v2841, 4
      %v2844 = vrot.slane %v2355, 5
      %v2845 = vsel %vm849, %v2843, %v2844
      %s2846 = scalar_lea.vmem %s1, 512
      %v2847 = vld [vmem:[%s2846] sm:$0xf]
      %v2848 = vld [vmem:[%s2846 + $0x4] sm:$0xf]
      %v2849 = vld [vmem:[%s2846 + $0x8] sm:$0xf]
      %v2850 = vld [vmem:[%s2846 + $0xc] sm:$0xf]
      %v2851 = vld [vmem:[%s2846 + $0x10] sm:$0xf]
      %v2852 = vld [vmem:[%s2846 + $0x14] sm:$0xf]
      %v2853 = vld [vmem:[%s2846 + $0x18] sm:$0xf]
      %v2854 = vld [vmem:[%s2846 + $0x1c] sm:$0xf]
      %v2855 = vld [vmem:[%s2846 + $0x20] sm:$0xf]
      %v2856 = vld [vmem:[%s2846 + $0x24] sm:$0xf]
      %v2857 = vld [vmem:[%s2846 + $0x28] sm:$0xf]
      %v2858 = vld [vmem:[%s2846 + $0x2c] sm:$0xf]
      %v2859 = vld [vmem:[%s2846 + $0x30] sm:$0xf]
      %v2860 = vld [vmem:[%s2846 + $0x34] sm:$0xf]
      %v2861 = vld [vmem:[%s2846 + $0x38] sm:$0xf]
      %v2862 = vld [vmem:[%s2846 + $0x3c] sm:$0xf]
      %v2863 = vunpack.c.l.b16 %v2793
      %v2864 = vunpack.c.l.b16 %v2796
      %v2865 = vunpack.c.l.b16 %v2800
      %v2866 = vunpack.c.l.b16 %v2803
      %v2867 = vunpack.c.l.b16 %v2807
      %v2868 = vunpack.c.l.b16 %v2810
      %v2869 = vunpack.c.l.b16 %v2814
      %v2870 = vunpack.c.l.b16 %v2817
      %v2871 = vunpack.c.l.b16 %v2821
      %v2872 = vunpack.c.l.b16 %v2824
      %v2873 = vunpack.c.l.b16 %v2828
      %v2874 = vunpack.c.l.b16 %v2831
      %v2875 = vunpack.c.l.b16 %v2835
      %v2876 = vunpack.c.l.b16 %v2838
      %v2877 = vunpack.c.l.b16 %v2842
      %v2878 = vunpack.c.l.b16 %v2845
      %v2879 = vpack.c.b16 %v2864, %v2863
      %v2880 = vpack.c.b16 %v2866, %v2865
      %v2881 = vpack.c.b16 %v2868, %v2867
      %v2882 = vpack.c.b16 %v2870, %v2869
      %v2883 = vpack.c.b16 %v2872, %v2871
      %v2884 = vpack.c.b16 %v2874, %v2873
      %v2885 = vpack.c.b16 %v2876, %v2875
      %v2886 = vpack.c.b16 %v2878, %v2877
      %v2911 = vunpack.c.l.b16 %v2847
      %v2912 = vunpack.c.l.b16 %v2848
      %v2913 = vunpack.c.l.b16 %v2849
      %v2914 = vunpack.c.l.b16 %v2850
      %v2915 = vunpack.c.l.b16 %v2851
      %v2916 = vunpack.c.l.b16 %v2852
      %v2917 = vunpack.c.l.b16 %v2853
      %v2918 = vunpack.c.l.b16 %v2854
      %v2919 = vunpack.c.l.b16 %v2855
      %v2920 = vunpack.c.l.b16 %v2856
      %v2921 = vunpack.c.l.b16 %v2857
      %v2922 = vunpack.c.l.b16 %v2858
      %v2923 = vunpack.c.l.b16 %v2859
      %v2924 = vunpack.c.l.b16 %v2860
      %v2925 = vunpack.c.l.b16 %v2861
      %v2926 = vunpack.c.l.b16 %v2862
      %v2927 = vpack.c.b16 %v2912, %v2911
      %v2928 = vpack.c.b16 %v2914, %v2913
      %v2929 = vpack.c.b16 %v2916, %v2915
      %v2930 = vpack.c.b16 %v2918, %v2917
      %v2931 = vpack.c.b16 %v2920, %v2919
      %v2932 = vpack.c.b16 %v2922, %v2921
      %v2933 = vpack.c.b16 %v2924, %v2923
      %v2934 = vpack.c.b16 %v2926, %v2925
      %2943 = vmatprep.subr.bf16.mxu0 0
      %2944 = vmatpush1.bf16.msra.mxu0 %v2934
      %2945 = vmatprep.subr.bf16.mxu0 0
      %2946 = vmatpush1.bf16.msra.mxu0 %v2933
      %2947 = vmatprep.subr.bf16.mxu0 0
      %2948 = vmatpush1.bf16.msra.mxu0 %v2932
      %2949 = vmatprep.subr.bf16.mxu0 0
      %2950 = vmatpush1.bf16.msra.mxu0 %v2931
      %2951 = vmatprep.subr.bf16.mxu0 0
      %2952 = vmatpush1.bf16.msra.mxu0 %v2930
      %2953 = vmatprep.subr.bf16.mxu0 0
      %2954 = vmatpush1.bf16.msra.mxu0 %v2929
      %2955 = vmatprep.subr.bf16.mxu0 0
      %2956 = vmatpush1.bf16.msra.mxu0 %v2928
      %2957 = vmatprep.subr.bf16.mxu0 0
      %2958 = vmatpush1.bf16.msra.mxu0 %v2927
      %2959 = vmatprep.subr.bf16.mxu0 0
      %2960 = vmatpush2.bf16.msra.mxu0 0
      %2961 = vmatprep.subr.bf16.mxu0 0
      %2962 = vmatpush2.bf16.msra.mxu0 0
      %2963 = vmatprep.subr.bf16.mxu0 0
      %2964 = vmatpush2.bf16.msra.mxu0 0
      %2965 = vmatprep.subr.bf16.mxu0 0
      %2966 = vmatpush2.bf16.msra.mxu0 0
      %2967 = vmatprep.subr.bf16.mxu0 0
      %2968 = vmatpush2.bf16.msra.mxu0 0
      %2969 = vmatprep.subr.bf16.mxu0 0
      %2970 = vmatpush2.bf16.msra.mxu0 0
      %2971 = vmatprep.subr.bf16.mxu0 0
      %2972 = vmatpush2.bf16.msra.mxu0 0
      %2973 = vmatprep.subr.bf16.mxu0 0
      %2974 = vmatpush2.bf16.msra.mxu0 0
      %2975 = vmatprep.mubr.bf16.mxu0 0
      %2976 = vmatmul.mubr.bf16.gmra.mxu0 %v2879
      %v2977 = vpop.f32.mrf.mxu0
      %v2978 = vadd.f32 0.0, %v2977
      %v2979 = vpop.f32.mrf.mxu0
      %v2980 = vpop.f32.mrf.mxu0
      %v2981 = vadd.f32 0.0, %v2980
      %v2982 = vpop.f32.mrf.mxu0
      %2983 = vmatprep.mubr.bf16.mxu0 0
      %2984 = vmatmul.mubr.bf16.gmra.mxu0 %v2880
      %v2985 = vpop.f32.mrf.mxu0
      %v2986 = vadd.f32 0.0, %v2985
      %v2987 = vpop.f32.mrf.mxu0
      %v2988 = vpop.f32.mrf.mxu0
      %v2989 = vadd.f32 0.0, %v2988
      %v2990 = vpop.f32.mrf.mxu0
      %2991 = vmatprep.mubr.bf16.mxu0 0
      %2992 = vmatmul.mubr.bf16.gmra.mxu0 %v2881
      %v2993 = vpop.f32.mrf.mxu0
      %v2994 = vadd.f32 0.0, %v2993
      %v2995 = vpop.f32.mrf.mxu0
      %v2996 = vpop.f32.mrf.mxu0
      %v2997 = vadd.f32 0.0, %v2996
      %v2998 = vpop.f32.mrf.mxu0
      %2999 = vmatprep.mubr.bf16.mxu0 0
      %3000 = vmatmul.mubr.bf16.gmra.mxu0 %v2882
      %v3001 = vpop.f32.mrf.mxu0
      %v3002 = vadd.f32 0.0, %v3001
      %v3003 = vpop.f32.mrf.mxu0
      %v3004 = vpop.f32.mrf.mxu0
      %v3005 = vadd.f32 0.0, %v3004
      %v3006 = vpop.f32.mrf.mxu0
      %3007 = vmatprep.mubr.bf16.mxu0 0
      %3008 = vmatmul.mubr.bf16.gmra.mxu0 %v2883
      %v3009 = vpop.f32.mrf.mxu0
      %v3010 = vadd.f32 0.0, %v3009
      %v3011 = vpop.f32.mrf.mxu0
      %v3012 = vpop.f32.mrf.mxu0
      %v3013 = vadd.f32 0.0, %v3012
      %v3014 = vpop.f32.mrf.mxu0
      %3015 = vmatprep.mubr.bf16.mxu0 0
      %3016 = vmatmul.mubr.bf16.gmra.mxu0 %v2884
      %v3017 = vpop.f32.mrf.mxu0
      %v3018 = vadd.f32 0.0, %v3017
      %v3019 = vpop.f32.mrf.mxu0
      %v3020 = vpop.f32.mrf.mxu0
      %v3021 = vadd.f32 0.0, %v3020
      %v3022 = vpop.f32.mrf.mxu0
      %3023 = vmatprep.mubr.bf16.mxu0 0
      %3024 = vmatmul.mubr.bf16.gmra.mxu0 %v2885
      %v3025 = vpop.f32.mrf.mxu0
      %v3026 = vadd.f32 0.0, %v3025
      %v3027 = vpop.f32.mrf.mxu0
      %v3028 = vpop.f32.mrf.mxu0
      %v3029 = vadd.f32 0.0, %v3028
      %v3030 = vpop.f32.mrf.mxu0
      %3031 = vmatprep.mubr.bf16.mxu0 0
      %3032 = vmatmul.mubr.bf16.gmra.mxu0 %v2886
      %v3033 = vpop.f32.mrf.mxu0
      %v3034 = vadd.f32 0.0, %v3033
      %v3035 = vpop.f32.mrf.mxu0
      %v3036 = vpop.f32.mrf.mxu0
      %v3037 = vadd.f32 0.0, %v3036
      %v3038 = vpop.f32.mrf.mxu0
      %3039 = vdwg.mxu0
      %v3040 = vadd.f32 %v2742, %v2978
      %v3041 = vadd.f32 %v2743, %v2981
      %v3042 = vadd.f32 %v2744, %v2986
      %v3043 = vadd.f32 %v2745, %v2989
      %v3044 = vadd.f32 %v2746, %v2994
      %v3045 = vadd.f32 %v2747, %v2997
      %v3046 = vadd.f32 %v2748, %v3002
      %v3047 = vadd.f32 %v2749, %v3005
      %v3048 = vadd.f32 %v2750, %v3010
      %v3049 = vadd.f32 %v2751, %v3013
      %v3050 = vadd.f32 %v2752, %v3018
      %v3051 = vadd.f32 %v2753, %v3021
      %v3052 = vadd.f32 %v2754, %v3026
      %v3053 = vadd.f32 %v2755, %v3029
      %v3054 = vadd.f32 %v2756, %v3034
      %v3055 = vadd.f32 %v2757, %v3037
      %v3056 = vld [vmem:[%s2] sm:$0x1]
      %v3058 = vlaneseq
      %v3059 = vshrl.u32 %v3058, 7
      %v3060 = vsub.s32 0, %v3059
      %v3061 = vrot.slane %v3056, %v3060
      %v3063 = vadd.f32 %v3040, %v3061
      %v3064 = vadd.f32 %v3041, %v3061
      %v3065 = vadd.f32 %v3042, %v3061
      %v3066 = vadd.f32 %v3043, %v3061
      %v3067 = vadd.f32 %v3044, %v3061
      %v3068 = vadd.f32 %v3045, %v3061
      %v3069 = vadd.f32 %v3046, %v3061
      %v3070 = vadd.f32 %v3047, %v3061
      %v3071 = vadd.f32 %v3048, %v3061
      %v3072 = vadd.f32 %v3049, %v3061
      %v3073 = vadd.f32 %v3050, %v3061
      %v3074 = vadd.f32 %v3051, %v3061
      %v3075 = vadd.f32 %v3052, %v3061
      %v3076 = vadd.f32 %v3053, %v3061
      %v3077 = vadd.f32 %v3054, %v3061
      %v3078 = vadd.f32 %v3055, %v3061
      %3079 = vst [vmem:[%s194] sm:$0xff] %v3063
      %3080 = vst [vmem:[%s194 + $0x8] sm:$0xff] %v3064
      %3081 = vst [vmem:[%s194 + $0x10] sm:$0xff] %v3065
      %3082 = vst [vmem:[%s194 + $0x18] sm:$0xff] %v3066
      %3083 = vst [vmem:[%s194 + $0x20] sm:$0xff] %v3067
      %3084 = vst [vmem:[%s194 + $0x28] sm:$0xff] %v3068
      %3085 = vst [vmem:[%s194 + $0x30] sm:$0xff] %v3069
      %3086 = vst [vmem:[%s194 + $0x38] sm:$0xff] %v3070
      %3087 = vst [vmem:[%s194 + $0x40] sm:$0xff] %v3071
      %3088 = vst [vmem:[%s194 + $0x48] sm:$0xff] %v3072
      %3089 = vst [vmem:[%s194 + $0x50] sm:$0xff] %v3073
      %3090 = vst [vmem:[%s194 + $0x58] sm:$0xff] %v3074
      %3091 = vst [vmem:[%s194 + $0x60] sm:$0xff] %v3075
      %3092 = vst [vmem:[%s194 + $0x68] sm:$0xff] %v3076
      %3093 = vst [vmem:[%s194 + $0x70] sm:$0xff] %v3077
      %3094 = vst [vmem:[%s194 + $0x78] sm:$0xff] %v3078
      %s3095 = smul.u32 8, %s19
      %p3096 = scmp.lt.s32.totalorder %s18, 1
      %s3097 = scalar_select %p3096, %s18, 1
      %p3098 = scmp.lt.s32.totalorder %s3095, 15
      %s3099 = scalar_select %p3098, %s3095, 15
      %s3100 = smul.addr %s3099, 2
      %s3101 = smul.addr %s3097, 32
      %s3102 = sadd.s32 %s3100, %s3101
      %s3103 = smul.addr %s3102, 8
      %s3104 = scalar_lea.vmem %s3, %s3103
      // Predicated region
      $region33: #{fourier_cnn_forward.5} parent=31 // pred_check
        %p3105 = pneg %p114
      $region34: #{fourier_cnn_forward.5} parent=31 // pred_check_branch
        %3107 = sbr.rel (%p3105) target = $region36
      $region35: #{fourier_cnn_forward.5} parent=31 // pred_region
        %s3108 = smul.u32 8, %s19
      $region36: #{fourier_cnn_forward.5} parent=31 // pred_fallthru
        _
    $region32: #{fourier_cnn_forward.5} parent=5 // pred_fallthru
      _
    %p3109 = scmp.le.s32.totalorder 2, %s9
    // Predicated region
    $region37: #{fourier_cnn_forward.5} parent=5 // pred_check
      %p3110 = pneg %p3109
    $region38: #{fourier_cnn_forward.5} parent=5 // pred_check_branch
      %3112 = sbr.rel (%p3110) target = $region40
    $region39: #{fourier_cnn_forward.5} parent=5 // pred_region
      %s3113 = ssub.s32 %s9, 2
      // Predicated region
      $region41: #{fourier_cnn_forward.5} parent=39 // pred_check
        %p3114 = pneg %p120
      $region42: #{fourier_cnn_forward.5} parent=39 // pred_check_branch
        %3116 = sbr.rel (%p3114) target = $region44
      $region43: #{fourier_cnn_forward.5} parent=39 // pred_region
        %s3117 = smul.u32 8, %s21
        %p3118 = scmp.lt.s32.totalorder %s20, 1
        %s3119 = scalar_select %p3118, %s20, 1
        %p3120 = scmp.lt.s32.totalorder %s3117, 15
        %s3121 = scalar_select %p3120, %s3117, 15
        %s3122 = smul.addr %s3121, 2
        %s3123 = smul.addr %s3119, 32
        %s3124 = sadd.s32 %s3122, %s3123
        %s3125 = smul.addr %s3124, 8
        %s3126 = scalar_lea.vmem %s3, %s3125
      $region44: #{fourier_cnn_forward.5} parent=39 // pred_fallthru
        _
    $region40: #{fourier_cnn_forward.5} parent=5 // pred_fallthru
      _
  $region6: #{fourier_cnn_forward.5} parent=0 // loop_footer
    %s13 = sadd.s32 1, %s9
  $region7: #{fourier_cnn_forward.5} parent=0 // loop_footer_branch
    %8 = sbr.rel target = $region3
  $region8: #{fourier_cnn_forward.5} parent=0 // loop_exit
    _

</llo_original>
